<compile_context>
chip_gen: v5e
topology: v5e:2x2
jax: 0.10.0
libtpu: 0.0.40
codegen_flags: <defaults>
</compile_context>

<pallas_src>
import functools
import math

import jax
import jax.numpy as jnp
from jax.experimental import pallas as pl
from jax.experimental.pallas import tpu as pltpu


_LANE = 128
_TAPS_3X3 = tuple((dy, dx) for dy in range(3) for dx in range(3))


def _round_up(x, m):
    return (x + m - 1) // m * m


# --------------------------------------------------------------------------
# In-kernel helpers
# --------------------------------------------------------------------------

def _stacked_conv(window, taps, out_hw, w_ref, batch):
    """3x3 conv as ONE MXU matmul with the taps stacked along K.

    window(dy, dx) -> (B, Ho, Wo, Cin) bf16 shifted window.
    w_ref: (len(taps)*Cin, Cout) bf16.
    returns f32 (B*Ho*Wo, Cout).
    """
    Ho, Wo = out_hw
    parts = [window(dy, dx) for (dy, dx) in taps]
    lhs = jnp.concatenate(parts, axis=-1) if len(parts) > 1 else parts[0]
    k = lhs.shape[-1]
    lhs = lhs.reshape(batch * Ho * Wo, k)           # lane-major, layout no-op
    return jnp.dot(lhs, w_ref[...], preferred_element_type=jnp.float32)


# --------------------------------------------------------------------------
# Pallas kernels
# --------------------------------------------------------------------------

def _conv1_kernel(x_ref, w_ref, *rest, out_hw, with_shortcut):
    """conv1 (3x3, pad=1) [+ fused 1x1 shortcut conv] + per-step BN partials.

    x_ref:   (B, H+2, W+2, Cin_p)  bf16, spatially pre-padded input
    w_ref:   (9*Cin_p, Cout_p)     bf16, K-stacked taps
    wsc_ref: (Cin_p, Cout_p)       bf16 (only if with_shortcut)
    y_ref:   (B, H, W, Cout_p)     bf16 conv output (UNPADDED)
    s/ss:    (1, 1, Cout_p)        f32 per-step sum / sum-of-squares partials
    """
    if with_shortcut:
        wsc_ref, y_ref, s_ref, ss_ref, ysc_ref, ssc_ref, sssc_ref = rest
    else:
        y_ref, s_ref, ss_ref = rest

    Ho, Wo = out_hw
    B = y_ref.shape[0]
    Cout = y_ref.shape[-1]

    acc = _stacked_conv(lambda dy, dx: x_ref[:, dy:dy + Ho, dx:dx + Wo, :],
                        _TAPS_3X3, out_hw, w_ref, B)
    y_ref[...] = acc.reshape(B, Ho, Wo, Cout).astype(y_ref.dtype)
    s_ref[...] = jnp.sum(acc, axis=0, keepdims=True).reshape(1, 1, Cout)
    ss_ref[...] = jnp.sum(acc * acc, axis=0, keepdims=True).reshape(1, 1, Cout)

    if with_shortcut:
        # 1x1 shortcut conv on the interior of the same (padded) input block.
        xi = x_ref[:, 1:1 + Ho, 1:1 + Wo, :].reshape(B * Ho * Wo, -1)
        acc_sc = jnp.dot(xi, wsc_ref[...], preferred_element_type=jnp.float32)
        ysc_ref[...] = acc_sc.reshape(B, Ho, Wo, Cout).astype(ysc_ref.dtype)
        ssc_ref[...] = jnp.sum(acc_sc, axis=0,
                               keepdims=True).reshape(1, 1, Cout)
        sssc_ref[...] = jnp.sum(acc_sc * acc_sc, axis=0,
                                keepdims=True).reshape(1, 1, Cout)


def _conv2_kernel(x_ref, scale_ref, shift_ref, w_ref,
                  y_ref, s_ref, ss_ref, pad_ref, *, out_hw):
    """conv2 (3x3, pad=1) with BN1+ReLU fused as a prologue + BN2 partials.

    x_ref:    (B, H, W, Cin_p)     bf16, UNPADDED conv1 output
    scale/shift: (1, Cin_p)        f32 folded BN1 scale / shift
    w_ref:    (9*Cin_p, Cout_p)    bf16
    pad_ref:  (B, H+2, W+2, Cin_p) bf16 VMEM scratch (zero-ring padded operand)
    """
    Ho, Wo = out_hw
    B = x_ref.shape[0]
    Cin = x_ref.shape[-1]
    Cout = y_ref.shape[-1]

    # BN1 + ReLU in f32 (v5e: keep elementwise math f32), then build the
    # zero-ring padded operand in VMEM.  PyTorch zero-pads the conv input
    # AFTER the activation, so the ring must be exactly 0; writing only the
    # four 1-pixel strips + the interior avoids a full redundant store pass.
    xbn = jnp.maximum(
        x_ref[...].astype(jnp.float32) * scale_ref[0] + shift_ref[0],
        0.0).astype(jnp.bfloat16)
    zrow = jnp.zeros((B, 1, Wo + 2, Cin), jnp.bfloat16)
    zcol = jnp.zeros((B, Ho + 2, 1, Cin), jnp.bfloat16)
    pad_ref[:, 0:1, :, :] = zrow
    pad_ref[:, Ho + 1:Ho + 2, :, :] = zrow
    pad_ref[:, :, 0:1, :] = zcol
    pad_ref[:, :, Wo + 1:Wo + 2, :] = zcol
    pad_ref[:, 1:Ho + 1, 1:Wo + 1, :] = xbn

    acc = _stacked_conv(lambda dy, dx: pad_ref[:, dy:dy + Ho, dx:dx + Wo, :],
                        _TAPS_3X3, out_hw, w_ref, B)
    y_ref[...] = acc.reshape(B, Ho, Wo, Cout).astype(y_ref.dtype)
    s_ref[...] = jnp.sum(acc, axis=0, keepdims=True).reshape(1, 1, Cout)
    ss_ref[...] = jnp.sum(acc * acc, axis=0, keepdims=True).reshape(1, 1, Cout)


def _bn_add_relu_kernel(a_ref, b_ref, sa_ref, ba_ref, sb_ref, bb_ref, o_ref,
                        *, out_hw, shortcut_padded):
    """out = relu( BN2(conv2_out) + [BN_sc(shortcut_conv_out) | x] ), fused."""
    Ho, Wo = out_hw
    a = a_ref[...].astype(jnp.float32)
    if shortcut_padded:                  # identity shortcut: b is padded x
        b = b_ref[:, 1:Ho + 1, 1:Wo + 1, :].astype(jnp.float32)
    else:
        b = b_ref[...].astype(jnp.float32)
    y = (a * sa_ref[0] + ba_ref[0]) + (b * sb_ref[0] + bb_ref[0])
    o_ref[...] = jnp.maximum(y, 0.0)


# --------------------------------------------------------------------------
# pallas_call wrappers
# --------------------------------------------------------------------------

def _conv1_call(x_pad, w1, wsc, *, out_hw, block_b):
    N, Hin, Win, Cin_p = x_pad.shape
    Ho, Wo = out_hw
    Cout_p = w1.shape[-1]
    n_steps = N // block_b
    with_shortcut = wsc is not None

    kernel = functools.partial(_conv1_kernel, out_hw=out_hw,
                               with_shortcut=with_shortcut)
    inputs = [x_pad, w1]
    in_specs = [
        pl.BlockSpec((block_b, Hin, Win, Cin_p), lambda n: (n, 0, 0, 0)),
        pl.BlockSpec((9 * Cin_p, Cout_p), lambda n: (0, 0)),
    ]
    out_shape = [
        jax.ShapeDtypeStruct((N, Ho, Wo, Cout_p), jnp.bfloat16),
        jax.ShapeDtypeStruct((n_steps, 1, Cout_p), jnp.float32),
        jax.ShapeDtypeStruct((n_steps, 1, Cout_p), jnp.float32),
    ]
    out_specs = [
        pl.BlockSpec((block_b, Ho, Wo, Cout_p), lambda n: (n, 0, 0, 0)),
        pl.BlockSpec((1, 1, Cout_p), lambda n: (n, 0, 0)),
        pl.BlockSpec((1, 1, Cout_p), lambda n: (n, 0, 0)),
    ]
    if with_shortcut:
        inputs.append(wsc)
        in_specs.append(pl.BlockSpec((Cin_p, Cout_p), lambda n: (0, 0)))
        out_shape += [
            jax.ShapeDtypeStruct((N, Ho, Wo, Cout_p), jnp.bfloat16),
            jax.ShapeDtypeStruct((n_steps, 1, Cout_p), jnp.float32),
            jax.ShapeDtypeStruct((n_steps, 1, Cout_p), jnp.float32),
        ]
        out_specs += [
            pl.BlockSpec((block_b, Ho, Wo, Cout_p), lambda n: (n, 0, 0, 0)),
            pl.BlockSpec((1, 1, Cout_p), lambda n: (n, 0, 0)),
            pl.BlockSpec((1, 1, Cout_p), lambda n: (n, 0, 0)),
        ]
    return pl.pallas_call(
        kernel,
        out_shape=tuple(out_shape),
        grid=(n_steps,),
        in_specs=in_specs,
        out_specs=tuple(out_specs),
        compiler_params=pltpu.CompilerParams(
            dimension_semantics=("parallel",)),     # megacore-friendly on v7x
    )(*inputs)


def _conv2_call(y1, scale1, shift1, w2, *, out_hw, block_b):
    N, Ho, Wo, Cin_p = y1.shape
    Cout_p = w2.shape[-1]
    n_steps = N // block_b
    kernel = functools.partial(_conv2_kernel, out_hw=out_hw)
    return pl.pallas_call(
        kernel,
        out_shape=(
            jax.ShapeDtypeStruct((N, Ho, Wo, Cout_p), jnp.bfloat16),
            jax.ShapeDtypeStruct((n_steps, 1, Cout_p), jnp.float32),
            jax.ShapeDtypeStruct((n_steps, 1, Cout_p), jnp.float32),
        ),
        grid=(n_steps,),
        in_specs=[
            pl.BlockSpec((block_b, Ho, Wo, Cin_p), lambda n: (n, 0, 0, 0)),
            pl.BlockSpec((1, Cin_p), lambda n: (0, 0)),
            pl.BlockSpec((1, Cin_p), lambda n: (0, 0)),
            pl.BlockSpec((9 * Cin_p, Cout_p), lambda n: (0, 0)),
        ],
        out_specs=(
            pl.BlockSpec((block_b, Ho, Wo, Cout_p), lambda n: (n, 0, 0, 0)),
            pl.BlockSpec((1, 1, Cout_p), lambda n: (n, 0, 0)),
            pl.BlockSpec((1, 1, Cout_p), lambda n: (n, 0, 0)),
        ),
        scratch_shapes=[pltpu.VMEM((block_b, Ho + 2, Wo + 2, Cin_p),
                                   jnp.bfloat16)],
        compiler_params=pltpu.CompilerParams(
            dimension_semantics=("parallel",)),
    )(y1, scale1, shift1, w2)


def _bn_add_relu_call(a, b, sa, ba, sb, bb, *, shortcut_padded, block_b):
    N, Ho, Wo, Cp = a.shape
    n_steps = N // block_b
    Hb, Wb, Cb = b.shape[1], b.shape[2], b.shape[3]
    kernel = functools.partial(_bn_add_relu_kernel, out_hw=(Ho, Wo),
                               shortcut_padded=shortcut_padded)
    return pl.pallas_call(
        kernel,
        out_shape=jax.ShapeDtypeStruct((N, Ho, Wo, Cp), jnp.float32),
        grid=(n_steps,),
        in_specs=[
            pl.BlockSpec((block_b, Ho, Wo, Cp), lambda n: (n, 0, 0, 0)),
            pl.BlockSpec((block_b, Hb, Wb, Cb), lambda n: (n, 0, 0, 0)),
            pl.BlockSpec((1, Cp), lambda n: (0, 0)),
            pl.BlockSpec((1, Cp), lambda n: (0, 0)),
            pl.BlockSpec((1, Cp), lambda n: (0, 0)),
            pl.BlockSpec((1, Cp), lambda n: (0, 0)),
        ],
        out_specs=pl.BlockSpec((block_b, Ho, Wo, Cp), lambda n: (n, 0, 0, 0)),
        compiler_params=pltpu.CompilerParams(
            dimension_semantics=("parallel",)),
    )(a, b, sa, ba, sb, bb)


# --------------------------------------------------------------------------
# BN fold (tiny per-channel math on (1, 128) vectors, plain JAX)
# --------------------------------------------------------------------------

def _bn_fold(s_part, ss_part, gamma_p, beta_p, count, eps=1e-5):
    # TODO(synk): E[x^2]-mean^2 with a >=0 clamp loses precision for very
    # large-magnitude activations vs. a shifted/two-pass variance.
    s = jnp.sum(s_part, axis=0)                    # (1, Cp)
    ss = jnp.sum(ss_part, axis=0)                  # (1, Cp)
    mean = s / count
    var = jnp.maximum(ss / count - mean * mean, 0.0)
    inv_std = jax.lax.rsqrt(var + eps)
    scale = gamma_p * inv_std
    shift = beta_p - mean * scale
    return scale, shift


# --------------------------------------------------------------------------
# Parameters (deterministic init, padded & K-stacked ONCE) and forward
# --------------------------------------------------------------------------

def init_basic_block_params(in_planes, planes, stride=1, seed=0):
    k1, k2, k3 = jax.random.split(jax.random.PRNGKey(seed), 3)

    def conv_w(key, cout, cin, k):
        std = math.sqrt(2.0 / (cin * k * k))
        return jax.random.normal(key, (cout, cin, k, k), jnp.float32) * std

    def pack_taps(w):   # torch (cout,cin,kh,kw) -> ((kh*kw)*Cin_p, Cout_p) bf16
        cout, cin, kh, kw = w.shape
        cin_p, cout_p = _round_up(cin, _LANE), _round_up(cout, _LANE)
        wt = jnp.transpose(w, (2, 3, 1, 0)).reshape(kh * kw, cin, cout)
        out = jnp.zeros((kh * kw, cin_p, cout_p), jnp.float32)
        out = out.at[:, :cin, :cout].set(wt)
        return out.reshape(kh * kw * cin_p, cout_p).astype(jnp.bfloat16)

    def bn_packed(c):   # gamma=1 / beta=0 on real channels, 0 on padded ones
        cp = _round_up(c, _LANE)
        gamma = jnp.zeros((1, cp), jnp.float32).at[0, :c].set(1.0)
        beta = jnp.zeros((1, cp), jnp.float32)
        return gamma, beta

    g1, b1 = bn_packed(planes)
    g2, b2 = bn_packed(planes)
    params = {
        "w1": pack_taps(conv_w(k1, planes, in_planes, 3)),
        "g1": g1, "b1": b1,
        "w2": pack_taps(conv_w(k2, planes, planes, 3)),
        "g2": g2, "b2": b2,
    }
    if stride != 1 or in_planes != planes:
        gsc, bsc = bn_packed(planes)
        params["wsc"] = pack_taps(conv_w(k3, planes, in_planes, 1))
        params["gsc"] = gsc
        params["bsc"] = bsc
    return params


def basic_block_forward(x_nchw, params, *, in_planes, planes, stride=1,
                        eps=1e-5, block_b=1):
    # TODO(synk): stride > 1 (downsampling BasicBlock) needs a strided 3x3
    # window gather; only the stride=1 block is implemented.
    assert stride == 1, "stride > 1 not implemented in this Pallas version"
    N, Cin, H, W = x_nchw.shape
    assert Cin == in_planes
    assert N % block_b == 0
    Cin_p = _round_up(in_planes, _LANE)
    Cout_p = _round_up(planes, _LANE)
    has_sc_conv = (stride != 1) or (in_planes != planes)

    # NCHW -> NHWC, channel pad to a lane multiple + zero spatial ring in ONE
    # wrapper pass, stored bf16 (HBM-bound chain: halve the DMA bytes).
    x_nhwc = jnp.transpose(x_nchw, (0, 2, 3, 1)).astype(jnp.bfloat16)
    x_pad = jnp.zeros((N, H + 2, W + 2, Cin_p), jnp.bfloat16)
    x_pad = x_pad.at[:, 1:H + 1, 1:W + 1, :Cin].set(x_nhwc)

    count = float(N * H * W)

    # conv1 (3x3) [+ fused 1x1 shortcut conv] with per-step BN partial sums.
    wsc = params.get("wsc") if has_sc_conv else None
    res = _conv1_call(x_pad, params["w1"], wsc, out_hw=(H, W),
                      block_b=block_b)
    if has_sc_conv:
        y1, s1, ss1, ysc, ssc, sssc = res
    else:
        y1, s1, ss1 = res
    scale1, shift1 = _bn_fold(s1, ss1, params["g1"], params["b1"], count, eps)

    # conv2 (3x3) with BN1+ReLU fused prologue (padding built in VMEM scratch).
    y2, s2, ss2 = _conv2_call(y1, scale1, shift1, params["w2"],
                              out_hw=(H, W), block_b=block_b)
    scale2, shift2 = _bn_fold(s2, ss2, params["g2"], params["b2"], count, eps)

    # BN2 + shortcut(-BN) + residual add + final ReLU in one fused kernel.
    if has_sc_conv:
        scale_sc, shift_sc = _bn_fold(ssc, sssc, params["gsc"],
                                      params["bsc"], count, eps)
        out = _bn_add_relu_call(y2, ysc, scale2, shift2, scale_sc, shift_sc,
                                shortcut_padded=False, block_b=block_b)
    else:
        ones = jnp.ones((1, Cout_p), jnp.float32)
        zeros = jnp.zeros((1, Cout_p), jnp.float32)
        out = _bn_add_relu_call(y2, x_pad, scale2, shift2, ones, zeros,
                                shortcut_padded=True, block_b=block_b)

    # back to NCHW to match the PyTorch module's output layout.
    return jnp.transpose(out[..., :planes], (0, 3, 1, 2))


if __name__ == "__main__":
    key = jax.random.PRNGKey(0)
    N, C, H, W = 2, 16, 16, 16          # small shapes; NCHW like PyTorch
    planes = 32                          # in_planes != planes -> conv shortcut
    x = jax.random.normal(key, (N, C, H, W), jnp.float32)

    params = init_basic_block_params(in_planes=C, planes=planes,
                                     stride=1, seed=0)
    fwd = jax.jit(functools.partial(
        basic_block_forward, in_planes=C, planes=planes, stride=1))

    out = jax.block_until_ready(fwd(x, params))
    assert out.shape == (N, planes, H, W) and out.dtype == jnp.float32
    assert bool(jnp.all(jnp.isfinite(out)))
    assert bool(jnp.all(out >= 0.0))     # final ReLU
    print("KERNEL_OK")
</pallas_src>

<mosaic_0001>
module attributes {stable_mosaic.version = 11 : i64} {
  func.func @_conv1_kernel(%arg0: i32, %arg1: memref<1x18x18x128xbf16, #tpu.memory_space<vmem>>, %arg2: memref<1152x128xbf16, #tpu.memory_space<vmem>>, %arg3: memref<128x128xbf16, #tpu.memory_space<vmem>>, %arg4: memref<1x16x16x128xbf16, #tpu.memory_space<vmem>>, %arg5: memref<1x1x128xf32, #tpu.memory_space<vmem>>, %arg6: memref<1x1x128xf32, #tpu.memory_space<vmem>>, %arg7: memref<1x16x16x128xbf16, #tpu.memory_space<vmem>>, %arg8: memref<1x1x128xf32, #tpu.memory_space<vmem>>, %arg9: memref<1x1x128xf32, #tpu.memory_space<vmem>>) attributes {dimension_semantics = [#tpu.dimension_semantics<parallel>], iteration_bounds = array<i64: 2>, scalar_prefetch = 0 : i64, scratch_operands = 0 : i64, tpu.core_type = #tpu.core_type<tc>, window_params = [{transform_indices = @transform_0, window_bounds = array<i64: 1, 18, 18, 128>}, {pipeline_mode = #tpu.pipeline_mode<synchronous>, transform_indices = @transform_1, window_bounds = array<i64: 1152, 128>}, {pipeline_mode = #tpu.pipeline_mode<synchronous>, transform_indices = @transform_2, window_bounds = array<i64: 128, 128>}, {transform_indices = @transform_3, window_bounds = array<i64: 1, 16, 16, 128>}, {transform_indices = @transform_4, window_bounds = array<i64: 1, 1, 128>}, {transform_indices = @transform_5, window_bounds = array<i64: 1, 1, 128>}, {transform_indices = @transform_6, window_bounds = array<i64: 1, 16, 16, 128>}, {transform_indices = @transform_7, window_bounds = array<i64: 1, 1, 128>}, {transform_indices = @transform_8, window_bounds = array<i64: 1, 1, 128>}]} {
    %c0 = arith.constant 0 : index
    %c0_0 = arith.constant 0 : index
    %c0_1 = arith.constant 0 : index
    %c0_2 = arith.constant 0 : index
    %0 = vector.load %arg1[%c0, %c0_0, %c0_1, %c0_2] : memref<1x18x18x128xbf16, #tpu.memory_space<vmem>>, vector<1x16x16x128xbf16>
    %c0_3 = arith.constant 0 : index
    %c0_4 = arith.constant 0 : index
    %c1 = arith.constant 1 : index
    %c0_5 = arith.constant 0 : index
    %1 = vector.load %arg1[%c0_3, %c0_4, %c1, %c0_5] : memref<1x18x18x128xbf16, #tpu.memory_space<vmem>>, vector<1x16x16x128xbf16>
    %c0_6 = arith.constant 0 : index
    %c0_7 = arith.constant 0 : index
    %c2 = arith.constant 2 : index
    %c0_8 = arith.constant 0 : index
    %2 = vector.load %arg1[%c0_6, %c0_7, %c2, %c0_8] : memref<1x18x18x128xbf16, #tpu.memory_space<vmem>>, vector<1x16x16x128xbf16>
    %c0_9 = arith.constant 0 : index
    %c1_10 = arith.constant 1 : index
    %c0_11 = arith.constant 0 : index
    %c0_12 = arith.constant 0 : index
    %3 = vector.load %arg1[%c0_9, %c1_10, %c0_11, %c0_12] : memref<1x18x18x128xbf16, #tpu.memory_space<vmem>>, vector<1x16x16x128xbf16>
    %c0_13 = arith.constant 0 : index
    %c1_14 = arith.constant 1 : index
    %c1_15 = arith.constant 1 : index
    %c0_16 = arith.constant 0 : index
    %4 = vector.load %arg1[%c0_13, %c1_14, %c1_15, %c0_16] : memref<1x18x18x128xbf16, #tpu.memory_space<vmem>>, vector<1x16x16x128xbf16>
    %c0_17 = arith.constant 0 : index
    %c1_18 = arith.constant 1 : index
    %c2_19 = arith.constant 2 : index
    %c0_20 = arith.constant 0 : index
    %5 = vector.load %arg1[%c0_17, %c1_18, %c2_19, %c0_20] : memref<1x18x18x128xbf16, #tpu.memory_space<vmem>>, vector<1x16x16x128xbf16>
    %c0_21 = arith.constant 0 : index
    %c2_22 = arith.constant 2 : index
    %c0_23 = arith.constant 0 : index
    %c0_24 = arith.constant 0 : index
    %6 = vector.load %arg1[%c0_21, %c2_22, %c0_23, %c0_24] : memref<1x18x18x128xbf16, #tpu.memory_space<vmem>>, vector<1x16x16x128xbf16>
    %c0_25 = arith.constant 0 : index
    %c2_26 = arith.constant 2 : index
    %c1_27 = arith.constant 1 : index
    %c0_28 = arith.constant 0 : index
    %7 = vector.load %arg1[%c0_25, %c2_26, %c1_27, %c0_28] : memref<1x18x18x128xbf16, #tpu.memory_space<vmem>>, vector<1x16x16x128xbf16>
    %c0_29 = arith.constant 0 : index
    %c2_30 = arith.constant 2 : index
    %c2_31 = arith.constant 2 : index
    %c0_32 = arith.constant 0 : index
    %8 = vector.load %arg1[%c0_29, %c2_30, %c2_31, %c0_32] : memref<1x18x18x128xbf16, #tpu.memory_space<vmem>>, vector<1x16x16x128xbf16>
    %9 = tpu.concatenate %0, %1, %2, %3, %4, %5, %6, %7, %8 in 3 : vector<1x16x16x128xbf16>, vector<1x16x16x128xbf16>, vector<1x16x16x128xbf16>, vector<1x16x16x128xbf16>, vector<1x16x16x128xbf16>, vector<1x16x16x128xbf16>, vector<1x16x16x128xbf16>, vector<1x16x16x128xbf16>, vector<1x16x16x128xbf16> -> vector<1x16x16x1152xbf16>
    %10 = vector.shape_cast %9 : vector<1x16x16x1152xbf16> to vector<256x1152xbf16>
    %c0_33 = arith.constant 0 : index
    %c0_34 = arith.constant 0 : index
    %11 = vector.load %arg2[%c0_33, %c0_34] : memref<1152x128xbf16, #tpu.memory_space<vmem>>, vector<1152x128xbf16>
    %cst = arith.constant dense<0.000000e+00> : vector<256x128xf32>
    %12 = tpu.matmul %10, %11, %cst {dimension_numbers = #tpu.dot_dimension_numbers<[1], [0], [0], [1], [0, 0, 1, 1], [], []>} : vector<256x1152xbf16>, vector<1152x128xbf16>, vector<256x128xf32> -> vector<256x128xf32>
    %13 = vector.shape_cast %12 : vector<256x128xf32> to vector<1x16x16x128xf32>
    %14 = arith.truncf %13 : vector<1x16x16x128xf32> to vector<1x16x16x128xbf16>
    %c0_35 = arith.constant 0 : index
    %c0_36 = arith.constant 0 : index
    %c0_37 = arith.constant 0 : index
    %c0_38 = arith.constant 0 : index
    %15 = vector.load %arg4[%c0_35, %c0_36, %c0_37, %c0_38] : memref<1x16x16x128xbf16, #tpu.memory_space<vmem>>, vector<1x16x16x128xbf16>
    tpu.vector_store %arg4[%c0_35, %c0_36, %c0_37, %c0_38], %14 {strides = array<i32>} : memref<1x16x16x128xbf16, #tpu.memory_space<vmem>>, vector<1x16x16x128xbf16>,
    %cst_39 = arith.constant dense<0.000000e+00> : vector<128xf32>
    %16 = vector.multi_reduction <add>, %12, %cst_39 [0] : vector<256x128xf32> to vector<128xf32>
    %17 = vector.shape_cast %16 : vector<128xf32> to vector<1x128xf32>
    %18 = vector.shape_cast %17 : vector<1x128xf32> to vector<1x1x128xf32>
    %c0_40 = arith.constant 0 : index
    %c0_41 = arith.constant 0 : index
    %c0_42 = arith.constant 0 : index
    %19 = vector.load %arg5[%c0_40, %c0_41, %c0_42] : memref<1x1x128xf32, #tpu.memory_space<vmem>>, vector<1x1x128xf32>
    tpu.vector_store %arg5[%c0_40, %c0_41, %c0_42], %18 {strides = array<i32>} : memref<1x1x128xf32, #tpu.memory_space<vmem>>, vector<1x1x128xf32>,
    %20 = arith.mulf %12, %12 : vector<256x128xf32>
    %cst_43 = arith.constant dense<0.000000e+00> : vector<128xf32>
    %21 = vector.multi_reduction <add>, %20, %cst_43 [0] : vector<256x128xf32> to vector<128xf32>
    %22 = vector.shape_cast %21 : vector<128xf32> to vector<1x128xf32>
    %23 = vector.shape_cast %22 : vector<1x128xf32> to vector<1x1x128xf32>
    %c0_44 = arith.constant 0 : index
    %c0_45 = arith.constant 0 : index
    %c0_46 = arith.constant 0 : index
    %24 = vector.load %arg6[%c0_44, %c0_45, %c0_46] : memref<1x1x128xf32, #tpu.memory_space<vmem>>, vector<1x1x128xf32>
    tpu.vector_store %arg6[%c0_44, %c0_45, %c0_46], %23 {strides = array<i32>} : memref<1x1x128xf32, #tpu.memory_space<vmem>>, vector<1x1x128xf32>,
    %c0_47 = arith.constant 0 : index
    %c1_48 = arith.constant 1 : index
    %c1_49 = arith.constant 1 : index
    %c0_50 = arith.constant 0 : index
    %25 = vector.load %arg1[%c0_47, %c1_48, %c1_49, %c0_50] : memref<1x18x18x128xbf16, #tpu.memory_space<vmem>>, vector<1x16x16x128xbf16>
    %26 = vector.shape_cast %25 : vector<1x16x16x128xbf16> to vector<256x128xbf16>
    %c0_51 = arith.constant 0 : index
    %c0_52 = arith.constant 0 : index
    %27 = vector.load %arg3[%c0_51, %c0_52] : memref<128x128xbf16, #tpu.memory_space<vmem>>, vector<128x128xbf16>
    %cst_53 = arith.constant dense<0.000000e+00> : vector<256x128xf32>
    %28 = tpu.matmul %26, %27, %cst_53 {dimension_numbers = #tpu.dot_dimension_numbers<[1], [0], [0], [1], [0, 0, 1, 1], [], []>} : vector<256x128xbf16>, vector<128x128xbf16>, vector<256x128xf32> -> vector<256x128xf32>
    %29 = vector.shape_cast %28 : vector<256x128xf32> to vector<1x16x16x128xf32>
    %30 = arith.truncf %29 : vector<1x16x16x128xf32> to vector<1x16x16x128xbf16>
    %c0_54 = arith.constant 0 : index
    %c0_55 = arith.constant 0 : index
    %c0_56 = arith.constant 0 : index
    %c0_57 = arith.constant 0 : index
    %31 = vector.load %arg7[%c0_54, %c0_55, %c0_56, %c0_57] : memref<1x16x16x128xbf16, #tpu.memory_space<vmem>>, vector<1x16x16x128xbf16>
    tpu.vector_store %arg7[%c0_54, %c0_55, %c0_56, %c0_57], %30 {strides = array<i32>} : memref<1x16x16x128xbf16, #tpu.memory_space<vmem>>, vector<1x16x16x128xbf16>,
    %cst_58 = arith.constant dense<0.000000e+00> : vector<128xf32>
    %32 = vector.multi_reduction <add>, %28, %cst_58 [0] : vector<256x128xf32> to vector<128xf32>
    %33 = vector.shape_cast %32 : vector<128xf32> to vector<1x128xf32>
    %34 = vector.shape_cast %33 : vector<1x128xf32> to vector<1x1x128xf32>
    %c0_59 = arith.constant 0 : index
    %c0_60 = arith.constant 0 : index
    %c0_61 = arith.constant 0 : index
    %35 = vector.load %arg8[%c0_59, %c0_60, %c0_61] : memref<1x1x128xf32, #tpu.memory_space<vmem>>, vector<1x1x128xf32>
    tpu.vector_store %arg8[%c0_59, %c0_60, %c0_61], %34 {strides = array<i32>} : memref<1x1x128xf32, #tpu.memory_space<vmem>>, vector<1x1x128xf32>,
    %36 = arith.mulf %28, %28 : vector<256x128xf32>
    %cst_62 = arith.constant dense<0.000000e+00> : vector<128xf32>
    %37 = vector.multi_reduction <add>, %36, %cst_62 [0] : vector<256x128xf32> to vector<128xf32>
    %38 = vector.shape_cast %37 : vector<128xf32> to vector<1x128xf32>
    %39 = vector.shape_cast %38 : vector<1x128xf32> to vector<1x1x128xf32>
    %c0_63 = arith.constant 0 : index
    %c0_64 = arith.constant 0 : index
    %c0_65 = arith.constant 0 : index
    %40 = vector.load %arg9[%c0_63, %c0_64, %c0_65] : memref<1x1x128xf32, #tpu.memory_space<vmem>>, vector<1x1x128xf32>
    tpu.vector_store %arg9[%c0_63, %c0_64, %c0_65], %39 {strides = array<i32>} : memref<1x1x128xf32, #tpu.memory_space<vmem>>, vector<1x1x128xf32>,
    return
  }
  func.func @transform_0(%arg0: i32) -> (i32, i32, i32, i32) {
    %c0_i32 = arith.constant 0 : i32
    %c0_i32_0 = arith.constant 0 : i32
    %c0_i32_1 = arith.constant 0 : i32
    %c0_i32_2 = arith.constant 0 : i32
    return %arg0, %c0_i32, %c0_i32_0, %c0_i32_1 : i32, i32, i32, i32
  }
  func.func @transform_1(%arg0: i32) -> (i32, i32) {
    %c0_i32 = arith.constant 0 : i32
    %c0_i32_0 = arith.constant 0 : i32
    %c0_i32_1 = arith.constant 0 : i32
    return %c0_i32, %c0_i32_0 : i32, i32
  }
  func.func @transform_2(%arg0: i32) -> (i32, i32) {
    %c0_i32 = arith.constant 0 : i32
    %c0_i32_0 = arith.constant 0 : i32
    %c0_i32_1 = arith.constant 0 : i32
    return %c0_i32, %c0_i32_0 : i32, i32
  }
  func.func @transform_3(%arg0: i32) -> (i32, i32, i32, i32) {
    %c0_i32 = arith.constant 0 : i32
    %c0_i32_0 = arith.constant 0 : i32
    %c0_i32_1 = arith.constant 0 : i32
    %c0_i32_2 = arith.constant 0 : i32
    return %arg0, %c0_i32, %c0_i32_0, %c0_i32_1 : i32, i32, i32, i32
  }
  func.func @transform_4(%arg0: i32) -> (i32, i32, i32) {
    %c0_i32 = arith.constant 0 : i32
    %c0_i32_0 = arith.constant 0 : i32
    %c0_i32_1 = arith.constant 0 : i32
    return %arg0, %c0_i32, %c0_i32_0 : i32, i32, i32
  }
  func.func @transform_5(%arg0: i32) -> (i32, i32, i32) {
    %c0_i32 = arith.constant 0 : i32
    %c0_i32_0 = arith.constant 0 : i32
    %c0_i32_1 = arith.constant 0 : i32
    return %arg0, %c0_i32, %c0_i32_0 : i32, i32, i32
  }
  func.func @transform_6(%arg0: i32) -> (i32, i32, i32, i32) {
    %c0_i32 = arith.constant 0 : i32
    %c0_i32_0 = arith.constant 0 : i32
    %c0_i32_1 = arith.constant 0 : i32
    %c0_i32_2 = arith.constant 0 : i32
    return %arg0, %c0_i32, %c0_i32_0, %c0_i32_1 : i32, i32, i32, i32
  }
  func.func @transform_7(%arg0: i32) -> (i32, i32, i32) {
    %c0_i32 = arith.constant 0 : i32
    %c0_i32_0 = arith.constant 0 : i32
    %c0_i32_1 = arith.constant 0 : i32
    return %arg0, %c0_i32, %c0_i32_0 : i32, i32, i32
  }
  func.func @transform_8(%arg0: i32) -> (i32, i32, i32) {
    %c0_i32 = arith.constant 0 : i32
    %c0_i32_0 = arith.constant 0 : i32
    %c0_i32_1 = arith.constant 0 : i32
    return %arg0, %c0_i32, %c0_i32_0 : i32, i32, i32
  }
}

module attributes {stable_mosaic.version = 11 : i64} {
  func.func @_bn_add_relu_kernel(%arg0: i32, %arg1: memref<1x16x16x128xbf16, #tpu.memory_space<vmem>>, %arg2: memref<1x16x16x128xbf16, #tpu.memory_space<vmem>>, %arg3: memref<1x128xf32, #tpu.memory_space<vmem>>, %arg4: memref<1x128xf32, #tpu.memory_space<vmem>>, %arg5: memref<1x128xf32, #tpu.memory_space<vmem>>, %arg6: memref<1x128xf32, #tpu.memory_space<vmem>>, %arg7: memref<1x16x16x128xf32, #tpu.memory_space<vmem>>) attributes {dimension_semantics = [#tpu.dimension_semantics<parallel>], iteration_bounds = array<i64: 2>, scalar_prefetch = 0 : i64, scratch_operands = 0 : i64, tpu.core_type = #tpu.core_type<tc>, window_params = [{transform_indices = @transform_0, window_bounds = array<i64: 1, 16, 16, 128>}, {transform_indices = @transform_1, window_bounds = array<i64: 1, 16, 16, 128>}, {pipeline_mode = #tpu.pipeline_mode<synchronous>, transform_indices = @transform_2, window_bounds = array<i64: 1, 128>}, {pipeline_mode = #tpu.pipeline_mode<synchronous>, transform_indices = @transform_3, window_bounds = array<i64: 1, 128>}, {pipeline_mode = #tpu.pipeline_mode<synchronous>, transform_indices = @transform_4, window_bounds = array<i64: 1, 128>}, {pipeline_mode = #tpu.pipeline_mode<synchronous>, transform_indices = @transform_5, window_bounds = array<i64: 1, 128>}, {transform_indices = @transform_6, window_bounds = array<i64: 1, 16, 16, 128>}]} {
    %c0 = arith.constant 0 : index
    %c0_0 = arith.constant 0 : index
    %c0_1 = arith.constant 0 : index
    %c0_2 = arith.constant 0 : index
    %0 = vector.load %arg1[%c0, %c0_0, %c0_1, %c0_2] : memref<1x16x16x128xbf16, #tpu.memory_space<vmem>>, vector<1x16x16x128xbf16>
    %1 = arith.extf %0 : vector<1x16x16x128xbf16> to vector<1x16x16x128xf32>
    %c0_3 = arith.constant 0 : index
    %c0_4 = arith.constant 0 : index
    %c0_5 = arith.constant 0 : index
    %c0_6 = arith.constant 0 : index
    %2 = vector.load %arg2[%c0_3, %c0_4, %c0_5, %c0_6] : memref<1x16x16x128xbf16, #tpu.memory_space<vmem>>, vector<1x16x16x128xbf16>
    %3 = arith.extf %2 : vector<1x16x16x128xbf16> to vector<1x16x16x128xf32>
    %c0_7 = arith.constant 0 : index
    %c0_8 = arith.constant 0 : index
    %4 = vector.load %arg3[%c0_7, %c0_8] : memref<1x128xf32, #tpu.memory_space<vmem>>, vector<1x128xf32>
    %5 = vector.shape_cast %4 : vector<1x128xf32> to vector<128xf32>
    %6 = vector.shape_cast %5 : vector<128xf32> to vector<1x1x1x128xf32>
    %7 = vector.broadcast %6 : vector<1x1x1x128xf32> to vector<1x16x16x128xf32>
    %8 = arith.mulf %1, %7 : vector<1x16x16x128xf32>
    %c0_9 = arith.constant 0 : index
    %c0_10 = arith.constant 0 : index
    %9 = vector.load %arg4[%c0_9, %c0_10] : memref<1x128xf32, #tpu.memory_space<vmem>>, vector<1x128xf32>
    %10 = vector.shape_cast %9 : vector<1x128xf32> to vector<128xf32>
    %11 = vector.shape_cast %10 : vector<128xf32> to vector<1x1x1x128xf32>
    %12 = vector.broadcast %11 : vector<1x1x1x128xf32> to vector<1x16x16x128xf32>
    %13 = arith.addf %8, %12 : vector<1x16x16x128xf32>
    %c0_11 = arith.constant 0 : index
    %c0_12 = arith.constant 0 : index
    %14 = vector.load %arg5[%c0_11, %c0_12] : memref<1x128xf32, #tpu.memory_space<vmem>>, vector<1x128xf32>
    %15 = vector.shape_cast %14 : vector<1x128xf32> to vector<128xf32>
    %16 = vector.shape_cast %15 : vector<128xf32> to vector<1x1x1x128xf32>
    %17 = vector.broadcast %16 : vector<1x1x1x128xf32> to vector<1x16x16x128xf32>
    %18 = arith.mulf %3, %17 : vector<1x16x16x128xf32>
    %c0_13 = arith.constant 0 : index
    %c0_14 = arith.constant 0 : index
    %19 = vector.load %arg6[%c0_13, %c0_14] : memref<1x128xf32, #tpu.memory_space<vmem>>, vector<1x128xf32>
    %20 = vector.shape_cast %19 : vector<1x128xf32> to vector<128xf32>
    %21 = vector.shape_cast %20 : vector<128xf32> to vector<1x1x1x128xf32>
    %22 = vector.broadcast %21 : vector<1x1x1x128xf32> to vector<1x16x16x128xf32>
    %23 = arith.addf %18, %22 : vector<1x16x16x128xf32>
    %24 = arith.addf %13, %23 : vector<1x16x16x128xf32>
    %cst = arith.constant 0.000000e+00 : f32
    %25 = vector.broadcast %cst : f32 to vector<1x16x16x128xf32>
    %26 = arith.maximumf %24, %25 : vector<1x16x16x128xf32>
    %c0_15 = arith.constant 0 : index
    %c0_16 = arith.constant 0 : index
    %c0_17 = arith.constant 0 : index
    %c0_18 = arith.constant 0 : index
    %27 = vector.load %arg7[%c0_15, %c0_16, %c0_17, %c0_18] : memref<1x16x16x128xf32, #tpu.memory_space<vmem>>, vector<1x16x16x128xf32>
    tpu.vector_store %arg7[%c0_15, %c0_16, %c0_17, %c0_18], %26 {strides = array<i32>} : memref<1x16x16x128xf32, #tpu.memory_space<vmem>>, vector<1x16x16x128xf32>,
    return
  }
  func.func @transform_0(%arg0: i32) -> (i32, i32, i32, i32) {
    %c0_i32 = arith.constant 0 : i32
    %c0_i32_0 = arith.constant 0 : i32
    %c0_i32_1 = arith.constant 0 : i32
    %c0_i32_2 = arith.constant 0 : i32
    return %arg0, %c0_i32, %c0_i32_0, %c0_i32_1 : i32, i32, i32, i32
  }
  func.func @transform_1(%arg0: i32) -> (i32, i32, i32, i32) {
    %c0_i32 = arith.constant 0 : i32
    %c0_i32_0 = arith.constant 0 : i32
    %c0_i32_1 = arith.constant 0 : i32
    %c0_i32_2 = arith.constant 0 : i32
    return %arg0, %c0_i32, %c0_i32_0, %c0_i32_1 : i32, i32, i32, i32
  }
  func.func @transform_2(%arg0: i32) -> (i32, i32) {
    %c0_i32 = arith.constant 0 : i32
    %c0_i32_0 = arith.constant 0 : i32
    %c0_i32_1 = arith.constant 0 : i32
    return %c0_i32, %c0_i32_0 : i32, i32
  }
  func.func @transform_3(%arg0: i32) -> (i32, i32) {
    %c0_i32 = arith.constant 0 : i32
    %c0_i32_0 = arith.constant 0 : i32
    %c0_i32_1 = arith.constant 0 : i32
    return %c0_i32, %c0_i32_0 : i32, i32
  }
  func.func @transform_4(%arg0: i32) -> (i32, i32) {
    %c0_i32 = arith.constant 0 : i32
    %c0_i32_0 = arith.constant 0 : i32
    %c0_i32_1 = arith.constant 0 : i32
    return %c0_i32, %c0_i32_0 : i32, i32
  }
  func.func @transform_5(%arg0: i32) -> (i32, i32) {
    %c0_i32 = arith.constant 0 : i32
    %c0_i32_0 = arith.constant 0 : i32
    %c0_i32_1 = arith.constant 0 : i32
    return %c0_i32, %c0_i32_0 : i32, i32
  }
  func.func @transform_6(%arg0: i32) -> (i32, i32, i32, i32) {
    %c0_i32 = arith.constant 0 : i32
    %c0_i32_0 = arith.constant 0 : i32
    %c0_i32_1 = arith.constant 0 : i32
    %c0_i32_2 = arith.constant 0 : i32
    return %arg0, %c0_i32, %c0_i32_0, %c0_i32_1 : i32, i32, i32, i32
  }
}

module attributes {stable_mosaic.version = 11 : i64} {
  func.func @_conv2_kernel(%arg0: i32, %arg1: memref<1x16x16x128xbf16, #tpu.memory_space<vmem>>, %arg2: memref<1x128xf32, #tpu.memory_space<vmem>>, %arg3: memref<1x128xf32, #tpu.memory_space<vmem>>, %arg4: memref<1152x128xbf16, #tpu.memory_space<vmem>>, %arg5: memref<1x16x16x128xbf16, #tpu.memory_space<vmem>>, %arg6: memref<1x1x128xf32, #tpu.memory_space<vmem>>, %arg7: memref<1x1x128xf32, #tpu.memory_space<vmem>>, %arg8: memref<1x18x18x128xbf16, #tpu.memory_space<vmem>>) attributes {dimension_semantics = [#tpu.dimension_semantics<parallel>], iteration_bounds = array<i64: 2>, scalar_prefetch = 0 : i64, scratch_operands = 1 : i64, tpu.core_type = #tpu.core_type<tc>, window_params = [{transform_indices = @transform_0, window_bounds = array<i64: 1, 16, 16, 128>}, {pipeline_mode = #tpu.pipeline_mode<synchronous>, transform_indices = @transform_1, window_bounds = array<i64: 1, 128>}, {pipeline_mode = #tpu.pipeline_mode<synchronous>, transform_indices = @transform_2, window_bounds = array<i64: 1, 128>}, {pipeline_mode = #tpu.pipeline_mode<synchronous>, transform_indices = @transform_3, window_bounds = array<i64: 1152, 128>}, {transform_indices = @transform_4, window_bounds = array<i64: 1, 16, 16, 128>}, {transform_indices = @transform_5, window_bounds = array<i64: 1, 1, 128>}, {transform_indices = @transform_6, window_bounds = array<i64: 1, 1, 128>}]} {
    %c0 = arith.constant 0 : index
    %c0_0 = arith.constant 0 : index
    %c0_1 = arith.constant 0 : index
    %c0_2 = arith.constant 0 : index
    %0 = vector.load %arg1[%c0, %c0_0, %c0_1, %c0_2] : memref<1x16x16x128xbf16, #tpu.memory_space<vmem>>, vector<1x16x16x128xbf16>
    %1 = arith.extf %0 : vector<1x16x16x128xbf16> to vector<1x16x16x128xf32>
    %c0_3 = arith.constant 0 : index
    %c0_4 = arith.constant 0 : index
    %2 = vector.load %arg2[%c0_3, %c0_4] : memref<1x128xf32, #tpu.memory_space<vmem>>, vector<1x128xf32>
    %3 = vector.shape_cast %2 : vector<1x128xf32> to vector<128xf32>
    %4 = vector.shape_cast %3 : vector<128xf32> to vector<1x1x1x128xf32>
    %5 = vector.broadcast %4 : vector<1x1x1x128xf32> to vector<1x16x16x128xf32>
    %6 = arith.mulf %1, %5 : vector<1x16x16x128xf32>
    %c0_5 = arith.constant 0 : index
    %c0_6 = arith.constant 0 : index
    %7 = vector.load %arg3[%c0_5, %c0_6] : memref<1x128xf32, #tpu.memory_space<vmem>>, vector<1x128xf32>
    %8 = vector.shape_cast %7 : vector<1x128xf32> to vector<128xf32>
    %9 = vector.shape_cast %8 : vector<128xf32> to vector<1x1x1x128xf32>
    %10 = vector.broadcast %9 : vector<1x1x1x128xf32> to vector<1x16x16x128xf32>
    %11 = arith.addf %6, %10 : vector<1x16x16x128xf32>
    %cst = arith.constant 0.000000e+00 : f32
    %12 = vector.broadcast %cst : f32 to vector<1x16x16x128xf32>
    %13 = arith.maximumf %11, %12 : vector<1x16x16x128xf32>
    %14 = arith.truncf %13 : vector<1x16x16x128xf32> to vector<1x16x16x128xbf16>
    %cst_7 = arith.constant 0.000000e+00 : bf16
    %15 = vector.broadcast %cst_7 : bf16 to vector<1x1x18x128xbf16>
    %cst_8 = arith.constant 0.000000e+00 : bf16
    %16 = vector.broadcast %cst_8 : bf16 to vector<1x18x1x128xbf16>
    %c0_9 = arith.constant 0 : index
    %c0_10 = arith.constant 0 : index
    %c0_11 = arith.constant 0 : index
    %c0_12 = arith.constant 0 : index
    %17 = vector.load %arg8[%c0_9, %c0_10, %c0_11, %c0_12] : memref<1x18x18x128xbf16, #tpu.memory_space<vmem>>, vector<1x1x18x128xbf16>
    tpu.vector_store %arg8[%c0_9, %c0_10, %c0_11, %c0_12], %15 {strides = array<i32>} : memref<1x18x18x128xbf16, #tpu.memory_space<vmem>>, vector<1x1x18x128xbf16>,
    %c0_13 = arith.constant 0 : index
    %c17 = arith.constant 17 : index
    %c0_14 = arith.constant 0 : index
    %c0_15 = arith.constant 0 : index
    %18 = vector.load %arg8[%c0_13, %c17, %c0_14, %c0_15] : memref<1x18x18x128xbf16, #tpu.memory_space<vmem>>, vector<1x1x18x128xbf16>
    tpu.vector_store %arg8[%c0_13, %c17, %c0_14, %c0_15], %15 {strides = array<i32>} : memref<1x18x18x128xbf16, #tpu.memory_space<vmem>>, vector<1x1x18x128xbf16>,
    %c0_16 = arith.constant 0 : index
    %c0_17 = arith.constant 0 : index
    %c0_18 = arith.constant 0 : index
    %c0_19 = arith.constant 0 : index
    %19 = vector.load %arg8[%c0_16, %c0_17, %c0_18, %c0_19] : memref<1x18x18x128xbf16, #tpu.memory_space<vmem>>, vector<1x18x1x128xbf16>
    tpu.vector_store %arg8[%c0_16, %c0_17, %c0_18, %c0_19], %16 {strides = array<i32>} : memref<1x18x18x128xbf16, #tpu.memory_space<vmem>>, vector<1x18x1x128xbf16>,
    %c0_20 = arith.constant 0 : index
    %c0_21 = arith.constant 0 : index
    %c17_22 = arith.constant 17 : index
    %c0_23 = arith.constant 0 : index
    %20 = vector.load %arg8[%c0_20, %c0_21, %c17_22, %c0_23] : memref<1x18x18x128xbf16, #tpu.memory_space<vmem>>, vector<1x18x1x128xbf16>
    tpu.vector_store %arg8[%c0_20, %c0_21, %c17_22, %c0_23], %16 {strides = array<i32>} : memref<1x18x18x128xbf16, #tpu.memory_space<vmem>>, vector<1x18x1x128xbf16>,
    %c0_24 = arith.constant 0 : index
    %c1 = arith.constant 1 : index
    %c1_25 = arith.constant 1 : index
    %c0_26 = arith.constant 0 : index
    %21 = vector.load %arg8[%c0_24, %c1, %c1_25, %c0_26] : memref<1x18x18x128xbf16, #tpu.memory_space<vmem>>, vector<1x16x16x128xbf16>
    tpu.vector_store %arg8[%c0_24, %c1, %c1_25, %c0_26], %14 {strides = array<i32>} : memref<1x18x18x128xbf16, #tpu.memory_space<vmem>>, vector<1x16x16x128xbf16>,
    %c0_27 = arith.constant 0 : index
    %c0_28 = arith.constant 0 : index
    %c0_29 = arith.constant 0 : index
    %c0_30 = arith.constant 0 : index
    %22 = vector.load %arg8[%c0_27, %c0_28, %c0_29, %c0_30] : memref<1x18x18x128xbf16, #tpu.memory_space<vmem>>, vector<1x16x16x128xbf16>
    %c0_31 = arith.constant 0 : index
    %c0_32 = arith.constant 0 : index
    %c1_33 = arith.constant 1 : index
    %c0_34 = arith.constant 0 : index
    %23 = vector.load %arg8[%c0_31, %c0_32, %c1_33, %c0_34] : memref<1x18x18x128xbf16, #tpu.memory_space<vmem>>, vector<1x16x16x128xbf16>
    %c0_35 = arith.constant 0 : index
    %c0_36 = arith.constant 0 : index
    %c2 = arith.constant 2 : index
    %c0_37 = arith.constant 0 : index
    %24 = vector.load %arg8[%c0_35, %c0_36, %c2, %c0_37] : memref<1x18x18x128xbf16, #tpu.memory_space<vmem>>, vector<1x16x16x128xbf16>
    %c0_38 = arith.constant 0 : index
    %c1_39 = arith.constant 1 : index
    %c0_40 = arith.constant 0 : index
    %c0_41 = arith.constant 0 : index
    %25 = vector.load %arg8[%c0_38, %c1_39, %c0_40, %c0_41] : memref<1x18x18x128xbf16, #tpu.memory_space<vmem>>, vector<1x16x16x128xbf16>
    %c0_42 = arith.constant 0 : index
    %c1_43 = arith.constant 1 : index
    %c1_44 = arith.constant 1 : index
    %c0_45 = arith.constant 0 : index
    %26 = vector.load %arg8[%c0_42, %c1_43, %c1_44, %c0_45] : memref<1x18x18x128xbf16, #tpu.memory_space<vmem>>, vector<1x16x16x128xbf16>
    %c0_46 = arith.constant 0 : index
    %c1_47 = arith.constant 1 : index
    %c2_48 = arith.constant 2 : index
    %c0_49 = arith.constant 0 : index
    %27 = vector.load %arg8[%c0_46, %c1_47, %c2_48, %c0_49] : memref<1x18x18x128xbf16, #tpu.memory_space<vmem>>, vector<1x16x16x128xbf16>
    %c0_50 = arith.constant 0 : index
    %c2_51 = arith.constant 2 : index
    %c0_52 = arith.constant 0 : index
    %c0_53 = arith.constant 0 : index
    %28 = vector.load %arg8[%c0_50, %c2_51, %c0_52, %c0_53] : memref<1x18x18x128xbf16, #tpu.memory_space<vmem>>, vector<1x16x16x128xbf16>
    %c0_54 = arith.constant 0 : index
    %c2_55 = arith.constant 2 : index
    %c1_56 = arith.constant 1 : index
    %c0_57 = arith.constant 0 : index
    %29 = vector.load %arg8[%c0_54, %c2_55, %c1_56, %c0_57] : memref<1x18x18x128xbf16, #tpu.memory_space<vmem>>, vector<1x16x16x128xbf16>
    %c0_58 = arith.constant 0 : index
    %c2_59 = arith.constant 2 : index
    %c2_60 = arith.constant 2 : index
    %c0_61 = arith.constant 0 : index
    %30 = vector.load %arg8[%c0_58, %c2_59, %c2_60, %c0_61] : memref<1x18x18x128xbf16, #tpu.memory_space<vmem>>, vector<1x16x16x128xbf16>
    %31 = tpu.concatenate %22, %23, %24, %25, %26, %27, %28, %29, %30 in 3 : vector<1x16x16x128xbf16>, vector<1x16x16x128xbf16>, vector<1x16x16x128xbf16>, vector<1x16x16x128xbf16>, vector<1x16x16x128xbf16>, vector<1x16x16x128xbf16>, vector<1x16x16x128xbf16>, vector<1x16x16x128xbf16>, vector<1x16x16x128xbf16> -> vector<1x16x16x1152xbf16>
    %32 = vector.shape_cast %31 : vector<1x16x16x1152xbf16> to vector<256x1152xbf16>
    %c0_62 = arith.constant 0 : index
    %c0_63 = arith.constant 0 : index
    %33 = vector.load %arg4[%c0_62, %c0_63] : memref<1152x128xbf16, #tpu.memory_space<vmem>>, vector<1152x128xbf16>
    %cst_64 = arith.constant dense<0.000000e+00> : vector<256x128xf32>
    %34 = tpu.matmul %32, %33, %cst_64 {dimension_numbers = #tpu.dot_dimension_numbers<[1], [0], [0], [1], [0, 0, 1, 1], [], []>} : vector<256x1152xbf16>, vector<1152x128xbf16>, vector<256x128xf32> -> vector<256x128xf32>
    %35 = vector.shape_cast %34 : vector<256x128xf32> to vector<1x16x16x128xf32>
    %36 = arith.truncf %35 : vector<1x16x16x128xf32> to vector<1x16x16x128xbf16>
    %c0_65 = arith.constant 0 : index
    %c0_66 = arith.constant 0 : index
    %c0_67 = arith.constant 0 : index
    %c0_68 = arith.constant 0 : index
    %37 = vector.load %arg5[%c0_65, %c0_66, %c0_67, %c0_68] : memref<1x16x16x128xbf16, #tpu.memory_space<vmem>>, vector<1x16x16x128xbf16>
    tpu.vector_store %arg5[%c0_65, %c0_66, %c0_67, %c0_68], %36 {strides = array<i32>} : memref<1x16x16x128xbf16, #tpu.memory_space<vmem>>, vector<1x16x16x128xbf16>,
    %cst_69 = arith.constant dense<0.000000e+00> : vector<128xf32>
    %38 = vector.multi_reduction <add>, %34, %cst_69 [0] : vector<256x128xf32> to vector<128xf32>
    %39 = vector.shape_cast %38 : vector<128xf32> to vector<1x128xf32>
    %40 = vector.shape_cast %39 : vector<1x128xf32> to vector<1x1x128xf32>
    %c0_70 = arith.constant 0 : index
    %c0_71 = arith.constant 0 : index
    %c0_72 = arith.constant 0 : index
    %41 = vector.load %arg6[%c0_70, %c0_71, %c0_72] : memref<1x1x128xf32, #tpu.memory_space<vmem>>, vector<1x1x128xf32>
    tpu.vector_store %arg6[%c0_70, %c0_71, %c0_72], %40 {strides = array<i32>} : memref<1x1x128xf32, #tpu.memory_space<vmem>>, vector<1x1x128xf32>,
    %42 = arith.mulf %34, %34 : vector<256x128xf32>
    %cst_73 = arith.constant dense<0.000000e+00> : vector<128xf32>
    %43 = vector.multi_reduction <add>, %42, %cst_73 [0] : vector<256x128xf32> to vector<128xf32>
    %44 = vector.shape_cast %43 : vector<128xf32> to vector<1x128xf32>
    %45 = vector.shape_cast %44 : vector<1x128xf32> to vector<1x1x128xf32>
    %c0_74 = arith.constant 0 : index
    %c0_75 = arith.constant 0 : index
    %c0_76 = arith.constant 0 : index
    %46 = vector.load %arg7[%c0_74, %c0_75, %c0_76] : memref<1x1x128xf32, #tpu.memory_space<vmem>>, vector<1x1x128xf32>
    tpu.vector_store %arg7[%c0_74, %c0_75, %c0_76], %45 {strides = array<i32>} : memref<1x1x128xf32, #tpu.memory_space<vmem>>, vector<1x1x128xf32>,
    return
  }
  func.func @transform_0(%arg0: i32) -> (i32, i32, i32, i32) {
    %c0_i32 = arith.constant 0 : i32
    %c0_i32_0 = arith.constant 0 : i32
    %c0_i32_1 = arith.constant 0 : i32
    %c0_i32_2 = arith.constant 0 : i32
    return %arg0, %c0_i32, %c0_i32_0, %c0_i32_1 : i32, i32, i32, i32
  }
  func.func @transform_1(%arg0: i32) -> (i32, i32) {
    %c0_i32 = arith.constant 0 : i32
    %c0_i32_0 = arith.constant 0 : i32
    %c0_i32_1 = arith.constant 0 : i32
    return %c0_i32, %c0_i32_0 : i32, i32
  }
  func.func @transform_2(%arg0: i32) -> (i32, i32) {
    %c0_i32 = arith.constant 0 : i32
    %c0_i32_0 = arith.constant 0 : i32
    %c0_i32_1 = arith.constant 0 : i32
    return %c0_i32, %c0_i32_0 : i32, i32
  }
  func.func @transform_3(%arg0: i32) -> (i32, i32) {
    %c0_i32 = arith.constant 0 : i32
    %c0_i32_0 = arith.constant 0 : i32
    %c0_i32_1 = arith.constant 0 : i32
    return %c0_i32, %c0_i32_0 : i32, i32
  }
  func.func @transform_4(%arg0: i32) -> (i32, i32, i32, i32) {
    %c0_i32 = arith.constant 0 : i32
    %c0_i32_0 = arith.constant 0 : i32
    %c0_i32_1 = arith.constant 0 : i32
    %c0_i32_2 = arith.constant 0 : i32
    return %arg0, %c0_i32, %c0_i32_0, %c0_i32_1 : i32, i32, i32, i32
  }
  func.func @transform_5(%arg0: i32) -> (i32, i32, i32) {
    %c0_i32 = arith.constant 0 : i32
    %c0_i32_0 = arith.constant 0 : i32
    %c0_i32_1 = arith.constant 0 : i32
    return %arg0, %c0_i32, %c0_i32_0 : i32, i32, i32
  }
  func.func @transform_6(%arg0: i32) -> (i32, i32, i32) {
    %c0_i32 = arith.constant 0 : i32
    %c0_i32_0 = arith.constant 0 : i32
    %c0_i32_1 = arith.constant 0 : i32
    return %arg0, %c0_i32, %c0_i32_0 : i32, i32, i32
  }
}

</mosaic_0001>

<llo_original>
// kernel: basic_block_forward.5
$region0: #{basic_block_forward.5}
  #allocation0 [shape = 'u32[]', space=smem, size = 0x4, offset = 0x4, fixed_abs, tag = 'smem constant byte address 0x4 - core index']
  #allocation1 [shape = 'u32[72,128]{1,0:T(1,128)}', space=vmem, size = 0x9000, scoped, tag = 'internal scratch']
  %s0 = inlined_call_operand.vmem [shape: bf16[2,16,16,128], index: 0, kind: input, shape index: {}]
  %s1 = inlined_call_operand.vmem [shape: bf16[2,16,16,128], index: 1, kind: input, shape index: {}]
  %s2 = inlined_call_operand.vmem [shape: f32[1,128], index: 2, kind: input, shape index: {}]
  %s3 = inlined_call_operand.vmem [shape: f32[1,128], index: 3, kind: input, shape index: {}]
  %s4 = inlined_call_operand.vmem [shape: f32[1,128], index: 4, kind: input, shape index: {}]
  %s5 = inlined_call_operand.vmem [shape: f32[1,128], index: 5, kind: input, shape index: {}]
  %s6 = inlined_call_operand.vmem [shape: f32[2,16,16,128], index: 6, kind: output, shape index: {}]
  %s7 = sld [smem:[#allocation0]]
  $region57: #{basic_block_forward.5} parent=0
    _
  %s9 = ssub.s32 1, %s7
  %s10 = scalar_select 0, %s9, %s7
  loop: start=0, step=1, limit=4
  $region2: #{basic_block_forward.5} parent=0 // loop_pre_header
    _
  $region3: #{basic_block_forward.5} parent=0 // loop_header
    %s12 = sphi 0, %s16
    %p13 = scmp.ge.s32.totalorder %s12, 4
    %s22 = sphi 0, %s24
    %s25 = sphi 0, %s22
    %s26 = sphi 0, %s25
    %s42 = sphi 0, %s26
    %s48 = sphi 0, %s50
    %s51 = sphi 0, %s48
    %s52 = sphi 0, %s51
    %s68 = sphi 0, %s52
    %s72 = sphi 0, %s72
    %s74 = sphi 0, %s72
    %s75 = sphi 0, %s74
    %s89 = sphi 0, %s75
    %s93 = sphi 0, %s93
    %s95 = sphi 0, %s93
    %s96 = sphi 0, %s95
    %s110 = sphi 0, %s96
    %s114 = sphi 0, %s114
    %s116 = sphi 0, %s114
    %s117 = sphi 0, %s116
    %s131 = sphi 0, %s117
    %s135 = sphi 0, %s135
    %s137 = sphi 0, %s135
    %s138 = sphi 0, %s137
    %s152 = sphi 0, %s138
    %s158 = sphi 0, %s160
    %s161 = sphi 0, %s158
    %s162 = sphi 0, %s161
    %s178 = sphi 0, %s162
  $region4: #{basic_block_forward.5} parent=0 // loop_header_branch
    %15 = sbr.rel (%p13) target = $region8
  $region5: #{basic_block_forward.5} parent=0 // loop_body
    %s17 = ssub.s32 %s12, 1
    %s18 = ssub.s32 %s12, 2
    %s19 = sadd.s32 %s12, 1
    %s20 = ssub.s32 %s12, %s19
    %p21 = scmp.eq.s32.totalorder %s20, 0
    %s23 = sadd.s32 %s22, 1
    %s24 = scalar_select %p21, %s22, %s23
    %p27 = pneg %p21
    %p28 = scmp.eq.s32.totalorder %s12, 1
    %p29 = por %p27, %p28
    %p30 = scmp.ne.s32.totalorder %s22, %s25
    %p31 = scmp.eq.s32.totalorder %s12, 0
    %p32 = por %p30, %p31
    %p33 = scmp.ne.s32.totalorder %s22, %s25
    %p34 = scmp.eq.s32.totalorder %s17, 1
    %p35 = por %p33, %p34
    %p36 = scmp.ne.s32.totalorder %s25, %s26
    %p37 = scmp.eq.s32.totalorder %s17, 0
    %p38 = por %p36, %p37
    %p39 = scmp.ne.s32.totalorder %s25, %s26
    %p40 = scmp.eq.s32.totalorder %s18, 1
    %p41 = por %p39, %p40
    %p43 = scmp.ne.s32.totalorder %s26, %s42
    %p44 = scmp.eq.s32.totalorder %s18, 0
    %p45 = por %p43, %p44
    %s46 = ssub.s32 %s12, %s19
    %p47 = scmp.eq.s32.totalorder %s46, 0
    %s49 = sadd.s32 %s48, 1
    %s50 = scalar_select %p47, %s48, %s49
    %p53 = pneg %p47
    %p54 = scmp.eq.s32.totalorder %s12, 1
    %p55 = por %p53, %p54
    %p56 = scmp.ne.s32.totalorder %s48, %s51
    %p57 = scmp.eq.s32.totalorder %s12, 0
    %p58 = por %p56, %p57
    %p59 = scmp.ne.s32.totalorder %s48, %s51
    %p60 = scmp.eq.s32.totalorder %s17, 1
    %p61 = por %p59, %p60
    %p62 = scmp.ne.s32.totalorder %s51, %s52
    %p63 = scmp.eq.s32.totalorder %s17, 0
    %p64 = por %p62, %p63
    %p65 = scmp.ne.s32.totalorder %s51, %s52
    %p66 = scmp.eq.s32.totalorder %s18, 1
    %p67 = por %p65, %p66
    %p69 = scmp.ne.s32.totalorder %s52, %s68
    %p70 = scmp.eq.s32.totalorder %s18, 0
    %p71 = por %p69, %p70
    %s73 = sadd.s32 %s72, 1
    %p76 = scmp.eq.s32.totalorder %s12, 1
    %p77 = scmp.ne.s32.totalorder %s72, %s74
    %p78 = scmp.eq.s32.totalorder %s12, 0
    %p79 = por %p77, %p78
    %p80 = scmp.ne.s32.totalorder %s72, %s74
    %p81 = scmp.eq.s32.totalorder %s17, 1
    %p82 = por %p80, %p81
    %p83 = scmp.ne.s32.totalorder %s74, %s75
    %p84 = scmp.eq.s32.totalorder %s17, 0
    %p85 = por %p83, %p84
    %p86 = scmp.ne.s32.totalorder %s74, %s75
    %p87 = scmp.eq.s32.totalorder %s18, 1
    %p88 = por %p86, %p87
    %p90 = scmp.ne.s32.totalorder %s75, %s89
    %p91 = scmp.eq.s32.totalorder %s18, 0
    %p92 = por %p90, %p91
    %s94 = sadd.s32 %s93, 1
    %p97 = scmp.eq.s32.totalorder %s12, 1
    %p98 = scmp.ne.s32.totalorder %s93, %s95
    %p99 = scmp.eq.s32.totalorder %s12, 0
    %p100 = por %p98, %p99
    %p101 = scmp.ne.s32.totalorder %s93, %s95
    %p102 = scmp.eq.s32.totalorder %s17, 1
    %p103 = por %p101, %p102
    %p104 = scmp.ne.s32.totalorder %s95, %s96
    %p105 = scmp.eq.s32.totalorder %s17, 0
    %p106 = por %p104, %p105
    %p107 = scmp.ne.s32.totalorder %s95, %s96
    %p108 = scmp.eq.s32.totalorder %s18, 1
    %p109 = por %p107, %p108
    %p111 = scmp.ne.s32.totalorder %s96, %s110
    %p112 = scmp.eq.s32.totalorder %s18, 0
    %p113 = por %p111, %p112
    %s115 = sadd.s32 %s114, 1
    %p118 = scmp.eq.s32.totalorder %s12, 1
    %p119 = scmp.ne.s32.totalorder %s114, %s116
    %p120 = scmp.eq.s32.totalorder %s12, 0
    %p121 = por %p119, %p120
    %p122 = scmp.ne.s32.totalorder %s114, %s116
    %p123 = scmp.eq.s32.totalorder %s17, 1
    %p124 = por %p122, %p123
    %p125 = scmp.ne.s32.totalorder %s116, %s117
    %p126 = scmp.eq.s32.totalorder %s17, 0
    %p127 = por %p125, %p126
    %p128 = scmp.ne.s32.totalorder %s116, %s117
    %p129 = scmp.eq.s32.totalorder %s18, 1
    %p130 = por %p128, %p129
    %p132 = scmp.ne.s32.totalorder %s117, %s131
    %p133 = scmp.eq.s32.totalorder %s18, 0
    %p134 = por %p132, %p133
    %s136 = sadd.s32 %s135, 1
    %p139 = scmp.eq.s32.totalorder %s12, 1
    %p140 = scmp.ne.s32.totalorder %s135, %s137
    %p141 = scmp.eq.s32.totalorder %s12, 0
    %p142 = por %p140, %p141
    %p143 = scmp.ne.s32.totalorder %s135, %s137
    %p144 = scmp.eq.s32.totalorder %s17, 1
    %p145 = por %p143, %p144
    %p146 = scmp.ne.s32.totalorder %s137, %s138
    %p147 = scmp.eq.s32.totalorder %s17, 0
    %p148 = por %p146, %p147
    %p149 = scmp.ne.s32.totalorder %s137, %s138
    %p150 = scmp.eq.s32.totalorder %s18, 1
    %p151 = por %p149, %p150
    %p153 = scmp.ne.s32.totalorder %s138, %s152
    %p154 = scmp.eq.s32.totalorder %s18, 0
    %p155 = por %p153, %p154
    %s156 = ssub.s32 %s12, %s19
    %p157 = scmp.eq.s32.totalorder %s156, 0
    %s159 = sadd.s32 %s158, 1
    %s160 = scalar_select %p157, %s158, %s159
    %p163 = pneg %p157
    %p164 = scmp.eq.s32.totalorder %s12, 1
    %p165 = por %p163, %p164
    %p166 = scmp.ne.s32.totalorder %s158, %s161
    %p167 = scmp.eq.s32.totalorder %s12, 0
    %p168 = por %p166, %p167
    %p169 = scmp.ne.s32.totalorder %s158, %s161
    %p170 = scmp.eq.s32.totalorder %s17, 1
    %p171 = por %p169, %p170
    %p172 = scmp.ne.s32.totalorder %s161, %s162
    %p173 = scmp.eq.s32.totalorder %s17, 0
    %p174 = por %p172, %p173
    %p175 = scmp.ne.s32.totalorder %s161, %s162
    %p176 = scmp.eq.s32.totalorder %s18, 1
    %p177 = por %p175, %p176
    %p179 = scmp.ne.s32.totalorder %s162, %s178
    %p180 = scmp.eq.s32.totalorder %s18, 0
    %p181 = por %p179, %p180
    %p182 = scmp.le.s32.totalorder 1, %s12
    %p183 = scmp.lt.s32.totalorder %s12, 3
    %p184 = pnand %p182, %p183
    %p185 = pneg %p184
    // Predicated region
    $region9: #{basic_block_forward.5} parent=5 // pred_check
      _
    $region10: #{basic_block_forward.5} parent=5 // pred_check_branch
      %187 = sbr.rel (%p184) target = $region12
    $region11: #{basic_block_forward.5} parent=5 // pred_region
      %s188 = ssub.s32 %s12, 1
      // Predicated region
      $region13: #{basic_block_forward.5} parent=11 // pred_check
        %p189 = pneg %p85
      $region14: #{basic_block_forward.5} parent=11 // pred_check_branch
        %191 = sbr.rel (%p189) target = $region16
      $region15: #{basic_block_forward.5} parent=11 // pred_region
        _
      $region16: #{basic_block_forward.5} parent=11 // pred_fallthru
        _
      // Predicated region
      $region17: #{basic_block_forward.5} parent=11 // pred_check
        %p192 = pneg %p106
      $region18: #{basic_block_forward.5} parent=11 // pred_check_branch
        %194 = sbr.rel (%p192) target = $region20
      $region19: #{basic_block_forward.5} parent=11 // pred_region
        _
      $region20: #{basic_block_forward.5} parent=11 // pred_fallthru
        _
      // Predicated region
      $region21: #{basic_block_forward.5} parent=11 // pred_check
        %p195 = pneg %p127
      $region22: #{basic_block_forward.5} parent=11 // pred_check_branch
        %197 = sbr.rel (%p195) target = $region24
      $region23: #{basic_block_forward.5} parent=11 // pred_region
        _
      $region24: #{basic_block_forward.5} parent=11 // pred_fallthru
        _
      // Predicated region
      $region25: #{basic_block_forward.5} parent=11 // pred_check
        %p198 = pneg %p148
      $region26: #{basic_block_forward.5} parent=11 // pred_check_branch
        %200 = sbr.rel (%p198) target = $region28
      $region27: #{basic_block_forward.5} parent=11 // pred_region
        _
      $region28: #{basic_block_forward.5} parent=11 // pred_fallthru
        _
    $region12: #{basic_block_forward.5} parent=5 // pred_fallthru
      _
    %p201 = scmp.lt.s32.totalorder %s12, 2
    // Predicated region
    $region29: #{basic_block_forward.5} parent=5 // pred_check
      %p202 = pneg %p201
    $region30: #{basic_block_forward.5} parent=5 // pred_check_branch
      %204 = sbr.rel (%p202) target = $region32
    $region31: #{basic_block_forward.5} parent=5 // pred_region
      // Predicated region
      $region33: #{basic_block_forward.5} parent=31 // pred_check
        %p205 = pneg %p32
      $region34: #{basic_block_forward.5} parent=31 // pred_check_branch
        %207 = sbr.rel (%p205) target = $region36
      $region35: #{basic_block_forward.5} parent=31 // pred_region
        %p208 = scmp.lt.s32.totalorder %s12, 1
        %s209 = scalar_select %p208, %s12, 1
        %s210 = smul.addr %s209, 32
        %s211 = smul.addr %s210, 4
        %s212 = scalar_lea.vmem %s0, %s211
      $region36: #{basic_block_forward.5} parent=31 // pred_fallthru
        _
      // Predicated region
      $region37: #{basic_block_forward.5} parent=31 // pred_check
        %p213 = pneg %p58
      $region38: #{basic_block_forward.5} parent=31 // pred_check_branch
        %215 = sbr.rel (%p213) target = $region40
      $region39: #{basic_block_forward.5} parent=31 // pred_region
        %p216 = scmp.lt.s32.totalorder %s12, 1
        %s217 = scalar_select %p216, %s12, 1
        %s218 = smul.addr %s217, 32
        %s219 = smul.addr %s218, 4
        %s220 = scalar_lea.vmem %s1, %s219
      $region40: #{basic_block_forward.5} parent=31 // pred_fallthru
        _
    $region32: #{basic_block_forward.5} parent=5 // pred_fallthru
      _
    %p221 = scmp.le.s32.totalorder 1, %s12
    %p222 = scmp.lt.s32.totalorder %s12, 3
    %p223 = pnand %p221, %p222
    %p224 = pneg %p223
    // Predicated region
    $region41: #{basic_block_forward.5} parent=5 // pred_check
      _
    $region42: #{basic_block_forward.5} parent=5 // pred_check_branch
      %226 = sbr.rel (%p223) target = $region44
    $region43: #{basic_block_forward.5} parent=5 // pred_region
      %s227 = ssub.s32 %s12, 1
      %p228 = scmp.lt.s32.totalorder %s17, 1
      %s229 = scalar_select %p228, %s17, 1
      %s230 = smul.addr %s229, 32
      %s231 = smul.addr %s230, 4
      %s232 = scalar_lea.vmem %s0, %s231
      %p233 = pneg %p38
      %p234 = pneg %p35
      %p235 = scmp.lt.s32.totalorder %s17, 1
      %s236 = scalar_select %p235, %s17, 1
      %s237 = smul.addr %s236, 32
      %s238 = smul.addr %s237, 4
      %s239 = scalar_lea.vmem %s1, %s238
      %p240 = pneg %p64
      %p241 = pneg %p61
      %p242 = pneg %p85
      %p243 = pneg %p82
      %p244 = pneg %p106
      %p245 = pneg %p103
      %p246 = pneg %p127
      %p247 = pneg %p124
      %p248 = pneg %p148
      %p249 = pneg %p145
      %p250 = pneg %p174
      %p251 = pneg %p171
      %p252 = scmp.lt.s32.totalorder %s17, 1
      %s253 = scalar_select %p252, %s17, 1
      %s254 = smul.addr %s253, 32
      %s255 = smul.addr %s254, 8
      %s256 = scalar_lea.vmem %s6, %s255
      %p257 = scmp.lt.s32.totalorder %s17, 1
      %s258 = scalar_select %p257, %s17, 1
      %s259 = smul.addr %s258, 32
      %s260 = smul.addr %s259, 4
      %s261 = scalar_lea.vmem %s0, %s260
      %p262 = scmp.lt.s32.totalorder %s17, 1
      %s263 = scalar_select %p262, %s17, 1
      %s264 = smul.addr %s263, 32
      %s265 = smul.addr %s264, 4
      %s266 = scalar_lea.vmem %s1, %s265
      %p267 = scmp.lt.s32.totalorder %s17, 1
      %s268 = scalar_select %p267, %s17, 1
      %s269 = smul.addr %s268, 32
      %s270 = smul.addr %s269, 8
      %s271 = scalar_lea.vmem %s6, %s270
      %v272 = vld [vmem:[%s261] sm:$0xf]
      %v273 = vld [vmem:[%s261 + $0x4] sm:$0xf]
      %v274 = vld [vmem:[%s261 + $0x8] sm:$0xf]
      %v275 = vld [vmem:[%s261 + $0xc] sm:$0xf]
      %v276 = vld [vmem:[%s261 + $0x10] sm:$0xf]
      %v277 = vld [vmem:[%s261 + $0x14] sm:$0xf]
      %v278 = vld [vmem:[%s261 + $0x18] sm:$0xf]
      %v279 = vld [vmem:[%s261 + $0x1c] sm:$0xf]
      %v280 = vld [vmem:[%s261 + $0x20] sm:$0xf]
      %v281 = vld [vmem:[%s261 + $0x24] sm:$0xf]
      %v282 = vld [vmem:[%s261 + $0x28] sm:$0xf]
      %v283 = vld [vmem:[%s261 + $0x2c] sm:$0xf]
      %v284 = vld [vmem:[%s261 + $0x30] sm:$0xf]
      %v285 = vld [vmem:[%s261 + $0x34] sm:$0xf]
      %v286 = vld [vmem:[%s261 + $0x38] sm:$0xf]
      %v287 = vld [vmem:[%s261 + $0x3c] sm:$0xf]
      %v288 = vld [vmem:[%s261 + $0x40] sm:$0xf]
      %v289 = vld [vmem:[%s261 + $0x44] sm:$0xf]
      %v290 = vld [vmem:[%s261 + $0x48] sm:$0xf]
      %v291 = vld [vmem:[%s261 + $0x4c] sm:$0xf]
      %v292 = vld [vmem:[%s261 + $0x50] sm:$0xf]
      %v293 = vld [vmem:[%s261 + $0x54] sm:$0xf]
      %v294 = vld [vmem:[%s261 + $0x58] sm:$0xf]
      %v295 = vld [vmem:[%s261 + $0x5c] sm:$0xf]
      %v296 = vld [vmem:[%s261 + $0x60] sm:$0xf]
      %v297 = vld [vmem:[%s261 + $0x64] sm:$0xf]
      %v298 = vld [vmem:[%s261 + $0x68] sm:$0xf]
      %v299 = vld [vmem:[%s261 + $0x6c] sm:$0xf]
      %v300 = vld [vmem:[%s261 + $0x70] sm:$0xf]
      %v301 = vld [vmem:[%s261 + $0x74] sm:$0xf]
      %v302 = vld [vmem:[%s261 + $0x78] sm:$0xf]
      %v303 = vld [vmem:[%s261 + $0x7c] sm:$0xf]
      %v304 = vunpack.c.l.bf16 %v272
      %v305 = vunpack.c.l.bf16 %v273
      %v306 = vunpack.c.l.bf16 %v274
      %v307 = vunpack.c.l.bf16 %v275
      %v308 = vunpack.c.l.bf16 %v276
      %v309 = vunpack.c.l.bf16 %v277
      %v310 = vunpack.c.l.bf16 %v278
      %v311 = vunpack.c.l.bf16 %v279
      %v312 = vunpack.c.l.bf16 %v280
      %v313 = vunpack.c.l.bf16 %v281
      %v314 = vunpack.c.l.bf16 %v282
      %v315 = vunpack.c.l.bf16 %v283
      %v316 = vunpack.c.l.bf16 %v284
      %v317 = vunpack.c.l.bf16 %v285
      %v318 = vunpack.c.l.bf16 %v286
      %v319 = vunpack.c.l.bf16 %v287
      %v320 = vunpack.c.l.bf16 %v288
      %v321 = vunpack.c.l.bf16 %v289
      %v322 = vunpack.c.l.bf16 %v290
      %v323 = vunpack.c.l.bf16 %v291
      %v324 = vunpack.c.l.bf16 %v292
      %v325 = vunpack.c.l.bf16 %v293
      %v326 = vunpack.c.l.bf16 %v294
      %v327 = vunpack.c.l.bf16 %v295
      %v328 = vunpack.c.l.bf16 %v296
      %v329 = vunpack.c.l.bf16 %v297
      %v330 = vunpack.c.l.bf16 %v298
      %v331 = vunpack.c.l.bf16 %v299
      %v332 = vunpack.c.l.bf16 %v300
      %v333 = vunpack.c.l.bf16 %v301
      %v334 = vunpack.c.l.bf16 %v302
      %v335 = vunpack.c.l.bf16 %v303
      %v336 = vld [vmem:[%s266] sm:$0xf]
      %v337 = vld [vmem:[%s266 + $0x4] sm:$0xf]
      %v338 = vld [vmem:[%s266 + $0x8] sm:$0xf]
      %v339 = vld [vmem:[%s266 + $0xc] sm:$0xf]
      %v340 = vld [vmem:[%s266 + $0x10] sm:$0xf]
      %v341 = vld [vmem:[%s266 + $0x14] sm:$0xf]
      %v342 = vld [vmem:[%s266 + $0x18] sm:$0xf]
      %v343 = vld [vmem:[%s266 + $0x1c] sm:$0xf]
      %v344 = vld [vmem:[%s266 + $0x20] sm:$0xf]
      %v345 = vld [vmem:[%s266 + $0x24] sm:$0xf]
      %v346 = vld [vmem:[%s266 + $0x28] sm:$0xf]
      %v347 = vld [vmem:[%s266 + $0x2c] sm:$0xf]
      %v348 = vld [vmem:[%s266 + $0x30] sm:$0xf]
      %v349 = vld [vmem:[%s266 + $0x34] sm:$0xf]
      %v350 = vld [vmem:[%s266 + $0x38] sm:$0xf]
      %v351 = vld [vmem:[%s266 + $0x3c] sm:$0xf]
      %v352 = vld [vmem:[%s266 + $0x40] sm:$0xf]
      %v353 = vld [vmem:[%s266 + $0x44] sm:$0xf]
      %v354 = vld [vmem:[%s266 + $0x48] sm:$0xf]
      %v355 = vld [vmem:[%s266 + $0x4c] sm:$0xf]
      %v356 = vld [vmem:[%s266 + $0x50] sm:$0xf]
      %v357 = vld [vmem:[%s266 + $0x54] sm:$0xf]
      %v358 = vld [vmem:[%s266 + $0x58] sm:$0xf]
      %v359 = vld [vmem:[%s266 + $0x5c] sm:$0xf]
      %v360 = vld [vmem:[%s266 + $0x60] sm:$0xf]
      %v361 = vld [vmem:[%s266 + $0x64] sm:$0xf]
      %v362 = vld [vmem:[%s266 + $0x68] sm:$0xf]
      %v363 = vld [vmem:[%s266 + $0x6c] sm:$0xf]
      %v364 = vld [vmem:[%s266 + $0x70] sm:$0xf]
      %v365 = vld [vmem:[%s266 + $0x74] sm:$0xf]
      %v366 = vld [vmem:[%s266 + $0x78] sm:$0xf]
      %v367 = vld [vmem:[%s266 + $0x7c] sm:$0xf]
      %v368 = vunpack.c.l.bf16 %v336
      %v369 = vunpack.c.l.bf16 %v337
      %v370 = vunpack.c.l.bf16 %v338
      %v371 = vunpack.c.l.bf16 %v339
      %v372 = vunpack.c.l.bf16 %v340
      %v373 = vunpack.c.l.bf16 %v341
      %v374 = vunpack.c.l.bf16 %v342
      %v375 = vunpack.c.l.bf16 %v343
      %v376 = vunpack.c.l.bf16 %v344
      %v377 = vunpack.c.l.bf16 %v345
      %v378 = vunpack.c.l.bf16 %v346
      %v379 = vunpack.c.l.bf16 %v347
      %v380 = vunpack.c.l.bf16 %v348
      %v381 = vunpack.c.l.bf16 %v349
      %v382 = vunpack.c.l.bf16 %v350
      %v383 = vunpack.c.l.bf16 %v351
      %v384 = vunpack.c.l.bf16 %v352
      %v385 = vunpack.c.l.bf16 %v353
      %v386 = vunpack.c.l.bf16 %v354
      %v387 = vunpack.c.l.bf16 %v355
      %v388 = vunpack.c.l.bf16 %v356
      %v389 = vunpack.c.l.bf16 %v357
      %v390 = vunpack.c.l.bf16 %v358
      %v391 = vunpack.c.l.bf16 %v359
      %v392 = vunpack.c.l.bf16 %v360
      %v393 = vunpack.c.l.bf16 %v361
      %v394 = vunpack.c.l.bf16 %v362
      %v395 = vunpack.c.l.bf16 %v363
      %v396 = vunpack.c.l.bf16 %v364
      %v397 = vunpack.c.l.bf16 %v365
      %v398 = vunpack.c.l.bf16 %v366
      %v399 = vunpack.c.l.bf16 %v367
      %v400 = vld [vmem:[%s2] sm:$0x1]
      %v402 = vperm.slane %v400, 0
      %v404 = vmul.f32 %v304, %v402
      %v405 = vmul.f32 %v305, %v402
      %v406 = vmul.f32 %v306, %v402
      %v407 = vmul.f32 %v307, %v402
      %v408 = vmul.f32 %v308, %v402
      %v409 = vmul.f32 %v309, %v402
      %v410 = vmul.f32 %v310, %v402
      %v411 = vmul.f32 %v311, %v402
      %v412 = vmul.f32 %v312, %v402
      %v413 = vmul.f32 %v313, %v402
      %v414 = vmul.f32 %v314, %v402
      %v415 = vmul.f32 %v315, %v402
      %v416 = vmul.f32 %v316, %v402
      %v417 = vmul.f32 %v317, %v402
      %v418 = vmul.f32 %v318, %v402
      %v419 = vmul.f32 %v319, %v402
      %v420 = vmul.f32 %v320, %v402
      %v421 = vmul.f32 %v321, %v402
      %v422 = vmul.f32 %v322, %v402
      %v423 = vmul.f32 %v323, %v402
      %v424 = vmul.f32 %v324, %v402
      %v425 = vmul.f32 %v325, %v402
      %v426 = vmul.f32 %v326, %v402
      %v427 = vmul.f32 %v327, %v402
      %v428 = vmul.f32 %v328, %v402
      %v429 = vmul.f32 %v329, %v402
      %v430 = vmul.f32 %v330, %v402
      %v431 = vmul.f32 %v331, %v402
      %v432 = vmul.f32 %v332, %v402
      %v433 = vmul.f32 %v333, %v402
      %v434 = vmul.f32 %v334, %v402
      %v435 = vmul.f32 %v335, %v402
      %v436 = vld [vmem:[%s3] sm:$0x1]
      %v438 = vperm.slane %v436, 0
      %v440 = vadd.f32 %v404, %v438
      %v441 = vadd.f32 %v405, %v438
      %v442 = vadd.f32 %v406, %v438
      %v443 = vadd.f32 %v407, %v438
      %v444 = vadd.f32 %v408, %v438
      %v445 = vadd.f32 %v409, %v438
      %v446 = vadd.f32 %v410, %v438
      %v447 = vadd.f32 %v411, %v438
      %v448 = vadd.f32 %v412, %v438
      %v449 = vadd.f32 %v413, %v438
      %v450 = vadd.f32 %v414, %v438
      %v451 = vadd.f32 %v415, %v438
      %v452 = vadd.f32 %v416, %v438
      %v453 = vadd.f32 %v417, %v438
      %v454 = vadd.f32 %v418, %v438
      %v455 = vadd.f32 %v419, %v438
      %v456 = vadd.f32 %v420, %v438
      %v457 = vadd.f32 %v421, %v438
      %v458 = vadd.f32 %v422, %v438
      %v459 = vadd.f32 %v423, %v438
      %v460 = vadd.f32 %v424, %v438
      %v461 = vadd.f32 %v425, %v438
      %v462 = vadd.f32 %v426, %v438
      %v463 = vadd.f32 %v427, %v438
      %v464 = vadd.f32 %v428, %v438
      %v465 = vadd.f32 %v429, %v438
      %v466 = vadd.f32 %v430, %v438
      %v467 = vadd.f32 %v431, %v438
      %v468 = vadd.f32 %v432, %v438
      %v469 = vadd.f32 %v433, %v438
      %v470 = vadd.f32 %v434, %v438
      %v471 = vadd.f32 %v435, %v438
      %v472 = vld [vmem:[%s4] sm:$0x1]
      %v474 = vperm.slane %v472, 0
      %v476 = vmul.f32 %v368, %v474
      %v477 = vmul.f32 %v369, %v474
      %v478 = vmul.f32 %v370, %v474
      %v479 = vmul.f32 %v371, %v474
      %v480 = vmul.f32 %v372, %v474
      %v481 = vmul.f32 %v373, %v474
      %v482 = vmul.f32 %v374, %v474
      %v483 = vmul.f32 %v375, %v474
      %v484 = vmul.f32 %v376, %v474
      %v485 = vmul.f32 %v377, %v474
      %v486 = vmul.f32 %v378, %v474
      %v487 = vmul.f32 %v379, %v474
      %v488 = vmul.f32 %v380, %v474
      %v489 = vmul.f32 %v381, %v474
      %v490 = vmul.f32 %v382, %v474
      %v491 = vmul.f32 %v383, %v474
      %v492 = vmul.f32 %v384, %v474
      %v493 = vmul.f32 %v385, %v474
      %v494 = vmul.f32 %v386, %v474
      %v495 = vmul.f32 %v387, %v474
      %v496 = vmul.f32 %v388, %v474
      %v497 = vmul.f32 %v389, %v474
      %v498 = vmul.f32 %v390, %v474
      %v499 = vmul.f32 %v391, %v474
      %v500 = vmul.f32 %v392, %v474
      %v501 = vmul.f32 %v393, %v474
      %v502 = vmul.f32 %v394, %v474
      %v503 = vmul.f32 %v395, %v474
      %v504 = vmul.f32 %v396, %v474
      %v505 = vmul.f32 %v397, %v474
      %v506 = vmul.f32 %v398, %v474
      %v507 = vmul.f32 %v399, %v474
      %v508 = vld [vmem:[%s5] sm:$0x1]
      %v510 = vperm.slane %v508, 0
      %v512 = vadd.f32 %v476, %v510
      %v513 = vadd.f32 %v477, %v510
      %v514 = vadd.f32 %v478, %v510
      %v515 = vadd.f32 %v479, %v510
      %v516 = vadd.f32 %v480, %v510
      %v517 = vadd.f32 %v481, %v510
      %v518 = vadd.f32 %v482, %v510
      %v519 = vadd.f32 %v483, %v510
      %v520 = vadd.f32 %v484, %v510
      %v521 = vadd.f32 %v485, %v510
      %v522 = vadd.f32 %v486, %v510
      %v523 = vadd.f32 %v487, %v510
      %v524 = vadd.f32 %v488, %v510
      %v525 = vadd.f32 %v489, %v510
      %v526 = vadd.f32 %v490, %v510
      %v527 = vadd.f32 %v491, %v510
      %v528 = vadd.f32 %v492, %v510
      %v529 = vadd.f32 %v493, %v510
      %v530 = vadd.f32 %v494, %v510
      %v531 = vadd.f32 %v495, %v510
      %v532 = vadd.f32 %v496, %v510
      %v533 = vadd.f32 %v497, %v510
      %v534 = vadd.f32 %v498, %v510
      %v535 = vadd.f32 %v499, %v510
      %v536 = vadd.f32 %v500, %v510
      %v537 = vadd.f32 %v501, %v510
      %v538 = vadd.f32 %v502, %v510
      %v539 = vadd.f32 %v503, %v510
      %v540 = vadd.f32 %v504, %v510
      %v541 = vadd.f32 %v505, %v510
      %v542 = vadd.f32 %v506, %v510
      %v543 = vadd.f32 %v507, %v510
      %v544 = vadd.f32 %v440, %v512
      %v545 = vadd.f32 %v441, %v513
      %v546 = vadd.f32 %v442, %v514
      %v547 = vadd.f32 %v443, %v515
      %v548 = vadd.f32 %v444, %v516
      %v549 = vadd.f32 %v445, %v517
      %v550 = vadd.f32 %v446, %v518
      %v551 = vadd.f32 %v447, %v519
      %v552 = vadd.f32 %v448, %v520
      %v553 = vadd.f32 %v449, %v521
      %v554 = vadd.f32 %v450, %v522
      %v555 = vadd.f32 %v451, %v523
      %v556 = vadd.f32 %v452, %v524
      %v557 = vadd.f32 %v453, %v525
      %v558 = vadd.f32 %v454, %v526
      %v559 = vadd.f32 %v455, %v527
      %v560 = vadd.f32 %v456, %v528
      %v561 = vadd.f32 %v457, %v529
      %v562 = vadd.f32 %v458, %v530
      %v563 = vadd.f32 %v459, %v531
      %v564 = vadd.f32 %v460, %v532
      %v565 = vadd.f32 %v461, %v533
      %v566 = vadd.f32 %v462, %v534
      %v567 = vadd.f32 %v463, %v535
      %v568 = vadd.f32 %v464, %v536
      %v569 = vadd.f32 %v465, %v537
      %v570 = vadd.f32 %v466, %v538
      %v571 = vadd.f32 %v467, %v539
      %v572 = vadd.f32 %v468, %v540
      %v573 = vadd.f32 %v469, %v541
      %v574 = vadd.f32 %v470, %v542
      %v575 = vadd.f32 %v471, %v543
      %v576 = vmax.f32 %v544, 0.0
      %v577 = vmax.f32 %v545, 0.0
      %v578 = vmax.f32 %v546, 0.0
      %v579 = vmax.f32 %v547, 0.0
      %v580 = vmax.f32 %v548, 0.0
      %v581 = vmax.f32 %v549, 0.0
      %v582 = vmax.f32 %v550, 0.0
      %v583 = vmax.f32 %v551, 0.0
      %v584 = vmax.f32 %v552, 0.0
      %v585 = vmax.f32 %v553, 0.0
      %v586 = vmax.f32 %v554, 0.0
      %v587 = vmax.f32 %v555, 0.0
      %v588 = vmax.f32 %v556, 0.0
      %v589 = vmax.f32 %v557, 0.0
      %v590 = vmax.f32 %v558, 0.0
      %v591 = vmax.f32 %v559, 0.0
      %v592 = vmax.f32 %v560, 0.0
      %v593 = vmax.f32 %v561, 0.0
      %v594 = vmax.f32 %v562, 0.0
      %v595 = vmax.f32 %v563, 0.0
      %v596 = vmax.f32 %v564, 0.0
      %v597 = vmax.f32 %v565, 0.0
      %v598 = vmax.f32 %v566, 0.0
      %v599 = vmax.f32 %v567, 0.0
      %v600 = vmax.f32 %v568, 0.0
      %v601 = vmax.f32 %v569, 0.0
      %v602 = vmax.f32 %v570, 0.0
      %v603 = vmax.f32 %v571, 0.0
      %v604 = vmax.f32 %v572, 0.0
      %v605 = vmax.f32 %v573, 0.0
      %v606 = vmax.f32 %v574, 0.0
      %v607 = vmax.f32 %v575, 0.0
      %608 = vst [vmem:[%s271] sm:$0xff] %v576
      %609 = vst [vmem:[%s271 + $0x8] sm:$0xff] %v577
      %610 = vst [vmem:[%s271 + $0x10] sm:$0xff] %v578
      %611 = vst [vmem:[%s271 + $0x18] sm:$0xff] %v579
      %612 = vst [vmem:[%s271 + $0x20] sm:$0xff] %v580
      %613 = vst [vmem:[%s271 + $0x28] sm:$0xff] %v581
      %614 = vst [vmem:[%s271 + $0x30] sm:$0xff] %v582
      %615 = vst [vmem:[%s271 + $0x38] sm:$0xff] %v583
      %616 = vst [vmem:[%s271 + $0x40] sm:$0xff] %v584
      %617 = vst [vmem:[%s271 + $0x48] sm:$0xff] %v585
      %618 = vst [vmem:[%s271 + $0x50] sm:$0xff] %v586
      %619 = vst [vmem:[%s271 + $0x58] sm:$0xff] %v587
      %620 = vst [vmem:[%s271 + $0x60] sm:$0xff] %v588
      %621 = vst [vmem:[%s271 + $0x68] sm:$0xff] %v589
      %622 = vst [vmem:[%s271 + $0x70] sm:$0xff] %v590
      %623 = vst [vmem:[%s271 + $0x78] sm:$0xff] %v591
      %624 = vst [vmem:[%s271 + $0x80] sm:$0xff] %v592
      %625 = vst [vmem:[%s271 + $0x88] sm:$0xff] %v593
      %626 = vst [vmem:[%s271 + $0x90] sm:$0xff] %v594
      %627 = vst [vmem:[%s271 + $0x98] sm:$0xff] %v595
      %628 = vst [vmem:[%s271 + $0xa0] sm:$0xff] %v596
      %629 = vst [vmem:[%s271 + $0xa8] sm:$0xff] %v597
      %630 = vst [vmem:[%s271 + $0xb0] sm:$0xff] %v598
      %631 = vst [vmem:[%s271 + $0xb8] sm:$0xff] %v599
      %632 = vst [vmem:[%s271 + $0xc0] sm:$0xff] %v600
      %633 = vst [vmem:[%s271 + $0xc8] sm:$0xff] %v601
      %634 = vst [vmem:[%s271 + $0xd0] sm:$0xff] %v602
      %635 = vst [vmem:[%s271 + $0xd8] sm:$0xff] %v603
      %636 = vst [vmem:[%s271 + $0xe0] sm:$0xff] %v604
      %637 = vst [vmem:[%s271 + $0xe8] sm:$0xff] %v605
      %638 = vst [vmem:[%s271 + $0xf0] sm:$0xff] %v606
      %639 = vst [vmem:[%s271 + $0xf8] sm:$0xff] %v607
      %p640 = scmp.lt.s32.totalorder %s17, 1
      %s641 = scalar_select %p640, %s17, 1
      %s642 = smul.addr %s641, 32
      %s643 = smul.addr %s642, 8
      %s644 = scalar_lea.vmem %s6, %s643
      // Predicated region
      $region45: #{basic_block_forward.5} parent=43 // pred_check
        %p645 = pneg %p171
      $region46: #{basic_block_forward.5} parent=43 // pred_check_branch
        %647 = sbr.rel (%p645) target = $region48
      $region47: #{basic_block_forward.5} parent=43 // pred_region
        _
      $region48: #{basic_block_forward.5} parent=43 // pred_fallthru
        _
    $region44: #{basic_block_forward.5} parent=5 // pred_fallthru
      _
    %p648 = scmp.le.s32.totalorder 2, %s12
    // Predicated region
    $region49: #{basic_block_forward.5} parent=5 // pred_check
      %p649 = pneg %p648
    $region50: #{basic_block_forward.5} parent=5 // pred_check_branch
      %651 = sbr.rel (%p649) target = $region52
    $region51: #{basic_block_forward.5} parent=5 // pred_region
      %s652 = ssub.s32 %s12, 2
      // Predicated region
      $region53: #{basic_block_forward.5} parent=51 // pred_check
        %p653 = pneg %p177
      $region54: #{basic_block_forward.5} parent=51 // pred_check_branch
        %655 = sbr.rel (%p653) target = $region56
      $region55: #{basic_block_forward.5} parent=51 // pred_region
        %p656 = scmp.lt.s32.totalorder %s18, 1
        %s657 = scalar_select %p656, %s18, 1
        %s658 = smul.addr %s657, 32
        %s659 = smul.addr %s658, 8
        %s660 = scalar_lea.vmem %s6, %s659
      $region56: #{basic_block_forward.5} parent=51 // pred_fallthru
        _
    $region52: #{basic_block_forward.5} parent=5 // pred_fallthru
      _
  $region6: #{basic_block_forward.5} parent=0 // loop_footer
    %s16 = sadd.s32 1, %s12
  $region7: #{basic_block_forward.5} parent=0 // loop_footer_branch
    %11 = sbr.rel target = $region3
  $region8: #{basic_block_forward.5} parent=0 // loop_exit
    _

// kernel: basic_block_forward.3
$region0: #{basic_block_forward.3}
  #allocation0 [shape = 'u32[]', space=smem, size = 0x4, offset = 0x4, fixed_abs, tag = 'smem constant byte address 0x4 - core index']
  #allocation1 [shape = 'u32[72,128]{1,0:T(1,128)}', space=vmem, size = 0x9000, scoped, tag = 'internal scratch']
  %s0 = inlined_call_operand.vmem [shape: bf16[2,18,18,128], index: 0, kind: input, shape index: {}]
  %s1 = inlined_call_operand.vmem [shape: bf16[1152,128], index: 1, kind: input, shape index: {}]
  %s2 = inlined_call_operand.vmem [shape: bf16[128,128], index: 2, kind: input, shape index: {}]
  %s3 = inlined_call_operand.vmem [shape: bf16[2,16,16,128], index: 3, kind: output, shape index: {0}]
  %s4 = inlined_call_operand.vmem [shape: f32[2,1,128], index: 4, kind: output, shape index: {1}]
  %s5 = inlined_call_operand.vmem [shape: f32[2,1,128], index: 5, kind: output, shape index: {2}]
  %s6 = inlined_call_operand.vmem [shape: bf16[2,16,16,128], index: 6, kind: output, shape index: {3}]
  %s7 = inlined_call_operand.vmem [shape: f32[2,1,128], index: 7, kind: output, shape index: {4}]
  %s8 = inlined_call_operand.vmem [shape: f32[2,1,128], index: 8, kind: output, shape index: {5}]
  %9 = xla_tuple %s3, %s4, %s5, %s6, %s7, %s8
  %s10 = sld [smem:[#allocation0]]
  $region85: #{basic_block_forward.3} parent=0
    _
  %s12 = ssub.s32 1, %s10
  %s13 = scalar_select 0, %s12, %s10
  loop: start=0, step=1, limit=4
  $region2: #{basic_block_forward.3} parent=0 // loop_pre_header
    _
  $region3: #{basic_block_forward.3} parent=0 // loop_header
    %s15 = sphi 0, %s19
    %p16 = scmp.ge.s32.totalorder %s15, 4
    %s25 = sphi 0, %s27
    %s28 = sphi 0, %s25
    %s29 = sphi 0, %s28
    %s45 = sphi 0, %s29
    %s49 = sphi 0, %s49
    %s51 = sphi 0, %s49
    %s52 = sphi 0, %s51
    %s66 = sphi 0, %s52
    %s70 = sphi 0, %s70
    %s72 = sphi 0, %s70
    %s73 = sphi 0, %s72
    %s87 = sphi 0, %s73
    %s93 = sphi 0, %s95
    %s96 = sphi 0, %s93
    %s97 = sphi 0, %s96
    %s113 = sphi 0, %s97
    %s119 = sphi 0, %s121
    %s122 = sphi 0, %s119
    %s123 = sphi 0, %s122
    %s139 = sphi 0, %s123
    %s145 = sphi 0, %s147
    %s148 = sphi 0, %s145
    %s149 = sphi 0, %s148
    %s165 = sphi 0, %s149
    %s171 = sphi 0, %s173
    %s174 = sphi 0, %s171
    %s175 = sphi 0, %s174
    %s191 = sphi 0, %s175
    %s197 = sphi 0, %s199
    %s200 = sphi 0, %s197
    %s201 = sphi 0, %s200
    %s217 = sphi 0, %s201
    %s223 = sphi 0, %s225
    %s226 = sphi 0, %s223
    %s227 = sphi 0, %s226
    %s243 = sphi 0, %s227
  $region4: #{basic_block_forward.3} parent=0 // loop_header_branch
    %18 = sbr.rel (%p16) target = $region8
  $region5: #{basic_block_forward.3} parent=0 // loop_body
    %s20 = ssub.s32 %s15, 1
    %s21 = ssub.s32 %s15, 2
    %s22 = sadd.s32 %s15, 1
    %s23 = ssub.s32 %s15, %s22
    %p24 = scmp.eq.s32.totalorder %s23, 0
    %s26 = sadd.s32 %s25, 1
    %s27 = scalar_select %p24, %s25, %s26
    %p30 = pneg %p24
    %p31 = scmp.eq.s32.totalorder %s15, 1
    %p32 = por %p30, %p31
    %p33 = scmp.ne.s32.totalorder %s25, %s28
    %p34 = scmp.eq.s32.totalorder %s15, 0
    %p35 = por %p33, %p34
    %p36 = scmp.ne.s32.totalorder %s25, %s28
    %p37 = scmp.eq.s32.totalorder %s20, 1
    %p38 = por %p36, %p37
    %p39 = scmp.ne.s32.totalorder %s28, %s29
    %p40 = scmp.eq.s32.totalorder %s20, 0
    %p41 = por %p39, %p40
    %p42 = scmp.ne.s32.totalorder %s28, %s29
    %p43 = scmp.eq.s32.totalorder %s21, 1
    %p44 = por %p42, %p43
    %p46 = scmp.ne.s32.totalorder %s29, %s45
    %p47 = scmp.eq.s32.totalorder %s21, 0
    %p48 = por %p46, %p47
    %s50 = sadd.s32 %s49, 1
    %p53 = scmp.eq.s32.totalorder %s15, 1
    %p54 = scmp.ne.s32.totalorder %s49, %s51
    %p55 = scmp.eq.s32.totalorder %s15, 0
    %p56 = por %p54, %p55
    %p57 = scmp.ne.s32.totalorder %s49, %s51
    %p58 = scmp.eq.s32.totalorder %s20, 1
    %p59 = por %p57, %p58
    %p60 = scmp.ne.s32.totalorder %s51, %s52
    %p61 = scmp.eq.s32.totalorder %s20, 0
    %p62 = por %p60, %p61
    %p63 = scmp.ne.s32.totalorder %s51, %s52
    %p64 = scmp.eq.s32.totalorder %s21, 1
    %p65 = por %p63, %p64
    %p67 = scmp.ne.s32.totalorder %s52, %s66
    %p68 = scmp.eq.s32.totalorder %s21, 0
    %p69 = por %p67, %p68
    %s71 = sadd.s32 %s70, 1
    %p74 = scmp.eq.s32.totalorder %s15, 1
    %p75 = scmp.ne.s32.totalorder %s70, %s72
    %p76 = scmp.eq.s32.totalorder %s15, 0
    %p77 = por %p75, %p76
    %p78 = scmp.ne.s32.totalorder %s70, %s72
    %p79 = scmp.eq.s32.totalorder %s20, 1
    %p80 = por %p78, %p79
    %p81 = scmp.ne.s32.totalorder %s72, %s73
    %p82 = scmp.eq.s32.totalorder %s20, 0
    %p83 = por %p81, %p82
    %p84 = scmp.ne.s32.totalorder %s72, %s73
    %p85 = scmp.eq.s32.totalorder %s21, 1
    %p86 = por %p84, %p85
    %p88 = scmp.ne.s32.totalorder %s73, %s87
    %p89 = scmp.eq.s32.totalorder %s21, 0
    %p90 = por %p88, %p89
    %s91 = ssub.s32 %s15, %s22
    %p92 = scmp.eq.s32.totalorder %s91, 0
    %s94 = sadd.s32 %s93, 1
    %s95 = scalar_select %p92, %s93, %s94
    %p98 = pneg %p92
    %p99 = scmp.eq.s32.totalorder %s15, 1
    %p100 = por %p98, %p99
    %p101 = scmp.ne.s32.totalorder %s93, %s96
    %p102 = scmp.eq.s32.totalorder %s15, 0
    %p103 = por %p101, %p102
    %p104 = scmp.ne.s32.totalorder %s93, %s96
    %p105 = scmp.eq.s32.totalorder %s20, 1
    %p106 = por %p104, %p105
    %p107 = scmp.ne.s32.totalorder %s96, %s97
    %p108 = scmp.eq.s32.totalorder %s20, 0
    %p109 = por %p107, %p108
    %p110 = scmp.ne.s32.totalorder %s96, %s97
    %p111 = scmp.eq.s32.totalorder %s21, 1
    %p112 = por %p110, %p111
    %p114 = scmp.ne.s32.totalorder %s97, %s113
    %p115 = scmp.eq.s32.totalorder %s21, 0
    %p116 = por %p114, %p115
    %s117 = ssub.s32 %s15, %s22
    %p118 = scmp.eq.s32.totalorder %s117, 0
    %s120 = sadd.s32 %s119, 1
    %s121 = scalar_select %p118, %s119, %s120
    %p124 = pneg %p118
    %p125 = scmp.eq.s32.totalorder %s15, 1
    %p126 = por %p124, %p125
    %p127 = scmp.ne.s32.totalorder %s119, %s122
    %p128 = scmp.eq.s32.totalorder %s15, 0
    %p129 = por %p127, %p128
    %p130 = scmp.ne.s32.totalorder %s119, %s122
    %p131 = scmp.eq.s32.totalorder %s20, 1
    %p132 = por %p130, %p131
    %p133 = scmp.ne.s32.totalorder %s122, %s123
    %p134 = scmp.eq.s32.totalorder %s20, 0
    %p135 = por %p133, %p134
    %p136 = scmp.ne.s32.totalorder %s122, %s123
    %p137 = scmp.eq.s32.totalorder %s21, 1
    %p138 = por %p136, %p137
    %p140 = scmp.ne.s32.totalorder %s123, %s139
    %p141 = scmp.eq.s32.totalorder %s21, 0
    %p142 = por %p140, %p141
    %s143 = ssub.s32 %s15, %s22
    %p144 = scmp.eq.s32.totalorder %s143, 0
    %s146 = sadd.s32 %s145, 1
    %s147 = scalar_select %p144, %s145, %s146
    %p150 = pneg %p144
    %p151 = scmp.eq.s32.totalorder %s15, 1
    %p152 = por %p150, %p151
    %p153 = scmp.ne.s32.totalorder %s145, %s148
    %p154 = scmp.eq.s32.totalorder %s15, 0
    %p155 = por %p153, %p154
    %p156 = scmp.ne.s32.totalorder %s145, %s148
    %p157 = scmp.eq.s32.totalorder %s20, 1
    %p158 = por %p156, %p157
    %p159 = scmp.ne.s32.totalorder %s148, %s149
    %p160 = scmp.eq.s32.totalorder %s20, 0
    %p161 = por %p159, %p160
    %p162 = scmp.ne.s32.totalorder %s148, %s149
    %p163 = scmp.eq.s32.totalorder %s21, 1
    %p164 = por %p162, %p163
    %p166 = scmp.ne.s32.totalorder %s149, %s165
    %p167 = scmp.eq.s32.totalorder %s21, 0
    %p168 = por %p166, %p167
    %s169 = ssub.s32 %s15, %s22
    %p170 = scmp.eq.s32.totalorder %s169, 0
    %s172 = sadd.s32 %s171, 1
    %s173 = scalar_select %p170, %s171, %s172
    %p176 = pneg %p170
    %p177 = scmp.eq.s32.totalorder %s15, 1
    %p178 = por %p176, %p177
    %p179 = scmp.ne.s32.totalorder %s171, %s174
    %p180 = scmp.eq.s32.totalorder %s15, 0
    %p181 = por %p179, %p180
    %p182 = scmp.ne.s32.totalorder %s171, %s174
    %p183 = scmp.eq.s32.totalorder %s20, 1
    %p184 = por %p182, %p183
    %p185 = scmp.ne.s32.totalorder %s174, %s175
    %p186 = scmp.eq.s32.totalorder %s20, 0
    %p187 = por %p185, %p186
    %p188 = scmp.ne.s32.totalorder %s174, %s175
    %p189 = scmp.eq.s32.totalorder %s21, 1
    %p190 = por %p188, %p189
    %p192 = scmp.ne.s32.totalorder %s175, %s191
    %p193 = scmp.eq.s32.totalorder %s21, 0
    %p194 = por %p192, %p193
    %s195 = ssub.s32 %s15, %s22
    %p196 = scmp.eq.s32.totalorder %s195, 0
    %s198 = sadd.s32 %s197, 1
    %s199 = scalar_select %p196, %s197, %s198
    %p202 = pneg %p196
    %p203 = scmp.eq.s32.totalorder %s15, 1
    %p204 = por %p202, %p203
    %p205 = scmp.ne.s32.totalorder %s197, %s200
    %p206 = scmp.eq.s32.totalorder %s15, 0
    %p207 = por %p205, %p206
    %p208 = scmp.ne.s32.totalorder %s197, %s200
    %p209 = scmp.eq.s32.totalorder %s20, 1
    %p210 = por %p208, %p209
    %p211 = scmp.ne.s32.totalorder %s200, %s201
    %p212 = scmp.eq.s32.totalorder %s20, 0
    %p213 = por %p211, %p212
    %p214 = scmp.ne.s32.totalorder %s200, %s201
    %p215 = scmp.eq.s32.totalorder %s21, 1
    %p216 = por %p214, %p215
    %p218 = scmp.ne.s32.totalorder %s201, %s217
    %p219 = scmp.eq.s32.totalorder %s21, 0
    %p220 = por %p218, %p219
    %s221 = ssub.s32 %s15, %s22
    %p222 = scmp.eq.s32.totalorder %s221, 0
    %s224 = sadd.s32 %s223, 1
    %s225 = scalar_select %p222, %s223, %s224
    %p228 = pneg %p222
    %p229 = scmp.eq.s32.totalorder %s15, 1
    %p230 = por %p228, %p229
    %p231 = scmp.ne.s32.totalorder %s223, %s226
    %p232 = scmp.eq.s32.totalorder %s15, 0
    %p233 = por %p231, %p232
    %p234 = scmp.ne.s32.totalorder %s223, %s226
    %p235 = scmp.eq.s32.totalorder %s20, 1
    %p236 = por %p234, %p235
    %p237 = scmp.ne.s32.totalorder %s226, %s227
    %p238 = scmp.eq.s32.totalorder %s20, 0
    %p239 = por %p237, %p238
    %p240 = scmp.ne.s32.totalorder %s226, %s227
    %p241 = scmp.eq.s32.totalorder %s21, 1
    %p242 = por %p240, %p241
    %p244 = scmp.ne.s32.totalorder %s227, %s243
    %p245 = scmp.eq.s32.totalorder %s21, 0
    %p246 = por %p244, %p245
    %p247 = scmp.le.s32.totalorder 1, %s15
    %p248 = scmp.lt.s32.totalorder %s15, 3
    %p249 = pnand %p247, %p248
    %p250 = pneg %p249
    // Predicated region
    $region9: #{basic_block_forward.3} parent=5 // pred_check
      _
    $region10: #{basic_block_forward.3} parent=5 // pred_check_branch
      %252 = sbr.rel (%p249) target = $region12
    $region11: #{basic_block_forward.3} parent=5 // pred_region
      %s253 = ssub.s32 %s15, 1
      // Predicated region
      $region13: #{basic_block_forward.3} parent=11 // pred_check
        %p254 = pneg %p62
      $region14: #{basic_block_forward.3} parent=11 // pred_check_branch
        %256 = sbr.rel (%p254) target = $region16
      $region15: #{basic_block_forward.3} parent=11 // pred_region
        _
      $region16: #{basic_block_forward.3} parent=11 // pred_fallthru
        _
      // Predicated region
      $region17: #{basic_block_forward.3} parent=11 // pred_check
        %p257 = pneg %p83
      $region18: #{basic_block_forward.3} parent=11 // pred_check_branch
        %259 = sbr.rel (%p257) target = $region20
      $region19: #{basic_block_forward.3} parent=11 // pred_region
        _
      $region20: #{basic_block_forward.3} parent=11 // pred_fallthru
        _
    $region12: #{basic_block_forward.3} parent=5 // pred_fallthru
      _
    %p260 = scmp.lt.s32.totalorder %s15, 2
    // Predicated region
    $region21: #{basic_block_forward.3} parent=5 // pred_check
      %p261 = pneg %p260
    $region22: #{basic_block_forward.3} parent=5 // pred_check_branch
      %263 = sbr.rel (%p261) target = $region24
    $region23: #{basic_block_forward.3} parent=5 // pred_region
      // Predicated region
      $region25: #{basic_block_forward.3} parent=23 // pred_check
        %p264 = pneg %p35
      $region26: #{basic_block_forward.3} parent=23 // pred_check_branch
        %266 = sbr.rel (%p264) target = $region28
      $region27: #{basic_block_forward.3} parent=23 // pred_region
        %p267 = scmp.lt.s32.totalorder %s15, 1
        %s268 = scalar_select %p267, %s15, 1
        %s269 = smul.addr %s268, 54
        %s270 = smul.addr %s269, 4
        %s271 = scalar_lea.vmem %s0, %s270
      $region28: #{basic_block_forward.3} parent=23 // pred_fallthru
        _
    $region24: #{basic_block_forward.3} parent=5 // pred_fallthru
      _
    %p272 = scmp.le.s32.totalorder 1, %s15
    %p273 = scmp.lt.s32.totalorder %s15, 3
    %p274 = pnand %p272, %p273
    %p275 = pneg %p274
    // Predicated region
    $region29: #{basic_block_forward.3} parent=5 // pred_check
      _
    $region30: #{basic_block_forward.3} parent=5 // pred_check_branch
      %277 = sbr.rel (%p274) target = $region32
    $region31: #{basic_block_forward.3} parent=5 // pred_region
      %s278 = ssub.s32 %s15, 1
      %p279 = scmp.lt.s32.totalorder %s20, 1
      %s280 = scalar_select %p279, %s20, 1
      %s281 = smul.addr %s280, 54
      %s282 = smul.addr %s281, 4
      %s283 = scalar_lea.vmem %s0, %s282
      %p284 = pneg %p41
      %p285 = pneg %p38
      %p286 = pneg %p62
      %p287 = pneg %p59
      %p288 = pneg %p83
      %p289 = pneg %p80
      %p290 = pneg %p109
      %p291 = pneg %p106
      %p292 = scmp.lt.s32.totalorder %s20, 1
      %s293 = scalar_select %p292, %s20, 1
      %s294 = smul.addr %s293, 32
      %s295 = smul.addr %s294, 4
      %s296 = scalar_lea.vmem %s3, %s295
      %p297 = pneg %p135
      %p298 = pneg %p132
      %p299 = scmp.lt.s32.totalorder %s20, 1
      %s300 = scalar_select %p299, %s20, 1
      %s301 = scalar_lea.vmem %s4, %s300
      %p302 = pneg %p161
      %p303 = pneg %p158
      %p304 = scmp.lt.s32.totalorder %s20, 1
      %s305 = scalar_select %p304, %s20, 1
      %s306 = scalar_lea.vmem %s5, %s305
      %p307 = pneg %p187
      %p308 = pneg %p184
      %p309 = scmp.lt.s32.totalorder %s20, 1
      %s310 = scalar_select %p309, %s20, 1
      %s311 = smul.addr %s310, 32
      %s312 = smul.addr %s311, 4
      %s313 = scalar_lea.vmem %s6, %s312
      %p314 = pneg %p213
      %p315 = pneg %p210
      %p316 = scmp.lt.s32.totalorder %s20, 1
      %s317 = scalar_select %p316, %s20, 1
      %s318 = scalar_lea.vmem %s7, %s317
      %p319 = pneg %p239
      %p320 = pneg %p236
      %p321 = scmp.lt.s32.totalorder %s20, 1
      %s322 = scalar_select %p321, %s20, 1
      %s323 = scalar_lea.vmem %s8, %s322
      %p324 = scmp.lt.s32.totalorder %s20, 1
      %s325 = scalar_select %p324, %s20, 1
      %s326 = smul.addr %s325, 54
      %s327 = smul.addr %s326, 4
      %s328 = scalar_lea.vmem %s0, %s327
      %p329 = scmp.lt.s32.totalorder %s20, 1
      %s330 = scalar_select %p329, %s20, 1
      %s331 = smul.addr %s330, 32
      %s332 = smul.addr %s331, 4
      %s333 = scalar_lea.vmem %s3, %s332
      %p334 = scmp.lt.s32.totalorder %s20, 1
      %s335 = scalar_select %p334, %s20, 1
      %s336 = scalar_lea.vmem %s4, %s335
      %p337 = scmp.lt.s32.totalorder %s20, 1
      %s338 = scalar_select %p337, %s20, 1
      %s339 = scalar_lea.vmem %s5, %s338
      %p340 = scmp.lt.s32.totalorder %s20, 1
      %s341 = scalar_select %p340, %s20, 1
      %s342 = smul.addr %s341, 32
      %s343 = smul.addr %s342, 4
      %s344 = scalar_lea.vmem %s6, %s343
      %p345 = scmp.lt.s32.totalorder %s20, 1
      %s346 = scalar_select %p345, %s20, 1
      %s347 = scalar_lea.vmem %s7, %s346
      %p348 = scmp.lt.s32.totalorder %s20, 1
      %s349 = scalar_select %p348, %s20, 1
      %s350 = scalar_lea.vmem %s8, %s349
      %v351 = vld [vmem:[%s328] sm:$0xf]
      %v352 = vld [vmem:[%s328 + $0x4] sm:$0xf]
      %v353 = vld [vmem:[%s328 + $0xc] sm:$0xf]
      %v354 = vld [vmem:[%s328 + $0x10] sm:$0xf]
      %v355 = vld [vmem:[%s328 + $0x18] sm:$0xf]
      %v356 = vld [vmem:[%s328 + $0x1c] sm:$0xf]
      %v357 = vld [vmem:[%s328 + $0x24] sm:$0xf]
      %v358 = vld [vmem:[%s328 + $0x28] sm:$0xf]
      %v359 = vld [vmem:[%s328 + $0x30] sm:$0xf]
      %v360 = vld [vmem:[%s328 + $0x34] sm:$0xf]
      %v361 = vld [vmem:[%s328 + $0x3c] sm:$0xf]
      %v362 = vld [vmem:[%s328 + $0x40] sm:$0xf]
      %v363 = vld [vmem:[%s328 + $0x48] sm:$0xf]
      %v364 = vld [vmem:[%s328 + $0x4c] sm:$0xf]
      %v365 = vld [vmem:[%s328 + $0x54] sm:$0xf]
      %v366 = vld [vmem:[%s328 + $0x58] sm:$0xf]
      %v367 = vld [vmem:[%s328 + $0x60] sm:$0xf]
      %v368 = vld [vmem:[%s328 + $0x64] sm:$0xf]
      %v369 = vld [vmem:[%s328 + $0x6c] sm:$0xf]
      %v370 = vld [vmem:[%s328 + $0x70] sm:$0xf]
      %v371 = vld [vmem:[%s328 + $0x78] sm:$0xf]
      %v372 = vld [vmem:[%s328 + $0x7c] sm:$0xf]
      %v373 = vld [vmem:[%s328 + $0x84] sm:$0xf]
      %v374 = vld [vmem:[%s328 + $0x88] sm:$0xf]
      %v375 = vld [vmem:[%s328 + $0x90] sm:$0xf]
      %v376 = vld [vmem:[%s328 + $0x94] sm:$0xf]
      %v377 = vld [vmem:[%s328 + $0x9c] sm:$0xf]
      %v378 = vld [vmem:[%s328 + $0xa0] sm:$0xf]
      %v379 = vld [vmem:[%s328 + $0xa8] sm:$0xf]
      %v380 = vld [vmem:[%s328 + $0xac] sm:$0xf]
      %v381 = vld [vmem:[%s328 + $0xb4] sm:$0xf]
      %v382 = vld [vmem:[%s328 + $0xb8] sm:$0xf]
      %v383 = vld [vmem:[%s328 + $0x8] sm:$0x1]
      %v384 = vld [vmem:[%s328 + $0x14] sm:$0x1]
      %v385 = vld [vmem:[%s328 + $0x20] sm:$0x1]
      %v386 = vld [vmem:[%s328 + $0x2c] sm:$0x1]
      %v387 = vld [vmem:[%s328 + $0x38] sm:$0x1]
      %v388 = vld [vmem:[%s328 + $0x44] sm:$0x1]
      %v389 = vld [vmem:[%s328 + $0x50] sm:$0x1]
      %v390 = vld [vmem:[%s328 + $0x5c] sm:$0x1]
      %v391 = vld [vmem:[%s328 + $0x68] sm:$0x1]
      %v392 = vld [vmem:[%s328 + $0x74] sm:$0x1]
      %v393 = vld [vmem:[%s328 + $0x80] sm:$0x1]
      %v394 = vld [vmem:[%s328 + $0x8c] sm:$0x1]
      %v395 = vld [vmem:[%s328 + $0x98] sm:$0x1]
      %v396 = vld [vmem:[%s328 + $0xa4] sm:$0x1]
      %v397 = vld [vmem:[%s328 + $0xb0] sm:$0x1]
      %v398 = vld [vmem:[%s328 + $0xbc] sm:$0x1]
      %v399 = vld [vmem:[%s328] sm:$0xe]
      %v400 = vld [vmem:[%s328 + $0xc] sm:$0xe]
      %v401 = vld [vmem:[%s328 + $0x18] sm:$0xe]
      %v402 = vld [vmem:[%s328 + $0x24] sm:$0xe]
      %v403 = vld [vmem:[%s328 + $0x30] sm:$0xe]
      %v404 = vld [vmem:[%s328 + $0x3c] sm:$0xe]
      %v405 = vld [vmem:[%s328 + $0x48] sm:$0xe]
      %v406 = vld [vmem:[%s328 + $0x54] sm:$0xe]
      %v407 = vld [vmem:[%s328 + $0x60] sm:$0xe]
      %v408 = vld [vmem:[%s328 + $0x6c] sm:$0xe]
      %v409 = vld [vmem:[%s328 + $0x78] sm:$0xe]
      %v410 = vld [vmem:[%s328 + $0x84] sm:$0xe]
      %v411 = vld [vmem:[%s328 + $0x90] sm:$0xe]
      %v412 = vld [vmem:[%s328 + $0x9c] sm:$0xe]
      %v413 = vld [vmem:[%s328 + $0xa8] sm:$0xe]
      %v414 = vld [vmem:[%s328 + $0xb4] sm:$0xe]
      %s415 = scalar_lea.vmem %s328, 12
      %v416 = vld [vmem:[%s415] sm:$0xf]
      %v417 = vld [vmem:[%s415 + $0x4] sm:$0xf]
      %v418 = vld [vmem:[%s415 + $0xc] sm:$0xf]
      %v419 = vld [vmem:[%s415 + $0x10] sm:$0xf]
      %v420 = vld [vmem:[%s415 + $0x18] sm:$0xf]
      %v421 = vld [vmem:[%s415 + $0x1c] sm:$0xf]
      %v422 = vld [vmem:[%s415 + $0x24] sm:$0xf]
      %v423 = vld [vmem:[%s415 + $0x28] sm:$0xf]
      %v424 = vld [vmem:[%s415 + $0x30] sm:$0xf]
      %v425 = vld [vmem:[%s415 + $0x34] sm:$0xf]
      %v426 = vld [vmem:[%s415 + $0x3c] sm:$0xf]
      %v427 = vld [vmem:[%s415 + $0x40] sm:$0xf]
      %v428 = vld [vmem:[%s415 + $0x48] sm:$0xf]
      %v429 = vld [vmem:[%s415 + $0x4c] sm:$0xf]
      %v430 = vld [vmem:[%s415 + $0x54] sm:$0xf]
      %v431 = vld [vmem:[%s415 + $0x58] sm:$0xf]
      %v432 = vld [vmem:[%s415 + $0x60] sm:$0xf]
      %v433 = vld [vmem:[%s415 + $0x64] sm:$0xf]
      %v434 = vld [vmem:[%s415 + $0x6c] sm:$0xf]
      %v435 = vld [vmem:[%s415 + $0x70] sm:$0xf]
      %v436 = vld [vmem:[%s415 + $0x78] sm:$0xf]
      %v437 = vld [vmem:[%s415 + $0x7c] sm:$0xf]
      %v438 = vld [vmem:[%s415 + $0x84] sm:$0xf]
      %v439 = vld [vmem:[%s415 + $0x88] sm:$0xf]
      %v440 = vld [vmem:[%s415 + $0x90] sm:$0xf]
      %v441 = vld [vmem:[%s415 + $0x94] sm:$0xf]
      %v442 = vld [vmem:[%s415 + $0x9c] sm:$0xf]
      %v443 = vld [vmem:[%s415 + $0xa0] sm:$0xf]
      %v444 = vld [vmem:[%s415 + $0xa8] sm:$0xf]
      %v445 = vld [vmem:[%s415 + $0xac] sm:$0xf]
      %v446 = vld [vmem:[%s415 + $0xb4] sm:$0xf]
      %v447 = vld [vmem:[%s415 + $0xb8] sm:$0xf]
      %v448 = vld [vmem:[%s415 + $0x8] sm:$0x1]
      %v449 = vld [vmem:[%s415 + $0x14] sm:$0x1]
      %v450 = vld [vmem:[%s415 + $0x20] sm:$0x1]
      %v451 = vld [vmem:[%s415 + $0x2c] sm:$0x1]
      %v452 = vld [vmem:[%s415 + $0x38] sm:$0x1]
      %v453 = vld [vmem:[%s415 + $0x44] sm:$0x1]
      %v454 = vld [vmem:[%s415 + $0x50] sm:$0x1]
      %v455 = vld [vmem:[%s415 + $0x5c] sm:$0x1]
      %v456 = vld [vmem:[%s415 + $0x68] sm:$0x1]
      %v457 = vld [vmem:[%s415 + $0x74] sm:$0x1]
      %v458 = vld [vmem:[%s415 + $0x80] sm:$0x1]
      %v459 = vld [vmem:[%s415 + $0x8c] sm:$0x1]
      %v460 = vld [vmem:[%s415 + $0x98] sm:$0x1]
      %v461 = vld [vmem:[%s415 + $0xa4] sm:$0x1]
      %v462 = vld [vmem:[%s415 + $0xb0] sm:$0x1]
      %v463 = vld [vmem:[%s415 + $0xbc] sm:$0x1]
      %v464 = vld [vmem:[%s415] sm:$0xe]
      %v465 = vld [vmem:[%s415 + $0xc] sm:$0xe]
      %v466 = vld [vmem:[%s415 + $0x18] sm:$0xe]
      %v467 = vld [vmem:[%s415 + $0x24] sm:$0xe]
      %v468 = vld [vmem:[%s415 + $0x30] sm:$0xe]
      %v469 = vld [vmem:[%s415 + $0x3c] sm:$0xe]
      %v470 = vld [vmem:[%s415 + $0x48] sm:$0xe]
      %v471 = vld [vmem:[%s415 + $0x54] sm:$0xe]
      %v472 = vld [vmem:[%s415 + $0x60] sm:$0xe]
      %v473 = vld [vmem:[%s415 + $0x6c] sm:$0xe]
      %v474 = vld [vmem:[%s415 + $0x78] sm:$0xe]
      %v475 = vld [vmem:[%s415 + $0x84] sm:$0xe]
      %v476 = vld [vmem:[%s415 + $0x90] sm:$0xe]
      %v477 = vld [vmem:[%s415 + $0x9c] sm:$0xe]
      %v478 = vld [vmem:[%s415 + $0xa8] sm:$0xe]
      %v479 = vld [vmem:[%s415 + $0xb4] sm:$0xe]
      %s480 = scalar_lea.vmem %s328, 24
      %v481 = vld [vmem:[%s480] sm:$0xf]
      %v482 = vld [vmem:[%s480 + $0x4] sm:$0xf]
      %v483 = vld [vmem:[%s480 + $0xc] sm:$0xf]
      %v484 = vld [vmem:[%s480 + $0x10] sm:$0xf]
      %v485 = vld [vmem:[%s480 + $0x18] sm:$0xf]
      %v486 = vld [vmem:[%s480 + $0x1c] sm:$0xf]
      %v487 = vld [vmem:[%s480 + $0x24] sm:$0xf]
      %v488 = vld [vmem:[%s480 + $0x28] sm:$0xf]
      %v489 = vld [vmem:[%s480 + $0x30] sm:$0xf]
      %v490 = vld [vmem:[%s480 + $0x34] sm:$0xf]
      %v491 = vld [vmem:[%s480 + $0x3c] sm:$0xf]
      %v492 = vld [vmem:[%s480 + $0x40] sm:$0xf]
      %v493 = vld [vmem:[%s480 + $0x48] sm:$0xf]
      %v494 = vld [vmem:[%s480 + $0x4c] sm:$0xf]
      %v495 = vld [vmem:[%s480 + $0x54] sm:$0xf]
      %v496 = vld [vmem:[%s480 + $0x58] sm:$0xf]
      %v497 = vld [vmem:[%s480 + $0x60] sm:$0xf]
      %v498 = vld [vmem:[%s480 + $0x64] sm:$0xf]
      %v499 = vld [vmem:[%s480 + $0x6c] sm:$0xf]
      %v500 = vld [vmem:[%s480 + $0x70] sm:$0xf]
      %v501 = vld [vmem:[%s480 + $0x78] sm:$0xf]
      %v502 = vld [vmem:[%s480 + $0x7c] sm:$0xf]
      %v503 = vld [vmem:[%s480 + $0x84] sm:$0xf]
      %v504 = vld [vmem:[%s480 + $0x88] sm:$0xf]
      %v505 = vld [vmem:[%s480 + $0x90] sm:$0xf]
      %v506 = vld [vmem:[%s480 + $0x94] sm:$0xf]
      %v507 = vld [vmem:[%s480 + $0x9c] sm:$0xf]
      %v508 = vld [vmem:[%s480 + $0xa0] sm:$0xf]
      %v509 = vld [vmem:[%s480 + $0xa8] sm:$0xf]
      %v510 = vld [vmem:[%s480 + $0xac] sm:$0xf]
      %v511 = vld [vmem:[%s480 + $0xb4] sm:$0xf]
      %v512 = vld [vmem:[%s480 + $0xb8] sm:$0xf]
      %v513 = vld [vmem:[%s480 + $0x8] sm:$0x1]
      %v514 = vld [vmem:[%s480 + $0x14] sm:$0x1]
      %v515 = vld [vmem:[%s480 + $0x20] sm:$0x1]
      %v516 = vld [vmem:[%s480 + $0x2c] sm:$0x1]
      %v517 = vld [vmem:[%s480 + $0x38] sm:$0x1]
      %v518 = vld [vmem:[%s480 + $0x44] sm:$0x1]
      %v519 = vld [vmem:[%s480 + $0x50] sm:$0x1]
      %v520 = vld [vmem:[%s480 + $0x5c] sm:$0x1]
      %v521 = vld [vmem:[%s480 + $0x68] sm:$0x1]
      %v522 = vld [vmem:[%s480 + $0x74] sm:$0x1]
      %v523 = vld [vmem:[%s480 + $0x80] sm:$0x1]
      %v524 = vld [vmem:[%s480 + $0x8c] sm:$0x1]
      %v525 = vld [vmem:[%s480 + $0x98] sm:$0x1]
      %v526 = vld [vmem:[%s480 + $0xa4] sm:$0x1]
      %v527 = vld [vmem:[%s480 + $0xb0] sm:$0x1]
      %v528 = vld [vmem:[%s480 + $0xbc] sm:$0x1]
      %v529 = vld [vmem:[%s480] sm:$0xe]
      %v530 = vld [vmem:[%s480 + $0xc] sm:$0xe]
      %v531 = vld [vmem:[%s480 + $0x18] sm:$0xe]
      %v532 = vld [vmem:[%s480 + $0x24] sm:$0xe]
      %v533 = vld [vmem:[%s480 + $0x30] sm:$0xe]
      %v534 = vld [vmem:[%s480 + $0x3c] sm:$0xe]
      %v535 = vld [vmem:[%s480 + $0x48] sm:$0xe]
      %v536 = vld [vmem:[%s480 + $0x54] sm:$0xe]
      %v537 = vld [vmem:[%s480 + $0x60] sm:$0xe]
      %v538 = vld [vmem:[%s480 + $0x6c] sm:$0xe]
      %v539 = vld [vmem:[%s480 + $0x78] sm:$0xe]
      %v540 = vld [vmem:[%s480 + $0x84] sm:$0xe]
      %v541 = vld [vmem:[%s480 + $0x90] sm:$0xe]
      %v542 = vld [vmem:[%s480 + $0x9c] sm:$0xe]
      %v543 = vld [vmem:[%s480 + $0xa8] sm:$0xe]
      %v544 = vld [vmem:[%s480 + $0xb4] sm:$0xe]
      %v577 = vunpack.c.l.b16 %v351
      %v578 = vunpack.c.l.b16 %v352
      %v579 = vunpack.c.l.b16 %v353
      %v580 = vunpack.c.l.b16 %v354
      %v581 = vunpack.c.l.b16 %v355
      %v582 = vunpack.c.l.b16 %v356
      %v583 = vunpack.c.l.b16 %v357
      %v584 = vunpack.c.l.b16 %v358
      %v585 = vunpack.c.l.b16 %v359
      %v586 = vunpack.c.l.b16 %v360
      %v587 = vunpack.c.l.b16 %v361
      %v588 = vunpack.c.l.b16 %v362
      %v589 = vunpack.c.l.b16 %v363
      %v590 = vunpack.c.l.b16 %v364
      %v591 = vunpack.c.l.b16 %v365
      %v592 = vunpack.c.l.b16 %v366
      %v593 = vunpack.c.l.b16 %v367
      %v594 = vunpack.c.l.b16 %v368
      %v595 = vunpack.c.l.b16 %v369
      %v596 = vunpack.c.l.b16 %v370
      %v597 = vunpack.c.l.b16 %v371
      %v598 = vunpack.c.l.b16 %v372
      %v599 = vunpack.c.l.b16 %v373
      %v600 = vunpack.c.l.b16 %v374
      %v601 = vunpack.c.l.b16 %v375
      %v602 = vunpack.c.l.b16 %v376
      %v603 = vunpack.c.l.b16 %v377
      %v604 = vunpack.c.l.b16 %v378
      %v605 = vunpack.c.l.b16 %v379
      %v606 = vunpack.c.l.b16 %v380
      %v607 = vunpack.c.l.b16 %v381
      %v608 = vunpack.c.l.b16 %v382
      %v609 = vpack.c.b16 %v578, %v577
      %v610 = vpack.c.b16 %v580, %v579
      %v611 = vpack.c.b16 %v582, %v581
      %v612 = vpack.c.b16 %v584, %v583
      %v613 = vpack.c.b16 %v586, %v585
      %v614 = vpack.c.b16 %v588, %v587
      %v615 = vpack.c.b16 %v590, %v589
      %v616 = vpack.c.b16 %v592, %v591
      %v617 = vpack.c.b16 %v594, %v593
      %v618 = vpack.c.b16 %v596, %v595
      %v619 = vpack.c.b16 %v598, %v597
      %v620 = vpack.c.b16 %v600, %v599
      %v621 = vpack.c.b16 %v602, %v601
      %v622 = vpack.c.b16 %v604, %v603
      %v623 = vpack.c.b16 %v606, %v605
      %v624 = vpack.c.b16 %v608, %v607
      %v657 = vunpack.c.l.b16 %v383
      %v658 = vunpack.c.l.b16 %v384
      %v659 = vunpack.c.l.b16 %v385
      %v660 = vunpack.c.l.b16 %v386
      %v661 = vunpack.c.l.b16 %v387
      %v662 = vunpack.c.l.b16 %v388
      %v663 = vunpack.c.l.b16 %v389
      %v664 = vunpack.c.l.b16 %v390
      %v665 = vunpack.c.l.b16 %v391
      %v666 = vunpack.c.l.b16 %v392
      %v667 = vunpack.c.l.b16 %v393
      %v668 = vunpack.c.l.b16 %v394
      %v669 = vunpack.c.l.b16 %v395
      %v670 = vunpack.c.l.b16 %v396
      %v671 = vunpack.c.l.b16 %v397
      %v672 = vunpack.c.l.b16 %v398
      %v673 = vpack.c.b16 %v657, %v657
      %v674 = vpack.c.b16 %v658, %v658
      %v675 = vpack.c.b16 %v659, %v659
      %v676 = vpack.c.b16 %v660, %v660
      %v677 = vpack.c.b16 %v661, %v661
      %v678 = vpack.c.b16 %v662, %v662
      %v679 = vpack.c.b16 %v663, %v663
      %v680 = vpack.c.b16 %v664, %v664
      %v681 = vpack.c.b16 %v665, %v665
      %v682 = vpack.c.b16 %v666, %v666
      %v683 = vpack.c.b16 %v667, %v667
      %v684 = vpack.c.b16 %v668, %v668
      %v685 = vpack.c.b16 %v669, %v669
      %v686 = vpack.c.b16 %v670, %v670
      %v687 = vpack.c.b16 %v671, %v671
      %v688 = vpack.c.b16 %v672, %v672
      %vm689 = vsmask.f32 7424
      %v691 = vshrl.u32 %v609, 16
      %v693 = vshll.u32 %v609, 16
      %v695 = vrot.slane %v693, 1
      %v696 = vor.u32 %v691, %v695
      %v698 = vshll.u32 %v673, 16
      %v700 = vrot.slane %v698, 1
      %v701 = vsel %vm689, %v696, %v700
      %v703 = vshrl.u32 %v610, 16
      %v705 = vshll.u32 %v610, 16
      %v707 = vrot.slane %v705, 1
      %v708 = vor.u32 %v703, %v707
      %v710 = vshll.u32 %v674, 16
      %v712 = vrot.slane %v710, 1
      %v713 = vsel %vm689, %v708, %v712
      %v715 = vshrl.u32 %v611, 16
      %v717 = vshll.u32 %v611, 16
      %v719 = vrot.slane %v717, 1
      %v720 = vor.u32 %v715, %v719
      %v722 = vshll.u32 %v675, 16
      %v724 = vrot.slane %v722, 1
      %v725 = vsel %vm689, %v720, %v724
      %v727 = vshrl.u32 %v612, 16
      %v729 = vshll.u32 %v612, 16
      %v731 = vrot.slane %v729, 1
      %v732 = vor.u32 %v727, %v731
      %v734 = vshll.u32 %v676, 16
      %v736 = vrot.slane %v734, 1
      %v737 = vsel %vm689, %v732, %v736
      %v739 = vshrl.u32 %v613, 16
      %v741 = vshll.u32 %v613, 16
      %v743 = vrot.slane %v741, 1
      %v744 = vor.u32 %v739, %v743
      %v746 = vshll.u32 %v677, 16
      %v748 = vrot.slane %v746, 1
      %v749 = vsel %vm689, %v744, %v748
      %v751 = vshrl.u32 %v614, 16
      %v753 = vshll.u32 %v614, 16
      %v755 = vrot.slane %v753, 1
      %v756 = vor.u32 %v751, %v755
      %v758 = vshll.u32 %v678, 16
      %v760 = vrot.slane %v758, 1
      %v761 = vsel %vm689, %v756, %v760
      %v763 = vshrl.u32 %v615, 16
      %v765 = vshll.u32 %v615, 16
      %v767 = vrot.slane %v765, 1
      %v768 = vor.u32 %v763, %v767
      %v770 = vshll.u32 %v679, 16
      %v772 = vrot.slane %v770, 1
      %v773 = vsel %vm689, %v768, %v772
      %v775 = vshrl.u32 %v616, 16
      %v777 = vshll.u32 %v616, 16
      %v779 = vrot.slane %v777, 1
      %v780 = vor.u32 %v775, %v779
      %v782 = vshll.u32 %v680, 16
      %v784 = vrot.slane %v782, 1
      %v785 = vsel %vm689, %v780, %v784
      %v787 = vshrl.u32 %v617, 16
      %v789 = vshll.u32 %v617, 16
      %v791 = vrot.slane %v789, 1
      %v792 = vor.u32 %v787, %v791
      %v794 = vshll.u32 %v681, 16
      %v796 = vrot.slane %v794, 1
      %v797 = vsel %vm689, %v792, %v796
      %v799 = vshrl.u32 %v618, 16
      %v801 = vshll.u32 %v618, 16
      %v803 = vrot.slane %v801, 1
      %v804 = vor.u32 %v799, %v803
      %v806 = vshll.u32 %v682, 16
      %v808 = vrot.slane %v806, 1
      %v809 = vsel %vm689, %v804, %v808
      %v811 = vshrl.u32 %v619, 16
      %v813 = vshll.u32 %v619, 16
      %v815 = vrot.slane %v813, 1
      %v816 = vor.u32 %v811, %v815
      %v818 = vshll.u32 %v683, 16
      %v820 = vrot.slane %v818, 1
      %v821 = vsel %vm689, %v816, %v820
      %v823 = vshrl.u32 %v620, 16
      %v825 = vshll.u32 %v620, 16
      %v827 = vrot.slane %v825, 1
      %v828 = vor.u32 %v823, %v827
      %v830 = vshll.u32 %v684, 16
      %v832 = vrot.slane %v830, 1
      %v833 = vsel %vm689, %v828, %v832
      %v835 = vshrl.u32 %v621, 16
      %v837 = vshll.u32 %v621, 16
      %v839 = vrot.slane %v837, 1
      %v840 = vor.u32 %v835, %v839
      %v842 = vshll.u32 %v685, 16
      %v844 = vrot.slane %v842, 1
      %v845 = vsel %vm689, %v840, %v844
      %v847 = vshrl.u32 %v622, 16
      %v849 = vshll.u32 %v622, 16
      %v851 = vrot.slane %v849, 1
      %v852 = vor.u32 %v847, %v851
      %v854 = vshll.u32 %v686, 16
      %v856 = vrot.slane %v854, 1
      %v857 = vsel %vm689, %v852, %v856
      %v859 = vshrl.u32 %v623, 16
      %v861 = vshll.u32 %v623, 16
      %v863 = vrot.slane %v861, 1
      %v864 = vor.u32 %v859, %v863
      %v866 = vshll.u32 %v687, 16
      %v868 = vrot.slane %v866, 1
      %v869 = vsel %vm689, %v864, %v868
      %v871 = vshrl.u32 %v624, 16
      %v873 = vshll.u32 %v624, 16
      %v875 = vrot.slane %v873, 1
      %v876 = vor.u32 %v871, %v875
      %v878 = vshll.u32 %v688, 16
      %v880 = vrot.slane %v878, 1
      %v881 = vsel %vm689, %v876, %v880
      %v914 = vunpack.c.l.b16 %v399
      %v915 = vunpack.c.l.b16 %v400
      %v916 = vunpack.c.l.b16 %v401
      %v917 = vunpack.c.l.b16 %v402
      %v918 = vunpack.c.l.b16 %v403
      %v919 = vunpack.c.l.b16 %v404
      %v920 = vunpack.c.l.b16 %v405
      %v921 = vunpack.c.l.b16 %v406
      %v922 = vunpack.c.l.b16 %v407
      %v923 = vunpack.c.l.b16 %v408
      %v924 = vunpack.c.l.b16 %v409
      %v925 = vunpack.c.l.b16 %v410
      %v926 = vunpack.c.l.b16 %v411
      %v927 = vunpack.c.l.b16 %v412
      %v928 = vunpack.c.l.b16 %v413
      %v929 = vunpack.c.l.b16 %v414
      %v930 = vpack.c.b16 %v578, %v914
      %v931 = vpack.c.b16 %v580, %v915
      %v932 = vpack.c.b16 %v582, %v916
      %v933 = vpack.c.b16 %v584, %v917
      %v934 = vpack.c.b16 %v586, %v918
      %v935 = vpack.c.b16 %v588, %v919
      %v936 = vpack.c.b16 %v590, %v920
      %v937 = vpack.c.b16 %v592, %v921
      %v938 = vpack.c.b16 %v594, %v922
      %v939 = vpack.c.b16 %v596, %v923
      %v940 = vpack.c.b16 %v598, %v924
      %v941 = vpack.c.b16 %v600, %v925
      %v942 = vpack.c.b16 %v602, %v926
      %v943 = vpack.c.b16 %v604, %v927
      %v944 = vpack.c.b16 %v606, %v928
      %v945 = vpack.c.b16 %v608, %v929
      %vm946 = vcmask 1046528
      %v947 = vrot.slane %v930, 1
      %v948 = vrot.slane %v673, 1
      %v949 = vsel %vm946, %v947, %v948
      %v950 = vrot.slane %v931, 1
      %v951 = vrot.slane %v674, 1
      %v952 = vsel %vm946, %v950, %v951
      %v953 = vrot.slane %v932, 1
      %v954 = vrot.slane %v675, 1
      %v955 = vsel %vm946, %v953, %v954
      %v956 = vrot.slane %v933, 1
      %v957 = vrot.slane %v676, 1
      %v958 = vsel %vm946, %v956, %v957
      %v959 = vrot.slane %v934, 1
      %v960 = vrot.slane %v677, 1
      %v961 = vsel %vm946, %v959, %v960
      %v962 = vrot.slane %v935, 1
      %v963 = vrot.slane %v678, 1
      %v964 = vsel %vm946, %v962, %v963
      %v965 = vrot.slane %v936, 1
      %v966 = vrot.slane %v679, 1
      %v967 = vsel %vm946, %v965, %v966
      %v968 = vrot.slane %v937, 1
      %v969 = vrot.slane %v680, 1
      %v970 = vsel %vm946, %v968, %v969
      %v971 = vrot.slane %v938, 1
      %v972 = vrot.slane %v681, 1
      %v973 = vsel %vm946, %v971, %v972
      %v974 = vrot.slane %v939, 1
      %v975 = vrot.slane %v682, 1
      %v976 = vsel %vm946, %v974, %v975
      %v977 = vrot.slane %v940, 1
      %v978 = vrot.slane %v683, 1
      %v979 = vsel %vm946, %v977, %v978
      %v980 = vrot.slane %v941, 1
      %v981 = vrot.slane %v684, 1
      %v982 = vsel %vm946, %v980, %v981
      %v983 = vrot.slane %v942, 1
      %v984 = vrot.slane %v685, 1
      %v985 = vsel %vm946, %v983, %v984
      %v986 = vrot.slane %v943, 1
      %v987 = vrot.slane %v686, 1
      %v988 = vsel %vm946, %v986, %v987
      %v989 = vrot.slane %v944, 1
      %v990 = vrot.slane %v687, 1
      %v991 = vsel %vm946, %v989, %v990
      %v992 = vrot.slane %v945, 1
      %v993 = vrot.slane %v688, 1
      %v994 = vsel %vm946, %v992, %v993
      %v1043 = vunpack.c.l.b16 %v416
      %v1044 = vunpack.c.l.b16 %v417
      %v1045 = vunpack.c.l.b16 %v418
      %v1046 = vunpack.c.l.b16 %v419
      %v1047 = vunpack.c.l.b16 %v420
      %v1048 = vunpack.c.l.b16 %v421
      %v1049 = vunpack.c.l.b16 %v422
      %v1050 = vunpack.c.l.b16 %v423
      %v1051 = vunpack.c.l.b16 %v424
      %v1052 = vunpack.c.l.b16 %v425
      %v1053 = vunpack.c.l.b16 %v426
      %v1054 = vunpack.c.l.b16 %v427
      %v1055 = vunpack.c.l.b16 %v428
      %v1056 = vunpack.c.l.b16 %v429
      %v1057 = vunpack.c.l.b16 %v430
      %v1058 = vunpack.c.l.b16 %v431
      %v1059 = vunpack.c.l.b16 %v432
      %v1060 = vunpack.c.l.b16 %v433
      %v1061 = vunpack.c.l.b16 %v434
      %v1062 = vunpack.c.l.b16 %v435
      %v1063 = vunpack.c.l.b16 %v436
      %v1064 = vunpack.c.l.b16 %v437
      %v1065 = vunpack.c.l.b16 %v438
      %v1066 = vunpack.c.l.b16 %v439
      %v1067 = vunpack.c.l.b16 %v440
      %v1068 = vunpack.c.l.b16 %v441
      %v1069 = vunpack.c.l.b16 %v442
      %v1070 = vunpack.c.l.b16 %v443
      %v1071 = vunpack.c.l.b16 %v444
      %v1072 = vunpack.c.l.b16 %v445
      %v1073 = vunpack.c.l.b16 %v446
      %v1074 = vunpack.c.l.b16 %v447
      %v1075 = vpack.c.b16 %v1044, %v1043
      %v1076 = vpack.c.b16 %v1046, %v1045
      %v1077 = vpack.c.b16 %v1048, %v1047
      %v1078 = vpack.c.b16 %v1050, %v1049
      %v1079 = vpack.c.b16 %v1052, %v1051
      %v1080 = vpack.c.b16 %v1054, %v1053
      %v1081 = vpack.c.b16 %v1056, %v1055
      %v1082 = vpack.c.b16 %v1058, %v1057
      %v1083 = vpack.c.b16 %v1060, %v1059
      %v1084 = vpack.c.b16 %v1062, %v1061
      %v1085 = vpack.c.b16 %v1064, %v1063
      %v1086 = vpack.c.b16 %v1066, %v1065
      %v1087 = vpack.c.b16 %v1068, %v1067
      %v1088 = vpack.c.b16 %v1070, %v1069
      %v1089 = vpack.c.b16 %v1072, %v1071
      %v1090 = vpack.c.b16 %v1074, %v1073
      %v1123 = vunpack.c.l.b16 %v448
      %v1124 = vunpack.c.l.b16 %v449
      %v1125 = vunpack.c.l.b16 %v450
      %v1126 = vunpack.c.l.b16 %v451
      %v1127 = vunpack.c.l.b16 %v452
      %v1128 = vunpack.c.l.b16 %v453
      %v1129 = vunpack.c.l.b16 %v454
      %v1130 = vunpack.c.l.b16 %v455
      %v1131 = vunpack.c.l.b16 %v456
      %v1132 = vunpack.c.l.b16 %v457
      %v1133 = vunpack.c.l.b16 %v458
      %v1134 = vunpack.c.l.b16 %v459
      %v1135 = vunpack.c.l.b16 %v460
      %v1136 = vunpack.c.l.b16 %v461
      %v1137 = vunpack.c.l.b16 %v462
      %v1138 = vunpack.c.l.b16 %v463
      %v1139 = vpack.c.b16 %v1123, %v1123
      %v1140 = vpack.c.b16 %v1124, %v1124
      %v1141 = vpack.c.b16 %v1125, %v1125
      %v1142 = vpack.c.b16 %v1126, %v1126
      %v1143 = vpack.c.b16 %v1127, %v1127
      %v1144 = vpack.c.b16 %v1128, %v1128
      %v1145 = vpack.c.b16 %v1129, %v1129
      %v1146 = vpack.c.b16 %v1130, %v1130
      %v1147 = vpack.c.b16 %v1131, %v1131
      %v1148 = vpack.c.b16 %v1132, %v1132
      %v1149 = vpack.c.b16 %v1133, %v1133
      %v1150 = vpack.c.b16 %v1134, %v1134
      %v1151 = vpack.c.b16 %v1135, %v1135
      %v1152 = vpack.c.b16 %v1136, %v1136
      %v1153 = vpack.c.b16 %v1137, %v1137
      %v1154 = vpack.c.b16 %v1138, %v1138
      %v1156 = vshrl.u32 %v1075, 16
      %v1158 = vshll.u32 %v1075, 16
      %v1160 = vrot.slane %v1158, 1
      %v1161 = vor.u32 %v1156, %v1160
      %v1163 = vshll.u32 %v1139, 16
      %v1165 = vrot.slane %v1163, 1
      %v1166 = vsel %vm689, %v1161, %v1165
      %v1168 = vshrl.u32 %v1076, 16
      %v1170 = vshll.u32 %v1076, 16
      %v1172 = vrot.slane %v1170, 1
      %v1173 = vor.u32 %v1168, %v1172
      %v1175 = vshll.u32 %v1140, 16
      %v1177 = vrot.slane %v1175, 1
      %v1178 = vsel %vm689, %v1173, %v1177
      %v1180 = vshrl.u32 %v1077, 16
      %v1182 = vshll.u32 %v1077, 16
      %v1184 = vrot.slane %v1182, 1
      %v1185 = vor.u32 %v1180, %v1184
      %v1187 = vshll.u32 %v1141, 16
      %v1189 = vrot.slane %v1187, 1
      %v1190 = vsel %vm689, %v1185, %v1189
      %v1192 = vshrl.u32 %v1078, 16
      %v1194 = vshll.u32 %v1078, 16
      %v1196 = vrot.slane %v1194, 1
      %v1197 = vor.u32 %v1192, %v1196
      %v1199 = vshll.u32 %v1142, 16
      %v1201 = vrot.slane %v1199, 1
      %v1202 = vsel %vm689, %v1197, %v1201
      %v1204 = vshrl.u32 %v1079, 16
      %v1206 = vshll.u32 %v1079, 16
      %v1208 = vrot.slane %v1206, 1
      %v1209 = vor.u32 %v1204, %v1208
      %v1211 = vshll.u32 %v1143, 16
      %v1213 = vrot.slane %v1211, 1
      %v1214 = vsel %vm689, %v1209, %v1213
      %v1216 = vshrl.u32 %v1080, 16
      %v1218 = vshll.u32 %v1080, 16
      %v1220 = vrot.slane %v1218, 1
      %v1221 = vor.u32 %v1216, %v1220
      %v1223 = vshll.u32 %v1144, 16
      %v1225 = vrot.slane %v1223, 1
      %v1226 = vsel %vm689, %v1221, %v1225
      %v1228 = vshrl.u32 %v1081, 16
      %v1230 = vshll.u32 %v1081, 16
      %v1232 = vrot.slane %v1230, 1
      %v1233 = vor.u32 %v1228, %v1232
      %v1235 = vshll.u32 %v1145, 16
      %v1237 = vrot.slane %v1235, 1
      %v1238 = vsel %vm689, %v1233, %v1237
      %v1240 = vshrl.u32 %v1082, 16
      %v1242 = vshll.u32 %v1082, 16
      %v1244 = vrot.slane %v1242, 1
      %v1245 = vor.u32 %v1240, %v1244
      %v1247 = vshll.u32 %v1146, 16
      %v1249 = vrot.slane %v1247, 1
      %v1250 = vsel %vm689, %v1245, %v1249
      %v1252 = vshrl.u32 %v1083, 16
      %v1254 = vshll.u32 %v1083, 16
      %v1256 = vrot.slane %v1254, 1
      %v1257 = vor.u32 %v1252, %v1256
      %v1259 = vshll.u32 %v1147, 16
      %v1261 = vrot.slane %v1259, 1
      %v1262 = vsel %vm689, %v1257, %v1261
      %v1264 = vshrl.u32 %v1084, 16
      %v1266 = vshll.u32 %v1084, 16
      %v1268 = vrot.slane %v1266, 1
      %v1269 = vor.u32 %v1264, %v1268
      %v1271 = vshll.u32 %v1148, 16
      %v1273 = vrot.slane %v1271, 1
      %v1274 = vsel %vm689, %v1269, %v1273
      %v1276 = vshrl.u32 %v1085, 16
      %v1278 = vshll.u32 %v1085, 16
      %v1280 = vrot.slane %v1278, 1
      %v1281 = vor.u32 %v1276, %v1280
      %v1283 = vshll.u32 %v1149, 16
      %v1285 = vrot.slane %v1283, 1
      %v1286 = vsel %vm689, %v1281, %v1285
      %v1288 = vshrl.u32 %v1086, 16
      %v1290 = vshll.u32 %v1086, 16
      %v1292 = vrot.slane %v1290, 1
      %v1293 = vor.u32 %v1288, %v1292
      %v1295 = vshll.u32 %v1150, 16
      %v1297 = vrot.slane %v1295, 1
      %v1298 = vsel %vm689, %v1293, %v1297
      %v1300 = vshrl.u32 %v1087, 16
      %v1302 = vshll.u32 %v1087, 16
      %v1304 = vrot.slane %v1302, 1
      %v1305 = vor.u32 %v1300, %v1304
      %v1307 = vshll.u32 %v1151, 16
      %v1309 = vrot.slane %v1307, 1
      %v1310 = vsel %vm689, %v1305, %v1309
      %v1312 = vshrl.u32 %v1088, 16
      %v1314 = vshll.u32 %v1088, 16
      %v1316 = vrot.slane %v1314, 1
      %v1317 = vor.u32 %v1312, %v1316
      %v1319 = vshll.u32 %v1152, 16
      %v1321 = vrot.slane %v1319, 1
      %v1322 = vsel %vm689, %v1317, %v1321
      %v1324 = vshrl.u32 %v1089, 16
      %v1326 = vshll.u32 %v1089, 16
      %v1328 = vrot.slane %v1326, 1
      %v1329 = vor.u32 %v1324, %v1328
      %v1331 = vshll.u32 %v1153, 16
      %v1333 = vrot.slane %v1331, 1
      %v1334 = vsel %vm689, %v1329, %v1333
      %v1336 = vshrl.u32 %v1090, 16
      %v1338 = vshll.u32 %v1090, 16
      %v1340 = vrot.slane %v1338, 1
      %v1341 = vor.u32 %v1336, %v1340
      %v1343 = vshll.u32 %v1154, 16
      %v1345 = vrot.slane %v1343, 1
      %v1346 = vsel %vm689, %v1341, %v1345
      %v1379 = vunpack.c.l.b16 %v464
      %v1380 = vunpack.c.l.b16 %v465
      %v1381 = vunpack.c.l.b16 %v466
      %v1382 = vunpack.c.l.b16 %v467
      %v1383 = vunpack.c.l.b16 %v468
      %v1384 = vunpack.c.l.b16 %v469
      %v1385 = vunpack.c.l.b16 %v470
      %v1386 = vunpack.c.l.b16 %v471
      %v1387 = vunpack.c.l.b16 %v472
      %v1388 = vunpack.c.l.b16 %v473
      %v1389 = vunpack.c.l.b16 %v474
      %v1390 = vunpack.c.l.b16 %v475
      %v1391 = vunpack.c.l.b16 %v476
      %v1392 = vunpack.c.l.b16 %v477
      %v1393 = vunpack.c.l.b16 %v478
      %v1394 = vunpack.c.l.b16 %v479
      %v1395 = vpack.c.b16 %v1044, %v1379
      %v1396 = vpack.c.b16 %v1046, %v1380
      %v1397 = vpack.c.b16 %v1048, %v1381
      %v1398 = vpack.c.b16 %v1050, %v1382
      %v1399 = vpack.c.b16 %v1052, %v1383
      %v1400 = vpack.c.b16 %v1054, %v1384
      %v1401 = vpack.c.b16 %v1056, %v1385
      %v1402 = vpack.c.b16 %v1058, %v1386
      %v1403 = vpack.c.b16 %v1060, %v1387
      %v1404 = vpack.c.b16 %v1062, %v1388
      %v1405 = vpack.c.b16 %v1064, %v1389
      %v1406 = vpack.c.b16 %v1066, %v1390
      %v1407 = vpack.c.b16 %v1068, %v1391
      %v1408 = vpack.c.b16 %v1070, %v1392
      %v1409 = vpack.c.b16 %v1072, %v1393
      %v1410 = vpack.c.b16 %v1074, %v1394
      %v1411 = vrot.slane %v1395, 1
      %v1412 = vrot.slane %v1139, 1
      %v1413 = vsel %vm946, %v1411, %v1412
      %v1414 = vrot.slane %v1396, 1
      %v1415 = vrot.slane %v1140, 1
      %v1416 = vsel %vm946, %v1414, %v1415
      %v1417 = vrot.slane %v1397, 1
      %v1418 = vrot.slane %v1141, 1
      %v1419 = vsel %vm946, %v1417, %v1418
      %v1420 = vrot.slane %v1398, 1
      %v1421 = vrot.slane %v1142, 1
      %v1422 = vsel %vm946, %v1420, %v1421
      %v1423 = vrot.slane %v1399, 1
      %v1424 = vrot.slane %v1143, 1
      %v1425 = vsel %vm946, %v1423, %v1424
      %v1426 = vrot.slane %v1400, 1
      %v1427 = vrot.slane %v1144, 1
      %v1428 = vsel %vm946, %v1426, %v1427
      %v1429 = vrot.slane %v1401, 1
      %v1430 = vrot.slane %v1145, 1
      %v1431 = vsel %vm946, %v1429, %v1430
      %v1432 = vrot.slane %v1402, 1
      %v1433 = vrot.slane %v1146, 1
      %v1434 = vsel %vm946, %v1432, %v1433
      %v1435 = vrot.slane %v1403, 1
      %v1436 = vrot.slane %v1147, 1
      %v1437 = vsel %vm946, %v1435, %v1436
      %v1438 = vrot.slane %v1404, 1
      %v1439 = vrot.slane %v1148, 1
      %v1440 = vsel %vm946, %v1438, %v1439
      %v1441 = vrot.slane %v1405, 1
      %v1442 = vrot.slane %v1149, 1
      %v1443 = vsel %vm946, %v1441, %v1442
      %v1444 = vrot.slane %v1406, 1
      %v1445 = vrot.slane %v1150, 1
      %v1446 = vsel %vm946, %v1444, %v1445
      %v1447 = vrot.slane %v1407, 1
      %v1448 = vrot.slane %v1151, 1
      %v1449 = vsel %vm946, %v1447, %v1448
      %v1450 = vrot.slane %v1408, 1
      %v1451 = vrot.slane %v1152, 1
      %v1452 = vsel %vm946, %v1450, %v1451
      %v1453 = vrot.slane %v1409, 1
      %v1454 = vrot.slane %v1153, 1
      %v1455 = vsel %vm946, %v1453, %v1454
      %v1456 = vrot.slane %v1410, 1
      %v1457 = vrot.slane %v1154, 1
      %v1458 = vsel %vm946, %v1456, %v1457
      %v1507 = vunpack.c.l.b16 %v481
      %v1508 = vunpack.c.l.b16 %v482
      %v1509 = vunpack.c.l.b16 %v483
      %v1510 = vunpack.c.l.b16 %v484
      %v1511 = vunpack.c.l.b16 %v485
      %v1512 = vunpack.c.l.b16 %v486
      %v1513 = vunpack.c.l.b16 %v487
      %v1514 = vunpack.c.l.b16 %v488
      %v1515 = vunpack.c.l.b16 %v489
      %v1516 = vunpack.c.l.b16 %v490
      %v1517 = vunpack.c.l.b16 %v491
      %v1518 = vunpack.c.l.b16 %v492
      %v1519 = vunpack.c.l.b16 %v493
      %v1520 = vunpack.c.l.b16 %v494
      %v1521 = vunpack.c.l.b16 %v495
      %v1522 = vunpack.c.l.b16 %v496
      %v1523 = vunpack.c.l.b16 %v497
      %v1524 = vunpack.c.l.b16 %v498
      %v1525 = vunpack.c.l.b16 %v499
      %v1526 = vunpack.c.l.b16 %v500
      %v1527 = vunpack.c.l.b16 %v501
      %v1528 = vunpack.c.l.b16 %v502
      %v1529 = vunpack.c.l.b16 %v503
      %v1530 = vunpack.c.l.b16 %v504
      %v1531 = vunpack.c.l.b16 %v505
      %v1532 = vunpack.c.l.b16 %v506
      %v1533 = vunpack.c.l.b16 %v507
      %v1534 = vunpack.c.l.b16 %v508
      %v1535 = vunpack.c.l.b16 %v509
      %v1536 = vunpack.c.l.b16 %v510
      %v1537 = vunpack.c.l.b16 %v511
      %v1538 = vunpack.c.l.b16 %v512
      %v1539 = vpack.c.b16 %v1508, %v1507
      %v1540 = vpack.c.b16 %v1510, %v1509
      %v1541 = vpack.c.b16 %v1512, %v1511
      %v1542 = vpack.c.b16 %v1514, %v1513
      %v1543 = vpack.c.b16 %v1516, %v1515
      %v1544 = vpack.c.b16 %v1518, %v1517
      %v1545 = vpack.c.b16 %v1520, %v1519
      %v1546 = vpack.c.b16 %v1522, %v1521
      %v1547 = vpack.c.b16 %v1524, %v1523
      %v1548 = vpack.c.b16 %v1526, %v1525
      %v1549 = vpack.c.b16 %v1528, %v1527
      %v1550 = vpack.c.b16 %v1530, %v1529
      %v1551 = vpack.c.b16 %v1532, %v1531
      %v1552 = vpack.c.b16 %v1534, %v1533
      %v1553 = vpack.c.b16 %v1536, %v1535
      %v1554 = vpack.c.b16 %v1538, %v1537
      %v1587 = vunpack.c.l.b16 %v513
      %v1588 = vunpack.c.l.b16 %v514
      %v1589 = vunpack.c.l.b16 %v515
      %v1590 = vunpack.c.l.b16 %v516
      %v1591 = vunpack.c.l.b16 %v517
      %v1592 = vunpack.c.l.b16 %v518
      %v1593 = vunpack.c.l.b16 %v519
      %v1594 = vunpack.c.l.b16 %v520
      %v1595 = vunpack.c.l.b16 %v521
      %v1596 = vunpack.c.l.b16 %v522
      %v1597 = vunpack.c.l.b16 %v523
      %v1598 = vunpack.c.l.b16 %v524
      %v1599 = vunpack.c.l.b16 %v525
      %v1600 = vunpack.c.l.b16 %v526
      %v1601 = vunpack.c.l.b16 %v527
      %v1602 = vunpack.c.l.b16 %v528
      %v1603 = vpack.c.b16 %v1587, %v1587
      %v1604 = vpack.c.b16 %v1588, %v1588
      %v1605 = vpack.c.b16 %v1589, %v1589
      %v1606 = vpack.c.b16 %v1590, %v1590
      %v1607 = vpack.c.b16 %v1591, %v1591
      %v1608 = vpack.c.b16 %v1592, %v1592
      %v1609 = vpack.c.b16 %v1593, %v1593
      %v1610 = vpack.c.b16 %v1594, %v1594
      %v1611 = vpack.c.b16 %v1595, %v1595
      %v1612 = vpack.c.b16 %v1596, %v1596
      %v1613 = vpack.c.b16 %v1597, %v1597
      %v1614 = vpack.c.b16 %v1598, %v1598
      %v1615 = vpack.c.b16 %v1599, %v1599
      %v1616 = vpack.c.b16 %v1600, %v1600
      %v1617 = vpack.c.b16 %v1601, %v1601
      %v1618 = vpack.c.b16 %v1602, %v1602
      %v1620 = vshrl.u32 %v1539, 16
      %v1622 = vshll.u32 %v1539, 16
      %v1624 = vrot.slane %v1622, 1
      %v1625 = vor.u32 %v1620, %v1624
      %v1627 = vshll.u32 %v1603, 16
      %v1629 = vrot.slane %v1627, 1
      %v1630 = vsel %vm689, %v1625, %v1629
      %v1632 = vshrl.u32 %v1540, 16
      %v1634 = vshll.u32 %v1540, 16
      %v1636 = vrot.slane %v1634, 1
      %v1637 = vor.u32 %v1632, %v1636
      %v1639 = vshll.u32 %v1604, 16
      %v1641 = vrot.slane %v1639, 1
      %v1642 = vsel %vm689, %v1637, %v1641
      %v1644 = vshrl.u32 %v1541, 16
      %v1646 = vshll.u32 %v1541, 16
      %v1648 = vrot.slane %v1646, 1
      %v1649 = vor.u32 %v1644, %v1648
      %v1651 = vshll.u32 %v1605, 16
      %v1653 = vrot.slane %v1651, 1
      %v1654 = vsel %vm689, %v1649, %v1653
      %v1656 = vshrl.u32 %v1542, 16
      %v1658 = vshll.u32 %v1542, 16
      %v1660 = vrot.slane %v1658, 1
      %v1661 = vor.u32 %v1656, %v1660
      %v1663 = vshll.u32 %v1606, 16
      %v1665 = vrot.slane %v1663, 1
      %v1666 = vsel %vm689, %v1661, %v1665
      %v1668 = vshrl.u32 %v1543, 16
      %v1670 = vshll.u32 %v1543, 16
      %v1672 = vrot.slane %v1670, 1
      %v1673 = vor.u32 %v1668, %v1672
      %v1675 = vshll.u32 %v1607, 16
      %v1677 = vrot.slane %v1675, 1
      %v1678 = vsel %vm689, %v1673, %v1677
      %v1680 = vshrl.u32 %v1544, 16
      %v1682 = vshll.u32 %v1544, 16
      %v1684 = vrot.slane %v1682, 1
      %v1685 = vor.u32 %v1680, %v1684
      %v1687 = vshll.u32 %v1608, 16
      %v1689 = vrot.slane %v1687, 1
      %v1690 = vsel %vm689, %v1685, %v1689
      %v1692 = vshrl.u32 %v1545, 16
      %v1694 = vshll.u32 %v1545, 16
      %v1696 = vrot.slane %v1694, 1
      %v1697 = vor.u32 %v1692, %v1696
      %v1699 = vshll.u32 %v1609, 16
      %v1701 = vrot.slane %v1699, 1
      %v1702 = vsel %vm689, %v1697, %v1701
      %v1704 = vshrl.u32 %v1546, 16
      %v1706 = vshll.u32 %v1546, 16
      %v1708 = vrot.slane %v1706, 1
      %v1709 = vor.u32 %v1704, %v1708
      %v1711 = vshll.u32 %v1610, 16
      %v1713 = vrot.slane %v1711, 1
      %v1714 = vsel %vm689, %v1709, %v1713
      %v1716 = vshrl.u32 %v1547, 16
      %v1718 = vshll.u32 %v1547, 16
      %v1720 = vrot.slane %v1718, 1
      %v1721 = vor.u32 %v1716, %v1720
      %v1723 = vshll.u32 %v1611, 16
      %v1725 = vrot.slane %v1723, 1
      %v1726 = vsel %vm689, %v1721, %v1725
      %v1728 = vshrl.u32 %v1548, 16
      %v1730 = vshll.u32 %v1548, 16
      %v1732 = vrot.slane %v1730, 1
      %v1733 = vor.u32 %v1728, %v1732
      %v1735 = vshll.u32 %v1612, 16
      %v1737 = vrot.slane %v1735, 1
      %v1738 = vsel %vm689, %v1733, %v1737
      %v1740 = vshrl.u32 %v1549, 16
      %v1742 = vshll.u32 %v1549, 16
      %v1744 = vrot.slane %v1742, 1
      %v1745 = vor.u32 %v1740, %v1744
      %v1747 = vshll.u32 %v1613, 16
      %v1749 = vrot.slane %v1747, 1
      %v1750 = vsel %vm689, %v1745, %v1749
      %v1752 = vshrl.u32 %v1550, 16
      %v1754 = vshll.u32 %v1550, 16
      %v1756 = vrot.slane %v1754, 1
      %v1757 = vor.u32 %v1752, %v1756
      %v1759 = vshll.u32 %v1614, 16
      %v1761 = vrot.slane %v1759, 1
      %v1762 = vsel %vm689, %v1757, %v1761
      %v1764 = vshrl.u32 %v1551, 16
      %v1766 = vshll.u32 %v1551, 16
      %v1768 = vrot.slane %v1766, 1
      %v1769 = vor.u32 %v1764, %v1768
      %v1771 = vshll.u32 %v1615, 16
      %v1773 = vrot.slane %v1771, 1
      %v1774 = vsel %vm689, %v1769, %v1773
      %v1776 = vshrl.u32 %v1552, 16
      %v1778 = vshll.u32 %v1552, 16
      %v1780 = vrot.slane %v1778, 1
      %v1781 = vor.u32 %v1776, %v1780
      %v1783 = vshll.u32 %v1616, 16
      %v1785 = vrot.slane %v1783, 1
      %v1786 = vsel %vm689, %v1781, %v1785
      %v1788 = vshrl.u32 %v1553, 16
      %v1790 = vshll.u32 %v1553, 16
      %v1792 = vrot.slane %v1790, 1
      %v1793 = vor.u32 %v1788, %v1792
      %v1795 = vshll.u32 %v1617, 16
      %v1797 = vrot.slane %v1795, 1
      %v1798 = vsel %vm689, %v1793, %v1797
      %v1800 = vshrl.u32 %v1554, 16
      %v1802 = vshll.u32 %v1554, 16
      %v1804 = vrot.slane %v1802, 1
      %v1805 = vor.u32 %v1800, %v1804
      %v1807 = vshll.u32 %v1618, 16
      %v1809 = vrot.slane %v1807, 1
      %v1810 = vsel %vm689, %v1805, %v1809
      %v1843 = vunpack.c.l.b16 %v529
      %v1844 = vunpack.c.l.b16 %v530
      %v1845 = vunpack.c.l.b16 %v531
      %v1846 = vunpack.c.l.b16 %v532
      %v1847 = vunpack.c.l.b16 %v533
      %v1848 = vunpack.c.l.b16 %v534
      %v1849 = vunpack.c.l.b16 %v535
      %v1850 = vunpack.c.l.b16 %v536
      %v1851 = vunpack.c.l.b16 %v537
      %v1852 = vunpack.c.l.b16 %v538
      %v1853 = vunpack.c.l.b16 %v539
      %v1854 = vunpack.c.l.b16 %v540
      %v1855 = vunpack.c.l.b16 %v541
      %v1856 = vunpack.c.l.b16 %v542
      %v1857 = vunpack.c.l.b16 %v543
      %v1858 = vunpack.c.l.b16 %v544
      %v1859 = vpack.c.b16 %v1508, %v1843
      %v1860 = vpack.c.b16 %v1510, %v1844
      %v1861 = vpack.c.b16 %v1512, %v1845
      %v1862 = vpack.c.b16 %v1514, %v1846
      %v1863 = vpack.c.b16 %v1516, %v1847
      %v1864 = vpack.c.b16 %v1518, %v1848
      %v1865 = vpack.c.b16 %v1520, %v1849
      %v1866 = vpack.c.b16 %v1522, %v1850
      %v1867 = vpack.c.b16 %v1524, %v1851
      %v1868 = vpack.c.b16 %v1526, %v1852
      %v1869 = vpack.c.b16 %v1528, %v1853
      %v1870 = vpack.c.b16 %v1530, %v1854
      %v1871 = vpack.c.b16 %v1532, %v1855
      %v1872 = vpack.c.b16 %v1534, %v1856
      %v1873 = vpack.c.b16 %v1536, %v1857
      %v1874 = vpack.c.b16 %v1538, %v1858
      %v1875 = vrot.slane %v1859, 1
      %v1876 = vrot.slane %v1603, 1
      %v1877 = vsel %vm946, %v1875, %v1876
      %v1878 = vrot.slane %v1860, 1
      %v1879 = vrot.slane %v1604, 1
      %v1880 = vsel %vm946, %v1878, %v1879
      %v1881 = vrot.slane %v1861, 1
      %v1882 = vrot.slane %v1605, 1
      %v1883 = vsel %vm946, %v1881, %v1882
      %v1884 = vrot.slane %v1862, 1
      %v1885 = vrot.slane %v1606, 1
      %v1886 = vsel %vm946, %v1884, %v1885
      %v1887 = vrot.slane %v1863, 1
      %v1888 = vrot.slane %v1607, 1
      %v1889 = vsel %vm946, %v1887, %v1888
      %v1890 = vrot.slane %v1864, 1
      %v1891 = vrot.slane %v1608, 1
      %v1892 = vsel %vm946, %v1890, %v1891
      %v1893 = vrot.slane %v1865, 1
      %v1894 = vrot.slane %v1609, 1
      %v1895 = vsel %vm946, %v1893, %v1894
      %v1896 = vrot.slane %v1866, 1
      %v1897 = vrot.slane %v1610, 1
      %v1898 = vsel %vm946, %v1896, %v1897
      %v1899 = vrot.slane %v1867, 1
      %v1900 = vrot.slane %v1611, 1
      %v1901 = vsel %vm946, %v1899, %v1900
      %v1902 = vrot.slane %v1868, 1
      %v1903 = vrot.slane %v1612, 1
      %v1904 = vsel %vm946, %v1902, %v1903
      %v1905 = vrot.slane %v1869, 1
      %v1906 = vrot.slane %v1613, 1
      %v1907 = vsel %vm946, %v1905, %v1906
      %v1908 = vrot.slane %v1870, 1
      %v1909 = vrot.slane %v1614, 1
      %v1910 = vsel %vm946, %v1908, %v1909
      %v1911 = vrot.slane %v1871, 1
      %v1912 = vrot.slane %v1615, 1
      %v1913 = vsel %vm946, %v1911, %v1912
      %v1914 = vrot.slane %v1872, 1
      %v1915 = vrot.slane %v1616, 1
      %v1916 = vsel %vm946, %v1914, %v1915
      %v1917 = vrot.slane %v1873, 1
      %v1918 = vrot.slane %v1617, 1
      %v1919 = vsel %vm946, %v1917, %v1918
      %v1920 = vrot.slane %v1874, 1
      %v1921 = vrot.slane %v1618, 1
      %v1922 = vsel %vm946, %v1920, %v1921
      %v1939 = vld [vmem:[%s1] sm:$0xf]
      %v1940 = vld [vmem:[%s1 + $0x4] sm:$0xf]
      %v1941 = vld [vmem:[%s1 + $0x8] sm:$0xf]
      %v1942 = vld [vmem:[%s1 + $0xc] sm:$0xf]
      %v1943 = vld [vmem:[%s1 + $0x10] sm:$0xf]
      %v1944 = vld [vmem:[%s1 + $0x14] sm:$0xf]
      %v1945 = vld [vmem:[%s1 + $0x18] sm:$0xf]
      %v1946 = vld [vmem:[%s1 + $0x1c] sm:$0xf]
      %v1947 = vld [vmem:[%s1 + $0x20] sm:$0xf]
      %v1948 = vld [vmem:[%s1 + $0x24] sm:$0xf]
      %v1949 = vld [vmem:[%s1 + $0x28] sm:$0xf]
      %v1950 = vld [vmem:[%s1 + $0x2c] sm:$0xf]
      %v1951 = vld [vmem:[%s1 + $0x30] sm:$0xf]
      %v1952 = vld [vmem:[%s1 + $0x34] sm:$0xf]
      %v1953 = vld [vmem:[%s1 + $0x38] sm:$0xf]
      %v1954 = vld [vmem:[%s1 + $0x3c] sm:$0xf]
      %v1955 = vld [vmem:[%s1 + $0x40] sm:$0xf]
      %v1956 = vld [vmem:[%s1 + $0x44] sm:$0xf]
      %v1957 = vld [vmem:[%s1 + $0x48] sm:$0xf]
      %v1958 = vld [vmem:[%s1 + $0x4c] sm:$0xf]
      %v1959 = vld [vmem:[%s1 + $0x50] sm:$0xf]
      %v1960 = vld [vmem:[%s1 + $0x54] sm:$0xf]
      %v1961 = vld [vmem:[%s1 + $0x58] sm:$0xf]
      %v1962 = vld [vmem:[%s1 + $0x5c] sm:$0xf]
      %v1963 = vld [vmem:[%s1 + $0x60] sm:$0xf]
      %v1964 = vld [vmem:[%s1 + $0x64] sm:$0xf]
      %v1965 = vld [vmem:[%s1 + $0x68] sm:$0xf]
      %v1966 = vld [vmem:[%s1 + $0x6c] sm:$0xf]
      %v1967 = vld [vmem:[%s1 + $0x70] sm:$0xf]
      %v1968 = vld [vmem:[%s1 + $0x74] sm:$0xf]
      %v1969 = vld [vmem:[%s1 + $0x78] sm:$0xf]
      %v1970 = vld [vmem:[%s1 + $0x7c] sm:$0xf]
      %v1971 = vld [vmem:[%s1 + $0x80] sm:$0xf]
      %v1972 = vld [vmem:[%s1 + $0x84] sm:$0xf]
      %v1973 = vld [vmem:[%s1 + $0x88] sm:$0xf]
      %v1974 = vld [vmem:[%s1 + $0x8c] sm:$0xf]
      %v1975 = vld [vmem:[%s1 + $0x90] sm:$0xf]
      %v1976 = vld [vmem:[%s1 + $0x94] sm:$0xf]
      %v1977 = vld [vmem:[%s1 + $0x98] sm:$0xf]
      %v1978 = vld [vmem:[%s1 + $0x9c] sm:$0xf]
      %v1979 = vld [vmem:[%s1 + $0xa0] sm:$0xf]
      %v1980 = vld [vmem:[%s1 + $0xa4] sm:$0xf]
      %v1981 = vld [vmem:[%s1 + $0xa8] sm:$0xf]
      %v1982 = vld [vmem:[%s1 + $0xac] sm:$0xf]
      %v1983 = vld [vmem:[%s1 + $0xb0] sm:$0xf]
      %v1984 = vld [vmem:[%s1 + $0xb4] sm:$0xf]
      %v1985 = vld [vmem:[%s1 + $0xb8] sm:$0xf]
      %v1986 = vld [vmem:[%s1 + $0xbc] sm:$0xf]
      %v1987 = vld [vmem:[%s1 + $0xc0] sm:$0xf]
      %v1988 = vld [vmem:[%s1 + $0xc4] sm:$0xf]
      %v1989 = vld [vmem:[%s1 + $0xc8] sm:$0xf]
      %v1990 = vld [vmem:[%s1 + $0xcc] sm:$0xf]
      %v1991 = vld [vmem:[%s1 + $0xd0] sm:$0xf]
      %v1992 = vld [vmem:[%s1 + $0xd4] sm:$0xf]
      %v1993 = vld [vmem:[%s1 + $0xd8] sm:$0xf]
      %v1994 = vld [vmem:[%s1 + $0xdc] sm:$0xf]
      %v1995 = vld [vmem:[%s1 + $0xe0] sm:$0xf]
      %v1996 = vld [vmem:[%s1 + $0xe4] sm:$0xf]
      %v1997 = vld [vmem:[%s1 + $0xe8] sm:$0xf]
      %v1998 = vld [vmem:[%s1 + $0xec] sm:$0xf]
      %v1999 = vld [vmem:[%s1 + $0xf0] sm:$0xf]
      %v2000 = vld [vmem:[%s1 + $0xf4] sm:$0xf]
      %v2001 = vld [vmem:[%s1 + $0xf8] sm:$0xf]
      %v2002 = vld [vmem:[%s1 + $0xfc] sm:$0xf]
      %v2003 = vld [vmem:[%s1 + $0x100] sm:$0xf]
      %v2004 = vld [vmem:[%s1 + $0x104] sm:$0xf]
      %v2005 = vld [vmem:[%s1 + $0x108] sm:$0xf]
      %v2006 = vld [vmem:[%s1 + $0x10c] sm:$0xf]
      %v2007 = vld [vmem:[%s1 + $0x110] sm:$0xf]
      %v2008 = vld [vmem:[%s1 + $0x114] sm:$0xf]
      %v2009 = vld [vmem:[%s1 + $0x118] sm:$0xf]
      %v2010 = vld [vmem:[%s1 + $0x11c] sm:$0xf]
      %v2011 = vld [vmem:[%s1 + $0x120] sm:$0xf]
      %v2012 = vld [vmem:[%s1 + $0x124] sm:$0xf]
      %v2013 = vld [vmem:[%s1 + $0x128] sm:$0xf]
      %v2014 = vld [vmem:[%s1 + $0x12c] sm:$0xf]
      %v2015 = vld [vmem:[%s1 + $0x130] sm:$0xf]
      %v2016 = vld [vmem:[%s1 + $0x134] sm:$0xf]
      %v2017 = vld [vmem:[%s1 + $0x138] sm:$0xf]
      %v2018 = vld [vmem:[%s1 + $0x13c] sm:$0xf]
      %v2019 = vld [vmem:[%s1 + $0x140] sm:$0xf]
      %v2020 = vld [vmem:[%s1 + $0x144] sm:$0xf]
      %v2021 = vld [vmem:[%s1 + $0x148] sm:$0xf]
      %v2022 = vld [vmem:[%s1 + $0x14c] sm:$0xf]
      %v2023 = vld [vmem:[%s1 + $0x150] sm:$0xf]
      %v2024 = vld [vmem:[%s1 + $0x154] sm:$0xf]
      %v2025 = vld [vmem:[%s1 + $0x158] sm:$0xf]
      %v2026 = vld [vmem:[%s1 + $0x15c] sm:$0xf]
      %v2027 = vld [vmem:[%s1 + $0x160] sm:$0xf]
      %v2028 = vld [vmem:[%s1 + $0x164] sm:$0xf]
      %v2029 = vld [vmem:[%s1 + $0x168] sm:$0xf]
      %v2030 = vld [vmem:[%s1 + $0x16c] sm:$0xf]
      %v2031 = vld [vmem:[%s1 + $0x170] sm:$0xf]
      %v2032 = vld [vmem:[%s1 + $0x174] sm:$0xf]
      %v2033 = vld [vmem:[%s1 + $0x178] sm:$0xf]
      %v2034 = vld [vmem:[%s1 + $0x17c] sm:$0xf]
      %v2035 = vld [vmem:[%s1 + $0x180] sm:$0xf]
      %v2036 = vld [vmem:[%s1 + $0x184] sm:$0xf]
      %v2037 = vld [vmem:[%s1 + $0x188] sm:$0xf]
      %v2038 = vld [vmem:[%s1 + $0x18c] sm:$0xf]
      %v2039 = vld [vmem:[%s1 + $0x190] sm:$0xf]
      %v2040 = vld [vmem:[%s1 + $0x194] sm:$0xf]
      %v2041 = vld [vmem:[%s1 + $0x198] sm:$0xf]
      %v2042 = vld [vmem:[%s1 + $0x19c] sm:$0xf]
      %v2043 = vld [vmem:[%s1 + $0x1a0] sm:$0xf]
      %v2044 = vld [vmem:[%s1 + $0x1a4] sm:$0xf]
      %v2045 = vld [vmem:[%s1 + $0x1a8] sm:$0xf]
      %v2046 = vld [vmem:[%s1 + $0x1ac] sm:$0xf]
      %v2047 = vld [vmem:[%s1 + $0x1b0] sm:$0xf]
      %v2048 = vld [vmem:[%s1 + $0x1b4] sm:$0xf]
      %v2049 = vld [vmem:[%s1 + $0x1b8] sm:$0xf]
      %v2050 = vld [vmem:[%s1 + $0x1bc] sm:$0xf]
      %v2051 = vld [vmem:[%s1 + $0x1c0] sm:$0xf]
      %v2052 = vld [vmem:[%s1 + $0x1c4] sm:$0xf]
      %v2053 = vld [vmem:[%s1 + $0x1c8] sm:$0xf]
      %v2054 = vld [vmem:[%s1 + $0x1cc] sm:$0xf]
      %v2055 = vld [vmem:[%s1 + $0x1d0] sm:$0xf]
      %v2056 = vld [vmem:[%s1 + $0x1d4] sm:$0xf]
      %v2057 = vld [vmem:[%s1 + $0x1d8] sm:$0xf]
      %v2058 = vld [vmem:[%s1 + $0x1dc] sm:$0xf]
      %v2059 = vld [vmem:[%s1 + $0x1e0] sm:$0xf]
      %v2060 = vld [vmem:[%s1 + $0x1e4] sm:$0xf]
      %v2061 = vld [vmem:[%s1 + $0x1e8] sm:$0xf]
      %v2062 = vld [vmem:[%s1 + $0x1ec] sm:$0xf]
      %v2063 = vld [vmem:[%s1 + $0x1f0] sm:$0xf]
      %v2064 = vld [vmem:[%s1 + $0x1f4] sm:$0xf]
      %v2065 = vld [vmem:[%s1 + $0x1f8] sm:$0xf]
      %v2066 = vld [vmem:[%s1 + $0x1fc] sm:$0xf]
      %v2067 = vld [vmem:[%s1 + $0x200] sm:$0xf]
      %v2068 = vld [vmem:[%s1 + $0x204] sm:$0xf]
      %v2069 = vld [vmem:[%s1 + $0x208] sm:$0xf]
      %v2070 = vld [vmem:[%s1 + $0x20c] sm:$0xf]
      %v2071 = vld [vmem:[%s1 + $0x210] sm:$0xf]
      %v2072 = vld [vmem:[%s1 + $0x214] sm:$0xf]
      %v2073 = vld [vmem:[%s1 + $0x218] sm:$0xf]
      %v2074 = vld [vmem:[%s1 + $0x21c] sm:$0xf]
      %v2075 = vld [vmem:[%s1 + $0x220] sm:$0xf]
      %v2076 = vld [vmem:[%s1 + $0x224] sm:$0xf]
      %v2077 = vld [vmem:[%s1 + $0x228] sm:$0xf]
      %v2078 = vld [vmem:[%s1 + $0x22c] sm:$0xf]
      %v2079 = vld [vmem:[%s1 + $0x230] sm:$0xf]
      %v2080 = vld [vmem:[%s1 + $0x234] sm:$0xf]
      %v2081 = vld [vmem:[%s1 + $0x238] sm:$0xf]
      %v2082 = vld [vmem:[%s1 + $0x23c] sm:$0xf]
      %v2227 = vunpack.c.l.b16 %v1939
      %v2228 = vunpack.c.l.b16 %v1940
      %v2229 = vunpack.c.l.b16 %v1941
      %v2230 = vunpack.c.l.b16 %v1942
      %v2231 = vunpack.c.l.b16 %v1943
      %v2232 = vunpack.c.l.b16 %v1944
      %v2233 = vunpack.c.l.b16 %v1945
      %v2234 = vunpack.c.l.b16 %v1946
      %v2235 = vunpack.c.l.b16 %v1947
      %v2236 = vunpack.c.l.b16 %v1948
      %v2237 = vunpack.c.l.b16 %v1949
      %v2238 = vunpack.c.l.b16 %v1950
      %v2239 = vunpack.c.l.b16 %v1951
      %v2240 = vunpack.c.l.b16 %v1952
      %v2241 = vunpack.c.l.b16 %v1953
      %v2242 = vunpack.c.l.b16 %v1954
      %v2243 = vunpack.c.l.b16 %v1955
      %v2244 = vunpack.c.l.b16 %v1956
      %v2245 = vunpack.c.l.b16 %v1957
      %v2246 = vunpack.c.l.b16 %v1958
      %v2247 = vunpack.c.l.b16 %v1959
      %v2248 = vunpack.c.l.b16 %v1960
      %v2249 = vunpack.c.l.b16 %v1961
      %v2250 = vunpack.c.l.b16 %v1962
      %v2251 = vunpack.c.l.b16 %v1963
      %v2252 = vunpack.c.l.b16 %v1964
      %v2253 = vunpack.c.l.b16 %v1965
      %v2254 = vunpack.c.l.b16 %v1966
      %v2255 = vunpack.c.l.b16 %v1967
      %v2256 = vunpack.c.l.b16 %v1968
      %v2257 = vunpack.c.l.b16 %v1969
      %v2258 = vunpack.c.l.b16 %v1970
      %v2259 = vunpack.c.l.b16 %v1971
      %v2260 = vunpack.c.l.b16 %v1972
      %v2261 = vunpack.c.l.b16 %v1973
      %v2262 = vunpack.c.l.b16 %v1974
      %v2263 = vunpack.c.l.b16 %v1975
      %v2264 = vunpack.c.l.b16 %v1976
      %v2265 = vunpack.c.l.b16 %v1977
      %v2266 = vunpack.c.l.b16 %v1978
      %v2267 = vunpack.c.l.b16 %v1979
      %v2268 = vunpack.c.l.b16 %v1980
      %v2269 = vunpack.c.l.b16 %v1981
      %v2270 = vunpack.c.l.b16 %v1982
      %v2271 = vunpack.c.l.b16 %v1983
      %v2272 = vunpack.c.l.b16 %v1984
      %v2273 = vunpack.c.l.b16 %v1985
      %v2274 = vunpack.c.l.b16 %v1986
      %v2275 = vunpack.c.l.b16 %v1987
      %v2276 = vunpack.c.l.b16 %v1988
      %v2277 = vunpack.c.l.b16 %v1989
      %v2278 = vunpack.c.l.b16 %v1990
      %v2279 = vunpack.c.l.b16 %v1991
      %v2280 = vunpack.c.l.b16 %v1992
      %v2281 = vunpack.c.l.b16 %v1993
      %v2282 = vunpack.c.l.b16 %v1994
      %v2283 = vunpack.c.l.b16 %v1995
      %v2284 = vunpack.c.l.b16 %v1996
      %v2285 = vunpack.c.l.b16 %v1997
      %v2286 = vunpack.c.l.b16 %v1998
      %v2287 = vunpack.c.l.b16 %v1999
      %v2288 = vunpack.c.l.b16 %v2000
      %v2289 = vunpack.c.l.b16 %v2001
      %v2290 = vunpack.c.l.b16 %v2002
      %v2291 = vunpack.c.l.b16 %v2003
      %v2292 = vunpack.c.l.b16 %v2004
      %v2293 = vunpack.c.l.b16 %v2005
      %v2294 = vunpack.c.l.b16 %v2006
      %v2295 = vunpack.c.l.b16 %v2007
      %v2296 = vunpack.c.l.b16 %v2008
      %v2297 = vunpack.c.l.b16 %v2009
      %v2298 = vunpack.c.l.b16 %v2010
      %v2299 = vunpack.c.l.b16 %v2011
      %v2300 = vunpack.c.l.b16 %v2012
      %v2301 = vunpack.c.l.b16 %v2013
      %v2302 = vunpack.c.l.b16 %v2014
      %v2303 = vunpack.c.l.b16 %v2015
      %v2304 = vunpack.c.l.b16 %v2016
      %v2305 = vunpack.c.l.b16 %v2017
      %v2306 = vunpack.c.l.b16 %v2018
      %v2307 = vunpack.c.l.b16 %v2019
      %v2308 = vunpack.c.l.b16 %v2020
      %v2309 = vunpack.c.l.b16 %v2021
      %v2310 = vunpack.c.l.b16 %v2022
      %v2311 = vunpack.c.l.b16 %v2023
      %v2312 = vunpack.c.l.b16 %v2024
      %v2313 = vunpack.c.l.b16 %v2025
      %v2314 = vunpack.c.l.b16 %v2026
      %v2315 = vunpack.c.l.b16 %v2027
      %v2316 = vunpack.c.l.b16 %v2028
      %v2317 = vunpack.c.l.b16 %v2029
      %v2318 = vunpack.c.l.b16 %v2030
      %v2319 = vunpack.c.l.b16 %v2031
      %v2320 = vunpack.c.l.b16 %v2032
      %v2321 = vunpack.c.l.b16 %v2033
      %v2322 = vunpack.c.l.b16 %v2034
      %v2323 = vunpack.c.l.b16 %v2035
      %v2324 = vunpack.c.l.b16 %v2036
      %v2325 = vunpack.c.l.b16 %v2037
      %v2326 = vunpack.c.l.b16 %v2038
      %v2327 = vunpack.c.l.b16 %v2039
      %v2328 = vunpack.c.l.b16 %v2040
      %v2329 = vunpack.c.l.b16 %v2041
      %v2330 = vunpack.c.l.b16 %v2042
      %v2331 = vunpack.c.l.b16 %v2043
      %v2332 = vunpack.c.l.b16 %v2044
      %v2333 = vunpack.c.l.b16 %v2045
      %v2334 = vunpack.c.l.b16 %v2046
      %v2335 = vunpack.c.l.b16 %v2047
      %v2336 = vunpack.c.l.b16 %v2048
      %v2337 = vunpack.c.l.b16 %v2049
      %v2338 = vunpack.c.l.b16 %v2050
      %v2339 = vunpack.c.l.b16 %v2051
      %v2340 = vunpack.c.l.b16 %v2052
      %v2341 = vunpack.c.l.b16 %v2053
      %v2342 = vunpack.c.l.b16 %v2054
      %v2343 = vunpack.c.l.b16 %v2055
      %v2344 = vunpack.c.l.b16 %v2056
      %v2345 = vunpack.c.l.b16 %v2057
      %v2346 = vunpack.c.l.b16 %v2058
      %v2347 = vunpack.c.l.b16 %v2059
      %v2348 = vunpack.c.l.b16 %v2060
      %v2349 = vunpack.c.l.b16 %v2061
      %v2350 = vunpack.c.l.b16 %v2062
      %v2351 = vunpack.c.l.b16 %v2063
      %v2352 = vunpack.c.l.b16 %v2064
      %v2353 = vunpack.c.l.b16 %v2065
      %v2354 = vunpack.c.l.b16 %v2066
      %v2355 = vunpack.c.l.b16 %v2067
      %v2356 = vunpack.c.l.b16 %v2068
      %v2357 = vunpack.c.l.b16 %v2069
      %v2358 = vunpack.c.l.b16 %v2070
      %v2359 = vunpack.c.l.b16 %v2071
      %v2360 = vunpack.c.l.b16 %v2072
      %v2361 = vunpack.c.l.b16 %v2073
      %v2362 = vunpack.c.l.b16 %v2074
      %v2363 = vunpack.c.l.b16 %v2075
      %v2364 = vunpack.c.l.b16 %v2076
      %v2365 = vunpack.c.l.b16 %v2077
      %v2366 = vunpack.c.l.b16 %v2078
      %v2367 = vunpack.c.l.b16 %v2079
      %v2368 = vunpack.c.l.b16 %v2080
      %v2369 = vunpack.c.l.b16 %v2081
      %v2370 = vunpack.c.l.b16 %v2082
      %v2371 = vpack.c.b16 %v2228, %v2227
      %v2372 = vpack.c.b16 %v2230, %v2229
      %v2373 = vpack.c.b16 %v2232, %v2231
      %v2374 = vpack.c.b16 %v2234, %v2233
      %v2375 = vpack.c.b16 %v2236, %v2235
      %v2376 = vpack.c.b16 %v2238, %v2237
      %v2377 = vpack.c.b16 %v2240, %v2239
      %v2378 = vpack.c.b16 %v2242, %v2241
      %v2379 = vpack.c.b16 %v2244, %v2243
      %v2380 = vpack.c.b16 %v2246, %v2245
      %v2381 = vpack.c.b16 %v2248, %v2247
      %v2382 = vpack.c.b16 %v2250, %v2249
      %v2383 = vpack.c.b16 %v2252, %v2251
      %v2384 = vpack.c.b16 %v2254, %v2253
      %v2385 = vpack.c.b16 %v2256, %v2255
      %v2386 = vpack.c.b16 %v2258, %v2257
      %v2387 = vpack.c.b16 %v2260, %v2259
      %v2388 = vpack.c.b16 %v2262, %v2261
      %v2389 = vpack.c.b16 %v2264, %v2263
      %v2390 = vpack.c.b16 %v2266, %v2265
      %v2391 = vpack.c.b16 %v2268, %v2267
      %v2392 = vpack.c.b16 %v2270, %v2269
      %v2393 = vpack.c.b16 %v2272, %v2271
      %v2394 = vpack.c.b16 %v2274, %v2273
      %v2395 = vpack.c.b16 %v2276, %v2275
      %v2396 = vpack.c.b16 %v2278, %v2277
      %v2397 = vpack.c.b16 %v2280, %v2279
      %v2398 = vpack.c.b16 %v2282, %v2281
      %v2399 = vpack.c.b16 %v2284, %v2283
      %v2400 = vpack.c.b16 %v2286, %v2285
      %v2401 = vpack.c.b16 %v2288, %v2287
      %v2402 = vpack.c.b16 %v2290, %v2289
      %v2403 = vpack.c.b16 %v2292, %v2291
      %v2404 = vpack.c.b16 %v2294, %v2293
      %v2405 = vpack.c.b16 %v2296, %v2295
      %v2406 = vpack.c.b16 %v2298, %v2297
      %v2407 = vpack.c.b16 %v2300, %v2299
      %v2408 = vpack.c.b16 %v2302, %v2301
      %v2409 = vpack.c.b16 %v2304, %v2303
      %v2410 = vpack.c.b16 %v2306, %v2305
      %v2411 = vpack.c.b16 %v2308, %v2307
      %v2412 = vpack.c.b16 %v2310, %v2309
      %v2413 = vpack.c.b16 %v2312, %v2311
      %v2414 = vpack.c.b16 %v2314, %v2313
      %v2415 = vpack.c.b16 %v2316, %v2315
      %v2416 = vpack.c.b16 %v2318, %v2317
      %v2417 = vpack.c.b16 %v2320, %v2319
      %v2418 = vpack.c.b16 %v2322, %v2321
      %v2419 = vpack.c.b16 %v2324, %v2323
      %v2420 = vpack.c.b16 %v2326, %v2325
      %v2421 = vpack.c.b16 %v2328, %v2327
      %v2422 = vpack.c.b16 %v2330, %v2329
      %v2423 = vpack.c.b16 %v2332, %v2331
      %v2424 = vpack.c.b16 %v2334, %v2333
      %v2425 = vpack.c.b16 %v2336, %v2335
      %v2426 = vpack.c.b16 %v2338, %v2337
      %v2427 = vpack.c.b16 %v2340, %v2339
      %v2428 = vpack.c.b16 %v2342, %v2341
      %v2429 = vpack.c.b16 %v2344, %v2343
      %v2430 = vpack.c.b16 %v2346, %v2345
      %v2431 = vpack.c.b16 %v2348, %v2347
      %v2432 = vpack.c.b16 %v2350, %v2349
      %v2433 = vpack.c.b16 %v2352, %v2351
      %v2434 = vpack.c.b16 %v2354, %v2353
      %v2435 = vpack.c.b16 %v2356, %v2355
      %v2436 = vpack.c.b16 %v2358, %v2357
      %v2437 = vpack.c.b16 %v2360, %v2359
      %v2438 = vpack.c.b16 %v2362, %v2361
      %v2439 = vpack.c.b16 %v2364, %v2363
      %v2440 = vpack.c.b16 %v2366, %v2365
      %v2441 = vpack.c.b16 %v2368, %v2367
      %v2442 = vpack.c.b16 %v2370, %v2369
      %2515 = vmatpush.bf16.msra.mxu0 %v2378
      %2516 = vmatpush.bf16.msra.mxu0 %v2377
      %2517 = vmatpush.bf16.msra.mxu0 %v2376
      %2518 = vmatpush.bf16.msra.mxu0 %v2375
      %2519 = vmatpush.bf16.msra.mxu0 %v2374
      %2520 = vmatpush.bf16.msra.mxu0 %v2373
      %2521 = vmatpush.bf16.msra.mxu0 %v2372
      %2522 = vmatpush.bf16.msra.mxu0 %v2371
      %2523 = vmatmul.bf16.gmra.mxu0 %v609
      %v2524 = vpop.f32.mrf.mxu0
      %v2525 = vadd.f32 0.0, %v2524
      %v2526 = vpop.f32.mrf.mxu0
      %v2527 = vadd.f32 0.0, %v2526
      %2528 = vmatmul.bf16.gmra.mxu0 %v610
      %v2529 = vpop.f32.mrf.mxu0
      %v2530 = vadd.f32 0.0, %v2529
      %v2531 = vpop.f32.mrf.mxu0
      %v2532 = vadd.f32 0.0, %v2531
      %2533 = vmatmul.bf16.gmra.mxu0 %v611
      %v2534 = vpop.f32.mrf.mxu0
      %v2535 = vadd.f32 0.0, %v2534
      %v2536 = vpop.f32.mrf.mxu0
      %v2537 = vadd.f32 0.0, %v2536
      %2538 = vmatmul.bf16.gmra.mxu0 %v612
      %v2539 = vpop.f32.mrf.mxu0
      %v2540 = vadd.f32 0.0, %v2539
      %v2541 = vpop.f32.mrf.mxu0
      %v2542 = vadd.f32 0.0, %v2541
      %2543 = vmatmul.bf16.gmra.mxu0 %v613
      %v2544 = vpop.f32.mrf.mxu0
      %v2545 = vadd.f32 0.0, %v2544
      %v2546 = vpop.f32.mrf.mxu0
      %v2547 = vadd.f32 0.0, %v2546
      %2548 = vmatmul.bf16.gmra.mxu0 %v614
      %v2549 = vpop.f32.mrf.mxu0
      %v2550 = vadd.f32 0.0, %v2549
      %v2551 = vpop.f32.mrf.mxu0
      %v2552 = vadd.f32 0.0, %v2551
      %2553 = vmatmul.bf16.gmra.mxu0 %v615
      %v2554 = vpop.f32.mrf.mxu0
      %v2555 = vadd.f32 0.0, %v2554
      %v2556 = vpop.f32.mrf.mxu0
      %v2557 = vadd.f32 0.0, %v2556
      %2558 = vmatmul.bf16.gmra.mxu0 %v616
      %v2559 = vpop.f32.mrf.mxu0
      %v2560 = vadd.f32 0.0, %v2559
      %v2561 = vpop.f32.mrf.mxu0
      %v2562 = vadd.f32 0.0, %v2561
      %2563 = vmatmul.bf16.gmra.mxu0 %v617
      %v2564 = vpop.f32.mrf.mxu0
      %v2565 = vadd.f32 0.0, %v2564
      %v2566 = vpop.f32.mrf.mxu0
      %v2567 = vadd.f32 0.0, %v2566
      %2568 = vmatmul.bf16.gmra.mxu0 %v618
      %v2569 = vpop.f32.mrf.mxu0
      %v2570 = vadd.f32 0.0, %v2569
      %v2571 = vpop.f32.mrf.mxu0
      %v2572 = vadd.f32 0.0, %v2571
      %2573 = vmatmul.bf16.gmra.mxu0 %v619
      %v2574 = vpop.f32.mrf.mxu0
      %v2575 = vadd.f32 0.0, %v2574
      %v2576 = vpop.f32.mrf.mxu0
      %v2577 = vadd.f32 0.0, %v2576
      %2578 = vmatmul.bf16.gmra.mxu0 %v620
      %v2579 = vpop.f32.mrf.mxu0
      %v2580 = vadd.f32 0.0, %v2579
      %v2581 = vpop.f32.mrf.mxu0
      %v2582 = vadd.f32 0.0, %v2581
      %2583 = vmatmul.bf16.gmra.mxu0 %v621
      %v2584 = vpop.f32.mrf.mxu0
      %v2585 = vadd.f32 0.0, %v2584
      %v2586 = vpop.f32.mrf.mxu0
      %v2587 = vadd.f32 0.0, %v2586
      %2588 = vmatmul.bf16.gmra.mxu0 %v622
      %v2589 = vpop.f32.mrf.mxu0
      %v2590 = vadd.f32 0.0, %v2589
      %v2591 = vpop.f32.mrf.mxu0
      %v2592 = vadd.f32 0.0, %v2591
      %2593 = vmatmul.bf16.gmra.mxu0 %v623
      %v2594 = vpop.f32.mrf.mxu0
      %v2595 = vadd.f32 0.0, %v2594
      %v2596 = vpop.f32.mrf.mxu0
      %v2597 = vadd.f32 0.0, %v2596
      %2598 = vmatmul.bf16.gmra.mxu0 %v624
      %v2599 = vpop.f32.mrf.mxu0
      %v2600 = vadd.f32 0.0, %v2599
      %v2601 = vpop.f32.mrf.mxu0
      %v2602 = vadd.f32 0.0, %v2601
      %2603 = vdwg.mxu0
      %2604 = vmatpush.bf16.msra.mxu0 %v2386
      %2605 = vmatpush.bf16.msra.mxu0 %v2385
      %2606 = vmatpush.bf16.msra.mxu0 %v2384
      %2607 = vmatpush.bf16.msra.mxu0 %v2383
      %2608 = vmatpush.bf16.msra.mxu0 %v2382
      %2609 = vmatpush.bf16.msra.mxu0 %v2381
      %2610 = vmatpush.bf16.msra.mxu0 %v2380
      %2611 = vmatpush.bf16.msra.mxu0 %v2379
      %2612 = vmatmul.bf16.gmra.mxu0 %v701
      %v2613 = vpop.f32.mrf.mxu0
      %v2614 = vadd.f32 %v2525, %v2613
      %v2615 = vpop.f32.mrf.mxu0
      %v2616 = vadd.f32 %v2527, %v2615
      %2617 = vmatmul.bf16.gmra.mxu0 %v713
      %v2618 = vpop.f32.mrf.mxu0
      %v2619 = vadd.f32 %v2530, %v2618
      %v2620 = vpop.f32.mrf.mxu0
      %v2621 = vadd.f32 %v2532, %v2620
      %2622 = vmatmul.bf16.gmra.mxu0 %v725
      %v2623 = vpop.f32.mrf.mxu0
      %v2624 = vadd.f32 %v2535, %v2623
      %v2625 = vpop.f32.mrf.mxu0
      %v2626 = vadd.f32 %v2537, %v2625
      %2627 = vmatmul.bf16.gmra.mxu0 %v737
      %v2628 = vpop.f32.mrf.mxu0
      %v2629 = vadd.f32 %v2540, %v2628
      %v2630 = vpop.f32.mrf.mxu0
      %v2631 = vadd.f32 %v2542, %v2630
      %2632 = vmatmul.bf16.gmra.mxu0 %v749
      %v2633 = vpop.f32.mrf.mxu0
      %v2634 = vadd.f32 %v2545, %v2633
      %v2635 = vpop.f32.mrf.mxu0
      %v2636 = vadd.f32 %v2547, %v2635
      %2637 = vmatmul.bf16.gmra.mxu0 %v761
      %v2638 = vpop.f32.mrf.mxu0
      %v2639 = vadd.f32 %v2550, %v2638
      %v2640 = vpop.f32.mrf.mxu0
      %v2641 = vadd.f32 %v2552, %v2640
      %2642 = vmatmul.bf16.gmra.mxu0 %v773
      %v2643 = vpop.f32.mrf.mxu0
      %v2644 = vadd.f32 %v2555, %v2643
      %v2645 = vpop.f32.mrf.mxu0
      %v2646 = vadd.f32 %v2557, %v2645
      %2647 = vmatmul.bf16.gmra.mxu0 %v785
      %v2648 = vpop.f32.mrf.mxu0
      %v2649 = vadd.f32 %v2560, %v2648
      %v2650 = vpop.f32.mrf.mxu0
      %v2651 = vadd.f32 %v2562, %v2650
      %2652 = vmatmul.bf16.gmra.mxu0 %v797
      %v2653 = vpop.f32.mrf.mxu0
      %v2654 = vadd.f32 %v2565, %v2653
      %v2655 = vpop.f32.mrf.mxu0
      %v2656 = vadd.f32 %v2567, %v2655
      %2657 = vmatmul.bf16.gmra.mxu0 %v809
      %v2658 = vpop.f32.mrf.mxu0
      %v2659 = vadd.f32 %v2570, %v2658
      %v2660 = vpop.f32.mrf.mxu0
      %v2661 = vadd.f32 %v2572, %v2660
      %2662 = vmatmul.bf16.gmra.mxu0 %v821
      %v2663 = vpop.f32.mrf.mxu0
      %v2664 = vadd.f32 %v2575, %v2663
      %v2665 = vpop.f32.mrf.mxu0
      %v2666 = vadd.f32 %v2577, %v2665
      %2667 = vmatmul.bf16.gmra.mxu0 %v833
      %v2668 = vpop.f32.mrf.mxu0
      %v2669 = vadd.f32 %v2580, %v2668
      %v2670 = vpop.f32.mrf.mxu0
      %v2671 = vadd.f32 %v2582, %v2670
      %2672 = vmatmul.bf16.gmra.mxu0 %v845
      %v2673 = vpop.f32.mrf.mxu0
      %v2674 = vadd.f32 %v2585, %v2673
      %v2675 = vpop.f32.mrf.mxu0
      %v2676 = vadd.f32 %v2587, %v2675
      %2677 = vmatmul.bf16.gmra.mxu0 %v857
      %v2678 = vpop.f32.mrf.mxu0
      %v2679 = vadd.f32 %v2590, %v2678
      %v2680 = vpop.f32.mrf.mxu0
      %v2681 = vadd.f32 %v2592, %v2680
      %2682 = vmatmul.bf16.gmra.mxu0 %v869
      %v2683 = vpop.f32.mrf.mxu0
      %v2684 = vadd.f32 %v2595, %v2683
      %v2685 = vpop.f32.mrf.mxu0
      %v2686 = vadd.f32 %v2597, %v2685
      %2687 = vmatmul.bf16.gmra.mxu0 %v881
      %v2688 = vpop.f32.mrf.mxu0
      %v2689 = vadd.f32 %v2600, %v2688
      %v2690 = vpop.f32.mrf.mxu0
      %v2691 = vadd.f32 %v2602, %v2690
      %2692 = vdwg.mxu0
      %2693 = vmatpush.bf16.msra.mxu0 %v2394
      %2694 = vmatpush.bf16.msra.mxu0 %v2393
      %2695 = vmatpush.bf16.msra.mxu0 %v2392
      %2696 = vmatpush.bf16.msra.mxu0 %v2391
      %2697 = vmatpush.bf16.msra.mxu0 %v2390
      %2698 = vmatpush.bf16.msra.mxu0 %v2389
      %2699 = vmatpush.bf16.msra.mxu0 %v2388
      %2700 = vmatpush.bf16.msra.mxu0 %v2387
      %2701 = vmatmul.bf16.gmra.mxu0 %v949
      %v2702 = vpop.f32.mrf.mxu0
      %v2703 = vadd.f32 %v2614, %v2702
      %v2704 = vpop.f32.mrf.mxu0
      %v2705 = vadd.f32 %v2616, %v2704
      %2706 = vmatmul.bf16.gmra.mxu0 %v952
      %v2707 = vpop.f32.mrf.mxu0
      %v2708 = vadd.f32 %v2619, %v2707
      %v2709 = vpop.f32.mrf.mxu0
      %v2710 = vadd.f32 %v2621, %v2709
      %2711 = vmatmul.bf16.gmra.mxu0 %v955
      %v2712 = vpop.f32.mrf.mxu0
      %v2713 = vadd.f32 %v2624, %v2712
      %v2714 = vpop.f32.mrf.mxu0
      %v2715 = vadd.f32 %v2626, %v2714
      %2716 = vmatmul.bf16.gmra.mxu0 %v958
      %v2717 = vpop.f32.mrf.mxu0
      %v2718 = vadd.f32 %v2629, %v2717
      %v2719 = vpop.f32.mrf.mxu0
      %v2720 = vadd.f32 %v2631, %v2719
      %2721 = vmatmul.bf16.gmra.mxu0 %v961
      %v2722 = vpop.f32.mrf.mxu0
      %v2723 = vadd.f32 %v2634, %v2722
      %v2724 = vpop.f32.mrf.mxu0
      %v2725 = vadd.f32 %v2636, %v2724
      %2726 = vmatmul.bf16.gmra.mxu0 %v964
      %v2727 = vpop.f32.mrf.mxu0
      %v2728 = vadd.f32 %v2639, %v2727
      %v2729 = vpop.f32.mrf.mxu0
      %v2730 = vadd.f32 %v2641, %v2729
      %2731 = vmatmul.bf16.gmra.mxu0 %v967
      %v2732 = vpop.f32.mrf.mxu0
      %v2733 = vadd.f32 %v2644, %v2732
      %v2734 = vpop.f32.mrf.mxu0
      %v2735 = vadd.f32 %v2646, %v2734
      %2736 = vmatmul.bf16.gmra.mxu0 %v970
      %v2737 = vpop.f32.mrf.mxu0
      %v2738 = vadd.f32 %v2649, %v2737
      %v2739 = vpop.f32.mrf.mxu0
      %v2740 = vadd.f32 %v2651, %v2739
      %2741 = vmatmul.bf16.gmra.mxu0 %v973
      %v2742 = vpop.f32.mrf.mxu0
      %v2743 = vadd.f32 %v2654, %v2742
      %v2744 = vpop.f32.mrf.mxu0
      %v2745 = vadd.f32 %v2656, %v2744
      %2746 = vmatmul.bf16.gmra.mxu0 %v976
      %v2747 = vpop.f32.mrf.mxu0
      %v2748 = vadd.f32 %v2659, %v2747
      %v2749 = vpop.f32.mrf.mxu0
      %v2750 = vadd.f32 %v2661, %v2749
      %2751 = vmatmul.bf16.gmra.mxu0 %v979
      %v2752 = vpop.f32.mrf.mxu0
      %v2753 = vadd.f32 %v2664, %v2752
      %v2754 = vpop.f32.mrf.mxu0
      %v2755 = vadd.f32 %v2666, %v2754
      %2756 = vmatmul.bf16.gmra.mxu0 %v982
      %v2757 = vpop.f32.mrf.mxu0
      %v2758 = vadd.f32 %v2669, %v2757
      %v2759 = vpop.f32.mrf.mxu0
      %v2760 = vadd.f32 %v2671, %v2759
      %2761 = vmatmul.bf16.gmra.mxu0 %v985
      %v2762 = vpop.f32.mrf.mxu0
      %v2763 = vadd.f32 %v2674, %v2762
      %v2764 = vpop.f32.mrf.mxu0
      %v2765 = vadd.f32 %v2676, %v2764
      %2766 = vmatmul.bf16.gmra.mxu0 %v988
      %v2767 = vpop.f32.mrf.mxu0
      %v2768 = vadd.f32 %v2679, %v2767
      %v2769 = vpop.f32.mrf.mxu0
      %v2770 = vadd.f32 %v2681, %v2769
      %2771 = vmatmul.bf16.gmra.mxu0 %v991
      %v2772 = vpop.f32.mrf.mxu0
      %v2773 = vadd.f32 %v2684, %v2772
      %v2774 = vpop.f32.mrf.mxu0
      %v2775 = vadd.f32 %v2686, %v2774
      %2776 = vmatmul.bf16.gmra.mxu0 %v994
      %v2777 = vpop.f32.mrf.mxu0
      %v2778 = vadd.f32 %v2689, %v2777
      %v2779 = vpop.f32.mrf.mxu0
      %v2780 = vadd.f32 %v2691, %v2779
      %2781 = vdwg.mxu0
      %2782 = vmatpush.bf16.msra.mxu0 %v2402
      %2783 = vmatpush.bf16.msra.mxu0 %v2401
      %2784 = vmatpush.bf16.msra.mxu0 %v2400
      %2785 = vmatpush.bf16.msra.mxu0 %v2399
      %2786 = vmatpush.bf16.msra.mxu0 %v2398
      %2787 = vmatpush.bf16.msra.mxu0 %v2397
      %2788 = vmatpush.bf16.msra.mxu0 %v2396
      %2789 = vmatpush.bf16.msra.mxu0 %v2395
      %2790 = vmatmul.bf16.gmra.mxu0 %v1075
      %v2791 = vpop.f32.mrf.mxu0
      %v2792 = vadd.f32 %v2703, %v2791
      %v2793 = vpop.f32.mrf.mxu0
      %v2794 = vadd.f32 %v2705, %v2793
      %2795 = vmatmul.bf16.gmra.mxu0 %v1076
      %v2796 = vpop.f32.mrf.mxu0
      %v2797 = vadd.f32 %v2708, %v2796
      %v2798 = vpop.f32.mrf.mxu0
      %v2799 = vadd.f32 %v2710, %v2798
      %2800 = vmatmul.bf16.gmra.mxu0 %v1077
      %v2801 = vpop.f32.mrf.mxu0
      %v2802 = vadd.f32 %v2713, %v2801
      %v2803 = vpop.f32.mrf.mxu0
      %v2804 = vadd.f32 %v2715, %v2803
      %2805 = vmatmul.bf16.gmra.mxu0 %v1078
      %v2806 = vpop.f32.mrf.mxu0
      %v2807 = vadd.f32 %v2718, %v2806
      %v2808 = vpop.f32.mrf.mxu0
      %v2809 = vadd.f32 %v2720, %v2808
      %2810 = vmatmul.bf16.gmra.mxu0 %v1079
      %v2811 = vpop.f32.mrf.mxu0
      %v2812 = vadd.f32 %v2723, %v2811
      %v2813 = vpop.f32.mrf.mxu0
      %v2814 = vadd.f32 %v2725, %v2813
      %2815 = vmatmul.bf16.gmra.mxu0 %v1080
      %v2816 = vpop.f32.mrf.mxu0
      %v2817 = vadd.f32 %v2728, %v2816
      %v2818 = vpop.f32.mrf.mxu0
      %v2819 = vadd.f32 %v2730, %v2818
      %2820 = vmatmul.bf16.gmra.mxu0 %v1081
      %v2821 = vpop.f32.mrf.mxu0
      %v2822 = vadd.f32 %v2733, %v2821
      %v2823 = vpop.f32.mrf.mxu0
      %v2824 = vadd.f32 %v2735, %v2823
      %2825 = vmatmul.bf16.gmra.mxu0 %v1082
      %v2826 = vpop.f32.mrf.mxu0
      %v2827 = vadd.f32 %v2738, %v2826
      %v2828 = vpop.f32.mrf.mxu0
      %v2829 = vadd.f32 %v2740, %v2828
      %2830 = vmatmul.bf16.gmra.mxu0 %v1083
      %v2831 = vpop.f32.mrf.mxu0
      %v2832 = vadd.f32 %v2743, %v2831
      %v2833 = vpop.f32.mrf.mxu0
      %v2834 = vadd.f32 %v2745, %v2833
      %2835 = vmatmul.bf16.gmra.mxu0 %v1084
      %v2836 = vpop.f32.mrf.mxu0
      %v2837 = vadd.f32 %v2748, %v2836
      %v2838 = vpop.f32.mrf.mxu0
      %v2839 = vadd.f32 %v2750, %v2838
      %2840 = vmatmul.bf16.gmra.mxu0 %v1085
      %v2841 = vpop.f32.mrf.mxu0
      %v2842 = vadd.f32 %v2753, %v2841
      %v2843 = vpop.f32.mrf.mxu0
      %v2844 = vadd.f32 %v2755, %v2843
      %2845 = vmatmul.bf16.gmra.mxu0 %v1086
      %v2846 = vpop.f32.mrf.mxu0
      %v2847 = vadd.f32 %v2758, %v2846
      %v2848 = vpop.f32.mrf.mxu0
      %v2849 = vadd.f32 %v2760, %v2848
      %2850 = vmatmul.bf16.gmra.mxu0 %v1087
      %v2851 = vpop.f32.mrf.mxu0
      %v2852 = vadd.f32 %v2763, %v2851
      %v2853 = vpop.f32.mrf.mxu0
      %v2854 = vadd.f32 %v2765, %v2853
      %2855 = vmatmul.bf16.gmra.mxu0 %v1088
      %v2856 = vpop.f32.mrf.mxu0
      %v2857 = vadd.f32 %v2768, %v2856
      %v2858 = vpop.f32.mrf.mxu0
      %v2859 = vadd.f32 %v2770, %v2858
      %2860 = vmatmul.bf16.gmra.mxu0 %v1089
      %v2861 = vpop.f32.mrf.mxu0
      %v2862 = vadd.f32 %v2773, %v2861
      %v2863 = vpop.f32.mrf.mxu0
      %v2864 = vadd.f32 %v2775, %v2863
      %2865 = vmatmul.bf16.gmra.mxu0 %v1090
      %v2866 = vpop.f32.mrf.mxu0
      %v2867 = vadd.f32 %v2778, %v2866
      %v2868 = vpop.f32.mrf.mxu0
      %v2869 = vadd.f32 %v2780, %v2868
      %2870 = vdwg.mxu0
      %2871 = vmatpush.bf16.msra.mxu0 %v2410
      %2872 = vmatpush.bf16.msra.mxu0 %v2409
      %2873 = vmatpush.bf16.msra.mxu0 %v2408
      %2874 = vmatpush.bf16.msra.mxu0 %v2407
      %2875 = vmatpush.bf16.msra.mxu0 %v2406
      %2876 = vmatpush.bf16.msra.mxu0 %v2405
      %2877 = vmatpush.bf16.msra.mxu0 %v2404
      %2878 = vmatpush.bf16.msra.mxu0 %v2403
      %2879 = vmatmul.bf16.gmra.mxu0 %v1166
      %v2880 = vpop.f32.mrf.mxu0
      %v2881 = vadd.f32 %v2792, %v2880
      %v2882 = vpop.f32.mrf.mxu0
      %v2883 = vadd.f32 %v2794, %v2882
      %2884 = vmatmul.bf16.gmra.mxu0 %v1178
      %v2885 = vpop.f32.mrf.mxu0
      %v2886 = vadd.f32 %v2797, %v2885
      %v2887 = vpop.f32.mrf.mxu0
      %v2888 = vadd.f32 %v2799, %v2887
      %2889 = vmatmul.bf16.gmra.mxu0 %v1190
      %v2890 = vpop.f32.mrf.mxu0
      %v2891 = vadd.f32 %v2802, %v2890
      %v2892 = vpop.f32.mrf.mxu0
      %v2893 = vadd.f32 %v2804, %v2892
      %2894 = vmatmul.bf16.gmra.mxu0 %v1202
      %v2895 = vpop.f32.mrf.mxu0
      %v2896 = vadd.f32 %v2807, %v2895
      %v2897 = vpop.f32.mrf.mxu0
      %v2898 = vadd.f32 %v2809, %v2897
      %2899 = vmatmul.bf16.gmra.mxu0 %v1214
      %v2900 = vpop.f32.mrf.mxu0
      %v2901 = vadd.f32 %v2812, %v2900
      %v2902 = vpop.f32.mrf.mxu0
      %v2903 = vadd.f32 %v2814, %v2902
      %2904 = vmatmul.bf16.gmra.mxu0 %v1226
      %v2905 = vpop.f32.mrf.mxu0
      %v2906 = vadd.f32 %v2817, %v2905
      %v2907 = vpop.f32.mrf.mxu0
      %v2908 = vadd.f32 %v2819, %v2907
      %2909 = vmatmul.bf16.gmra.mxu0 %v1238
      %v2910 = vpop.f32.mrf.mxu0
      %v2911 = vadd.f32 %v2822, %v2910
      %v2912 = vpop.f32.mrf.mxu0
      %v2913 = vadd.f32 %v2824, %v2912
      %2914 = vmatmul.bf16.gmra.mxu0 %v1250
      %v2915 = vpop.f32.mrf.mxu0
      %v2916 = vadd.f32 %v2827, %v2915
      %v2917 = vpop.f32.mrf.mxu0
      %v2918 = vadd.f32 %v2829, %v2917
      %2919 = vmatmul.bf16.gmra.mxu0 %v1262
      %v2920 = vpop.f32.mrf.mxu0
      %v2921 = vadd.f32 %v2832, %v2920
      %v2922 = vpop.f32.mrf.mxu0
      %v2923 = vadd.f32 %v2834, %v2922
      %2924 = vmatmul.bf16.gmra.mxu0 %v1274
      %v2925 = vpop.f32.mrf.mxu0
      %v2926 = vadd.f32 %v2837, %v2925
      %v2927 = vpop.f32.mrf.mxu0
      %v2928 = vadd.f32 %v2839, %v2927
      %2929 = vmatmul.bf16.gmra.mxu0 %v1286
      %v2930 = vpop.f32.mrf.mxu0
      %v2931 = vadd.f32 %v2842, %v2930
      %v2932 = vpop.f32.mrf.mxu0
      %v2933 = vadd.f32 %v2844, %v2932
      %2934 = vmatmul.bf16.gmra.mxu0 %v1298
      %v2935 = vpop.f32.mrf.mxu0
      %v2936 = vadd.f32 %v2847, %v2935
      %v2937 = vpop.f32.mrf.mxu0
      %v2938 = vadd.f32 %v2849, %v2937
      %2939 = vmatmul.bf16.gmra.mxu0 %v1310
      %v2940 = vpop.f32.mrf.mxu0
      %v2941 = vadd.f32 %v2852, %v2940
      %v2942 = vpop.f32.mrf.mxu0
      %v2943 = vadd.f32 %v2854, %v2942
      %2944 = vmatmul.bf16.gmra.mxu0 %v1322
      %v2945 = vpop.f32.mrf.mxu0
      %v2946 = vadd.f32 %v2857, %v2945
      %v2947 = vpop.f32.mrf.mxu0
      %v2948 = vadd.f32 %v2859, %v2947
      %2949 = vmatmul.bf16.gmra.mxu0 %v1334
      %v2950 = vpop.f32.mrf.mxu0
      %v2951 = vadd.f32 %v2862, %v2950
      %v2952 = vpop.f32.mrf.mxu0
      %v2953 = vadd.f32 %v2864, %v2952
      %2954 = vmatmul.bf16.gmra.mxu0 %v1346
      %v2955 = vpop.f32.mrf.mxu0
      %v2956 = vadd.f32 %v2867, %v2955
      %v2957 = vpop.f32.mrf.mxu0
      %v2958 = vadd.f32 %v2869, %v2957
      %2959 = vdwg.mxu0
      %2960 = vmatpush.bf16.msra.mxu0 %v2418
      %2961 = vmatpush.bf16.msra.mxu0 %v2417
      %2962 = vmatpush.bf16.msra.mxu0 %v2416
      %2963 = vmatpush.bf16.msra.mxu0 %v2415
      %2964 = vmatpush.bf16.msra.mxu0 %v2414
      %2965 = vmatpush.bf16.msra.mxu0 %v2413
      %2966 = vmatpush.bf16.msra.mxu0 %v2412
      %2967 = vmatpush.bf16.msra.mxu0 %v2411
      %2968 = vmatmul.bf16.gmra.mxu0 %v1413
      %v2969 = vpop.f32.mrf.mxu0
      %v2970 = vadd.f32 %v2881, %v2969
      %v2971 = vpop.f32.mrf.mxu0
      %v2972 = vadd.f32 %v2883, %v2971
      %2973 = vmatmul.bf16.gmra.mxu0 %v1416
      %v2974 = vpop.f32.mrf.mxu0
      %v2975 = vadd.f32 %v2886, %v2974
      %v2976 = vpop.f32.mrf.mxu0
      %v2977 = vadd.f32 %v2888, %v2976
      %2978 = vmatmul.bf16.gmra.mxu0 %v1419
      %v2979 = vpop.f32.mrf.mxu0
      %v2980 = vadd.f32 %v2891, %v2979
      %v2981 = vpop.f32.mrf.mxu0
      %v2982 = vadd.f32 %v2893, %v2981
      %2983 = vmatmul.bf16.gmra.mxu0 %v1422
      %v2984 = vpop.f32.mrf.mxu0
      %v2985 = vadd.f32 %v2896, %v2984
      %v2986 = vpop.f32.mrf.mxu0
      %v2987 = vadd.f32 %v2898, %v2986
      %2988 = vmatmul.bf16.gmra.mxu0 %v1425
      %v2989 = vpop.f32.mrf.mxu0
      %v2990 = vadd.f32 %v2901, %v2989
      %v2991 = vpop.f32.mrf.mxu0
      %v2992 = vadd.f32 %v2903, %v2991
      %2993 = vmatmul.bf16.gmra.mxu0 %v1428
      %v2994 = vpop.f32.mrf.mxu0
      %v2995 = vadd.f32 %v2906, %v2994
      %v2996 = vpop.f32.mrf.mxu0
      %v2997 = vadd.f32 %v2908, %v2996
      %2998 = vmatmul.bf16.gmra.mxu0 %v1431
      %v2999 = vpop.f32.mrf.mxu0
      %v3000 = vadd.f32 %v2911, %v2999
      %v3001 = vpop.f32.mrf.mxu0
      %v3002 = vadd.f32 %v2913, %v3001
      %3003 = vmatmul.bf16.gmra.mxu0 %v1434
      %v3004 = vpop.f32.mrf.mxu0
      %v3005 = vadd.f32 %v2916, %v3004
      %v3006 = vpop.f32.mrf.mxu0
      %v3007 = vadd.f32 %v2918, %v3006
      %3008 = vmatmul.bf16.gmra.mxu0 %v1437
      %v3009 = vpop.f32.mrf.mxu0
      %v3010 = vadd.f32 %v2921, %v3009
      %v3011 = vpop.f32.mrf.mxu0
      %v3012 = vadd.f32 %v2923, %v3011
      %3013 = vmatmul.bf16.gmra.mxu0 %v1440
      %v3014 = vpop.f32.mrf.mxu0
      %v3015 = vadd.f32 %v2926, %v3014
      %v3016 = vpop.f32.mrf.mxu0
      %v3017 = vadd.f32 %v2928, %v3016
      %3018 = vmatmul.bf16.gmra.mxu0 %v1443
      %v3019 = vpop.f32.mrf.mxu0
      %v3020 = vadd.f32 %v2931, %v3019
      %v3021 = vpop.f32.mrf.mxu0
      %v3022 = vadd.f32 %v2933, %v3021
      %3023 = vmatmul.bf16.gmra.mxu0 %v1446
      %v3024 = vpop.f32.mrf.mxu0
      %v3025 = vadd.f32 %v2936, %v3024
      %v3026 = vpop.f32.mrf.mxu0
      %v3027 = vadd.f32 %v2938, %v3026
      %3028 = vmatmul.bf16.gmra.mxu0 %v1449
      %v3029 = vpop.f32.mrf.mxu0
      %v3030 = vadd.f32 %v2941, %v3029
      %v3031 = vpop.f32.mrf.mxu0
      %v3032 = vadd.f32 %v2943, %v3031
      %3033 = vmatmul.bf16.gmra.mxu0 %v1452
      %v3034 = vpop.f32.mrf.mxu0
      %v3035 = vadd.f32 %v2946, %v3034
      %v3036 = vpop.f32.mrf.mxu0
      %v3037 = vadd.f32 %v2948, %v3036
      %3038 = vmatmul.bf16.gmra.mxu0 %v1455
      %v3039 = vpop.f32.mrf.mxu0
      %v3040 = vadd.f32 %v2951, %v3039
      %v3041 = vpop.f32.mrf.mxu0
      %v3042 = vadd.f32 %v2953, %v3041
      %3043 = vmatmul.bf16.gmra.mxu0 %v1458
      %v3044 = vpop.f32.mrf.mxu0
      %v3045 = vadd.f32 %v2956, %v3044
      %v3046 = vpop.f32.mrf.mxu0
      %v3047 = vadd.f32 %v2958, %v3046
      %3048 = vdwg.mxu0
      %3049 = vmatpush.bf16.msra.mxu0 %v2426
      %3050 = vmatpush.bf16.msra.mxu0 %v2425
      %3051 = vmatpush.bf16.msra.mxu0 %v2424
      %3052 = vmatpush.bf16.msra.mxu0 %v2423
      %3053 = vmatpush.bf16.msra.mxu0 %v2422
      %3054 = vmatpush.bf16.msra.mxu0 %v2421
      %3055 = vmatpush.bf16.msra.mxu0 %v2420
      %3056 = vmatpush.bf16.msra.mxu0 %v2419
      %3057 = vmatmul.bf16.gmra.mxu0 %v1539
      %v3058 = vpop.f32.mrf.mxu0
      %v3059 = vadd.f32 %v2970, %v3058
      %v3060 = vpop.f32.mrf.mxu0
      %v3061 = vadd.f32 %v2972, %v3060
      %3062 = vmatmul.bf16.gmra.mxu0 %v1540
      %v3063 = vpop.f32.mrf.mxu0
      %v3064 = vadd.f32 %v2975, %v3063
      %v3065 = vpop.f32.mrf.mxu0
      %v3066 = vadd.f32 %v2977, %v3065
      %3067 = vmatmul.bf16.gmra.mxu0 %v1541
      %v3068 = vpop.f32.mrf.mxu0
      %v3069 = vadd.f32 %v2980, %v3068
      %v3070 = vpop.f32.mrf.mxu0
      %v3071 = vadd.f32 %v2982, %v3070
      %3072 = vmatmul.bf16.gmra.mxu0 %v1542
      %v3073 = vpop.f32.mrf.mxu0
      %v3074 = vadd.f32 %v2985, %v3073
      %v3075 = vpop.f32.mrf.mxu0
      %v3076 = vadd.f32 %v2987, %v3075
      %3077 = vmatmul.bf16.gmra.mxu0 %v1543
      %v3078 = vpop.f32.mrf.mxu0
      %v3079 = vadd.f32 %v2990, %v3078
      %v3080 = vpop.f32.mrf.mxu0
      %v3081 = vadd.f32 %v2992, %v3080
      %3082 = vmatmul.bf16.gmra.mxu0 %v1544
      %v3083 = vpop.f32.mrf.mxu0
      %v3084 = vadd.f32 %v2995, %v3083
      %v3085 = vpop.f32.mrf.mxu0
      %v3086 = vadd.f32 %v2997, %v3085
      %3087 = vmatmul.bf16.gmra.mxu0 %v1545
      %v3088 = vpop.f32.mrf.mxu0
      %v3089 = vadd.f32 %v3000, %v3088
      %v3090 = vpop.f32.mrf.mxu0
      %v3091 = vadd.f32 %v3002, %v3090
      %3092 = vmatmul.bf16.gmra.mxu0 %v1546
      %v3093 = vpop.f32.mrf.mxu0
      %v3094 = vadd.f32 %v3005, %v3093
      %v3095 = vpop.f32.mrf.mxu0
      %v3096 = vadd.f32 %v3007, %v3095
      %3097 = vmatmul.bf16.gmra.mxu0 %v1547
      %v3098 = vpop.f32.mrf.mxu0
      %v3099 = vadd.f32 %v3010, %v3098
      %v3100 = vpop.f32.mrf.mxu0
      %v3101 = vadd.f32 %v3012, %v3100
      %3102 = vmatmul.bf16.gmra.mxu0 %v1548
      %v3103 = vpop.f32.mrf.mxu0
      %v3104 = vadd.f32 %v3015, %v3103
      %v3105 = vpop.f32.mrf.mxu0
      %v3106 = vadd.f32 %v3017, %v3105
      %3107 = vmatmul.bf16.gmra.mxu0 %v1549
      %v3108 = vpop.f32.mrf.mxu0
      %v3109 = vadd.f32 %v3020, %v3108
      %v3110 = vpop.f32.mrf.mxu0
      %v3111 = vadd.f32 %v3022, %v3110
      %3112 = vmatmul.bf16.gmra.mxu0 %v1550
      %v3113 = vpop.f32.mrf.mxu0
      %v3114 = vadd.f32 %v3025, %v3113
      %v3115 = vpop.f32.mrf.mxu0
      %v3116 = vadd.f32 %v3027, %v3115
      %3117 = vmatmul.bf16.gmra.mxu0 %v1551
      %v3118 = vpop.f32.mrf.mxu0
      %v3119 = vadd.f32 %v3030, %v3118
      %v3120 = vpop.f32.mrf.mxu0
      %v3121 = vadd.f32 %v3032, %v3120
      %3122 = vmatmul.bf16.gmra.mxu0 %v1552
      %v3123 = vpop.f32.mrf.mxu0
      %v3124 = vadd.f32 %v3035, %v3123
      %v3125 = vpop.f32.mrf.mxu0
      %v3126 = vadd.f32 %v3037, %v3125
      %3127 = vmatmul.bf16.gmra.mxu0 %v1553
      %v3128 = vpop.f32.mrf.mxu0
      %v3129 = vadd.f32 %v3040, %v3128
      %v3130 = vpop.f32.mrf.mxu0
      %v3131 = vadd.f32 %v3042, %v3130
      %3132 = vmatmul.bf16.gmra.mxu0 %v1554
      %v3133 = vpop.f32.mrf.mxu0
      %v3134 = vadd.f32 %v3045, %v3133
      %v3135 = vpop.f32.mrf.mxu0
      %v3136 = vadd.f32 %v3047, %v3135
      %3137 = vdwg.mxu0
      %3138 = vmatpush.bf16.msra.mxu0 %v2434
      %3139 = vmatpush.bf16.msra.mxu0 %v2433
      %3140 = vmatpush.bf16.msra.mxu0 %v2432
      %3141 = vmatpush.bf16.msra.mxu0 %v2431
      %3142 = vmatpush.bf16.msra.mxu0 %v2430
      %3143 = vmatpush.bf16.msra.mxu0 %v2429
      %3144 = vmatpush.bf16.msra.mxu0 %v2428
      %3145 = vmatpush.bf16.msra.mxu0 %v2427
      %3146 = vmatmul.bf16.gmra.mxu0 %v1630
      %v3147 = vpop.f32.mrf.mxu0
      %v3148 = vadd.f32 %v3059, %v3147
      %v3149 = vpop.f32.mrf.mxu0
      %v3150 = vadd.f32 %v3061, %v3149
      %3151 = vmatmul.bf16.gmra.mxu0 %v1642
      %v3152 = vpop.f32.mrf.mxu0
      %v3153 = vadd.f32 %v3064, %v3152
      %v3154 = vpop.f32.mrf.mxu0
      %v3155 = vadd.f32 %v3066, %v3154
      %3156 = vmatmul.bf16.gmra.mxu0 %v1654
      %v3157 = vpop.f32.mrf.mxu0
      %v3158 = vadd.f32 %v3069, %v3157
      %v3159 = vpop.f32.mrf.mxu0
      %v3160 = vadd.f32 %v3071, %v3159
      %3161 = vmatmul.bf16.gmra.mxu0 %v1666
      %v3162 = vpop.f32.mrf.mxu0
      %v3163 = vadd.f32 %v3074, %v3162
      %v3164 = vpop.f32.mrf.mxu0
      %v3165 = vadd.f32 %v3076, %v3164
      %3166 = vmatmul.bf16.gmra.mxu0 %v1678
      %v3167 = vpop.f32.mrf.mxu0
      %v3168 = vadd.f32 %v3079, %v3167
      %v3169 = vpop.f32.mrf.mxu0
      %v3170 = vadd.f32 %v3081, %v3169
      %3171 = vmatmul.bf16.gmra.mxu0 %v1690
      %v3172 = vpop.f32.mrf.mxu0
      %v3173 = vadd.f32 %v3084, %v3172
      %v3174 = vpop.f32.mrf.mxu0
      %v3175 = vadd.f32 %v3086, %v3174
      %3176 = vmatmul.bf16.gmra.mxu0 %v1702
      %v3177 = vpop.f32.mrf.mxu0
      %v3178 = vadd.f32 %v3089, %v3177
      %v3179 = vpop.f32.mrf.mxu0
      %v3180 = vadd.f32 %v3091, %v3179
      %3181 = vmatmul.bf16.gmra.mxu0 %v1714
      %v3182 = vpop.f32.mrf.mxu0
      %v3183 = vadd.f32 %v3094, %v3182
      %v3184 = vpop.f32.mrf.mxu0
      %v3185 = vadd.f32 %v3096, %v3184
      %3186 = vmatmul.bf16.gmra.mxu0 %v1726
      %v3187 = vpop.f32.mrf.mxu0
      %v3188 = vadd.f32 %v3099, %v3187
      %v3189 = vpop.f32.mrf.mxu0
      %v3190 = vadd.f32 %v3101, %v3189
      %3191 = vmatmul.bf16.gmra.mxu0 %v1738
      %v3192 = vpop.f32.mrf.mxu0
      %v3193 = vadd.f32 %v3104, %v3192
      %v3194 = vpop.f32.mrf.mxu0
      %v3195 = vadd.f32 %v3106, %v3194
      %3196 = vmatmul.bf16.gmra.mxu0 %v1750
      %v3197 = vpop.f32.mrf.mxu0
      %v3198 = vadd.f32 %v3109, %v3197
      %v3199 = vpop.f32.mrf.mxu0
      %v3200 = vadd.f32 %v3111, %v3199
      %3201 = vmatmul.bf16.gmra.mxu0 %v1762
      %v3202 = vpop.f32.mrf.mxu0
      %v3203 = vadd.f32 %v3114, %v3202
      %v3204 = vpop.f32.mrf.mxu0
      %v3205 = vadd.f32 %v3116, %v3204
      %3206 = vmatmul.bf16.gmra.mxu0 %v1774
      %v3207 = vpop.f32.mrf.mxu0
      %v3208 = vadd.f32 %v3119, %v3207
      %v3209 = vpop.f32.mrf.mxu0
      %v3210 = vadd.f32 %v3121, %v3209
      %3211 = vmatmul.bf16.gmra.mxu0 %v1786
      %v3212 = vpop.f32.mrf.mxu0
      %v3213 = vadd.f32 %v3124, %v3212
      %v3214 = vpop.f32.mrf.mxu0
      %v3215 = vadd.f32 %v3126, %v3214
      %3216 = vmatmul.bf16.gmra.mxu0 %v1798
      %v3217 = vpop.f32.mrf.mxu0
      %v3218 = vadd.f32 %v3129, %v3217
      %v3219 = vpop.f32.mrf.mxu0
      %v3220 = vadd.f32 %v3131, %v3219
      %3221 = vmatmul.bf16.gmra.mxu0 %v1810
      %v3222 = vpop.f32.mrf.mxu0
      %v3223 = vadd.f32 %v3134, %v3222
      %v3224 = vpop.f32.mrf.mxu0
      %v3225 = vadd.f32 %v3136, %v3224
      %3226 = vdwg.mxu0
      %3227 = vmatpush.bf16.msra.mxu0 %v2442
      %3228 = vmatpush.bf16.msra.mxu0 %v2441
      %3229 = vmatpush.bf16.msra.mxu0 %v2440
      %3230 = vmatpush.bf16.msra.mxu0 %v2439
      %3231 = vmatpush.bf16.msra.mxu0 %v2438
      %3232 = vmatpush.bf16.msra.mxu0 %v2437
      %3233 = vmatpush.bf16.msra.mxu0 %v2436
      %3234 = vmatpush.bf16.msra.mxu0 %v2435
      %3235 = vmatmul.bf16.gmra.mxu0 %v1877
      %v3236 = vpop.f32.mrf.mxu0
      %v3237 = vadd.f32 %v3148, %v3236
      %v3238 = vpop.f32.mrf.mxu0
      %v3239 = vadd.f32 %v3150, %v3238
      %3240 = vmatmul.bf16.gmra.mxu0 %v1880
      %v3241 = vpop.f32.mrf.mxu0
      %v3242 = vadd.f32 %v3153, %v3241
      %v3243 = vpop.f32.mrf.mxu0
      %v3244 = vadd.f32 %v3155, %v3243
      %3245 = vmatmul.bf16.gmra.mxu0 %v1883
      %v3246 = vpop.f32.mrf.mxu0
      %v3247 = vadd.f32 %v3158, %v3246
      %v3248 = vpop.f32.mrf.mxu0
      %v3249 = vadd.f32 %v3160, %v3248
      %3250 = vmatmul.bf16.gmra.mxu0 %v1886
      %v3251 = vpop.f32.mrf.mxu0
      %v3252 = vadd.f32 %v3163, %v3251
      %v3253 = vpop.f32.mrf.mxu0
      %v3254 = vadd.f32 %v3165, %v3253
      %3255 = vmatmul.bf16.gmra.mxu0 %v1889
      %v3256 = vpop.f32.mrf.mxu0
      %v3257 = vadd.f32 %v3168, %v3256
      %v3258 = vpop.f32.mrf.mxu0
      %v3259 = vadd.f32 %v3170, %v3258
      %3260 = vmatmul.bf16.gmra.mxu0 %v1892
      %v3261 = vpop.f32.mrf.mxu0
      %v3262 = vadd.f32 %v3173, %v3261
      %v3263 = vpop.f32.mrf.mxu0
      %v3264 = vadd.f32 %v3175, %v3263
      %3265 = vmatmul.bf16.gmra.mxu0 %v1895
      %v3266 = vpop.f32.mrf.mxu0
      %v3267 = vadd.f32 %v3178, %v3266
      %v3268 = vpop.f32.mrf.mxu0
      %v3269 = vadd.f32 %v3180, %v3268
      %3270 = vmatmul.bf16.gmra.mxu0 %v1898
      %v3271 = vpop.f32.mrf.mxu0
      %v3272 = vadd.f32 %v3183, %v3271
      %v3273 = vpop.f32.mrf.mxu0
      %v3274 = vadd.f32 %v3185, %v3273
      %3275 = vmatmul.bf16.gmra.mxu0 %v1901
      %v3276 = vpop.f32.mrf.mxu0
      %v3277 = vadd.f32 %v3188, %v3276
      %v3278 = vpop.f32.mrf.mxu0
      %v3279 = vadd.f32 %v3190, %v3278
      %3280 = vmatmul.bf16.gmra.mxu0 %v1904
      %v3281 = vpop.f32.mrf.mxu0
      %v3282 = vadd.f32 %v3193, %v3281
      %v3283 = vpop.f32.mrf.mxu0
      %v3284 = vadd.f32 %v3195, %v3283
      %3285 = vmatmul.bf16.gmra.mxu0 %v1907
      %v3286 = vpop.f32.mrf.mxu0
      %v3287 = vadd.f32 %v3198, %v3286
      %v3288 = vpop.f32.mrf.mxu0
      %v3289 = vadd.f32 %v3200, %v3288
      %3290 = vmatmul.bf16.gmra.mxu0 %v1910
      %v3291 = vpop.f32.mrf.mxu0
      %v3292 = vadd.f32 %v3203, %v3291
      %v3293 = vpop.f32.mrf.mxu0
      %v3294 = vadd.f32 %v3205, %v3293
      %3295 = vmatmul.bf16.gmra.mxu0 %v1913
      %v3296 = vpop.f32.mrf.mxu0
      %v3297 = vadd.f32 %v3208, %v3296
      %v3298 = vpop.f32.mrf.mxu0
      %v3299 = vadd.f32 %v3210, %v3298
      %3300 = vmatmul.bf16.gmra.mxu0 %v1916
      %v3301 = vpop.f32.mrf.mxu0
      %v3302 = vadd.f32 %v3213, %v3301
      %v3303 = vpop.f32.mrf.mxu0
      %v3304 = vadd.f32 %v3215, %v3303
      %3305 = vmatmul.bf16.gmra.mxu0 %v1919
      %v3306 = vpop.f32.mrf.mxu0
      %v3307 = vadd.f32 %v3218, %v3306
      %v3308 = vpop.f32.mrf.mxu0
      %v3309 = vadd.f32 %v3220, %v3308
      %3310 = vmatmul.bf16.gmra.mxu0 %v1922
      %v3311 = vpop.f32.mrf.mxu0
      %v3312 = vadd.f32 %v3223, %v3311
      %v3313 = vpop.f32.mrf.mxu0
      %v3314 = vadd.f32 %v3225, %v3313
      %3315 = vdwg.mxu0
      %v3316 = vpack.c.bf16 %v3237, %v3237
      %v3317 = vpack.c.bf16 %v3239, %v3239
      %v3318 = vpack.c.bf16 %v3242, %v3242
      %v3319 = vpack.c.bf16 %v3244, %v3244
      %v3320 = vpack.c.bf16 %v3247, %v3247
      %v3321 = vpack.c.bf16 %v3249, %v3249
      %v3322 = vpack.c.bf16 %v3252, %v3252
      %v3323 = vpack.c.bf16 %v3254, %v3254
      %v3324 = vpack.c.bf16 %v3257, %v3257
      %v3325 = vpack.c.bf16 %v3259, %v3259
      %v3326 = vpack.c.bf16 %v3262, %v3262
      %v3327 = vpack.c.bf16 %v3264, %v3264
      %v3328 = vpack.c.bf16 %v3267, %v3267
      %v3329 = vpack.c.bf16 %v3269, %v3269
      %v3330 = vpack.c.bf16 %v3272, %v3272
      %v3331 = vpack.c.bf16 %v3274, %v3274
      %v3332 = vpack.c.bf16 %v3277, %v3277
      %v3333 = vpack.c.bf16 %v3279, %v3279
      %v3334 = vpack.c.bf16 %v3282, %v3282
      %v3335 = vpack.c.bf16 %v3284, %v3284
      %v3336 = vpack.c.bf16 %v3287, %v3287
      %v3337 = vpack.c.bf16 %v3289, %v3289
      %v3338 = vpack.c.bf16 %v3292, %v3292
      %v3339 = vpack.c.bf16 %v3294, %v3294
      %v3340 = vpack.c.bf16 %v3297, %v3297
      %v3341 = vpack.c.bf16 %v3299, %v3299
      %v3342 = vpack.c.bf16 %v3302, %v3302
      %v3343 = vpack.c.bf16 %v3304, %v3304
      %v3344 = vpack.c.bf16 %v3307, %v3307
      %v3345 = vpack.c.bf16 %v3309, %v3309
      %v3346 = vpack.c.bf16 %v3312, %v3312
      %v3347 = vpack.c.bf16 %v3314, %v3314
      %3348 = vst [vmem:[%s333] sm:$0xf] %v3316
      %3349 = vst [vmem:[%s333 + $0x4] sm:$0xf] %v3317
      %3350 = vst [vmem:[%s333 + $0x8] sm:$0xf] %v3318
      %3351 = vst [vmem:[%s333 + $0xc] sm:$0xf] %v3319
      %3352 = vst [vmem:[%s333 + $0x10] sm:$0xf] %v3320
      %3353 = vst [vmem:[%s333 + $0x14] sm:$0xf] %v3321
      %3354 = vst [vmem:[%s333 + $0x18] sm:$0xf] %v3322
      %3355 = vst [vmem:[%s333 + $0x1c] sm:$0xf] %v3323
      %3356 = vst [vmem:[%s333 + $0x20] sm:$0xf] %v3324
      %3357 = vst [vmem:[%s333 + $0x24] sm:$0xf] %v3325
      %3358 = vst [vmem:[%s333 + $0x28] sm:$0xf] %v3326
      %3359 = vst [vmem:[%s333 + $0x2c] sm:$0xf] %v3327
      %3360 = vst [vmem:[%s333 + $0x30] sm:$0xf] %v3328
      %3361 = vst [vmem:[%s333 + $0x34] sm:$0xf] %v3329
      %3362 = vst [vmem:[%s333 + $0x38] sm:$0xf] %v3330
      %3363 = vst [vmem:[%s333 + $0x3c] sm:$0xf] %v3331
      %3364 = vst [vmem:[%s333 + $0x40] sm:$0xf] %v3332
      %3365 = vst [vmem:[%s333 + $0x44] sm:$0xf] %v3333
      %3366 = vst [vmem:[%s333 + $0x48] sm:$0xf] %v3334
      %3367 = vst [vmem:[%s333 + $0x4c] sm:$0xf] %v3335
      %3368 = vst [vmem:[%s333 + $0x50] sm:$0xf] %v3336
      %3369 = vst [vmem:[%s333 + $0x54] sm:$0xf] %v3337
      %3370 = vst [vmem:[%s333 + $0x58] sm:$0xf] %v3338
      %3371 = vst [vmem:[%s333 + $0x5c] sm:$0xf] %v3339
      %3372 = vst [vmem:[%s333 + $0x60] sm:$0xf] %v3340
      %3373 = vst [vmem:[%s333 + $0x64] sm:$0xf] %v3341
      %3374 = vst [vmem:[%s333 + $0x68] sm:$0xf] %v3342
      %3375 = vst [vmem:[%s333 + $0x6c] sm:$0xf] %v3343
      %3376 = vst [vmem:[%s333 + $0x70] sm:$0xf] %v3344
      %3377 = vst [vmem:[%s333 + $0x74] sm:$0xf] %v3345
      %3378 = vst [vmem:[%s333 + $0x78] sm:$0xf] %v3346
      %3379 = vst [vmem:[%s333 + $0x7c] sm:$0xf] %v3347
      %v3380 = vadd.f32 %v3237, %v3239
      %v3381 = vadd.f32 %v3380, %v3242
      %v3382 = vadd.f32 %v3381, %v3244
      %v3383 = vadd.f32 %v3382, %v3247
      %v3384 = vadd.f32 %v3383, %v3249
      %v3385 = vadd.f32 %v3384, %v3252
      %v3386 = vadd.f32 %v3385, %v3254
      %v3387 = vadd.f32 %v3386, %v3257
      %v3388 = vadd.f32 %v3387, %v3259
      %v3389 = vadd.f32 %v3388, %v3262
      %v3390 = vadd.f32 %v3389, %v3264
      %v3391 = vadd.f32 %v3390, %v3267
      %v3392 = vadd.f32 %v3391, %v3269
      %v3393 = vadd.f32 %v3392, %v3272
      %v3394 = vadd.f32 %v3393, %v3274
      %v3395 = vadd.f32 %v3394, %v3277
      %v3396 = vadd.f32 %v3395, %v3279
      %v3397 = vadd.f32 %v3396, %v3282
      %v3398 = vadd.f32 %v3397, %v3284
      %v3399 = vadd.f32 %v3398, %v3287
      %v3400 = vadd.f32 %v3399, %v3289
      %v3401 = vadd.f32 %v3400, %v3292
      %v3402 = vadd.f32 %v3401, %v3294
      %v3403 = vadd.f32 %v3402, %v3297
      %v3404 = vadd.f32 %v3403, %v3299
      %v3405 = vadd.f32 %v3404, %v3302
      %v3406 = vadd.f32 %v3405, %v3304
      %v3407 = vadd.f32 %v3406, %v3307
      %v3408 = vadd.f32 %v3407, %v3309
      %v3409 = vadd.f32 %v3408, %v3312
      %v3410 = vadd.f32 %v3409, %v3314
      %v3411 = vrot.slane %v3410, 4
      %v3412 = vadd.f32 %v3410, %v3411
      %v3413 = vrot.slane %v3412, 2
      %v3414 = vadd.f32 %v3412, %v3413
      %v3415 = vrot.slane %v3414, 1
      %v3416 = vadd.f32 %v3414, %v3415
      %3417 = vst [vmem:[%s336] sm:$0x1] %v3416
      %v3418 = vmul.f32 %v3237, %v3237
      %v3419 = vmul.f32 %v3239, %v3239
      %v3420 = vmul.f32 %v3242, %v3242
      %v3421 = vmul.f32 %v3244, %v3244
      %v3422 = vmul.f32 %v3247, %v3247
      %v3423 = vmul.f32 %v3249, %v3249
      %v3424 = vmul.f32 %v3252, %v3252
      %v3425 = vmul.f32 %v3254, %v3254
      %v3426 = vmul.f32 %v3257, %v3257
      %v3427 = vmul.f32 %v3259, %v3259
      %v3428 = vmul.f32 %v3262, %v3262
      %v3429 = vmul.f32 %v3264, %v3264
      %v3430 = vmul.f32 %v3267, %v3267
      %v3431 = vmul.f32 %v3269, %v3269
      %v3432 = vmul.f32 %v3272, %v3272
      %v3433 = vmul.f32 %v3274, %v3274
      %v3434 = vmul.f32 %v3277, %v3277
      %v3435 = vmul.f32 %v3279, %v3279
      %v3436 = vmul.f32 %v3282, %v3282
      %v3437 = vmul.f32 %v3284, %v3284
      %v3438 = vmul.f32 %v3287, %v3287
      %v3439 = vmul.f32 %v3289, %v3289
      %v3440 = vmul.f32 %v3292, %v3292
      %v3441 = vmul.f32 %v3294, %v3294
      %v3442 = vmul.f32 %v3297, %v3297
      %v3443 = vmul.f32 %v3299, %v3299
      %v3444 = vmul.f32 %v3302, %v3302
      %v3445 = vmul.f32 %v3304, %v3304
      %v3446 = vmul.f32 %v3307, %v3307
      %v3447 = vmul.f32 %v3309, %v3309
      %v3448 = vmul.f32 %v3312, %v3312
      %v3449 = vmul.f32 %v3314, %v3314
      %v3450 = vadd.f32 %v3418, %v3419
      %v3451 = vadd.f32 %v3450, %v3420
      %v3452 = vadd.f32 %v3451, %v3421
      %v3453 = vadd.f32 %v3452, %v3422
      %v3454 = vadd.f32 %v3453, %v3423
      %v3455 = vadd.f32 %v3454, %v3424
      %v3456 = vadd.f32 %v3455, %v3425
      %v3457 = vadd.f32 %v3456, %v3426
      %v3458 = vadd.f32 %v3457, %v3427
      %v3459 = vadd.f32 %v3458, %v3428
      %v3460 = vadd.f32 %v3459, %v3429
      %v3461 = vadd.f32 %v3460, %v3430
      %v3462 = vadd.f32 %v3461, %v3431
      %v3463 = vadd.f32 %v3462, %v3432
      %v3464 = vadd.f32 %v3463, %v3433
      %v3465 = vadd.f32 %v3464, %v3434
      %v3466 = vadd.f32 %v3465, %v3435
      %v3467 = vadd.f32 %v3466, %v3436
      %v3468 = vadd.f32 %v3467, %v3437
      %v3469 = vadd.f32 %v3468, %v3438
      %v3470 = vadd.f32 %v3469, %v3439
      %v3471 = vadd.f32 %v3470, %v3440
      %v3472 = vadd.f32 %v3471, %v3441
      %v3473 = vadd.f32 %v3472, %v3442
      %v3474 = vadd.f32 %v3473, %v3443
      %v3475 = vadd.f32 %v3474, %v3444
      %v3476 = vadd.f32 %v3475, %v3445
      %v3477 = vadd.f32 %v3476, %v3446
      %v3478 = vadd.f32 %v3477, %v3447
      %v3479 = vadd.f32 %v3478, %v3448
      %v3480 = vadd.f32 %v3479, %v3449
      %v3481 = vrot.slane %v3480, 4
      %v3482 = vadd.f32 %v3480, %v3481
      %v3483 = vrot.slane %v3482, 2
      %v3484 = vadd.f32 %v3482, %v3483
      %v3485 = vrot.slane %v3484, 1
      %v3486 = vadd.f32 %v3484, %v3485
      %3487 = vst [vmem:[%s339] sm:$0x1] %v3486
      %v3488 = vld [vmem:[%s415] sm:$0xf]
      %v3489 = vld [vmem:[%s415 + $0x4] sm:$0xf]
      %v3490 = vld [vmem:[%s415 + $0x8] sm:$0x1]
      %v3491 = vld [vmem:[%s415 + $0xc] sm:$0xf]
      %v3492 = vld [vmem:[%s415 + $0x10] sm:$0xf]
      %v3493 = vld [vmem:[%s415 + $0x14] sm:$0x1]
      %v3494 = vld [vmem:[%s415 + $0x18] sm:$0xf]
      %v3495 = vld [vmem:[%s415 + $0x1c] sm:$0xf]
      %v3496 = vld [vmem:[%s415 + $0x20] sm:$0x1]
      %v3497 = vld [vmem:[%s415 + $0x24] sm:$0xf]
      %v3498 = vld [vmem:[%s415 + $0x28] sm:$0xf]
      %v3499 = vld [vmem:[%s415 + $0x2c] sm:$0x1]
      %v3500 = vld [vmem:[%s415 + $0x30] sm:$0xf]
      %v3501 = vld [vmem:[%s415 + $0x34] sm:$0xf]
      %v3502 = vld [vmem:[%s415 + $0x38] sm:$0x1]
      %v3503 = vld [vmem:[%s415 + $0x3c] sm:$0xf]
      %v3504 = vld [vmem:[%s415 + $0x40] sm:$0xf]
      %v3505 = vld [vmem:[%s415 + $0x44] sm:$0x1]
      %v3506 = vld [vmem:[%s415 + $0x48] sm:$0xf]
      %v3507 = vld [vmem:[%s415 + $0x4c] sm:$0xf]
      %v3508 = vld [vmem:[%s415 + $0x50] sm:$0x1]
      %v3509 = vld [vmem:[%s415 + $0x54] sm:$0xf]
      %v3510 = vld [vmem:[%s415 + $0x58] sm:$0xf]
      %v3511 = vld [vmem:[%s415 + $0x5c] sm:$0x1]
      %v3512 = vld [vmem:[%s415 + $0x60] sm:$0xf]
      %v3513 = vld [vmem:[%s415 + $0x64] sm:$0xf]
      %v3514 = vld [vmem:[%s415 + $0x68] sm:$0x1]
      %v3515 = vld [vmem:[%s415 + $0x6c] sm:$0xf]
      %v3516 = vld [vmem:[%s415 + $0x70] sm:$0xf]
      %v3517 = vld [vmem:[%s415 + $0x74] sm:$0x1]
      %v3518 = vld [vmem:[%s415 + $0x78] sm:$0xf]
      %v3519 = vld [vmem:[%s415 + $0x7c] sm:$0xf]
      %v3520 = vld [vmem:[%s415 + $0x80] sm:$0x1]
      %v3521 = vld [vmem:[%s415 + $0x84] sm:$0xf]
      %v3522 = vld [vmem:[%s415 + $0x88] sm:$0xf]
      %v3523 = vld [vmem:[%s415 + $0x8c] sm:$0x1]
      %v3524 = vld [vmem:[%s415 + $0x90] sm:$0xf]
      %v3525 = vld [vmem:[%s415 + $0x94] sm:$0xf]
      %v3526 = vld [vmem:[%s415 + $0x98] sm:$0x1]
      %v3527 = vld [vmem:[%s415 + $0x9c] sm:$0xf]
      %v3528 = vld [vmem:[%s415 + $0xa0] sm:$0xf]
      %v3529 = vld [vmem:[%s415 + $0xa4] sm:$0x1]
      %v3530 = vld [vmem:[%s415 + $0xa8] sm:$0xf]
      %v3531 = vld [vmem:[%s415 + $0xac] sm:$0xf]
      %v3532 = vld [vmem:[%s415 + $0xb0] sm:$0x1]
      %v3533 = vld [vmem:[%s415 + $0xb4] sm:$0xf]
      %v3534 = vld [vmem:[%s415 + $0xb8] sm:$0xf]
      %v3535 = vld [vmem:[%s415 + $0xbc] sm:$0x1]
      %vm3536 = vsmask.f32 3328
      %vm3537 = vsmask.f32 7440
      %vm3538 = vmor %vm3536, %vm3537
      %v3540 = vshrl.u32 %v3488, 16
      %v3542 = vrot.slane %v3540, 4
      %v3543 = vshll.u32 %v3488, 16
      %v3545 = vrot.slane %v3543, 5
      %v3546 = vor.u32 %v3542, %v3545
      %v3547 = vrot.slane %v3546, 4
      %v3549 = vshll.u32 %v3489, 16
      %v3551 = vrot.slane %v3549, 5
      %v3552 = vsel %vm3538, %v3547, %v3551
      %v3553 = vshrl.u32 %v3489, 16
      %v3555 = vrot.slane %v3553, 4
      %v3556 = vor.u32 %v3555, %v3551
      %v3557 = vrot.slane %v3556, 4
      %v3559 = vshll.u32 %v3490, 16
      %v3561 = vrot.slane %v3559, 5
      %v3562 = vsel %vm3538, %v3557, %v3561
      %v3564 = vshrl.u32 %v3491, 16
      %v3566 = vrot.slane %v3564, 4
      %v3567 = vshll.u32 %v3491, 16
      %v3569 = vrot.slane %v3567, 5
      %v3570 = vor.u32 %v3566, %v3569
      %v3571 = vrot.slane %v3570, 4
      %v3573 = vshll.u32 %v3492, 16
      %v3575 = vrot.slane %v3573, 5
      %v3576 = vsel %vm3538, %v3571, %v3575
      %v3577 = vshrl.u32 %v3492, 16
      %v3579 = vrot.slane %v3577, 4
      %v3580 = vor.u32 %v3579, %v3575
      %v3581 = vrot.slane %v3580, 4
      %v3583 = vshll.u32 %v3493, 16
      %v3585 = vrot.slane %v3583, 5
      %v3586 = vsel %vm3538, %v3581, %v3585
      %v3588 = vshrl.u32 %v3494, 16
      %v3590 = vrot.slane %v3588, 4
      %v3591 = vshll.u32 %v3494, 16
      %v3593 = vrot.slane %v3591, 5
      %v3594 = vor.u32 %v3590, %v3593
      %v3595 = vrot.slane %v3594, 4
      %v3597 = vshll.u32 %v3495, 16
      %v3599 = vrot.slane %v3597, 5
      %v3600 = vsel %vm3538, %v3595, %v3599
      %v3601 = vshrl.u32 %v3495, 16
      %v3603 = vrot.slane %v3601, 4
      %v3604 = vor.u32 %v3603, %v3599
      %v3605 = vrot.slane %v3604, 4
      %v3607 = vshll.u32 %v3496, 16
      %v3609 = vrot.slane %v3607, 5
      %v3610 = vsel %vm3538, %v3605, %v3609
      %v3612 = vshrl.u32 %v3497, 16
      %v3614 = vrot.slane %v3612, 4
      %v3615 = vshll.u32 %v3497, 16
      %v3617 = vrot.slane %v3615, 5
      %v3618 = vor.u32 %v3614, %v3617
      %v3619 = vrot.slane %v3618, 4
      %v3621 = vshll.u32 %v3498, 16
      %v3623 = vrot.slane %v3621, 5
      %v3624 = vsel %vm3538, %v3619, %v3623
      %v3625 = vshrl.u32 %v3498, 16
      %v3627 = vrot.slane %v3625, 4
      %v3628 = vor.u32 %v3627, %v3623
      %v3629 = vrot.slane %v3628, 4
      %v3631 = vshll.u32 %v3499, 16
      %v3633 = vrot.slane %v3631, 5
      %v3634 = vsel %vm3538, %v3629, %v3633
      %v3636 = vshrl.u32 %v3500, 16
      %v3638 = vrot.slane %v3636, 4
      %v3639 = vshll.u32 %v3500, 16
      %v3641 = vrot.slane %v3639, 5
      %v3642 = vor.u32 %v3638, %v3641
      %v3643 = vrot.slane %v3642, 4
      %v3645 = vshll.u32 %v3501, 16
      %v3647 = vrot.slane %v3645, 5
      %v3648 = vsel %vm3538, %v3643, %v3647
      %v3649 = vshrl.u32 %v3501, 16
      %v3651 = vrot.slane %v3649, 4
      %v3652 = vor.u32 %v3651, %v3647
      %v3653 = vrot.slane %v3652, 4
      %v3655 = vshll.u32 %v3502, 16
      %v3657 = vrot.slane %v3655, 5
      %v3658 = vsel %vm3538, %v3653, %v3657
      %v3660 = vshrl.u32 %v3503, 16
      %v3662 = vrot.slane %v3660, 4
      %v3663 = vshll.u32 %v3503, 16
      %v3665 = vrot.slane %v3663, 5
      %v3666 = vor.u32 %v3662, %v3665
      %v3667 = vrot.slane %v3666, 4
      %v3669 = vshll.u32 %v3504, 16
      %v3671 = vrot.slane %v3669, 5
      %v3672 = vsel %vm3538, %v3667, %v3671
      %v3673 = vshrl.u32 %v3504, 16
      %v3675 = vrot.slane %v3673, 4
      %v3676 = vor.u32 %v3675, %v3671
      %v3677 = vrot.slane %v3676, 4
      %v3679 = vshll.u32 %v3505, 16
      %v3681 = vrot.slane %v3679, 5
      %v3682 = vsel %vm3538, %v3677, %v3681
      %v3684 = vshrl.u32 %v3506, 16
      %v3686 = vrot.slane %v3684, 4
      %v3687 = vshll.u32 %v3506, 16
      %v3689 = vrot.slane %v3687, 5
      %v3690 = vor.u32 %v3686, %v3689
      %v3691 = vrot.slane %v3690, 4
      %v3693 = vshll.u32 %v3507, 16
      %v3695 = vrot.slane %v3693, 5
      %v3696 = vsel %vm3538, %v3691, %v3695
      %v3697 = vshrl.u32 %v3507, 16
      %v3699 = vrot.slane %v3697, 4
      %v3700 = vor.u32 %v3699, %v3695
      %v3701 = vrot.slane %v3700, 4
      %v3703 = vshll.u32 %v3508, 16
      %v3705 = vrot.slane %v3703, 5
      %v3706 = vsel %vm3538, %v3701, %v3705
      %v3708 = vshrl.u32 %v3509, 16
      %v3710 = vrot.slane %v3708, 4
      %v3711 = vshll.u32 %v3509, 16
      %v3713 = vrot.slane %v3711, 5
      %v3714 = vor.u32 %v3710, %v3713
      %v3715 = vrot.slane %v3714, 4
      %v3717 = vshll.u32 %v3510, 16
      %v3719 = vrot.slane %v3717, 5
      %v3720 = vsel %vm3538, %v3715, %v3719
      %v3721 = vshrl.u32 %v3510, 16
      %v3723 = vrot.slane %v3721, 4
      %v3724 = vor.u32 %v3723, %v3719
      %v3725 = vrot.slane %v3724, 4
      %v3727 = vshll.u32 %v3511, 16
      %v3729 = vrot.slane %v3727, 5
      %v3730 = vsel %vm3538, %v3725, %v3729
      %v3732 = vshrl.u32 %v3512, 16
      %v3734 = vrot.slane %v3732, 4
      %v3735 = vshll.u32 %v3512, 16
      %v3737 = vrot.slane %v3735, 5
      %v3738 = vor.u32 %v3734, %v3737
      %v3739 = vrot.slane %v3738, 4
      %v3741 = vshll.u32 %v3513, 16
      %v3743 = vrot.slane %v3741, 5
      %v3744 = vsel %vm3538, %v3739, %v3743
      %v3745 = vshrl.u32 %v3513, 16
      %v3747 = vrot.slane %v3745, 4
      %v3748 = vor.u32 %v3747, %v3743
      %v3749 = vrot.slane %v3748, 4
      %v3751 = vshll.u32 %v3514, 16
      %v3753 = vrot.slane %v3751, 5
      %v3754 = vsel %vm3538, %v3749, %v3753
      %v3756 = vshrl.u32 %v3515, 16
      %v3758 = vrot.slane %v3756, 4
      %v3759 = vshll.u32 %v3515, 16
      %v3761 = vrot.slane %v3759, 5
      %v3762 = vor.u32 %v3758, %v3761
      %v3763 = vrot.slane %v3762, 4
      %v3765 = vshll.u32 %v3516, 16
      %v3767 = vrot.slane %v3765, 5
      %v3768 = vsel %vm3538, %v3763, %v3767
      %v3769 = vshrl.u32 %v3516, 16
      %v3771 = vrot.slane %v3769, 4
      %v3772 = vor.u32 %v3771, %v3767
      %v3773 = vrot.slane %v3772, 4
      %v3775 = vshll.u32 %v3517, 16
      %v3777 = vrot.slane %v3775, 5
      %v3778 = vsel %vm3538, %v3773, %v3777
      %v3780 = vshrl.u32 %v3518, 16
      %v3782 = vrot.slane %v3780, 4
      %v3783 = vshll.u32 %v3518, 16
      %v3785 = vrot.slane %v3783, 5
      %v3786 = vor.u32 %v3782, %v3785
      %v3787 = vrot.slane %v3786, 4
      %v3789 = vshll.u32 %v3519, 16
      %v3791 = vrot.slane %v3789, 5
      %v3792 = vsel %vm3538, %v3787, %v3791
      %v3793 = vshrl.u32 %v3519, 16
      %v3795 = vrot.slane %v3793, 4
      %v3796 = vor.u32 %v3795, %v3791
      %v3797 = vrot.slane %v3796, 4
      %v3799 = vshll.u32 %v3520, 16
      %v3801 = vrot.slane %v3799, 5
      %v3802 = vsel %vm3538, %v3797, %v3801
      %v3804 = vshrl.u32 %v3521, 16
      %v3806 = vrot.slane %v3804, 4
      %v3807 = vshll.u32 %v3521, 16
      %v3809 = vrot.slane %v3807, 5
      %v3810 = vor.u32 %v3806, %v3809
      %v3811 = vrot.slane %v3810, 4
      %v3813 = vshll.u32 %v3522, 16
      %v3815 = vrot.slane %v3813, 5
      %v3816 = vsel %vm3538, %v3811, %v3815
      %v3817 = vshrl.u32 %v3522, 16
      %v3819 = vrot.slane %v3817, 4
      %v3820 = vor.u32 %v3819, %v3815
      %v3821 = vrot.slane %v3820, 4
      %v3823 = vshll.u32 %v3523, 16
      %v3825 = vrot.slane %v3823, 5
      %v3826 = vsel %vm3538, %v3821, %v3825
      %v3828 = vshrl.u32 %v3524, 16
      %v3830 = vrot.slane %v3828, 4
      %v3831 = vshll.u32 %v3524, 16
      %v3833 = vrot.slane %v3831, 5
      %v3834 = vor.u32 %v3830, %v3833
      %v3835 = vrot.slane %v3834, 4
      %v3837 = vshll.u32 %v3525, 16
      %v3839 = vrot.slane %v3837, 5
      %v3840 = vsel %vm3538, %v3835, %v3839
      %v3841 = vshrl.u32 %v3525, 16
      %v3843 = vrot.slane %v3841, 4
      %v3844 = vor.u32 %v3843, %v3839
      %v3845 = vrot.slane %v3844, 4
      %v3847 = vshll.u32 %v3526, 16
      %v3849 = vrot.slane %v3847, 5
      %v3850 = vsel %vm3538, %v3845, %v3849
      %v3852 = vshrl.u32 %v3527, 16
      %v3854 = vrot.slane %v3852, 4
      %v3855 = vshll.u32 %v3527, 16
      %v3857 = vrot.slane %v3855, 5
      %v3858 = vor.u32 %v3854, %v3857
      %v3859 = vrot.slane %v3858, 4
      %v3861 = vshll.u32 %v3528, 16
      %v3863 = vrot.slane %v3861, 5
      %v3864 = vsel %vm3538, %v3859, %v3863
      %v3865 = vshrl.u32 %v3528, 16
      %v3867 = vrot.slane %v3865, 4
      %v3868 = vor.u32 %v3867, %v3863
      %v3869 = vrot.slane %v3868, 4
      %v3871 = vshll.u32 %v3529, 16
      %v3873 = vrot.slane %v3871, 5
      %v3874 = vsel %vm3538, %v3869, %v3873
      %v3876 = vshrl.u32 %v3530, 16
      %v3878 = vrot.slane %v3876, 4
      %v3879 = vshll.u32 %v3530, 16
      %v3881 = vrot.slane %v3879, 5
      %v3882 = vor.u32 %v3878, %v3881
      %v3883 = vrot.slane %v3882, 4
      %v3885 = vshll.u32 %v3531, 16
      %v3887 = vrot.slane %v3885, 5
      %v3888 = vsel %vm3538, %v3883, %v3887
      %v3889 = vshrl.u32 %v3531, 16
      %v3891 = vrot.slane %v3889, 4
      %v3892 = vor.u32 %v3891, %v3887
      %v3893 = vrot.slane %v3892, 4
      %v3895 = vshll.u32 %v3532, 16
      %v3897 = vrot.slane %v3895, 5
      %v3898 = vsel %vm3538, %v3893, %v3897
      %v3900 = vshrl.u32 %v3533, 16
      %v3902 = vrot.slane %v3900, 4
      %v3903 = vshll.u32 %v3533, 16
      %v3905 = vrot.slane %v3903, 5
      %v3906 = vor.u32 %v3902, %v3905
      %v3907 = vrot.slane %v3906, 4
      %v3909 = vshll.u32 %v3534, 16
      %v3911 = vrot.slane %v3909, 5
      %v3912 = vsel %vm3538, %v3907, %v3911
      %v3913 = vshrl.u32 %v3534, 16
      %v3915 = vrot.slane %v3913, 4
      %v3916 = vor.u32 %v3915, %v3911
      %v3917 = vrot.slane %v3916, 4
      %v3919 = vshll.u32 %v3535, 16
      %v3921 = vrot.slane %v3919, 5
      %v3922 = vsel %vm3538, %v3917, %v3921
      %v3923 = vld [vmem:[%s2] sm:$0xf]
      %v3924 = vld [vmem:[%s2 + $0x4] sm:$0xf]
      %v3925 = vld [vmem:[%s2 + $0x8] sm:$0xf]
      %v3926 = vld [vmem:[%s2 + $0xc] sm:$0xf]
      %v3927 = vld [vmem:[%s2 + $0x10] sm:$0xf]
      %v3928 = vld [vmem:[%s2 + $0x14] sm:$0xf]
      %v3929 = vld [vmem:[%s2 + $0x18] sm:$0xf]
      %v3930 = vld [vmem:[%s2 + $0x1c] sm:$0xf]
      %v3931 = vld [vmem:[%s2 + $0x20] sm:$0xf]
      %v3932 = vld [vmem:[%s2 + $0x24] sm:$0xf]
      %v3933 = vld [vmem:[%s2 + $0x28] sm:$0xf]
      %v3934 = vld [vmem:[%s2 + $0x2c] sm:$0xf]
      %v3935 = vld [vmem:[%s2 + $0x30] sm:$0xf]
      %v3936 = vld [vmem:[%s2 + $0x34] sm:$0xf]
      %v3937 = vld [vmem:[%s2 + $0x38] sm:$0xf]
      %v3938 = vld [vmem:[%s2 + $0x3c] sm:$0xf]
      %v3939 = vunpack.c.l.b16 %v3552
      %v3940 = vunpack.c.l.b16 %v3562
      %v3941 = vunpack.c.l.b16 %v3576
      %v3942 = vunpack.c.l.b16 %v3586
      %v3943 = vunpack.c.l.b16 %v3600
      %v3944 = vunpack.c.l.b16 %v3610
      %v3945 = vunpack.c.l.b16 %v3624
      %v3946 = vunpack.c.l.b16 %v3634
      %v3947 = vunpack.c.l.b16 %v3648
      %v3948 = vunpack.c.l.b16 %v3658
      %v3949 = vunpack.c.l.b16 %v3672
      %v3950 = vunpack.c.l.b16 %v3682
      %v3951 = vunpack.c.l.b16 %v3696
      %v3952 = vunpack.c.l.b16 %v3706
      %v3953 = vunpack.c.l.b16 %v3720
      %v3954 = vunpack.c.l.b16 %v3730
      %v3955 = vunpack.c.l.b16 %v3744
      %v3956 = vunpack.c.l.b16 %v3754
      %v3957 = vunpack.c.l.b16 %v3768
      %v3958 = vunpack.c.l.b16 %v3778
      %v3959 = vunpack.c.l.b16 %v3792
      %v3960 = vunpack.c.l.b16 %v3802
      %v3961 = vunpack.c.l.b16 %v3816
      %v3962 = vunpack.c.l.b16 %v3826
      %v3963 = vunpack.c.l.b16 %v3840
      %v3964 = vunpack.c.l.b16 %v3850
      %v3965 = vunpack.c.l.b16 %v3864
      %v3966 = vunpack.c.l.b16 %v3874
      %v3967 = vunpack.c.l.b16 %v3888
      %v3968 = vunpack.c.l.b16 %v3898
      %v3969 = vunpack.c.l.b16 %v3912
      %v3970 = vunpack.c.l.b16 %v3922
      %v3971 = vpack.c.b16 %v3940, %v3939
      %v3972 = vpack.c.b16 %v3942, %v3941
      %v3973 = vpack.c.b16 %v3944, %v3943
      %v3974 = vpack.c.b16 %v3946, %v3945
      %v3975 = vpack.c.b16 %v3948, %v3947
      %v3976 = vpack.c.b16 %v3950, %v3949
      %v3977 = vpack.c.b16 %v3952, %v3951
      %v3978 = vpack.c.b16 %v3954, %v3953
      %v3979 = vpack.c.b16 %v3956, %v3955
      %v3980 = vpack.c.b16 %v3958, %v3957
      %v3981 = vpack.c.b16 %v3960, %v3959
      %v3982 = vpack.c.b16 %v3962, %v3961
      %v3983 = vpack.c.b16 %v3964, %v3963
      %v3984 = vpack.c.b16 %v3966, %v3965
      %v3985 = vpack.c.b16 %v3968, %v3967
      %v3986 = vpack.c.b16 %v3970, %v3969
      %v4019 = vunpack.c.l.b16 %v3923
      %v4020 = vunpack.c.l.b16 %v3924
      %v4021 = vunpack.c.l.b16 %v3925
      %v4022 = vunpack.c.l.b16 %v3926
      %v4023 = vunpack.c.l.b16 %v3927
      %v4024 = vunpack.c.l.b16 %v3928
      %v4025 = vunpack.c.l.b16 %v3929
      %v4026 = vunpack.c.l.b16 %v3930
      %v4027 = vunpack.c.l.b16 %v3931
      %v4028 = vunpack.c.l.b16 %v3932
      %v4029 = vunpack.c.l.b16 %v3933
      %v4030 = vunpack.c.l.b16 %v3934
      %v4031 = vunpack.c.l.b16 %v3935
      %v4032 = vunpack.c.l.b16 %v3936
      %v4033 = vunpack.c.l.b16 %v3937
      %v4034 = vunpack.c.l.b16 %v3938
      %v4035 = vpack.c.b16 %v4020, %v4019
      %v4036 = vpack.c.b16 %v4022, %v4021
      %v4037 = vpack.c.b16 %v4024, %v4023
      %v4038 = vpack.c.b16 %v4026, %v4025
      %v4039 = vpack.c.b16 %v4028, %v4027
      %v4040 = vpack.c.b16 %v4030, %v4029
      %v4041 = vpack.c.b16 %v4032, %v4031
      %v4042 = vpack.c.b16 %v4034, %v4033
      %4051 = vmatpush.bf16.msra.mxu0 %v4042
      %4052 = vmatpush.bf16.msra.mxu0 %v4041
      %4053 = vmatpush.bf16.msra.mxu0 %v4040
      %4054 = vmatpush.bf16.msra.mxu0 %v4039
      %4055 = vmatpush.bf16.msra.mxu0 %v4038
      %4056 = vmatpush.bf16.msra.mxu0 %v4037
      %4057 = vmatpush.bf16.msra.mxu0 %v4036
      %4058 = vmatpush.bf16.msra.mxu0 %v4035
      %4059 = vmatmul.bf16.gmra.mxu0 %v3971
      %v4060 = vpop.f32.mrf.mxu0
      %v4061 = vadd.f32 0.0, %v4060
      %v4062 = vpop.f32.mrf.mxu0
      %v4063 = vadd.f32 0.0, %v4062
      %4064 = vmatmul.bf16.gmra.mxu0 %v3972
      %v4065 = vpop.f32.mrf.mxu0
      %v4066 = vadd.f32 0.0, %v4065
      %v4067 = vpop.f32.mrf.mxu0
      %v4068 = vadd.f32 0.0, %v4067
      %4069 = vmatmul.bf16.gmra.mxu0 %v3973
      %v4070 = vpop.f32.mrf.mxu0
      %v4071 = vadd.f32 0.0, %v4070
      %v4072 = vpop.f32.mrf.mxu0
      %v4073 = vadd.f32 0.0, %v4072
      %4074 = vmatmul.bf16.gmra.mxu0 %v3974
      %v4075 = vpop.f32.mrf.mxu0
      %v4076 = vadd.f32 0.0, %v4075
      %v4077 = vpop.f32.mrf.mxu0
      %v4078 = vadd.f32 0.0, %v4077
      %4079 = vmatmul.bf16.gmra.mxu0 %v3975
      %v4080 = vpop.f32.mrf.mxu0
      %v4081 = vadd.f32 0.0, %v4080
      %v4082 = vpop.f32.mrf.mxu0
      %v4083 = vadd.f32 0.0, %v4082
      %4084 = vmatmul.bf16.gmra.mxu0 %v3976
      %v4085 = vpop.f32.mrf.mxu0
      %v4086 = vadd.f32 0.0, %v4085
      %v4087 = vpop.f32.mrf.mxu0
      %v4088 = vadd.f32 0.0, %v4087
      %4089 = vmatmul.bf16.gmra.mxu0 %v3977
      %v4090 = vpop.f32.mrf.mxu0
      %v4091 = vadd.f32 0.0, %v4090
      %v4092 = vpop.f32.mrf.mxu0
      %v4093 = vadd.f32 0.0, %v4092
      %4094 = vmatmul.bf16.gmra.mxu0 %v3978
      %v4095 = vpop.f32.mrf.mxu0
      %v4096 = vadd.f32 0.0, %v4095
      %v4097 = vpop.f32.mrf.mxu0
      %v4098 = vadd.f32 0.0, %v4097
      %4099 = vmatmul.bf16.gmra.mxu0 %v3979
      %v4100 = vpop.f32.mrf.mxu0
      %v4101 = vadd.f32 0.0, %v4100
      %v4102 = vpop.f32.mrf.mxu0
      %v4103 = vadd.f32 0.0, %v4102
      %4104 = vmatmul.bf16.gmra.mxu0 %v3980
      %v4105 = vpop.f32.mrf.mxu0
      %v4106 = vadd.f32 0.0, %v4105
      %v4107 = vpop.f32.mrf.mxu0
      %v4108 = vadd.f32 0.0, %v4107
      %4109 = vmatmul.bf16.gmra.mxu0 %v3981
      %v4110 = vpop.f32.mrf.mxu0
      %v4111 = vadd.f32 0.0, %v4110
      %v4112 = vpop.f32.mrf.mxu0
      %v4113 = vadd.f32 0.0, %v4112
      %4114 = vmatmul.bf16.gmra.mxu0 %v3982
      %v4115 = vpop.f32.mrf.mxu0
      %v4116 = vadd.f32 0.0, %v4115
      %v4117 = vpop.f32.mrf.mxu0
      %v4118 = vadd.f32 0.0, %v4117
      %4119 = vmatmul.bf16.gmra.mxu0 %v3983
      %v4120 = vpop.f32.mrf.mxu0
      %v4121 = vadd.f32 0.0, %v4120
      %v4122 = vpop.f32.mrf.mxu0
      %v4123 = vadd.f32 0.0, %v4122
      %4124 = vmatmul.bf16.gmra.mxu0 %v3984
      %v4125 = vpop.f32.mrf.mxu0
      %v4126 = vadd.f32 0.0, %v4125
      %v4127 = vpop.f32.mrf.mxu0
      %v4128 = vadd.f32 0.0, %v4127
      %4129 = vmatmul.bf16.gmra.mxu0 %v3985
      %v4130 = vpop.f32.mrf.mxu0
      %v4131 = vadd.f32 0.0, %v4130
      %v4132 = vpop.f32.mrf.mxu0
      %v4133 = vadd.f32 0.0, %v4132
      %4134 = vmatmul.bf16.gmra.mxu0 %v3986
      %v4135 = vpop.f32.mrf.mxu0
      %v4136 = vadd.f32 0.0, %v4135
      %v4137 = vpop.f32.mrf.mxu0
      %v4138 = vadd.f32 0.0, %v4137
      %4139 = vdwg.mxu0
      %v4140 = vpack.c.bf16 %v4061, %v4061
      %v4141 = vpack.c.bf16 %v4063, %v4063
      %v4142 = vpack.c.bf16 %v4066, %v4066
      %v4143 = vpack.c.bf16 %v4068, %v4068
      %v4144 = vpack.c.bf16 %v4071, %v4071
      %v4145 = vpack.c.bf16 %v4073, %v4073
      %v4146 = vpack.c.bf16 %v4076, %v4076
      %v4147 = vpack.c.bf16 %v4078, %v4078
      %v4148 = vpack.c.bf16 %v4081, %v4081
      %v4149 = vpack.c.bf16 %v4083, %v4083
      %v4150 = vpack.c.bf16 %v4086, %v4086
      %v4151 = vpack.c.bf16 %v4088, %v4088
      %v4152 = vpack.c.bf16 %v4091, %v4091
      %v4153 = vpack.c.bf16 %v4093, %v4093
      %v4154 = vpack.c.bf16 %v4096, %v4096
      %v4155 = vpack.c.bf16 %v4098, %v4098
      %v4156 = vpack.c.bf16 %v4101, %v4101
      %v4157 = vpack.c.bf16 %v4103, %v4103
      %v4158 = vpack.c.bf16 %v4106, %v4106
      %v4159 = vpack.c.bf16 %v4108, %v4108
      %v4160 = vpack.c.bf16 %v4111, %v4111
      %v4161 = vpack.c.bf16 %v4113, %v4113
      %v4162 = vpack.c.bf16 %v4116, %v4116
      %v4163 = vpack.c.bf16 %v4118, %v4118
      %v4164 = vpack.c.bf16 %v4121, %v4121
      %v4165 = vpack.c.bf16 %v4123, %v4123
      %v4166 = vpack.c.bf16 %v4126, %v4126
      %v4167 = vpack.c.bf16 %v4128, %v4128
      %v4168 = vpack.c.bf16 %v4131, %v4131
      %v4169 = vpack.c.bf16 %v4133, %v4133
      %v4170 = vpack.c.bf16 %v4136, %v4136
      %v4171 = vpack.c.bf16 %v4138, %v4138
      %4172 = vst [vmem:[%s344] sm:$0xf] %v4140
      %4173 = vst [vmem:[%s344 + $0x4] sm:$0xf] %v4141
      %4174 = vst [vmem:[%s344 + $0x8] sm:$0xf] %v4142
      %4175 = vst [vmem:[%s344 + $0xc] sm:$0xf] %v4143
      %4176 = vst [vmem:[%s344 + $0x10] sm:$0xf] %v4144
      %4177 = vst [vmem:[%s344 + $0x14] sm:$0xf] %v4145
      %4178 = vst [vmem:[%s344 + $0x18] sm:$0xf] %v4146
      %4179 = vst [vmem:[%s344 + $0x1c] sm:$0xf] %v4147
      %4180 = vst [vmem:[%s344 + $0x20] sm:$0xf] %v4148
      %4181 = vst [vmem:[%s344 + $0x24] sm:$0xf] %v4149
      %4182 = vst [vmem:[%s344 + $0x28] sm:$0xf] %v4150
      %4183 = vst [vmem:[%s344 + $0x2c] sm:$0xf] %v4151
      %4184 = vst [vmem:[%s344 + $0x30] sm:$0xf] %v4152
      %4185 = vst [vmem:[%s344 + $0x34] sm:$0xf] %v4153
      %4186 = vst [vmem:[%s344 + $0x38] sm:$0xf] %v4154
      %4187 = vst [vmem:[%s344 + $0x3c] sm:$0xf] %v4155
      %4188 = vst [vmem:[%s344 + $0x40] sm:$0xf] %v4156
      %4189 = vst [vmem:[%s344 + $0x44] sm:$0xf] %v4157
      %4190 = vst [vmem:[%s344 + $0x48] sm:$0xf] %v4158
      %4191 = vst [vmem:[%s344 + $0x4c] sm:$0xf] %v4159
      %4192 = vst [vmem:[%s344 + $0x50] sm:$0xf] %v4160
      %4193 = vst [vmem:[%s344 + $0x54] sm:$0xf] %v4161
      %4194 = vst [vmem:[%s344 + $0x58] sm:$0xf] %v4162
      %4195 = vst [vmem:[%s344 + $0x5c] sm:$0xf] %v4163
      %4196 = vst [vmem:[%s344 + $0x60] sm:$0xf] %v4164
      %4197 = vst [vmem:[%s344 + $0x64] sm:$0xf] %v4165
      %4198 = vst [vmem:[%s344 + $0x68] sm:$0xf] %v4166
      %4199 = vst [vmem:[%s344 + $0x6c] sm:$0xf] %v4167
      %4200 = vst [vmem:[%s344 + $0x70] sm:$0xf] %v4168
      %4201 = vst [vmem:[%s344 + $0x74] sm:$0xf] %v4169
      %4202 = vst [vmem:[%s344 + $0x78] sm:$0xf] %v4170
      %4203 = vst [vmem:[%s344 + $0x7c] sm:$0xf] %v4171
      %v4204 = vadd.f32 %v4061, %v4063
      %v4205 = vadd.f32 %v4204, %v4066
      %v4206 = vadd.f32 %v4205, %v4068
      %v4207 = vadd.f32 %v4206, %v4071
      %v4208 = vadd.f32 %v4207, %v4073
      %v4209 = vadd.f32 %v4208, %v4076
      %v4210 = vadd.f32 %v4209, %v4078
      %v4211 = vadd.f32 %v4210, %v4081
      %v4212 = vadd.f32 %v4211, %v4083
      %v4213 = vadd.f32 %v4212, %v4086
      %v4214 = vadd.f32 %v4213, %v4088
      %v4215 = vadd.f32 %v4214, %v4091
      %v4216 = vadd.f32 %v4215, %v4093
      %v4217 = vadd.f32 %v4216, %v4096
      %v4218 = vadd.f32 %v4217, %v4098
      %v4219 = vadd.f32 %v4218, %v4101
      %v4220 = vadd.f32 %v4219, %v4103
      %v4221 = vadd.f32 %v4220, %v4106
      %v4222 = vadd.f32 %v4221, %v4108
      %v4223 = vadd.f32 %v4222, %v4111
      %v4224 = vadd.f32 %v4223, %v4113
      %v4225 = vadd.f32 %v4224, %v4116
      %v4226 = vadd.f32 %v4225, %v4118
      %v4227 = vadd.f32 %v4226, %v4121
      %v4228 = vadd.f32 %v4227, %v4123
      %v4229 = vadd.f32 %v4228, %v4126
      %v4230 = vadd.f32 %v4229, %v4128
      %v4231 = vadd.f32 %v4230, %v4131
      %v4232 = vadd.f32 %v4231, %v4133
      %v4233 = vadd.f32 %v4232, %v4136
      %v4234 = vadd.f32 %v4233, %v4138
      %v4235 = vrot.slane %v4234, 4
      %v4236 = vadd.f32 %v4234, %v4235
      %v4237 = vrot.slane %v4236, 2
      %v4238 = vadd.f32 %v4236, %v4237
      %v4239 = vrot.slane %v4238, 1
      %v4240 = vadd.f32 %v4238, %v4239
      %4241 = vst [vmem:[%s347] sm:$0x1] %v4240
      %v4242 = vmul.f32 %v4061, %v4061
      %v4243 = vmul.f32 %v4063, %v4063
      %v4244 = vmul.f32 %v4066, %v4066
      %v4245 = vmul.f32 %v4068, %v4068
      %v4246 = vmul.f32 %v4071, %v4071
      %v4247 = vmul.f32 %v4073, %v4073
      %v4248 = vmul.f32 %v4076, %v4076
      %v4249 = vmul.f32 %v4078, %v4078
      %v4250 = vmul.f32 %v4081, %v4081
      %v4251 = vmul.f32 %v4083, %v4083
      %v4252 = vmul.f32 %v4086, %v4086
      %v4253 = vmul.f32 %v4088, %v4088
      %v4254 = vmul.f32 %v4091, %v4091
      %v4255 = vmul.f32 %v4093, %v4093
      %v4256 = vmul.f32 %v4096, %v4096
      %v4257 = vmul.f32 %v4098, %v4098
      %v4258 = vmul.f32 %v4101, %v4101
      %v4259 = vmul.f32 %v4103, %v4103
      %v4260 = vmul.f32 %v4106, %v4106
      %v4261 = vmul.f32 %v4108, %v4108
      %v4262 = vmul.f32 %v4111, %v4111
      %v4263 = vmul.f32 %v4113, %v4113
      %v4264 = vmul.f32 %v4116, %v4116
      %v4265 = vmul.f32 %v4118, %v4118
      %v4266 = vmul.f32 %v4121, %v4121
      %v4267 = vmul.f32 %v4123, %v4123
      %v4268 = vmul.f32 %v4126, %v4126
      %v4269 = vmul.f32 %v4128, %v4128
      %v4270 = vmul.f32 %v4131, %v4131
      %v4271 = vmul.f32 %v4133, %v4133
      %v4272 = vmul.f32 %v4136, %v4136
      %v4273 = vmul.f32 %v4138, %v4138
      %v4274 = vadd.f32 %v4242, %v4243
      %v4275 = vadd.f32 %v4274, %v4244
      %v4276 = vadd.f32 %v4275, %v4245
      %v4277 = vadd.f32 %v4276, %v4246
      %v4278 = vadd.f32 %v4277, %v4247
      %v4279 = vadd.f32 %v4278, %v4248
      %v4280 = vadd.f32 %v4279, %v4249
      %v4281 = vadd.f32 %v4280, %v4250
      %v4282 = vadd.f32 %v4281, %v4251
      %v4283 = vadd.f32 %v4282, %v4252
      %v4284 = vadd.f32 %v4283, %v4253
      %v4285 = vadd.f32 %v4284, %v4254
      %v4286 = vadd.f32 %v4285, %v4255
      %v4287 = vadd.f32 %v4286, %v4256
      %v4288 = vadd.f32 %v4287, %v4257
      %v4289 = vadd.f32 %v4288, %v4258
      %v4290 = vadd.f32 %v4289, %v4259
      %v4291 = vadd.f32 %v4290, %v4260
      %v4292 = vadd.f32 %v4291, %v4261
      %v4293 = vadd.f32 %v4292, %v4262
      %v4294 = vadd.f32 %v4293, %v4263
      %v4295 = vadd.f32 %v4294, %v4264
      %v4296 = vadd.f32 %v4295, %v4265
      %v4297 = vadd.f32 %v4296, %v4266
      %v4298 = vadd.f32 %v4297, %v4267
      %v4299 = vadd.f32 %v4298, %v4268
      %v4300 = vadd.f32 %v4299, %v4269
      %v4301 = vadd.f32 %v4300, %v4270
      %v4302 = vadd.f32 %v4301, %v4271
      %v4303 = vadd.f32 %v4302, %v4272
      %v4304 = vadd.f32 %v4303, %v4273
      %v4305 = vrot.slane %v4304, 4
      %v4306 = vadd.f32 %v4304, %v4305
      %v4307 = vrot.slane %v4306, 2
      %v4308 = vadd.f32 %v4306, %v4307
      %v4309 = vrot.slane %v4308, 1
      %v4310 = vadd.f32 %v4308, %v4309
      %4311 = vst [vmem:[%s350] sm:$0x1] %v4310
      %p4312 = scmp.lt.s32.totalorder %s20, 1
      %s4313 = scalar_select %p4312, %s20, 1
      %s4314 = smul.addr %s4313, 32
      %s4315 = smul.addr %s4314, 4
      %s4316 = scalar_lea.vmem %s3, %s4315
      %p4317 = scmp.lt.s32.totalorder %s20, 1
      %s4318 = scalar_select %p4317, %s20, 1
      %s4319 = scalar_lea.vmem %s4, %s4318
      %p4320 = scmp.lt.s32.totalorder %s20, 1
      %s4321 = scalar_select %p4320, %s20, 1
      %s4322 = scalar_lea.vmem %s5, %s4321
      %p4323 = scmp.lt.s32.totalorder %s20, 1
      %s4324 = scalar_select %p4323, %s20, 1
      %s4325 = smul.addr %s4324, 32
      %s4326 = smul.addr %s4325, 4
      %s4327 = scalar_lea.vmem %s6, %s4326
      %p4328 = scmp.lt.s32.totalorder %s20, 1
      %s4329 = scalar_select %p4328, %s20, 1
      %s4330 = scalar_lea.vmem %s7, %s4329
      %p4331 = scmp.lt.s32.totalorder %s20, 1
      %s4332 = scalar_select %p4331, %s20, 1
      %s4333 = scalar_lea.vmem %s8, %s4332
      // Predicated region
      $region33: #{basic_block_forward.3} parent=31 // pred_check
        %p4334 = pneg %p106
      $region34: #{basic_block_forward.3} parent=31 // pred_check_branch
        %4336 = sbr.rel (%p4334) target = $region36
      $region35: #{basic_block_forward.3} parent=31 // pred_region
        _
      $region36: #{basic_block_forward.3} parent=31 // pred_fallthru
        _
      // Predicated region
      $region37: #{basic_block_forward.3} parent=31 // pred_check
        %p4337 = pneg %p132
      $region38: #{basic_block_forward.3} parent=31 // pred_check_branch
        %4339 = sbr.rel (%p4337) target = $region40
      $region39: #{basic_block_forward.3} parent=31 // pred_region
        _
      $region40: #{basic_block_forward.3} parent=31 // pred_fallthru
        _
      // Predicated region
      $region41: #{basic_block_forward.3} parent=31 // pred_check
        %p4340 = pneg %p158
      $region42: #{basic_block_forward.3} parent=31 // pred_check_branch
        %4342 = sbr.rel (%p4340) target = $region44
      $region43: #{basic_block_forward.3} parent=31 // pred_region
        _
      $region44: #{basic_block_forward.3} parent=31 // pred_fallthru
        _
      // Predicated region
      $region45: #{basic_block_forward.3} parent=31 // pred_check
        %p4343 = pneg %p184
      $region46: #{basic_block_forward.3} parent=31 // pred_check_branch
        %4345 = sbr.rel (%p4343) target = $region48
      $region47: #{basic_block_forward.3} parent=31 // pred_region
        _
      $region48: #{basic_block_forward.3} parent=31 // pred_fallthru
        _
      // Predicated region
      $region49: #{basic_block_forward.3} parent=31 // pred_check
        %p4346 = pneg %p210
      $region50: #{basic_block_forward.3} parent=31 // pred_check_branch
        %4348 = sbr.rel (%p4346) target = $region52
      $region51: #{basic_block_forward.3} parent=31 // pred_region
        _
      $region52: #{basic_block_forward.3} parent=31 // pred_fallthru
        _
      // Predicated region
      $region53: #{basic_block_forward.3} parent=31 // pred_check
        %p4349 = pneg %p236
      $region54: #{basic_block_forward.3} parent=31 // pred_check_branch
        %4351 = sbr.rel (%p4349) target = $region56
      $region55: #{basic_block_forward.3} parent=31 // pred_region
        _
      $region56: #{basic_block_forward.3} parent=31 // pred_fallthru
        _
    $region32: #{basic_block_forward.3} parent=5 // pred_fallthru
      _
    %p4352 = scmp.le.s32.totalorder 2, %s15
    // Predicated region
    $region57: #{basic_block_forward.3} parent=5 // pred_check
      %p4353 = pneg %p4352
    $region58: #{basic_block_forward.3} parent=5 // pred_check_branch
      %4355 = sbr.rel (%p4353) target = $region60
    $region59: #{basic_block_forward.3} parent=5 // pred_region
      %s4356 = ssub.s32 %s15, 2
      // Predicated region
      $region61: #{basic_block_forward.3} parent=59 // pred_check
        %p4357 = pneg %p112
      $region62: #{basic_block_forward.3} parent=59 // pred_check_branch
        %4359 = sbr.rel (%p4357) target = $region64
      $region63: #{basic_block_forward.3} parent=59 // pred_region
        %p4360 = scmp.lt.s32.totalorder %s21, 1
        %s4361 = scalar_select %p4360, %s21, 1
        %s4362 = smul.addr %s4361, 32
        %s4363 = smul.addr %s4362, 4
        %s4364 = scalar_lea.vmem %s3, %s4363
      $region64: #{basic_block_forward.3} parent=59 // pred_fallthru
        _
      // Predicated region
      $region65: #{basic_block_forward.3} parent=59 // pred_check
        %p4365 = pneg %p138
      $region66: #{basic_block_forward.3} parent=59 // pred_check_branch
        %4367 = sbr.rel (%p4365) target = $region68
      $region67: #{basic_block_forward.3} parent=59 // pred_region
        %p4368 = scmp.lt.s32.totalorder %s21, 1
        %s4369 = scalar_select %p4368, %s21, 1
        %s4370 = scalar_lea.vmem %s4, %s4369
      $region68: #{basic_block_forward.3} parent=59 // pred_fallthru
        _
      // Predicated region
      $region69: #{basic_block_forward.3} parent=59 // pred_check
        %p4371 = pneg %p164
      $region70: #{basic_block_forward.3} parent=59 // pred_check_branch
        %4373 = sbr.rel (%p4371) target = $region72
      $region71: #{basic_block_forward.3} parent=59 // pred_region
        %p4374 = scmp.lt.s32.totalorder %s21, 1
        %s4375 = scalar_select %p4374, %s21, 1
        %s4376 = scalar_lea.vmem %s5, %s4375
      $region72: #{basic_block_forward.3} parent=59 // pred_fallthru
        _
      // Predicated region
      $region73: #{basic_block_forward.3} parent=59 // pred_check
        %p4377 = pneg %p190
      $region74: #{basic_block_forward.3} parent=59 // pred_check_branch
        %4379 = sbr.rel (%p4377) target = $region76
      $region75: #{basic_block_forward.3} parent=59 // pred_region
        %p4380 = scmp.lt.s32.totalorder %s21, 1
        %s4381 = scalar_select %p4380, %s21, 1
        %s4382 = smul.addr %s4381, 32
        %s4383 = smul.addr %s4382, 4
        %s4384 = scalar_lea.vmem %s6, %s4383
      $region76: #{basic_block_forward.3} parent=59 // pred_fallthru
        _
      // Predicated region
      $region77: #{basic_block_forward.3} parent=59 // pred_check
        %p4385 = pneg %p216
      $region78: #{basic_block_forward.3} parent=59 // pred_check_branch
        %4387 = sbr.rel (%p4385) target = $region80
      $region79: #{basic_block_forward.3} parent=59 // pred_region
        %p4388 = scmp.lt.s32.totalorder %s21, 1
        %s4389 = scalar_select %p4388, %s21, 1
        %s4390 = scalar_lea.vmem %s7, %s4389
      $region80: #{basic_block_forward.3} parent=59 // pred_fallthru
        _
      // Predicated region
      $region81: #{basic_block_forward.3} parent=59 // pred_check
        %p4391 = pneg %p242
      $region82: #{basic_block_forward.3} parent=59 // pred_check_branch
        %4393 = sbr.rel (%p4391) target = $region84
      $region83: #{basic_block_forward.3} parent=59 // pred_region
        %p4394 = scmp.lt.s32.totalorder %s21, 1
        %s4395 = scalar_select %p4394, %s21, 1
        %s4396 = scalar_lea.vmem %s8, %s4395
      $region84: #{basic_block_forward.3} parent=59 // pred_fallthru
        _
    $region60: #{basic_block_forward.3} parent=5 // pred_fallthru
      _
  $region6: #{basic_block_forward.3} parent=0 // loop_footer
    %s19 = sadd.s32 1, %s15
  $region7: #{basic_block_forward.3} parent=0 // loop_footer_branch
    %14 = sbr.rel target = $region3
  $region8: #{basic_block_forward.3} parent=0 // loop_exit
    _

// kernel: basic_block_forward.4
$region0: #{basic_block_forward.4}
  #allocation0 [shape = 'u32[]', space=smem, size = 0x4, offset = 0x4, fixed_abs, tag = 'smem constant byte address 0x4 - core index']
  #allocation1 [shape = 'u32[72,128]{1,0:T(1,128)}', space=vmem, size = 0x9000, scoped, tag = 'internal scratch']
  #allocation2 [shape = 'bf16[1,18,18,128]{3,2,1,0:T(8,128)(2,1)}', space=vmem, size = 0x1b000, scoped, tag = 'scratch operand']
  %s0 = inlined_call_operand.vmem [shape: bf16[2,16,16,128], index: 0, kind: input, shape index: {}]
  %s1 = inlined_call_operand.vmem [shape: f32[1,128], index: 1, kind: input, shape index: {}]
  %s2 = inlined_call_operand.vmem [shape: f32[1,128], index: 2, kind: input, shape index: {}]
  %s3 = inlined_call_operand.vmem [shape: bf16[1152,128], index: 3, kind: input, shape index: {}]
  %s4 = inlined_call_operand.vmem [shape: bf16[2,16,16,128], index: 4, kind: output, shape index: {0}]
  %s5 = inlined_call_operand.vmem [shape: f32[2,1,128], index: 5, kind: output, shape index: {1}]
  %s6 = inlined_call_operand.vmem [shape: f32[2,1,128], index: 6, kind: output, shape index: {2}]
  %7 = xla_tuple %s4, %s5, %s6
  %s8 = sld [smem:[#allocation0]]
  $region65: #{basic_block_forward.4} parent=0
    _
  %s10 = ssub.s32 1, %s8
  %s11 = scalar_select 0, %s10, %s8
  loop: start=0, step=1, limit=4
  $region2: #{basic_block_forward.4} parent=0 // loop_pre_header
    _
  $region3: #{basic_block_forward.4} parent=0 // loop_header
    %s13 = sphi 0, %s17
    %p14 = scmp.ge.s32.totalorder %s13, 4
    %s23 = sphi 0, %s25
    %s26 = sphi 0, %s23
    %s27 = sphi 0, %s26
    %s43 = sphi 0, %s27
    %s47 = sphi 0, %s47
    %s49 = sphi 0, %s47
    %s50 = sphi 0, %s49
    %s64 = sphi 0, %s50
    %s68 = sphi 0, %s68
    %s70 = sphi 0, %s68
    %s71 = sphi 0, %s70
    %s85 = sphi 0, %s71
    %s89 = sphi 0, %s89
    %s91 = sphi 0, %s89
    %s92 = sphi 0, %s91
    %s106 = sphi 0, %s92
    %s112 = sphi 0, %s114
    %s115 = sphi 0, %s112
    %s116 = sphi 0, %s115
    %s132 = sphi 0, %s116
    %s138 = sphi 0, %s140
    %s141 = sphi 0, %s138
    %s142 = sphi 0, %s141
    %s158 = sphi 0, %s142
    %s164 = sphi 0, %s166
    %s167 = sphi 0, %s164
    %s168 = sphi 0, %s167
    %s184 = sphi 0, %s168
  $region4: #{basic_block_forward.4} parent=0 // loop_header_branch
    %16 = sbr.rel (%p14) target = $region8
  $region5: #{basic_block_forward.4} parent=0 // loop_body
    %s18 = ssub.s32 %s13, 1
    %s19 = ssub.s32 %s13, 2
    %s20 = sadd.s32 %s13, 1
    %s21 = ssub.s32 %s13, %s20
    %p22 = scmp.eq.s32.totalorder %s21, 0
    %s24 = sadd.s32 %s23, 1
    %s25 = scalar_select %p22, %s23, %s24
    %p28 = pneg %p22
    %p29 = scmp.eq.s32.totalorder %s13, 1
    %p30 = por %p28, %p29
    %p31 = scmp.ne.s32.totalorder %s23, %s26
    %p32 = scmp.eq.s32.totalorder %s13, 0
    %p33 = por %p31, %p32
    %p34 = scmp.ne.s32.totalorder %s23, %s26
    %p35 = scmp.eq.s32.totalorder %s18, 1
    %p36 = por %p34, %p35
    %p37 = scmp.ne.s32.totalorder %s26, %s27
    %p38 = scmp.eq.s32.totalorder %s18, 0
    %p39 = por %p37, %p38
    %p40 = scmp.ne.s32.totalorder %s26, %s27
    %p41 = scmp.eq.s32.totalorder %s19, 1
    %p42 = por %p40, %p41
    %p44 = scmp.ne.s32.totalorder %s27, %s43
    %p45 = scmp.eq.s32.totalorder %s19, 0
    %p46 = por %p44, %p45
    %s48 = sadd.s32 %s47, 1
    %p51 = scmp.eq.s32.totalorder %s13, 1
    %p52 = scmp.ne.s32.totalorder %s47, %s49
    %p53 = scmp.eq.s32.totalorder %s13, 0
    %p54 = por %p52, %p53
    %p55 = scmp.ne.s32.totalorder %s47, %s49
    %p56 = scmp.eq.s32.totalorder %s18, 1
    %p57 = por %p55, %p56
    %p58 = scmp.ne.s32.totalorder %s49, %s50
    %p59 = scmp.eq.s32.totalorder %s18, 0
    %p60 = por %p58, %p59
    %p61 = scmp.ne.s32.totalorder %s49, %s50
    %p62 = scmp.eq.s32.totalorder %s19, 1
    %p63 = por %p61, %p62
    %p65 = scmp.ne.s32.totalorder %s50, %s64
    %p66 = scmp.eq.s32.totalorder %s19, 0
    %p67 = por %p65, %p66
    %s69 = sadd.s32 %s68, 1
    %p72 = scmp.eq.s32.totalorder %s13, 1
    %p73 = scmp.ne.s32.totalorder %s68, %s70
    %p74 = scmp.eq.s32.totalorder %s13, 0
    %p75 = por %p73, %p74
    %p76 = scmp.ne.s32.totalorder %s68, %s70
    %p77 = scmp.eq.s32.totalorder %s18, 1
    %p78 = por %p76, %p77
    %p79 = scmp.ne.s32.totalorder %s70, %s71
    %p80 = scmp.eq.s32.totalorder %s18, 0
    %p81 = por %p79, %p80
    %p82 = scmp.ne.s32.totalorder %s70, %s71
    %p83 = scmp.eq.s32.totalorder %s19, 1
    %p84 = por %p82, %p83
    %p86 = scmp.ne.s32.totalorder %s71, %s85
    %p87 = scmp.eq.s32.totalorder %s19, 0
    %p88 = por %p86, %p87
    %s90 = sadd.s32 %s89, 1
    %p93 = scmp.eq.s32.totalorder %s13, 1
    %p94 = scmp.ne.s32.totalorder %s89, %s91
    %p95 = scmp.eq.s32.totalorder %s13, 0
    %p96 = por %p94, %p95
    %p97 = scmp.ne.s32.totalorder %s89, %s91
    %p98 = scmp.eq.s32.totalorder %s18, 1
    %p99 = por %p97, %p98
    %p100 = scmp.ne.s32.totalorder %s91, %s92
    %p101 = scmp.eq.s32.totalorder %s18, 0
    %p102 = por %p100, %p101
    %p103 = scmp.ne.s32.totalorder %s91, %s92
    %p104 = scmp.eq.s32.totalorder %s19, 1
    %p105 = por %p103, %p104
    %p107 = scmp.ne.s32.totalorder %s92, %s106
    %p108 = scmp.eq.s32.totalorder %s19, 0
    %p109 = por %p107, %p108
    %s110 = ssub.s32 %s13, %s20
    %p111 = scmp.eq.s32.totalorder %s110, 0
    %s113 = sadd.s32 %s112, 1
    %s114 = scalar_select %p111, %s112, %s113
    %p117 = pneg %p111
    %p118 = scmp.eq.s32.totalorder %s13, 1
    %p119 = por %p117, %p118
    %p120 = scmp.ne.s32.totalorder %s112, %s115
    %p121 = scmp.eq.s32.totalorder %s13, 0
    %p122 = por %p120, %p121
    %p123 = scmp.ne.s32.totalorder %s112, %s115
    %p124 = scmp.eq.s32.totalorder %s18, 1
    %p125 = por %p123, %p124
    %p126 = scmp.ne.s32.totalorder %s115, %s116
    %p127 = scmp.eq.s32.totalorder %s18, 0
    %p128 = por %p126, %p127
    %p129 = scmp.ne.s32.totalorder %s115, %s116
    %p130 = scmp.eq.s32.totalorder %s19, 1
    %p131 = por %p129, %p130
    %p133 = scmp.ne.s32.totalorder %s116, %s132
    %p134 = scmp.eq.s32.totalorder %s19, 0
    %p135 = por %p133, %p134
    %s136 = ssub.s32 %s13, %s20
    %p137 = scmp.eq.s32.totalorder %s136, 0
    %s139 = sadd.s32 %s138, 1
    %s140 = scalar_select %p137, %s138, %s139
    %p143 = pneg %p137
    %p144 = scmp.eq.s32.totalorder %s13, 1
    %p145 = por %p143, %p144
    %p146 = scmp.ne.s32.totalorder %s138, %s141
    %p147 = scmp.eq.s32.totalorder %s13, 0
    %p148 = por %p146, %p147
    %p149 = scmp.ne.s32.totalorder %s138, %s141
    %p150 = scmp.eq.s32.totalorder %s18, 1
    %p151 = por %p149, %p150
    %p152 = scmp.ne.s32.totalorder %s141, %s142
    %p153 = scmp.eq.s32.totalorder %s18, 0
    %p154 = por %p152, %p153
    %p155 = scmp.ne.s32.totalorder %s141, %s142
    %p156 = scmp.eq.s32.totalorder %s19, 1
    %p157 = por %p155, %p156
    %p159 = scmp.ne.s32.totalorder %s142, %s158
    %p160 = scmp.eq.s32.totalorder %s19, 0
    %p161 = por %p159, %p160
    %s162 = ssub.s32 %s13, %s20
    %p163 = scmp.eq.s32.totalorder %s162, 0
    %s165 = sadd.s32 %s164, 1
    %s166 = scalar_select %p163, %s164, %s165
    %p169 = pneg %p163
    %p170 = scmp.eq.s32.totalorder %s13, 1
    %p171 = por %p169, %p170
    %p172 = scmp.ne.s32.totalorder %s164, %s167
    %p173 = scmp.eq.s32.totalorder %s13, 0
    %p174 = por %p172, %p173
    %p175 = scmp.ne.s32.totalorder %s164, %s167
    %p176 = scmp.eq.s32.totalorder %s18, 1
    %p177 = por %p175, %p176
    %p178 = scmp.ne.s32.totalorder %s167, %s168
    %p179 = scmp.eq.s32.totalorder %s18, 0
    %p180 = por %p178, %p179
    %p181 = scmp.ne.s32.totalorder %s167, %s168
    %p182 = scmp.eq.s32.totalorder %s19, 1
    %p183 = por %p181, %p182
    %p185 = scmp.ne.s32.totalorder %s168, %s184
    %p186 = scmp.eq.s32.totalorder %s19, 0
    %p187 = por %p185, %p186
    %p188 = scmp.le.s32.totalorder 1, %s13
    %p189 = scmp.lt.s32.totalorder %s13, 3
    %p190 = pnand %p188, %p189
    %p191 = pneg %p190
    // Predicated region
    $region9: #{basic_block_forward.4} parent=5 // pred_check
      _
    $region10: #{basic_block_forward.4} parent=5 // pred_check_branch
      %193 = sbr.rel (%p190) target = $region12
    $region11: #{basic_block_forward.4} parent=5 // pred_region
      %s194 = ssub.s32 %s13, 1
      // Predicated region
      $region13: #{basic_block_forward.4} parent=11 // pred_check
        %p195 = pneg %p60
      $region14: #{basic_block_forward.4} parent=11 // pred_check_branch
        %197 = sbr.rel (%p195) target = $region16
      $region15: #{basic_block_forward.4} parent=11 // pred_region
        _
      $region16: #{basic_block_forward.4} parent=11 // pred_fallthru
        _
      // Predicated region
      $region17: #{basic_block_forward.4} parent=11 // pred_check
        %p198 = pneg %p81
      $region18: #{basic_block_forward.4} parent=11 // pred_check_branch
        %200 = sbr.rel (%p198) target = $region20
      $region19: #{basic_block_forward.4} parent=11 // pred_region
        _
      $region20: #{basic_block_forward.4} parent=11 // pred_fallthru
        _
      // Predicated region
      $region21: #{basic_block_forward.4} parent=11 // pred_check
        %p201 = pneg %p102
      $region22: #{basic_block_forward.4} parent=11 // pred_check_branch
        %203 = sbr.rel (%p201) target = $region24
      $region23: #{basic_block_forward.4} parent=11 // pred_region
        _
      $region24: #{basic_block_forward.4} parent=11 // pred_fallthru
        _
    $region12: #{basic_block_forward.4} parent=5 // pred_fallthru
      _
    %p204 = scmp.lt.s32.totalorder %s13, 2
    // Predicated region
    $region25: #{basic_block_forward.4} parent=5 // pred_check
      %p205 = pneg %p204
    $region26: #{basic_block_forward.4} parent=5 // pred_check_branch
      %207 = sbr.rel (%p205) target = $region28
    $region27: #{basic_block_forward.4} parent=5 // pred_region
      // Predicated region
      $region29: #{basic_block_forward.4} parent=27 // pred_check
        %p208 = pneg %p33
      $region30: #{basic_block_forward.4} parent=27 // pred_check_branch
        %210 = sbr.rel (%p208) target = $region32
      $region31: #{basic_block_forward.4} parent=27 // pred_region
        %p211 = scmp.lt.s32.totalorder %s13, 1
        %s212 = scalar_select %p211, %s13, 1
        %s213 = smul.addr %s212, 32
        %s214 = smul.addr %s213, 4
        %s215 = scalar_lea.vmem %s0, %s214
      $region32: #{basic_block_forward.4} parent=27 // pred_fallthru
        _
    $region28: #{basic_block_forward.4} parent=5 // pred_fallthru
      _
    %p216 = scmp.le.s32.totalorder 1, %s13
    %p217 = scmp.lt.s32.totalorder %s13, 3
    %p218 = pnand %p216, %p217
    %p219 = pneg %p218
    // Predicated region
    $region33: #{basic_block_forward.4} parent=5 // pred_check
      _
    $region34: #{basic_block_forward.4} parent=5 // pred_check_branch
      %221 = sbr.rel (%p218) target = $region36
    $region35: #{basic_block_forward.4} parent=5 // pred_region
      %s222 = ssub.s32 %s13, 1
      %p223 = scmp.lt.s32.totalorder %s18, 1
      %s224 = scalar_select %p223, %s18, 1
      %s225 = smul.addr %s224, 32
      %s226 = smul.addr %s225, 4
      %s227 = scalar_lea.vmem %s0, %s226
      %p228 = pneg %p39
      %p229 = pneg %p36
      %p230 = pneg %p60
      %p231 = pneg %p57
      %p232 = pneg %p81
      %p233 = pneg %p78
      %p234 = pneg %p102
      %p235 = pneg %p99
      %p236 = pneg %p128
      %p237 = pneg %p125
      %p238 = scmp.lt.s32.totalorder %s18, 1
      %s239 = scalar_select %p238, %s18, 1
      %s240 = smul.addr %s239, 32
      %s241 = smul.addr %s240, 4
      %s242 = scalar_lea.vmem %s4, %s241
      %p243 = pneg %p154
      %p244 = pneg %p151
      %p245 = scmp.lt.s32.totalorder %s18, 1
      %s246 = scalar_select %p245, %s18, 1
      %s247 = scalar_lea.vmem %s5, %s246
      %p248 = pneg %p180
      %p249 = pneg %p177
      %p250 = scmp.lt.s32.totalorder %s18, 1
      %s251 = scalar_select %p250, %s18, 1
      %s252 = scalar_lea.vmem %s6, %s251
      %p253 = scmp.lt.s32.totalorder %s18, 1
      %s254 = scalar_select %p253, %s18, 1
      %s255 = smul.addr %s254, 32
      %s256 = smul.addr %s255, 4
      %s257 = scalar_lea.vmem %s0, %s256
      %p258 = scmp.lt.s32.totalorder %s18, 1
      %s259 = scalar_select %p258, %s18, 1
      %s260 = smul.addr %s259, 32
      %s261 = smul.addr %s260, 4
      %s262 = scalar_lea.vmem %s4, %s261
      %p263 = scmp.lt.s32.totalorder %s18, 1
      %s264 = scalar_select %p263, %s18, 1
      %s265 = scalar_lea.vmem %s5, %s264
      %p266 = scmp.lt.s32.totalorder %s18, 1
      %s267 = scalar_select %p266, %s18, 1
      %s268 = scalar_lea.vmem %s6, %s267
      %v270 = vld [vmem:[%s257] sm:$0xf]
      %v271 = vld [vmem:[%s257 + $0x4] sm:$0xf]
      %v272 = vld [vmem:[%s257 + $0x8] sm:$0xf]
      %v273 = vld [vmem:[%s257 + $0xc] sm:$0xf]
      %v274 = vld [vmem:[%s257 + $0x10] sm:$0xf]
      %v275 = vld [vmem:[%s257 + $0x14] sm:$0xf]
      %v276 = vld [vmem:[%s257 + $0x18] sm:$0xf]
      %v277 = vld [vmem:[%s257 + $0x1c] sm:$0xf]
      %v278 = vld [vmem:[%s257 + $0x20] sm:$0xf]
      %v279 = vld [vmem:[%s257 + $0x24] sm:$0xf]
      %v280 = vld [vmem:[%s257 + $0x28] sm:$0xf]
      %v281 = vld [vmem:[%s257 + $0x2c] sm:$0xf]
      %v282 = vld [vmem:[%s257 + $0x30] sm:$0xf]
      %v283 = vld [vmem:[%s257 + $0x34] sm:$0xf]
      %v284 = vld [vmem:[%s257 + $0x38] sm:$0xf]
      %v285 = vld [vmem:[%s257 + $0x3c] sm:$0xf]
      %v286 = vld [vmem:[%s257 + $0x40] sm:$0xf]
      %v287 = vld [vmem:[%s257 + $0x44] sm:$0xf]
      %v288 = vld [vmem:[%s257 + $0x48] sm:$0xf]
      %v289 = vld [vmem:[%s257 + $0x4c] sm:$0xf]
      %v290 = vld [vmem:[%s257 + $0x50] sm:$0xf]
      %v291 = vld [vmem:[%s257 + $0x54] sm:$0xf]
      %v292 = vld [vmem:[%s257 + $0x58] sm:$0xf]
      %v293 = vld [vmem:[%s257 + $0x5c] sm:$0xf]
      %v294 = vld [vmem:[%s257 + $0x60] sm:$0xf]
      %v295 = vld [vmem:[%s257 + $0x64] sm:$0xf]
      %v296 = vld [vmem:[%s257 + $0x68] sm:$0xf]
      %v297 = vld [vmem:[%s257 + $0x6c] sm:$0xf]
      %v298 = vld [vmem:[%s257 + $0x70] sm:$0xf]
      %v299 = vld [vmem:[%s257 + $0x74] sm:$0xf]
      %v300 = vld [vmem:[%s257 + $0x78] sm:$0xf]
      %v301 = vld [vmem:[%s257 + $0x7c] sm:$0xf]
      %v302 = vunpack.c.l.bf16 %v270
      %v303 = vunpack.c.l.bf16 %v271
      %v304 = vunpack.c.l.bf16 %v272
      %v305 = vunpack.c.l.bf16 %v273
      %v306 = vunpack.c.l.bf16 %v274
      %v307 = vunpack.c.l.bf16 %v275
      %v308 = vunpack.c.l.bf16 %v276
      %v309 = vunpack.c.l.bf16 %v277
      %v310 = vunpack.c.l.bf16 %v278
      %v311 = vunpack.c.l.bf16 %v279
      %v312 = vunpack.c.l.bf16 %v280
      %v313 = vunpack.c.l.bf16 %v281
      %v314 = vunpack.c.l.bf16 %v282
      %v315 = vunpack.c.l.bf16 %v283
      %v316 = vunpack.c.l.bf16 %v284
      %v317 = vunpack.c.l.bf16 %v285
      %v318 = vunpack.c.l.bf16 %v286
      %v319 = vunpack.c.l.bf16 %v287
      %v320 = vunpack.c.l.bf16 %v288
      %v321 = vunpack.c.l.bf16 %v289
      %v322 = vunpack.c.l.bf16 %v290
      %v323 = vunpack.c.l.bf16 %v291
      %v324 = vunpack.c.l.bf16 %v292
      %v325 = vunpack.c.l.bf16 %v293
      %v326 = vunpack.c.l.bf16 %v294
      %v327 = vunpack.c.l.bf16 %v295
      %v328 = vunpack.c.l.bf16 %v296
      %v329 = vunpack.c.l.bf16 %v297
      %v330 = vunpack.c.l.bf16 %v298
      %v331 = vunpack.c.l.bf16 %v299
      %v332 = vunpack.c.l.bf16 %v300
      %v333 = vunpack.c.l.bf16 %v301
      %v334 = vld [vmem:[%s1] sm:$0x1]
      %v336 = vperm.slane %v334, 0
      %v338 = vmul.f32 %v302, %v336
      %v339 = vmul.f32 %v303, %v336
      %v340 = vmul.f32 %v304, %v336
      %v341 = vmul.f32 %v305, %v336
      %v342 = vmul.f32 %v306, %v336
      %v343 = vmul.f32 %v307, %v336
      %v344 = vmul.f32 %v308, %v336
      %v345 = vmul.f32 %v309, %v336
      %v346 = vmul.f32 %v310, %v336
      %v347 = vmul.f32 %v311, %v336
      %v348 = vmul.f32 %v312, %v336
      %v349 = vmul.f32 %v313, %v336
      %v350 = vmul.f32 %v314, %v336
      %v351 = vmul.f32 %v315, %v336
      %v352 = vmul.f32 %v316, %v336
      %v353 = vmul.f32 %v317, %v336
      %v354 = vmul.f32 %v318, %v336
      %v355 = vmul.f32 %v319, %v336
      %v356 = vmul.f32 %v320, %v336
      %v357 = vmul.f32 %v321, %v336
      %v358 = vmul.f32 %v322, %v336
      %v359 = vmul.f32 %v323, %v336
      %v360 = vmul.f32 %v324, %v336
      %v361 = vmul.f32 %v325, %v336
      %v362 = vmul.f32 %v326, %v336
      %v363 = vmul.f32 %v327, %v336
      %v364 = vmul.f32 %v328, %v336
      %v365 = vmul.f32 %v329, %v336
      %v366 = vmul.f32 %v330, %v336
      %v367 = vmul.f32 %v331, %v336
      %v368 = vmul.f32 %v332, %v336
      %v369 = vmul.f32 %v333, %v336
      %v370 = vld [vmem:[%s2] sm:$0x1]
      %v372 = vperm.slane %v370, 0
      %v374 = vadd.f32 %v338, %v372
      %v375 = vadd.f32 %v339, %v372
      %v376 = vadd.f32 %v340, %v372
      %v377 = vadd.f32 %v341, %v372
      %v378 = vadd.f32 %v342, %v372
      %v379 = vadd.f32 %v343, %v372
      %v380 = vadd.f32 %v344, %v372
      %v381 = vadd.f32 %v345, %v372
      %v382 = vadd.f32 %v346, %v372
      %v383 = vadd.f32 %v347, %v372
      %v384 = vadd.f32 %v348, %v372
      %v385 = vadd.f32 %v349, %v372
      %v386 = vadd.f32 %v350, %v372
      %v387 = vadd.f32 %v351, %v372
      %v388 = vadd.f32 %v352, %v372
      %v389 = vadd.f32 %v353, %v372
      %v390 = vadd.f32 %v354, %v372
      %v391 = vadd.f32 %v355, %v372
      %v392 = vadd.f32 %v356, %v372
      %v393 = vadd.f32 %v357, %v372
      %v394 = vadd.f32 %v358, %v372
      %v395 = vadd.f32 %v359, %v372
      %v396 = vadd.f32 %v360, %v372
      %v397 = vadd.f32 %v361, %v372
      %v398 = vadd.f32 %v362, %v372
      %v399 = vadd.f32 %v363, %v372
      %v400 = vadd.f32 %v364, %v372
      %v401 = vadd.f32 %v365, %v372
      %v402 = vadd.f32 %v366, %v372
      %v403 = vadd.f32 %v367, %v372
      %v404 = vadd.f32 %v368, %v372
      %v405 = vadd.f32 %v369, %v372
      %v406 = vmax.f32 %v374, 0.0
      %v407 = vmax.f32 %v375, 0.0
      %v408 = vmax.f32 %v376, 0.0
      %v409 = vmax.f32 %v377, 0.0
      %v410 = vmax.f32 %v378, 0.0
      %v411 = vmax.f32 %v379, 0.0
      %v412 = vmax.f32 %v380, 0.0
      %v413 = vmax.f32 %v381, 0.0
      %v414 = vmax.f32 %v382, 0.0
      %v415 = vmax.f32 %v383, 0.0
      %v416 = vmax.f32 %v384, 0.0
      %v417 = vmax.f32 %v385, 0.0
      %v418 = vmax.f32 %v386, 0.0
      %v419 = vmax.f32 %v387, 0.0
      %v420 = vmax.f32 %v388, 0.0
      %v421 = vmax.f32 %v389, 0.0
      %v422 = vmax.f32 %v390, 0.0
      %v423 = vmax.f32 %v391, 0.0
      %v424 = vmax.f32 %v392, 0.0
      %v425 = vmax.f32 %v393, 0.0
      %v426 = vmax.f32 %v394, 0.0
      %v427 = vmax.f32 %v395, 0.0
      %v428 = vmax.f32 %v396, 0.0
      %v429 = vmax.f32 %v397, 0.0
      %v430 = vmax.f32 %v398, 0.0
      %v431 = vmax.f32 %v399, 0.0
      %v432 = vmax.f32 %v400, 0.0
      %v433 = vmax.f32 %v401, 0.0
      %v434 = vmax.f32 %v402, 0.0
      %v435 = vmax.f32 %v403, 0.0
      %v436 = vmax.f32 %v404, 0.0
      %v437 = vmax.f32 %v405, 0.0
      %v438 = vpack.c.bf16 %v406, %v406
      %v439 = vpack.c.bf16 %v407, %v407
      %v440 = vpack.c.bf16 %v408, %v408
      %v441 = vpack.c.bf16 %v409, %v409
      %v442 = vpack.c.bf16 %v410, %v410
      %v443 = vpack.c.bf16 %v411, %v411
      %v444 = vpack.c.bf16 %v412, %v412
      %v445 = vpack.c.bf16 %v413, %v413
      %v446 = vpack.c.bf16 %v414, %v414
      %v447 = vpack.c.bf16 %v415, %v415
      %v448 = vpack.c.bf16 %v416, %v416
      %v449 = vpack.c.bf16 %v417, %v417
      %v450 = vpack.c.bf16 %v418, %v418
      %v451 = vpack.c.bf16 %v419, %v419
      %v452 = vpack.c.bf16 %v420, %v420
      %v453 = vpack.c.bf16 %v421, %v421
      %v454 = vpack.c.bf16 %v422, %v422
      %v455 = vpack.c.bf16 %v423, %v423
      %v456 = vpack.c.bf16 %v424, %v424
      %v457 = vpack.c.bf16 %v425, %v425
      %v458 = vpack.c.bf16 %v426, %v426
      %v459 = vpack.c.bf16 %v427, %v427
      %v460 = vpack.c.bf16 %v428, %v428
      %v461 = vpack.c.bf16 %v429, %v429
      %v462 = vpack.c.bf16 %v430, %v430
      %v463 = vpack.c.bf16 %v431, %v431
      %v464 = vpack.c.bf16 %v432, %v432
      %v465 = vpack.c.bf16 %v433, %v433
      %v466 = vpack.c.bf16 %v434, %v434
      %v467 = vpack.c.bf16 %v435, %v435
      %v468 = vpack.c.bf16 %v436, %v436
      %v469 = vpack.c.bf16 %v437, %v437
      %470 = vst [vmem:[#allocation2] sm:$0xf] 0
      %471 = vst [vmem:[#allocation2 + $0x4] sm:$0xf] 0
      %472 = vst [vmem:[#allocation2 + $0x8] sm:$0x1] 0
      %s473 = scalar_lea.vmem [#allocation2], 204
      %474 = vst [vmem:[%s473] sm:$0xf] 0
      %475 = vst [vmem:[%s473 + $0x4] sm:$0xf] 0
      %476 = vst [vmem:[%s473 + $0x8] sm:$0x1] 0
      %vm477 = vcmask 1040384
      %vm478 = vsmask.f32 256
      %vm479 = vmand %vm477, %vm478
      %v480 = vld [vmem:[#allocation2] sm:$0x1]
      %v481 = vsel %vm479, 0, %v480
      %482 = vst [vmem:[#allocation2] sm:$0x1] %v481
      %v483 = vld [vmem:[#allocation2 + $0xc] sm:$0x1]
      %v484 = vsel %vm479, 0, %v483
      %485 = vst [vmem:[#allocation2 + $0xc] sm:$0x1] %v484
      %v486 = vld [vmem:[#allocation2 + $0x18] sm:$0x1]
      %v487 = vsel %vm479, 0, %v486
      %488 = vst [vmem:[#allocation2 + $0x18] sm:$0x1] %v487
      %v489 = vld [vmem:[#allocation2 + $0x24] sm:$0x1]
      %v490 = vsel %vm479, 0, %v489
      %491 = vst [vmem:[#allocation2 + $0x24] sm:$0x1] %v490
      %v492 = vld [vmem:[#allocation2 + $0x30] sm:$0x1]
      %v493 = vsel %vm479, 0, %v492
      %494 = vst [vmem:[#allocation2 + $0x30] sm:$0x1] %v493
      %v495 = vld [vmem:[#allocation2 + $0x3c] sm:$0x1]
      %v496 = vsel %vm479, 0, %v495
      %497 = vst [vmem:[#allocation2 + $0x3c] sm:$0x1] %v496
      %v498 = vld [vmem:[#allocation2 + $0x48] sm:$0x1]
      %v499 = vsel %vm479, 0, %v498
      %500 = vst [vmem:[#allocation2 + $0x48] sm:$0x1] %v499
      %v501 = vld [vmem:[#allocation2 + $0x54] sm:$0x1]
      %v502 = vsel %vm479, 0, %v501
      %503 = vst [vmem:[#allocation2 + $0x54] sm:$0x1] %v502
      %v504 = vld [vmem:[#allocation2 + $0x60] sm:$0x1]
      %v505 = vsel %vm479, 0, %v504
      %506 = vst [vmem:[#allocation2 + $0x60] sm:$0x1] %v505
      %v507 = vld [vmem:[#allocation2 + $0x6c] sm:$0x1]
      %v508 = vsel %vm479, 0, %v507
      %509 = vst [vmem:[#allocation2 + $0x6c] sm:$0x1] %v508
      %v510 = vld [vmem:[#allocation2 + $0x78] sm:$0x1]
      %v511 = vsel %vm479, 0, %v510
      %512 = vst [vmem:[#allocation2 + $0x78] sm:$0x1] %v511
      %v513 = vld [vmem:[#allocation2 + $0x84] sm:$0x1]
      %v514 = vsel %vm479, 0, %v513
      %515 = vst [vmem:[#allocation2 + $0x84] sm:$0x1] %v514
      %v516 = vld [vmem:[#allocation2 + $0x90] sm:$0x1]
      %v517 = vsel %vm479, 0, %v516
      %518 = vst [vmem:[#allocation2 + $0x90] sm:$0x1] %v517
      %v519 = vld [vmem:[#allocation2 + $0x9c] sm:$0x1]
      %v520 = vsel %vm479, 0, %v519
      %521 = vst [vmem:[#allocation2 + $0x9c] sm:$0x1] %v520
      %v522 = vld [vmem:[#allocation2 + $0xa8] sm:$0x1]
      %v523 = vsel %vm479, 0, %v522
      %524 = vst [vmem:[#allocation2 + $0xa8] sm:$0x1] %v523
      %v525 = vld [vmem:[#allocation2 + $0xb4] sm:$0x1]
      %v526 = vsel %vm479, 0, %v525
      %527 = vst [vmem:[#allocation2 + $0xb4] sm:$0x1] %v526
      %v528 = vld [vmem:[#allocation2 + $0xc0] sm:$0x1]
      %v529 = vsel %vm479, 0, %v528
      %530 = vst [vmem:[#allocation2 + $0xc0] sm:$0x1] %v529
      %v531 = vld [vmem:[#allocation2 + $0xcc] sm:$0x1]
      %v532 = vsel %vm479, 0, %v531
      %533 = vst [vmem:[#allocation2 + $0xcc] sm:$0x1] %v532
      %vm534 = vsmask.f32 7938
      %vm535 = vmand %vm477, %vm534
      %v536 = vld [vmem:[#allocation2 + $0x8] sm:$0x1]
      %v537 = vsel %vm535, 0, %v536
      %538 = vst [vmem:[#allocation2 + $0x8] sm:$0x1] %v537
      %v539 = vld [vmem:[#allocation2 + $0x14] sm:$0x1]
      %v540 = vsel %vm535, 0, %v539
      %541 = vst [vmem:[#allocation2 + $0x14] sm:$0x1] %v540
      %v542 = vld [vmem:[#allocation2 + $0x20] sm:$0x1]
      %v543 = vsel %vm535, 0, %v542
      %544 = vst [vmem:[#allocation2 + $0x20] sm:$0x1] %v543
      %v545 = vld [vmem:[#allocation2 + $0x2c] sm:$0x1]
      %v546 = vsel %vm535, 0, %v545
      %547 = vst [vmem:[#allocation2 + $0x2c] sm:$0x1] %v546
      %v548 = vld [vmem:[#allocation2 + $0x38] sm:$0x1]
      %v549 = vsel %vm535, 0, %v548
      %550 = vst [vmem:[#allocation2 + $0x38] sm:$0x1] %v549
      %v551 = vld [vmem:[#allocation2 + $0x44] sm:$0x1]
      %v552 = vsel %vm535, 0, %v551
      %553 = vst [vmem:[#allocation2 + $0x44] sm:$0x1] %v552
      %v554 = vld [vmem:[#allocation2 + $0x50] sm:$0x1]
      %v555 = vsel %vm535, 0, %v554
      %556 = vst [vmem:[#allocation2 + $0x50] sm:$0x1] %v555
      %v557 = vld [vmem:[#allocation2 + $0x5c] sm:$0x1]
      %v558 = vsel %vm535, 0, %v557
      %559 = vst [vmem:[#allocation2 + $0x5c] sm:$0x1] %v558
      %v560 = vld [vmem:[#allocation2 + $0x68] sm:$0x1]
      %v561 = vsel %vm535, 0, %v560
      %562 = vst [vmem:[#allocation2 + $0x68] sm:$0x1] %v561
      %v563 = vld [vmem:[#allocation2 + $0x74] sm:$0x1]
      %v564 = vsel %vm535, 0, %v563
      %565 = vst [vmem:[#allocation2 + $0x74] sm:$0x1] %v564
      %v566 = vld [vmem:[#allocation2 + $0x80] sm:$0x1]
      %v567 = vsel %vm535, 0, %v566
      %568 = vst [vmem:[#allocation2 + $0x80] sm:$0x1] %v567
      %v569 = vld [vmem:[#allocation2 + $0x8c] sm:$0x1]
      %v570 = vsel %vm535, 0, %v569
      %571 = vst [vmem:[#allocation2 + $0x8c] sm:$0x1] %v570
      %v572 = vld [vmem:[#allocation2 + $0x98] sm:$0x1]
      %v573 = vsel %vm535, 0, %v572
      %574 = vst [vmem:[#allocation2 + $0x98] sm:$0x1] %v573
      %v575 = vld [vmem:[#allocation2 + $0xa4] sm:$0x1]
      %v576 = vsel %vm535, 0, %v575
      %577 = vst [vmem:[#allocation2 + $0xa4] sm:$0x1] %v576
      %v578 = vld [vmem:[#allocation2 + $0xb0] sm:$0x1]
      %v579 = vsel %vm535, 0, %v578
      %580 = vst [vmem:[#allocation2 + $0xb0] sm:$0x1] %v579
      %v581 = vld [vmem:[#allocation2 + $0xbc] sm:$0x1]
      %v582 = vsel %vm535, 0, %v581
      %583 = vst [vmem:[#allocation2 + $0xbc] sm:$0x1] %v582
      %v584 = vld [vmem:[#allocation2 + $0xc8] sm:$0x1]
      %v585 = vsel %vm535, 0, %v584
      %586 = vst [vmem:[#allocation2 + $0xc8] sm:$0x1] %v585
      %v587 = vld [vmem:[#allocation2 + $0xd4] sm:$0x1]
      %v588 = vsel %vm535, 0, %v587
      %589 = vst [vmem:[#allocation2 + $0xd4] sm:$0x1] %v588
      %vm590 = vsmask.f32 4368
      %vm591 = vmor %vm478, %vm590
      %v593 = vshrl.u32 %v438, 16
      %v595 = vrot.slane %v593, 7
      %v596 = vshll.u32 %v438, 16
      %v598 = vor.u32 %v595, %v596
      %v599 = vrot.slane %v595, 4
      %v601 = vshrl.u32 %v439, 16
      %v603 = vrot.slane %v601, 7
      %v604 = vshll.u32 %v439, 16
      %v606 = vor.u32 %v603, %v604
      %v607 = vsel %vm591, %v599, %v606
      %v608 = vrot.slane %v603, 4
      %v610 = vshrl.u32 %v440, 16
      %v612 = vrot.slane %v610, 7
      %v613 = vshll.u32 %v440, 16
      %v615 = vor.u32 %v612, %v613
      %v616 = vrot.slane %v612, 4
      %v618 = vshrl.u32 %v441, 16
      %v620 = vrot.slane %v618, 7
      %v621 = vshll.u32 %v441, 16
      %v623 = vor.u32 %v620, %v621
      %v624 = vsel %vm591, %v616, %v623
      %v625 = vrot.slane %v620, 4
      %v627 = vshrl.u32 %v442, 16
      %v629 = vrot.slane %v627, 7
      %v630 = vshll.u32 %v442, 16
      %v632 = vor.u32 %v629, %v630
      %v633 = vrot.slane %v629, 4
      %v635 = vshrl.u32 %v443, 16
      %v637 = vrot.slane %v635, 7
      %v638 = vshll.u32 %v443, 16
      %v640 = vor.u32 %v637, %v638
      %v641 = vsel %vm591, %v633, %v640
      %v642 = vrot.slane %v637, 4
      %v644 = vshrl.u32 %v444, 16
      %v646 = vrot.slane %v644, 7
      %v647 = vshll.u32 %v444, 16
      %v649 = vor.u32 %v646, %v647
      %v650 = vrot.slane %v646, 4
      %v652 = vshrl.u32 %v445, 16
      %v654 = vrot.slane %v652, 7
      %v655 = vshll.u32 %v445, 16
      %v657 = vor.u32 %v654, %v655
      %v658 = vsel %vm591, %v650, %v657
      %v659 = vrot.slane %v654, 4
      %v661 = vshrl.u32 %v446, 16
      %v663 = vrot.slane %v661, 7
      %v664 = vshll.u32 %v446, 16
      %v666 = vor.u32 %v663, %v664
      %v667 = vrot.slane %v663, 4
      %v669 = vshrl.u32 %v447, 16
      %v671 = vrot.slane %v669, 7
      %v672 = vshll.u32 %v447, 16
      %v674 = vor.u32 %v671, %v672
      %v675 = vsel %vm591, %v667, %v674
      %v676 = vrot.slane %v671, 4
      %v678 = vshrl.u32 %v448, 16
      %v680 = vrot.slane %v678, 7
      %v681 = vshll.u32 %v448, 16
      %v683 = vor.u32 %v680, %v681
      %v684 = vrot.slane %v680, 4
      %v686 = vshrl.u32 %v449, 16
      %v688 = vrot.slane %v686, 7
      %v689 = vshll.u32 %v449, 16
      %v691 = vor.u32 %v688, %v689
      %v692 = vsel %vm591, %v684, %v691
      %v693 = vrot.slane %v688, 4
      %v695 = vshrl.u32 %v450, 16
      %v697 = vrot.slane %v695, 7
      %v698 = vshll.u32 %v450, 16
      %v700 = vor.u32 %v697, %v698
      %v701 = vrot.slane %v697, 4
      %v703 = vshrl.u32 %v451, 16
      %v705 = vrot.slane %v703, 7
      %v706 = vshll.u32 %v451, 16
      %v708 = vor.u32 %v705, %v706
      %v709 = vsel %vm591, %v701, %v708
      %v710 = vrot.slane %v705, 4
      %v712 = vshrl.u32 %v452, 16
      %v714 = vrot.slane %v712, 7
      %v715 = vshll.u32 %v452, 16
      %v717 = vor.u32 %v714, %v715
      %v718 = vrot.slane %v714, 4
      %v720 = vshrl.u32 %v453, 16
      %v722 = vrot.slane %v720, 7
      %v723 = vshll.u32 %v453, 16
      %v725 = vor.u32 %v722, %v723
      %v726 = vsel %vm591, %v718, %v725
      %v727 = vrot.slane %v722, 4
      %v729 = vshrl.u32 %v454, 16
      %v731 = vrot.slane %v729, 7
      %v732 = vshll.u32 %v454, 16
      %v734 = vor.u32 %v731, %v732
      %v735 = vrot.slane %v731, 4
      %v737 = vshrl.u32 %v455, 16
      %v739 = vrot.slane %v737, 7
      %v740 = vshll.u32 %v455, 16
      %v742 = vor.u32 %v739, %v740
      %v743 = vsel %vm591, %v735, %v742
      %v744 = vrot.slane %v739, 4
      %v746 = vshrl.u32 %v456, 16
      %v748 = vrot.slane %v746, 7
      %v749 = vshll.u32 %v456, 16
      %v751 = vor.u32 %v748, %v749
      %v752 = vrot.slane %v748, 4
      %v754 = vshrl.u32 %v457, 16
      %v756 = vrot.slane %v754, 7
      %v757 = vshll.u32 %v457, 16
      %v759 = vor.u32 %v756, %v757
      %v760 = vsel %vm591, %v752, %v759
      %v761 = vrot.slane %v756, 4
      %v763 = vshrl.u32 %v458, 16
      %v765 = vrot.slane %v763, 7
      %v766 = vshll.u32 %v458, 16
      %v768 = vor.u32 %v765, %v766
      %v769 = vrot.slane %v765, 4
      %v771 = vshrl.u32 %v459, 16
      %v773 = vrot.slane %v771, 7
      %v774 = vshll.u32 %v459, 16
      %v776 = vor.u32 %v773, %v774
      %v777 = vsel %vm591, %v769, %v776
      %v778 = vrot.slane %v773, 4
      %v780 = vshrl.u32 %v460, 16
      %v782 = vrot.slane %v780, 7
      %v783 = vshll.u32 %v460, 16
      %v785 = vor.u32 %v782, %v783
      %v786 = vrot.slane %v782, 4
      %v788 = vshrl.u32 %v461, 16
      %v790 = vrot.slane %v788, 7
      %v791 = vshll.u32 %v461, 16
      %v793 = vor.u32 %v790, %v791
      %v794 = vsel %vm591, %v786, %v793
      %v795 = vrot.slane %v790, 4
      %v797 = vshrl.u32 %v462, 16
      %v799 = vrot.slane %v797, 7
      %v800 = vshll.u32 %v462, 16
      %v802 = vor.u32 %v799, %v800
      %v803 = vrot.slane %v799, 4
      %v805 = vshrl.u32 %v463, 16
      %v807 = vrot.slane %v805, 7
      %v808 = vshll.u32 %v463, 16
      %v810 = vor.u32 %v807, %v808
      %v811 = vsel %vm591, %v803, %v810
      %v812 = vrot.slane %v807, 4
      %v814 = vshrl.u32 %v464, 16
      %v816 = vrot.slane %v814, 7
      %v817 = vshll.u32 %v464, 16
      %v819 = vor.u32 %v816, %v817
      %v820 = vrot.slane %v816, 4
      %v822 = vshrl.u32 %v465, 16
      %v824 = vrot.slane %v822, 7
      %v825 = vshll.u32 %v465, 16
      %v827 = vor.u32 %v824, %v825
      %v828 = vsel %vm591, %v820, %v827
      %v829 = vrot.slane %v824, 4
      %v831 = vshrl.u32 %v466, 16
      %v833 = vrot.slane %v831, 7
      %v834 = vshll.u32 %v466, 16
      %v836 = vor.u32 %v833, %v834
      %v837 = vrot.slane %v833, 4
      %v839 = vshrl.u32 %v467, 16
      %v841 = vrot.slane %v839, 7
      %v842 = vshll.u32 %v467, 16
      %v844 = vor.u32 %v841, %v842
      %v845 = vsel %vm591, %v837, %v844
      %v846 = vrot.slane %v841, 4
      %v848 = vshrl.u32 %v468, 16
      %v850 = vrot.slane %v848, 7
      %v851 = vshll.u32 %v468, 16
      %v853 = vor.u32 %v850, %v851
      %v854 = vrot.slane %v850, 4
      %v856 = vshrl.u32 %v469, 16
      %v858 = vrot.slane %v856, 7
      %v859 = vshll.u32 %v469, 16
      %v861 = vor.u32 %v858, %v859
      %v862 = vsel %vm591, %v854, %v861
      %v863 = vrot.slane %v858, 4
      %s912 = scalar_lea.vmem [#allocation2], 12
      %vm913 = vcmask 1043456
      %vm914 = vmand %vm913, %vm534
      %v915 = vld [vmem:[%s912] sm:$0xf]
      %v916 = vsel %vm914, %v598, %v915
      %917 = vst [vmem:[%s912] sm:$0xf] %v916
      %918 = vst [vmem:[%s912 + $0x4] sm:$0xf] %v607
      %v919 = vld [vmem:[%s912 + $0x8] sm:$0x1]
      %v920 = vsel %vm479, %v608, %v919
      %921 = vst [vmem:[%s912 + $0x8] sm:$0x1] %v920
      %v922 = vld [vmem:[%s912 + $0xc] sm:$0xf]
      %v923 = vsel %vm914, %v615, %v922
      %924 = vst [vmem:[%s912 + $0xc] sm:$0xf] %v923
      %925 = vst [vmem:[%s912 + $0x10] sm:$0xf] %v624
      %v926 = vld [vmem:[%s912 + $0x14] sm:$0x1]
      %v927 = vsel %vm479, %v625, %v926
      %928 = vst [vmem:[%s912 + $0x14] sm:$0x1] %v927
      %v929 = vld [vmem:[%s912 + $0x18] sm:$0xf]
      %v930 = vsel %vm914, %v632, %v929
      %931 = vst [vmem:[%s912 + $0x18] sm:$0xf] %v930
      %932 = vst [vmem:[%s912 + $0x1c] sm:$0xf] %v641
      %v933 = vld [vmem:[%s912 + $0x20] sm:$0x1]
      %v934 = vsel %vm479, %v642, %v933
      %935 = vst [vmem:[%s912 + $0x20] sm:$0x1] %v934
      %v936 = vld [vmem:[%s912 + $0x24] sm:$0xf]
      %v937 = vsel %vm914, %v649, %v936
      %938 = vst [vmem:[%s912 + $0x24] sm:$0xf] %v937
      %939 = vst [vmem:[%s912 + $0x28] sm:$0xf] %v658
      %v940 = vld [vmem:[%s912 + $0x2c] sm:$0x1]
      %v941 = vsel %vm479, %v659, %v940
      %942 = vst [vmem:[%s912 + $0x2c] sm:$0x1] %v941
      %v943 = vld [vmem:[%s912 + $0x30] sm:$0xf]
      %v944 = vsel %vm914, %v666, %v943
      %945 = vst [vmem:[%s912 + $0x30] sm:$0xf] %v944
      %946 = vst [vmem:[%s912 + $0x34] sm:$0xf] %v675
      %v947 = vld [vmem:[%s912 + $0x38] sm:$0x1]
      %v948 = vsel %vm479, %v676, %v947
      %949 = vst [vmem:[%s912 + $0x38] sm:$0x1] %v948
      %v950 = vld [vmem:[%s912 + $0x3c] sm:$0xf]
      %v951 = vsel %vm914, %v683, %v950
      %952 = vst [vmem:[%s912 + $0x3c] sm:$0xf] %v951
      %953 = vst [vmem:[%s912 + $0x40] sm:$0xf] %v692
      %v954 = vld [vmem:[%s912 + $0x44] sm:$0x1]
      %v955 = vsel %vm479, %v693, %v954
      %956 = vst [vmem:[%s912 + $0x44] sm:$0x1] %v955
      %v957 = vld [vmem:[%s912 + $0x48] sm:$0xf]
      %v958 = vsel %vm914, %v700, %v957
      %959 = vst [vmem:[%s912 + $0x48] sm:$0xf] %v958
      %960 = vst [vmem:[%s912 + $0x4c] sm:$0xf] %v709
      %v961 = vld [vmem:[%s912 + $0x50] sm:$0x1]
      %v962 = vsel %vm479, %v710, %v961
      %963 = vst [vmem:[%s912 + $0x50] sm:$0x1] %v962
      %v964 = vld [vmem:[%s912 + $0x54] sm:$0xf]
      %v965 = vsel %vm914, %v717, %v964
      %966 = vst [vmem:[%s912 + $0x54] sm:$0xf] %v965
      %967 = vst [vmem:[%s912 + $0x58] sm:$0xf] %v726
      %v968 = vld [vmem:[%s912 + $0x5c] sm:$0x1]
      %v969 = vsel %vm479, %v727, %v968
      %970 = vst [vmem:[%s912 + $0x5c] sm:$0x1] %v969
      %v971 = vld [vmem:[%s912 + $0x60] sm:$0xf]
      %v972 = vsel %vm914, %v734, %v971
      %973 = vst [vmem:[%s912 + $0x60] sm:$0xf] %v972
      %974 = vst [vmem:[%s912 + $0x64] sm:$0xf] %v743
      %v975 = vld [vmem:[%s912 + $0x68] sm:$0x1]
      %v976 = vsel %vm479, %v744, %v975
      %977 = vst [vmem:[%s912 + $0x68] sm:$0x1] %v976
      %v978 = vld [vmem:[%s912 + $0x6c] sm:$0xf]
      %v979 = vsel %vm914, %v751, %v978
      %980 = vst [vmem:[%s912 + $0x6c] sm:$0xf] %v979
      %981 = vst [vmem:[%s912 + $0x70] sm:$0xf] %v760
      %v982 = vld [vmem:[%s912 + $0x74] sm:$0x1]
      %v983 = vsel %vm479, %v761, %v982
      %984 = vst [vmem:[%s912 + $0x74] sm:$0x1] %v983
      %v985 = vld [vmem:[%s912 + $0x78] sm:$0xf]
      %v986 = vsel %vm914, %v768, %v985
      %987 = vst [vmem:[%s912 + $0x78] sm:$0xf] %v986
      %988 = vst [vmem:[%s912 + $0x7c] sm:$0xf] %v777
      %v989 = vld [vmem:[%s912 + $0x80] sm:$0x1]
      %v990 = vsel %vm479, %v778, %v989
      %991 = vst [vmem:[%s912 + $0x80] sm:$0x1] %v990
      %v992 = vld [vmem:[%s912 + $0x84] sm:$0xf]
      %v993 = vsel %vm914, %v785, %v992
      %994 = vst [vmem:[%s912 + $0x84] sm:$0xf] %v993
      %995 = vst [vmem:[%s912 + $0x88] sm:$0xf] %v794
      %v996 = vld [vmem:[%s912 + $0x8c] sm:$0x1]
      %v997 = vsel %vm479, %v795, %v996
      %998 = vst [vmem:[%s912 + $0x8c] sm:$0x1] %v997
      %v999 = vld [vmem:[%s912 + $0x90] sm:$0xf]
      %v1000 = vsel %vm914, %v802, %v999
      %1001 = vst [vmem:[%s912 + $0x90] sm:$0xf] %v1000
      %1002 = vst [vmem:[%s912 + $0x94] sm:$0xf] %v811
      %v1003 = vld [vmem:[%s912 + $0x98] sm:$0x1]
      %v1004 = vsel %vm479, %v812, %v1003
      %1005 = vst [vmem:[%s912 + $0x98] sm:$0x1] %v1004
      %v1006 = vld [vmem:[%s912 + $0x9c] sm:$0xf]
      %v1007 = vsel %vm914, %v819, %v1006
      %1008 = vst [vmem:[%s912 + $0x9c] sm:$0xf] %v1007
      %1009 = vst [vmem:[%s912 + $0xa0] sm:$0xf] %v828
      %v1010 = vld [vmem:[%s912 + $0xa4] sm:$0x1]
      %v1011 = vsel %vm479, %v829, %v1010
      %1012 = vst [vmem:[%s912 + $0xa4] sm:$0x1] %v1011
      %v1013 = vld [vmem:[%s912 + $0xa8] sm:$0xf]
      %v1014 = vsel %vm914, %v836, %v1013
      %1015 = vst [vmem:[%s912 + $0xa8] sm:$0xf] %v1014
      %1016 = vst [vmem:[%s912 + $0xac] sm:$0xf] %v845
      %v1017 = vld [vmem:[%s912 + $0xb0] sm:$0x1]
      %v1018 = vsel %vm479, %v846, %v1017
      %1019 = vst [vmem:[%s912 + $0xb0] sm:$0x1] %v1018
      %v1020 = vld [vmem:[%s912 + $0xb4] sm:$0xf]
      %v1021 = vsel %vm914, %v853, %v1020
      %1022 = vst [vmem:[%s912 + $0xb4] sm:$0xf] %v1021
      %1023 = vst [vmem:[%s912 + $0xb8] sm:$0xf] %v862
      %v1024 = vld [vmem:[%s912 + $0xbc] sm:$0x1]
      %v1025 = vsel %vm479, %v863, %v1024
      %1026 = vst [vmem:[%s912 + $0xbc] sm:$0x1] %v1025
      %v1027 = vld [vmem:[#allocation2] sm:$0xf]
      %v1028 = vld [vmem:[#allocation2 + $0x4] sm:$0xf]
      %v1029 = vld [vmem:[#allocation2 + $0xc] sm:$0xf]
      %v1030 = vld [vmem:[#allocation2 + $0x10] sm:$0xf]
      %v1031 = vld [vmem:[#allocation2 + $0x18] sm:$0xf]
      %v1032 = vld [vmem:[#allocation2 + $0x1c] sm:$0xf]
      %v1033 = vld [vmem:[#allocation2 + $0x24] sm:$0xf]
      %v1034 = vld [vmem:[#allocation2 + $0x28] sm:$0xf]
      %v1035 = vld [vmem:[#allocation2 + $0x30] sm:$0xf]
      %v1036 = vld [vmem:[#allocation2 + $0x34] sm:$0xf]
      %v1037 = vld [vmem:[#allocation2 + $0x3c] sm:$0xf]
      %v1038 = vld [vmem:[#allocation2 + $0x40] sm:$0xf]
      %v1039 = vld [vmem:[#allocation2 + $0x48] sm:$0xf]
      %v1040 = vld [vmem:[#allocation2 + $0x4c] sm:$0xf]
      %v1041 = vld [vmem:[#allocation2 + $0x54] sm:$0xf]
      %v1042 = vld [vmem:[#allocation2 + $0x58] sm:$0xf]
      %v1043 = vld [vmem:[#allocation2 + $0x60] sm:$0xf]
      %v1044 = vld [vmem:[#allocation2 + $0x64] sm:$0xf]
      %v1045 = vld [vmem:[#allocation2 + $0x6c] sm:$0xf]
      %v1046 = vld [vmem:[#allocation2 + $0x70] sm:$0xf]
      %v1047 = vld [vmem:[#allocation2 + $0x78] sm:$0xf]
      %v1048 = vld [vmem:[#allocation2 + $0x7c] sm:$0xf]
      %v1049 = vld [vmem:[#allocation2 + $0x84] sm:$0xf]
      %v1050 = vld [vmem:[#allocation2 + $0x88] sm:$0xf]
      %v1051 = vld [vmem:[#allocation2 + $0x90] sm:$0xf]
      %v1052 = vld [vmem:[#allocation2 + $0x94] sm:$0xf]
      %v1053 = vld [vmem:[#allocation2 + $0x9c] sm:$0xf]
      %v1054 = vld [vmem:[#allocation2 + $0xa0] sm:$0xf]
      %v1055 = vld [vmem:[#allocation2 + $0xa8] sm:$0xf]
      %v1056 = vld [vmem:[#allocation2 + $0xac] sm:$0xf]
      %v1057 = vld [vmem:[#allocation2 + $0xb4] sm:$0xf]
      %v1058 = vld [vmem:[#allocation2 + $0xb8] sm:$0xf]
      %v1059 = vld [vmem:[#allocation2 + $0x8] sm:$0x1]
      %v1060 = vld [vmem:[#allocation2 + $0x14] sm:$0x1]
      %v1061 = vld [vmem:[#allocation2 + $0x20] sm:$0x1]
      %v1062 = vld [vmem:[#allocation2 + $0x2c] sm:$0x1]
      %v1063 = vld [vmem:[#allocation2 + $0x38] sm:$0x1]
      %v1064 = vld [vmem:[#allocation2 + $0x44] sm:$0x1]
      %v1065 = vld [vmem:[#allocation2 + $0x50] sm:$0x1]
      %v1066 = vld [vmem:[#allocation2 + $0x5c] sm:$0x1]
      %v1067 = vld [vmem:[#allocation2 + $0x68] sm:$0x1]
      %v1068 = vld [vmem:[#allocation2 + $0x74] sm:$0x1]
      %v1069 = vld [vmem:[#allocation2 + $0x80] sm:$0x1]
      %v1070 = vld [vmem:[#allocation2 + $0x8c] sm:$0x1]
      %v1071 = vld [vmem:[#allocation2 + $0x98] sm:$0x1]
      %v1072 = vld [vmem:[#allocation2 + $0xa4] sm:$0x1]
      %v1073 = vld [vmem:[#allocation2 + $0xb0] sm:$0x1]
      %v1074 = vld [vmem:[#allocation2 + $0xbc] sm:$0x1]
      %v1075 = vld [vmem:[#allocation2] sm:$0xe]
      %v1076 = vld [vmem:[#allocation2 + $0xc] sm:$0xe]
      %v1077 = vld [vmem:[#allocation2 + $0x18] sm:$0xe]
      %v1078 = vld [vmem:[#allocation2 + $0x24] sm:$0xe]
      %v1079 = vld [vmem:[#allocation2 + $0x30] sm:$0xe]
      %v1080 = vld [vmem:[#allocation2 + $0x3c] sm:$0xe]
      %v1081 = vld [vmem:[#allocation2 + $0x48] sm:$0xe]
      %v1082 = vld [vmem:[#allocation2 + $0x54] sm:$0xe]
      %v1083 = vld [vmem:[#allocation2 + $0x60] sm:$0xe]
      %v1084 = vld [vmem:[#allocation2 + $0x6c] sm:$0xe]
      %v1085 = vld [vmem:[#allocation2 + $0x78] sm:$0xe]
      %v1086 = vld [vmem:[#allocation2 + $0x84] sm:$0xe]
      %v1087 = vld [vmem:[#allocation2 + $0x90] sm:$0xe]
      %v1088 = vld [vmem:[#allocation2 + $0x9c] sm:$0xe]
      %v1089 = vld [vmem:[#allocation2 + $0xa8] sm:$0xe]
      %v1090 = vld [vmem:[#allocation2 + $0xb4] sm:$0xe]
      %v1091 = vld [vmem:[%s912] sm:$0xf]
      %v1092 = vld [vmem:[%s912 + $0x4] sm:$0xf]
      %v1093 = vld [vmem:[%s912 + $0xc] sm:$0xf]
      %v1094 = vld [vmem:[%s912 + $0x10] sm:$0xf]
      %v1095 = vld [vmem:[%s912 + $0x18] sm:$0xf]
      %v1096 = vld [vmem:[%s912 + $0x1c] sm:$0xf]
      %v1097 = vld [vmem:[%s912 + $0x24] sm:$0xf]
      %v1098 = vld [vmem:[%s912 + $0x28] sm:$0xf]
      %v1099 = vld [vmem:[%s912 + $0x30] sm:$0xf]
      %v1100 = vld [vmem:[%s912 + $0x34] sm:$0xf]
      %v1101 = vld [vmem:[%s912 + $0x3c] sm:$0xf]
      %v1102 = vld [vmem:[%s912 + $0x40] sm:$0xf]
      %v1103 = vld [vmem:[%s912 + $0x48] sm:$0xf]
      %v1104 = vld [vmem:[%s912 + $0x4c] sm:$0xf]
      %v1105 = vld [vmem:[%s912 + $0x54] sm:$0xf]
      %v1106 = vld [vmem:[%s912 + $0x58] sm:$0xf]
      %v1107 = vld [vmem:[%s912 + $0x60] sm:$0xf]
      %v1108 = vld [vmem:[%s912 + $0x64] sm:$0xf]
      %v1109 = vld [vmem:[%s912 + $0x6c] sm:$0xf]
      %v1110 = vld [vmem:[%s912 + $0x70] sm:$0xf]
      %v1111 = vld [vmem:[%s912 + $0x78] sm:$0xf]
      %v1112 = vld [vmem:[%s912 + $0x7c] sm:$0xf]
      %v1113 = vld [vmem:[%s912 + $0x84] sm:$0xf]
      %v1114 = vld [vmem:[%s912 + $0x88] sm:$0xf]
      %v1115 = vld [vmem:[%s912 + $0x90] sm:$0xf]
      %v1116 = vld [vmem:[%s912 + $0x94] sm:$0xf]
      %v1117 = vld [vmem:[%s912 + $0x9c] sm:$0xf]
      %v1118 = vld [vmem:[%s912 + $0xa0] sm:$0xf]
      %v1119 = vld [vmem:[%s912 + $0xa8] sm:$0xf]
      %v1120 = vld [vmem:[%s912 + $0xac] sm:$0xf]
      %v1121 = vld [vmem:[%s912 + $0xb4] sm:$0xf]
      %v1122 = vld [vmem:[%s912 + $0xb8] sm:$0xf]
      %v1123 = vld [vmem:[%s912 + $0x8] sm:$0x1]
      %v1124 = vld [vmem:[%s912 + $0x14] sm:$0x1]
      %v1125 = vld [vmem:[%s912 + $0x20] sm:$0x1]
      %v1126 = vld [vmem:[%s912 + $0x2c] sm:$0x1]
      %v1127 = vld [vmem:[%s912 + $0x38] sm:$0x1]
      %v1128 = vld [vmem:[%s912 + $0x44] sm:$0x1]
      %v1129 = vld [vmem:[%s912 + $0x50] sm:$0x1]
      %v1130 = vld [vmem:[%s912 + $0x5c] sm:$0x1]
      %v1131 = vld [vmem:[%s912 + $0x68] sm:$0x1]
      %v1132 = vld [vmem:[%s912 + $0x74] sm:$0x1]
      %v1133 = vld [vmem:[%s912 + $0x80] sm:$0x1]
      %v1134 = vld [vmem:[%s912 + $0x8c] sm:$0x1]
      %v1135 = vld [vmem:[%s912 + $0x98] sm:$0x1]
      %v1136 = vld [vmem:[%s912 + $0xa4] sm:$0x1]
      %v1137 = vld [vmem:[%s912 + $0xb0] sm:$0x1]
      %v1138 = vld [vmem:[%s912 + $0xbc] sm:$0x1]
      %v1139 = vld [vmem:[%s912] sm:$0xe]
      %v1140 = vld [vmem:[%s912 + $0xc] sm:$0xe]
      %v1141 = vld [vmem:[%s912 + $0x18] sm:$0xe]
      %v1142 = vld [vmem:[%s912 + $0x24] sm:$0xe]
      %v1143 = vld [vmem:[%s912 + $0x30] sm:$0xe]
      %v1144 = vld [vmem:[%s912 + $0x3c] sm:$0xe]
      %v1145 = vld [vmem:[%s912 + $0x48] sm:$0xe]
      %v1146 = vld [vmem:[%s912 + $0x54] sm:$0xe]
      %v1147 = vld [vmem:[%s912 + $0x60] sm:$0xe]
      %v1148 = vld [vmem:[%s912 + $0x6c] sm:$0xe]
      %v1149 = vld [vmem:[%s912 + $0x78] sm:$0xe]
      %v1150 = vld [vmem:[%s912 + $0x84] sm:$0xe]
      %v1151 = vld [vmem:[%s912 + $0x90] sm:$0xe]
      %v1152 = vld [vmem:[%s912 + $0x9c] sm:$0xe]
      %v1153 = vld [vmem:[%s912 + $0xa8] sm:$0xe]
      %v1154 = vld [vmem:[%s912 + $0xb4] sm:$0xe]
      %s1155 = scalar_lea.vmem [#allocation2], 24
      %v1156 = vld [vmem:[%s1155] sm:$0xf]
      %v1157 = vld [vmem:[%s1155 + $0x4] sm:$0xf]
      %v1158 = vld [vmem:[%s1155 + $0xc] sm:$0xf]
      %v1159 = vld [vmem:[%s1155 + $0x10] sm:$0xf]
      %v1160 = vld [vmem:[%s1155 + $0x18] sm:$0xf]
      %v1161 = vld [vmem:[%s1155 + $0x1c] sm:$0xf]
      %v1162 = vld [vmem:[%s1155 + $0x24] sm:$0xf]
      %v1163 = vld [vmem:[%s1155 + $0x28] sm:$0xf]
      %v1164 = vld [vmem:[%s1155 + $0x30] sm:$0xf]
      %v1165 = vld [vmem:[%s1155 + $0x34] sm:$0xf]
      %v1166 = vld [vmem:[%s1155 + $0x3c] sm:$0xf]
      %v1167 = vld [vmem:[%s1155 + $0x40] sm:$0xf]
      %v1168 = vld [vmem:[%s1155 + $0x48] sm:$0xf]
      %v1169 = vld [vmem:[%s1155 + $0x4c] sm:$0xf]
      %v1170 = vld [vmem:[%s1155 + $0x54] sm:$0xf]
      %v1171 = vld [vmem:[%s1155 + $0x58] sm:$0xf]
      %v1172 = vld [vmem:[%s1155 + $0x60] sm:$0xf]
      %v1173 = vld [vmem:[%s1155 + $0x64] sm:$0xf]
      %v1174 = vld [vmem:[%s1155 + $0x6c] sm:$0xf]
      %v1175 = vld [vmem:[%s1155 + $0x70] sm:$0xf]
      %v1176 = vld [vmem:[%s1155 + $0x78] sm:$0xf]
      %v1177 = vld [vmem:[%s1155 + $0x7c] sm:$0xf]
      %v1178 = vld [vmem:[%s1155 + $0x84] sm:$0xf]
      %v1179 = vld [vmem:[%s1155 + $0x88] sm:$0xf]
      %v1180 = vld [vmem:[%s1155 + $0x90] sm:$0xf]
      %v1181 = vld [vmem:[%s1155 + $0x94] sm:$0xf]
      %v1182 = vld [vmem:[%s1155 + $0x9c] sm:$0xf]
      %v1183 = vld [vmem:[%s1155 + $0xa0] sm:$0xf]
      %v1184 = vld [vmem:[%s1155 + $0xa8] sm:$0xf]
      %v1185 = vld [vmem:[%s1155 + $0xac] sm:$0xf]
      %v1186 = vld [vmem:[%s1155 + $0xb4] sm:$0xf]
      %v1187 = vld [vmem:[%s1155 + $0xb8] sm:$0xf]
      %v1188 = vld [vmem:[%s1155 + $0x8] sm:$0x1]
      %v1189 = vld [vmem:[%s1155 + $0x14] sm:$0x1]
      %v1190 = vld [vmem:[%s1155 + $0x20] sm:$0x1]
      %v1191 = vld [vmem:[%s1155 + $0x2c] sm:$0x1]
      %v1192 = vld [vmem:[%s1155 + $0x38] sm:$0x1]
      %v1193 = vld [vmem:[%s1155 + $0x44] sm:$0x1]
      %v1194 = vld [vmem:[%s1155 + $0x50] sm:$0x1]
      %v1195 = vld [vmem:[%s1155 + $0x5c] sm:$0x1]
      %v1196 = vld [vmem:[%s1155 + $0x68] sm:$0x1]
      %v1197 = vld [vmem:[%s1155 + $0x74] sm:$0x1]
      %v1198 = vld [vmem:[%s1155 + $0x80] sm:$0x1]
      %v1199 = vld [vmem:[%s1155 + $0x8c] sm:$0x1]
      %v1200 = vld [vmem:[%s1155 + $0x98] sm:$0x1]
      %v1201 = vld [vmem:[%s1155 + $0xa4] sm:$0x1]
      %v1202 = vld [vmem:[%s1155 + $0xb0] sm:$0x1]
      %v1203 = vld [vmem:[%s1155 + $0xbc] sm:$0x1]
      %v1204 = vld [vmem:[%s1155] sm:$0xe]
      %v1205 = vld [vmem:[%s1155 + $0xc] sm:$0xe]
      %v1206 = vld [vmem:[%s1155 + $0x18] sm:$0xe]
      %v1207 = vld [vmem:[%s1155 + $0x24] sm:$0xe]
      %v1208 = vld [vmem:[%s1155 + $0x30] sm:$0xe]
      %v1209 = vld [vmem:[%s1155 + $0x3c] sm:$0xe]
      %v1210 = vld [vmem:[%s1155 + $0x48] sm:$0xe]
      %v1211 = vld [vmem:[%s1155 + $0x54] sm:$0xe]
      %v1212 = vld [vmem:[%s1155 + $0x60] sm:$0xe]
      %v1213 = vld [vmem:[%s1155 + $0x6c] sm:$0xe]
      %v1214 = vld [vmem:[%s1155 + $0x78] sm:$0xe]
      %v1215 = vld [vmem:[%s1155 + $0x84] sm:$0xe]
      %v1216 = vld [vmem:[%s1155 + $0x90] sm:$0xe]
      %v1217 = vld [vmem:[%s1155 + $0x9c] sm:$0xe]
      %v1218 = vld [vmem:[%s1155 + $0xa8] sm:$0xe]
      %v1219 = vld [vmem:[%s1155 + $0xb4] sm:$0xe]
      %v1252 = vunpack.c.l.b16 %v1027
      %v1253 = vunpack.c.l.b16 %v1028
      %v1254 = vunpack.c.l.b16 %v1029
      %v1255 = vunpack.c.l.b16 %v1030
      %v1256 = vunpack.c.l.b16 %v1031
      %v1257 = vunpack.c.l.b16 %v1032
      %v1258 = vunpack.c.l.b16 %v1033
      %v1259 = vunpack.c.l.b16 %v1034
      %v1260 = vunpack.c.l.b16 %v1035
      %v1261 = vunpack.c.l.b16 %v1036
      %v1262 = vunpack.c.l.b16 %v1037
      %v1263 = vunpack.c.l.b16 %v1038
      %v1264 = vunpack.c.l.b16 %v1039
      %v1265 = vunpack.c.l.b16 %v1040
      %v1266 = vunpack.c.l.b16 %v1041
      %v1267 = vunpack.c.l.b16 %v1042
      %v1268 = vunpack.c.l.b16 %v1043
      %v1269 = vunpack.c.l.b16 %v1044
      %v1270 = vunpack.c.l.b16 %v1045
      %v1271 = vunpack.c.l.b16 %v1046
      %v1272 = vunpack.c.l.b16 %v1047
      %v1273 = vunpack.c.l.b16 %v1048
      %v1274 = vunpack.c.l.b16 %v1049
      %v1275 = vunpack.c.l.b16 %v1050
      %v1276 = vunpack.c.l.b16 %v1051
      %v1277 = vunpack.c.l.b16 %v1052
      %v1278 = vunpack.c.l.b16 %v1053
      %v1279 = vunpack.c.l.b16 %v1054
      %v1280 = vunpack.c.l.b16 %v1055
      %v1281 = vunpack.c.l.b16 %v1056
      %v1282 = vunpack.c.l.b16 %v1057
      %v1283 = vunpack.c.l.b16 %v1058
      %v1284 = vpack.c.b16 %v1253, %v1252
      %v1285 = vpack.c.b16 %v1255, %v1254
      %v1286 = vpack.c.b16 %v1257, %v1256
      %v1287 = vpack.c.b16 %v1259, %v1258
      %v1288 = vpack.c.b16 %v1261, %v1260
      %v1289 = vpack.c.b16 %v1263, %v1262
      %v1290 = vpack.c.b16 %v1265, %v1264
      %v1291 = vpack.c.b16 %v1267, %v1266
      %v1292 = vpack.c.b16 %v1269, %v1268
      %v1293 = vpack.c.b16 %v1271, %v1270
      %v1294 = vpack.c.b16 %v1273, %v1272
      %v1295 = vpack.c.b16 %v1275, %v1274
      %v1296 = vpack.c.b16 %v1277, %v1276
      %v1297 = vpack.c.b16 %v1279, %v1278
      %v1298 = vpack.c.b16 %v1281, %v1280
      %v1299 = vpack.c.b16 %v1283, %v1282
      %v1332 = vunpack.c.l.b16 %v1059
      %v1333 = vunpack.c.l.b16 %v1060
      %v1334 = vunpack.c.l.b16 %v1061
      %v1335 = vunpack.c.l.b16 %v1062
      %v1336 = vunpack.c.l.b16 %v1063
      %v1337 = vunpack.c.l.b16 %v1064
      %v1338 = vunpack.c.l.b16 %v1065
      %v1339 = vunpack.c.l.b16 %v1066
      %v1340 = vunpack.c.l.b16 %v1067
      %v1341 = vunpack.c.l.b16 %v1068
      %v1342 = vunpack.c.l.b16 %v1069
      %v1343 = vunpack.c.l.b16 %v1070
      %v1344 = vunpack.c.l.b16 %v1071
      %v1345 = vunpack.c.l.b16 %v1072
      %v1346 = vunpack.c.l.b16 %v1073
      %v1347 = vunpack.c.l.b16 %v1074
      %v1348 = vpack.c.b16 %v1332, %v1332
      %v1349 = vpack.c.b16 %v1333, %v1333
      %v1350 = vpack.c.b16 %v1334, %v1334
      %v1351 = vpack.c.b16 %v1335, %v1335
      %v1352 = vpack.c.b16 %v1336, %v1336
      %v1353 = vpack.c.b16 %v1337, %v1337
      %v1354 = vpack.c.b16 %v1338, %v1338
      %v1355 = vpack.c.b16 %v1339, %v1339
      %v1356 = vpack.c.b16 %v1340, %v1340
      %v1357 = vpack.c.b16 %v1341, %v1341
      %v1358 = vpack.c.b16 %v1342, %v1342
      %v1359 = vpack.c.b16 %v1343, %v1343
      %v1360 = vpack.c.b16 %v1344, %v1344
      %v1361 = vpack.c.b16 %v1345, %v1345
      %v1362 = vpack.c.b16 %v1346, %v1346
      %v1363 = vpack.c.b16 %v1347, %v1347
      %vm1364 = vsmask.f32 7424
      %v1366 = vshrl.u32 %v1284, 16
      %v1368 = vshll.u32 %v1284, 16
      %v1370 = vrot.slane %v1368, 1
      %v1371 = vor.u32 %v1366, %v1370
      %v1373 = vshll.u32 %v1348, 16
      %v1375 = vrot.slane %v1373, 1
      %v1376 = vsel %vm1364, %v1371, %v1375
      %v1378 = vshrl.u32 %v1285, 16
      %v1380 = vshll.u32 %v1285, 16
      %v1382 = vrot.slane %v1380, 1
      %v1383 = vor.u32 %v1378, %v1382
      %v1385 = vshll.u32 %v1349, 16
      %v1387 = vrot.slane %v1385, 1
      %v1388 = vsel %vm1364, %v1383, %v1387
      %v1390 = vshrl.u32 %v1286, 16
      %v1392 = vshll.u32 %v1286, 16
      %v1394 = vrot.slane %v1392, 1
      %v1395 = vor.u32 %v1390, %v1394
      %v1397 = vshll.u32 %v1350, 16
      %v1399 = vrot.slane %v1397, 1
      %v1400 = vsel %vm1364, %v1395, %v1399
      %v1402 = vshrl.u32 %v1287, 16
      %v1404 = vshll.u32 %v1287, 16
      %v1406 = vrot.slane %v1404, 1
      %v1407 = vor.u32 %v1402, %v1406
      %v1409 = vshll.u32 %v1351, 16
      %v1411 = vrot.slane %v1409, 1
      %v1412 = vsel %vm1364, %v1407, %v1411
      %v1414 = vshrl.u32 %v1288, 16
      %v1416 = vshll.u32 %v1288, 16
      %v1418 = vrot.slane %v1416, 1
      %v1419 = vor.u32 %v1414, %v1418
      %v1421 = vshll.u32 %v1352, 16
      %v1423 = vrot.slane %v1421, 1
      %v1424 = vsel %vm1364, %v1419, %v1423
      %v1426 = vshrl.u32 %v1289, 16
      %v1428 = vshll.u32 %v1289, 16
      %v1430 = vrot.slane %v1428, 1
      %v1431 = vor.u32 %v1426, %v1430
      %v1433 = vshll.u32 %v1353, 16
      %v1435 = vrot.slane %v1433, 1
      %v1436 = vsel %vm1364, %v1431, %v1435
      %v1438 = vshrl.u32 %v1290, 16
      %v1440 = vshll.u32 %v1290, 16
      %v1442 = vrot.slane %v1440, 1
      %v1443 = vor.u32 %v1438, %v1442
      %v1445 = vshll.u32 %v1354, 16
      %v1447 = vrot.slane %v1445, 1
      %v1448 = vsel %vm1364, %v1443, %v1447
      %v1450 = vshrl.u32 %v1291, 16
      %v1452 = vshll.u32 %v1291, 16
      %v1454 = vrot.slane %v1452, 1
      %v1455 = vor.u32 %v1450, %v1454
      %v1457 = vshll.u32 %v1355, 16
      %v1459 = vrot.slane %v1457, 1
      %v1460 = vsel %vm1364, %v1455, %v1459
      %v1462 = vshrl.u32 %v1292, 16
      %v1464 = vshll.u32 %v1292, 16
      %v1466 = vrot.slane %v1464, 1
      %v1467 = vor.u32 %v1462, %v1466
      %v1469 = vshll.u32 %v1356, 16
      %v1471 = vrot.slane %v1469, 1
      %v1472 = vsel %vm1364, %v1467, %v1471
      %v1474 = vshrl.u32 %v1293, 16
      %v1476 = vshll.u32 %v1293, 16
      %v1478 = vrot.slane %v1476, 1
      %v1479 = vor.u32 %v1474, %v1478
      %v1481 = vshll.u32 %v1357, 16
      %v1483 = vrot.slane %v1481, 1
      %v1484 = vsel %vm1364, %v1479, %v1483
      %v1486 = vshrl.u32 %v1294, 16
      %v1488 = vshll.u32 %v1294, 16
      %v1490 = vrot.slane %v1488, 1
      %v1491 = vor.u32 %v1486, %v1490
      %v1493 = vshll.u32 %v1358, 16
      %v1495 = vrot.slane %v1493, 1
      %v1496 = vsel %vm1364, %v1491, %v1495
      %v1498 = vshrl.u32 %v1295, 16
      %v1500 = vshll.u32 %v1295, 16
      %v1502 = vrot.slane %v1500, 1
      %v1503 = vor.u32 %v1498, %v1502
      %v1505 = vshll.u32 %v1359, 16
      %v1507 = vrot.slane %v1505, 1
      %v1508 = vsel %vm1364, %v1503, %v1507
      %v1510 = vshrl.u32 %v1296, 16
      %v1512 = vshll.u32 %v1296, 16
      %v1514 = vrot.slane %v1512, 1
      %v1515 = vor.u32 %v1510, %v1514
      %v1517 = vshll.u32 %v1360, 16
      %v1519 = vrot.slane %v1517, 1
      %v1520 = vsel %vm1364, %v1515, %v1519
      %v1522 = vshrl.u32 %v1297, 16
      %v1524 = vshll.u32 %v1297, 16
      %v1526 = vrot.slane %v1524, 1
      %v1527 = vor.u32 %v1522, %v1526
      %v1529 = vshll.u32 %v1361, 16
      %v1531 = vrot.slane %v1529, 1
      %v1532 = vsel %vm1364, %v1527, %v1531
      %v1534 = vshrl.u32 %v1298, 16
      %v1536 = vshll.u32 %v1298, 16
      %v1538 = vrot.slane %v1536, 1
      %v1539 = vor.u32 %v1534, %v1538
      %v1541 = vshll.u32 %v1362, 16
      %v1543 = vrot.slane %v1541, 1
      %v1544 = vsel %vm1364, %v1539, %v1543
      %v1546 = vshrl.u32 %v1299, 16
      %v1548 = vshll.u32 %v1299, 16
      %v1550 = vrot.slane %v1548, 1
      %v1551 = vor.u32 %v1546, %v1550
      %v1553 = vshll.u32 %v1363, 16
      %v1555 = vrot.slane %v1553, 1
      %v1556 = vsel %vm1364, %v1551, %v1555
      %v1589 = vunpack.c.l.b16 %v1075
      %v1590 = vunpack.c.l.b16 %v1076
      %v1591 = vunpack.c.l.b16 %v1077
      %v1592 = vunpack.c.l.b16 %v1078
      %v1593 = vunpack.c.l.b16 %v1079
      %v1594 = vunpack.c.l.b16 %v1080
      %v1595 = vunpack.c.l.b16 %v1081
      %v1596 = vunpack.c.l.b16 %v1082
      %v1597 = vunpack.c.l.b16 %v1083
      %v1598 = vunpack.c.l.b16 %v1084
      %v1599 = vunpack.c.l.b16 %v1085
      %v1600 = vunpack.c.l.b16 %v1086
      %v1601 = vunpack.c.l.b16 %v1087
      %v1602 = vunpack.c.l.b16 %v1088
      %v1603 = vunpack.c.l.b16 %v1089
      %v1604 = vunpack.c.l.b16 %v1090
      %v1605 = vpack.c.b16 %v1253, %v1589
      %v1606 = vpack.c.b16 %v1255, %v1590
      %v1607 = vpack.c.b16 %v1257, %v1591
      %v1608 = vpack.c.b16 %v1259, %v1592
      %v1609 = vpack.c.b16 %v1261, %v1593
      %v1610 = vpack.c.b16 %v1263, %v1594
      %v1611 = vpack.c.b16 %v1265, %v1595
      %v1612 = vpack.c.b16 %v1267, %v1596
      %v1613 = vpack.c.b16 %v1269, %v1597
      %v1614 = vpack.c.b16 %v1271, %v1598
      %v1615 = vpack.c.b16 %v1273, %v1599
      %v1616 = vpack.c.b16 %v1275, %v1600
      %v1617 = vpack.c.b16 %v1277, %v1601
      %v1618 = vpack.c.b16 %v1279, %v1602
      %v1619 = vpack.c.b16 %v1281, %v1603
      %v1620 = vpack.c.b16 %v1283, %v1604
      %vm1621 = vcmask 1046528
      %v1622 = vrot.slane %v1605, 1
      %v1623 = vrot.slane %v1348, 1
      %v1624 = vsel %vm1621, %v1622, %v1623
      %v1625 = vrot.slane %v1606, 1
      %v1626 = vrot.slane %v1349, 1
      %v1627 = vsel %vm1621, %v1625, %v1626
      %v1628 = vrot.slane %v1607, 1
      %v1629 = vrot.slane %v1350, 1
      %v1630 = vsel %vm1621, %v1628, %v1629
      %v1631 = vrot.slane %v1608, 1
      %v1632 = vrot.slane %v1351, 1
      %v1633 = vsel %vm1621, %v1631, %v1632
      %v1634 = vrot.slane %v1609, 1
      %v1635 = vrot.slane %v1352, 1
      %v1636 = vsel %vm1621, %v1634, %v1635
      %v1637 = vrot.slane %v1610, 1
      %v1638 = vrot.slane %v1353, 1
      %v1639 = vsel %vm1621, %v1637, %v1638
      %v1640 = vrot.slane %v1611, 1
      %v1641 = vrot.slane %v1354, 1
      %v1642 = vsel %vm1621, %v1640, %v1641
      %v1643 = vrot.slane %v1612, 1
      %v1644 = vrot.slane %v1355, 1
      %v1645 = vsel %vm1621, %v1643, %v1644
      %v1646 = vrot.slane %v1613, 1
      %v1647 = vrot.slane %v1356, 1
      %v1648 = vsel %vm1621, %v1646, %v1647
      %v1649 = vrot.slane %v1614, 1
      %v1650 = vrot.slane %v1357, 1
      %v1651 = vsel %vm1621, %v1649, %v1650
      %v1652 = vrot.slane %v1615, 1
      %v1653 = vrot.slane %v1358, 1
      %v1654 = vsel %vm1621, %v1652, %v1653
      %v1655 = vrot.slane %v1616, 1
      %v1656 = vrot.slane %v1359, 1
      %v1657 = vsel %vm1621, %v1655, %v1656
      %v1658 = vrot.slane %v1617, 1
      %v1659 = vrot.slane %v1360, 1
      %v1660 = vsel %vm1621, %v1658, %v1659
      %v1661 = vrot.slane %v1618, 1
      %v1662 = vrot.slane %v1361, 1
      %v1663 = vsel %vm1621, %v1661, %v1662
      %v1664 = vrot.slane %v1619, 1
      %v1665 = vrot.slane %v1362, 1
      %v1666 = vsel %vm1621, %v1664, %v1665
      %v1667 = vrot.slane %v1620, 1
      %v1668 = vrot.slane %v1363, 1
      %v1669 = vsel %vm1621, %v1667, %v1668
      %v1718 = vunpack.c.l.b16 %v1091
      %v1719 = vunpack.c.l.b16 %v1092
      %v1720 = vunpack.c.l.b16 %v1093
      %v1721 = vunpack.c.l.b16 %v1094
      %v1722 = vunpack.c.l.b16 %v1095
      %v1723 = vunpack.c.l.b16 %v1096
      %v1724 = vunpack.c.l.b16 %v1097
      %v1725 = vunpack.c.l.b16 %v1098
      %v1726 = vunpack.c.l.b16 %v1099
      %v1727 = vunpack.c.l.b16 %v1100
      %v1728 = vunpack.c.l.b16 %v1101
      %v1729 = vunpack.c.l.b16 %v1102
      %v1730 = vunpack.c.l.b16 %v1103
      %v1731 = vunpack.c.l.b16 %v1104
      %v1732 = vunpack.c.l.b16 %v1105
      %v1733 = vunpack.c.l.b16 %v1106
      %v1734 = vunpack.c.l.b16 %v1107
      %v1735 = vunpack.c.l.b16 %v1108
      %v1736 = vunpack.c.l.b16 %v1109
      %v1737 = vunpack.c.l.b16 %v1110
      %v1738 = vunpack.c.l.b16 %v1111
      %v1739 = vunpack.c.l.b16 %v1112
      %v1740 = vunpack.c.l.b16 %v1113
      %v1741 = vunpack.c.l.b16 %v1114
      %v1742 = vunpack.c.l.b16 %v1115
      %v1743 = vunpack.c.l.b16 %v1116
      %v1744 = vunpack.c.l.b16 %v1117
      %v1745 = vunpack.c.l.b16 %v1118
      %v1746 = vunpack.c.l.b16 %v1119
      %v1747 = vunpack.c.l.b16 %v1120
      %v1748 = vunpack.c.l.b16 %v1121
      %v1749 = vunpack.c.l.b16 %v1122
      %v1750 = vpack.c.b16 %v1719, %v1718
      %v1751 = vpack.c.b16 %v1721, %v1720
      %v1752 = vpack.c.b16 %v1723, %v1722
      %v1753 = vpack.c.b16 %v1725, %v1724
      %v1754 = vpack.c.b16 %v1727, %v1726
      %v1755 = vpack.c.b16 %v1729, %v1728
      %v1756 = vpack.c.b16 %v1731, %v1730
      %v1757 = vpack.c.b16 %v1733, %v1732
      %v1758 = vpack.c.b16 %v1735, %v1734
      %v1759 = vpack.c.b16 %v1737, %v1736
      %v1760 = vpack.c.b16 %v1739, %v1738
      %v1761 = vpack.c.b16 %v1741, %v1740
      %v1762 = vpack.c.b16 %v1743, %v1742
      %v1763 = vpack.c.b16 %v1745, %v1744
      %v1764 = vpack.c.b16 %v1747, %v1746
      %v1765 = vpack.c.b16 %v1749, %v1748
      %v1798 = vunpack.c.l.b16 %v1123
      %v1799 = vunpack.c.l.b16 %v1124
      %v1800 = vunpack.c.l.b16 %v1125
      %v1801 = vunpack.c.l.b16 %v1126
      %v1802 = vunpack.c.l.b16 %v1127
      %v1803 = vunpack.c.l.b16 %v1128
      %v1804 = vunpack.c.l.b16 %v1129
      %v1805 = vunpack.c.l.b16 %v1130
      %v1806 = vunpack.c.l.b16 %v1131
      %v1807 = vunpack.c.l.b16 %v1132
      %v1808 = vunpack.c.l.b16 %v1133
      %v1809 = vunpack.c.l.b16 %v1134
      %v1810 = vunpack.c.l.b16 %v1135
      %v1811 = vunpack.c.l.b16 %v1136
      %v1812 = vunpack.c.l.b16 %v1137
      %v1813 = vunpack.c.l.b16 %v1138
      %v1814 = vpack.c.b16 %v1798, %v1798
      %v1815 = vpack.c.b16 %v1799, %v1799
      %v1816 = vpack.c.b16 %v1800, %v1800
      %v1817 = vpack.c.b16 %v1801, %v1801
      %v1818 = vpack.c.b16 %v1802, %v1802
      %v1819 = vpack.c.b16 %v1803, %v1803
      %v1820 = vpack.c.b16 %v1804, %v1804
      %v1821 = vpack.c.b16 %v1805, %v1805
      %v1822 = vpack.c.b16 %v1806, %v1806
      %v1823 = vpack.c.b16 %v1807, %v1807
      %v1824 = vpack.c.b16 %v1808, %v1808
      %v1825 = vpack.c.b16 %v1809, %v1809
      %v1826 = vpack.c.b16 %v1810, %v1810
      %v1827 = vpack.c.b16 %v1811, %v1811
      %v1828 = vpack.c.b16 %v1812, %v1812
      %v1829 = vpack.c.b16 %v1813, %v1813
      %v1831 = vshrl.u32 %v1750, 16
      %v1833 = vshll.u32 %v1750, 16
      %v1835 = vrot.slane %v1833, 1
      %v1836 = vor.u32 %v1831, %v1835
      %v1838 = vshll.u32 %v1814, 16
      %v1840 = vrot.slane %v1838, 1
      %v1841 = vsel %vm1364, %v1836, %v1840
      %v1843 = vshrl.u32 %v1751, 16
      %v1845 = vshll.u32 %v1751, 16
      %v1847 = vrot.slane %v1845, 1
      %v1848 = vor.u32 %v1843, %v1847
      %v1850 = vshll.u32 %v1815, 16
      %v1852 = vrot.slane %v1850, 1
      %v1853 = vsel %vm1364, %v1848, %v1852
      %v1855 = vshrl.u32 %v1752, 16
      %v1857 = vshll.u32 %v1752, 16
      %v1859 = vrot.slane %v1857, 1
      %v1860 = vor.u32 %v1855, %v1859
      %v1862 = vshll.u32 %v1816, 16
      %v1864 = vrot.slane %v1862, 1
      %v1865 = vsel %vm1364, %v1860, %v1864
      %v1867 = vshrl.u32 %v1753, 16
      %v1869 = vshll.u32 %v1753, 16
      %v1871 = vrot.slane %v1869, 1
      %v1872 = vor.u32 %v1867, %v1871
      %v1874 = vshll.u32 %v1817, 16
      %v1876 = vrot.slane %v1874, 1
      %v1877 = vsel %vm1364, %v1872, %v1876
      %v1879 = vshrl.u32 %v1754, 16
      %v1881 = vshll.u32 %v1754, 16
      %v1883 = vrot.slane %v1881, 1
      %v1884 = vor.u32 %v1879, %v1883
      %v1886 = vshll.u32 %v1818, 16
      %v1888 = vrot.slane %v1886, 1
      %v1889 = vsel %vm1364, %v1884, %v1888
      %v1891 = vshrl.u32 %v1755, 16
      %v1893 = vshll.u32 %v1755, 16
      %v1895 = vrot.slane %v1893, 1
      %v1896 = vor.u32 %v1891, %v1895
      %v1898 = vshll.u32 %v1819, 16
      %v1900 = vrot.slane %v1898, 1
      %v1901 = vsel %vm1364, %v1896, %v1900
      %v1903 = vshrl.u32 %v1756, 16
      %v1905 = vshll.u32 %v1756, 16
      %v1907 = vrot.slane %v1905, 1
      %v1908 = vor.u32 %v1903, %v1907
      %v1910 = vshll.u32 %v1820, 16
      %v1912 = vrot.slane %v1910, 1
      %v1913 = vsel %vm1364, %v1908, %v1912
      %v1915 = vshrl.u32 %v1757, 16
      %v1917 = vshll.u32 %v1757, 16
      %v1919 = vrot.slane %v1917, 1
      %v1920 = vor.u32 %v1915, %v1919
      %v1922 = vshll.u32 %v1821, 16
      %v1924 = vrot.slane %v1922, 1
      %v1925 = vsel %vm1364, %v1920, %v1924
      %v1927 = vshrl.u32 %v1758, 16
      %v1929 = vshll.u32 %v1758, 16
      %v1931 = vrot.slane %v1929, 1
      %v1932 = vor.u32 %v1927, %v1931
      %v1934 = vshll.u32 %v1822, 16
      %v1936 = vrot.slane %v1934, 1
      %v1937 = vsel %vm1364, %v1932, %v1936
      %v1939 = vshrl.u32 %v1759, 16
      %v1941 = vshll.u32 %v1759, 16
      %v1943 = vrot.slane %v1941, 1
      %v1944 = vor.u32 %v1939, %v1943
      %v1946 = vshll.u32 %v1823, 16
      %v1948 = vrot.slane %v1946, 1
      %v1949 = vsel %vm1364, %v1944, %v1948
      %v1951 = vshrl.u32 %v1760, 16
      %v1953 = vshll.u32 %v1760, 16
      %v1955 = vrot.slane %v1953, 1
      %v1956 = vor.u32 %v1951, %v1955
      %v1958 = vshll.u32 %v1824, 16
      %v1960 = vrot.slane %v1958, 1
      %v1961 = vsel %vm1364, %v1956, %v1960
      %v1963 = vshrl.u32 %v1761, 16
      %v1965 = vshll.u32 %v1761, 16
      %v1967 = vrot.slane %v1965, 1
      %v1968 = vor.u32 %v1963, %v1967
      %v1970 = vshll.u32 %v1825, 16
      %v1972 = vrot.slane %v1970, 1
      %v1973 = vsel %vm1364, %v1968, %v1972
      %v1975 = vshrl.u32 %v1762, 16
      %v1977 = vshll.u32 %v1762, 16
      %v1979 = vrot.slane %v1977, 1
      %v1980 = vor.u32 %v1975, %v1979
      %v1982 = vshll.u32 %v1826, 16
      %v1984 = vrot.slane %v1982, 1
      %v1985 = vsel %vm1364, %v1980, %v1984
      %v1987 = vshrl.u32 %v1763, 16
      %v1989 = vshll.u32 %v1763, 16
      %v1991 = vrot.slane %v1989, 1
      %v1992 = vor.u32 %v1987, %v1991
      %v1994 = vshll.u32 %v1827, 16
      %v1996 = vrot.slane %v1994, 1
      %v1997 = vsel %vm1364, %v1992, %v1996
      %v1999 = vshrl.u32 %v1764, 16
      %v2001 = vshll.u32 %v1764, 16
      %v2003 = vrot.slane %v2001, 1
      %v2004 = vor.u32 %v1999, %v2003
      %v2006 = vshll.u32 %v1828, 16
      %v2008 = vrot.slane %v2006, 1
      %v2009 = vsel %vm1364, %v2004, %v2008
      %v2011 = vshrl.u32 %v1765, 16
      %v2013 = vshll.u32 %v1765, 16
      %v2015 = vrot.slane %v2013, 1
      %v2016 = vor.u32 %v2011, %v2015
      %v2018 = vshll.u32 %v1829, 16
      %v2020 = vrot.slane %v2018, 1
      %v2021 = vsel %vm1364, %v2016, %v2020
      %v2054 = vunpack.c.l.b16 %v1139
      %v2055 = vunpack.c.l.b16 %v1140
      %v2056 = vunpack.c.l.b16 %v1141
      %v2057 = vunpack.c.l.b16 %v1142
      %v2058 = vunpack.c.l.b16 %v1143
      %v2059 = vunpack.c.l.b16 %v1144
      %v2060 = vunpack.c.l.b16 %v1145
      %v2061 = vunpack.c.l.b16 %v1146
      %v2062 = vunpack.c.l.b16 %v1147
      %v2063 = vunpack.c.l.b16 %v1148
      %v2064 = vunpack.c.l.b16 %v1149
      %v2065 = vunpack.c.l.b16 %v1150
      %v2066 = vunpack.c.l.b16 %v1151
      %v2067 = vunpack.c.l.b16 %v1152
      %v2068 = vunpack.c.l.b16 %v1153
      %v2069 = vunpack.c.l.b16 %v1154
      %v2070 = vpack.c.b16 %v1719, %v2054
      %v2071 = vpack.c.b16 %v1721, %v2055
      %v2072 = vpack.c.b16 %v1723, %v2056
      %v2073 = vpack.c.b16 %v1725, %v2057
      %v2074 = vpack.c.b16 %v1727, %v2058
      %v2075 = vpack.c.b16 %v1729, %v2059
      %v2076 = vpack.c.b16 %v1731, %v2060
      %v2077 = vpack.c.b16 %v1733, %v2061
      %v2078 = vpack.c.b16 %v1735, %v2062
      %v2079 = vpack.c.b16 %v1737, %v2063
      %v2080 = vpack.c.b16 %v1739, %v2064
      %v2081 = vpack.c.b16 %v1741, %v2065
      %v2082 = vpack.c.b16 %v1743, %v2066
      %v2083 = vpack.c.b16 %v1745, %v2067
      %v2084 = vpack.c.b16 %v1747, %v2068
      %v2085 = vpack.c.b16 %v1749, %v2069
      %v2086 = vrot.slane %v2070, 1
      %v2087 = vrot.slane %v1814, 1
      %v2088 = vsel %vm1621, %v2086, %v2087
      %v2089 = vrot.slane %v2071, 1
      %v2090 = vrot.slane %v1815, 1
      %v2091 = vsel %vm1621, %v2089, %v2090
      %v2092 = vrot.slane %v2072, 1
      %v2093 = vrot.slane %v1816, 1
      %v2094 = vsel %vm1621, %v2092, %v2093
      %v2095 = vrot.slane %v2073, 1
      %v2096 = vrot.slane %v1817, 1
      %v2097 = vsel %vm1621, %v2095, %v2096
      %v2098 = vrot.slane %v2074, 1
      %v2099 = vrot.slane %v1818, 1
      %v2100 = vsel %vm1621, %v2098, %v2099
      %v2101 = vrot.slane %v2075, 1
      %v2102 = vrot.slane %v1819, 1
      %v2103 = vsel %vm1621, %v2101, %v2102
      %v2104 = vrot.slane %v2076, 1
      %v2105 = vrot.slane %v1820, 1
      %v2106 = vsel %vm1621, %v2104, %v2105
      %v2107 = vrot.slane %v2077, 1
      %v2108 = vrot.slane %v1821, 1
      %v2109 = vsel %vm1621, %v2107, %v2108
      %v2110 = vrot.slane %v2078, 1
      %v2111 = vrot.slane %v1822, 1
      %v2112 = vsel %vm1621, %v2110, %v2111
      %v2113 = vrot.slane %v2079, 1
      %v2114 = vrot.slane %v1823, 1
      %v2115 = vsel %vm1621, %v2113, %v2114
      %v2116 = vrot.slane %v2080, 1
      %v2117 = vrot.slane %v1824, 1
      %v2118 = vsel %vm1621, %v2116, %v2117
      %v2119 = vrot.slane %v2081, 1
      %v2120 = vrot.slane %v1825, 1
      %v2121 = vsel %vm1621, %v2119, %v2120
      %v2122 = vrot.slane %v2082, 1
      %v2123 = vrot.slane %v1826, 1
      %v2124 = vsel %vm1621, %v2122, %v2123
      %v2125 = vrot.slane %v2083, 1
      %v2126 = vrot.slane %v1827, 1
      %v2127 = vsel %vm1621, %v2125, %v2126
      %v2128 = vrot.slane %v2084, 1
      %v2129 = vrot.slane %v1828, 1
      %v2130 = vsel %vm1621, %v2128, %v2129
      %v2131 = vrot.slane %v2085, 1
      %v2132 = vrot.slane %v1829, 1
      %v2133 = vsel %vm1621, %v2131, %v2132
      %v2182 = vunpack.c.l.b16 %v1156
      %v2183 = vunpack.c.l.b16 %v1157
      %v2184 = vunpack.c.l.b16 %v1158
      %v2185 = vunpack.c.l.b16 %v1159
      %v2186 = vunpack.c.l.b16 %v1160
      %v2187 = vunpack.c.l.b16 %v1161
      %v2188 = vunpack.c.l.b16 %v1162
      %v2189 = vunpack.c.l.b16 %v1163
      %v2190 = vunpack.c.l.b16 %v1164
      %v2191 = vunpack.c.l.b16 %v1165
      %v2192 = vunpack.c.l.b16 %v1166
      %v2193 = vunpack.c.l.b16 %v1167
      %v2194 = vunpack.c.l.b16 %v1168
      %v2195 = vunpack.c.l.b16 %v1169
      %v2196 = vunpack.c.l.b16 %v1170
      %v2197 = vunpack.c.l.b16 %v1171
      %v2198 = vunpack.c.l.b16 %v1172
      %v2199 = vunpack.c.l.b16 %v1173
      %v2200 = vunpack.c.l.b16 %v1174
      %v2201 = vunpack.c.l.b16 %v1175
      %v2202 = vunpack.c.l.b16 %v1176
      %v2203 = vunpack.c.l.b16 %v1177
      %v2204 = vunpack.c.l.b16 %v1178
      %v2205 = vunpack.c.l.b16 %v1179
      %v2206 = vunpack.c.l.b16 %v1180
      %v2207 = vunpack.c.l.b16 %v1181
      %v2208 = vunpack.c.l.b16 %v1182
      %v2209 = vunpack.c.l.b16 %v1183
      %v2210 = vunpack.c.l.b16 %v1184
      %v2211 = vunpack.c.l.b16 %v1185
      %v2212 = vunpack.c.l.b16 %v1186
      %v2213 = vunpack.c.l.b16 %v1187
      %v2214 = vpack.c.b16 %v2183, %v2182
      %v2215 = vpack.c.b16 %v2185, %v2184
      %v2216 = vpack.c.b16 %v2187, %v2186
      %v2217 = vpack.c.b16 %v2189, %v2188
      %v2218 = vpack.c.b16 %v2191, %v2190
      %v2219 = vpack.c.b16 %v2193, %v2192
      %v2220 = vpack.c.b16 %v2195, %v2194
      %v2221 = vpack.c.b16 %v2197, %v2196
      %v2222 = vpack.c.b16 %v2199, %v2198
      %v2223 = vpack.c.b16 %v2201, %v2200
      %v2224 = vpack.c.b16 %v2203, %v2202
      %v2225 = vpack.c.b16 %v2205, %v2204
      %v2226 = vpack.c.b16 %v2207, %v2206
      %v2227 = vpack.c.b16 %v2209, %v2208
      %v2228 = vpack.c.b16 %v2211, %v2210
      %v2229 = vpack.c.b16 %v2213, %v2212
      %v2262 = vunpack.c.l.b16 %v1188
      %v2263 = vunpack.c.l.b16 %v1189
      %v2264 = vunpack.c.l.b16 %v1190
      %v2265 = vunpack.c.l.b16 %v1191
      %v2266 = vunpack.c.l.b16 %v1192
      %v2267 = vunpack.c.l.b16 %v1193
      %v2268 = vunpack.c.l.b16 %v1194
      %v2269 = vunpack.c.l.b16 %v1195
      %v2270 = vunpack.c.l.b16 %v1196
      %v2271 = vunpack.c.l.b16 %v1197
      %v2272 = vunpack.c.l.b16 %v1198
      %v2273 = vunpack.c.l.b16 %v1199
      %v2274 = vunpack.c.l.b16 %v1200
      %v2275 = vunpack.c.l.b16 %v1201
      %v2276 = vunpack.c.l.b16 %v1202
      %v2277 = vunpack.c.l.b16 %v1203
      %v2278 = vpack.c.b16 %v2262, %v2262
      %v2279 = vpack.c.b16 %v2263, %v2263
      %v2280 = vpack.c.b16 %v2264, %v2264
      %v2281 = vpack.c.b16 %v2265, %v2265
      %v2282 = vpack.c.b16 %v2266, %v2266
      %v2283 = vpack.c.b16 %v2267, %v2267
      %v2284 = vpack.c.b16 %v2268, %v2268
      %v2285 = vpack.c.b16 %v2269, %v2269
      %v2286 = vpack.c.b16 %v2270, %v2270
      %v2287 = vpack.c.b16 %v2271, %v2271
      %v2288 = vpack.c.b16 %v2272, %v2272
      %v2289 = vpack.c.b16 %v2273, %v2273
      %v2290 = vpack.c.b16 %v2274, %v2274
      %v2291 = vpack.c.b16 %v2275, %v2275
      %v2292 = vpack.c.b16 %v2276, %v2276
      %v2293 = vpack.c.b16 %v2277, %v2277
      %v2295 = vshrl.u32 %v2214, 16
      %v2297 = vshll.u32 %v2214, 16
      %v2299 = vrot.slane %v2297, 1
      %v2300 = vor.u32 %v2295, %v2299
      %v2302 = vshll.u32 %v2278, 16
      %v2304 = vrot.slane %v2302, 1
      %v2305 = vsel %vm1364, %v2300, %v2304
      %v2307 = vshrl.u32 %v2215, 16
      %v2309 = vshll.u32 %v2215, 16
      %v2311 = vrot.slane %v2309, 1
      %v2312 = vor.u32 %v2307, %v2311
      %v2314 = vshll.u32 %v2279, 16
      %v2316 = vrot.slane %v2314, 1
      %v2317 = vsel %vm1364, %v2312, %v2316
      %v2319 = vshrl.u32 %v2216, 16
      %v2321 = vshll.u32 %v2216, 16
      %v2323 = vrot.slane %v2321, 1
      %v2324 = vor.u32 %v2319, %v2323
      %v2326 = vshll.u32 %v2280, 16
      %v2328 = vrot.slane %v2326, 1
      %v2329 = vsel %vm1364, %v2324, %v2328
      %v2331 = vshrl.u32 %v2217, 16
      %v2333 = vshll.u32 %v2217, 16
      %v2335 = vrot.slane %v2333, 1
      %v2336 = vor.u32 %v2331, %v2335
      %v2338 = vshll.u32 %v2281, 16
      %v2340 = vrot.slane %v2338, 1
      %v2341 = vsel %vm1364, %v2336, %v2340
      %v2343 = vshrl.u32 %v2218, 16
      %v2345 = vshll.u32 %v2218, 16
      %v2347 = vrot.slane %v2345, 1
      %v2348 = vor.u32 %v2343, %v2347
      %v2350 = vshll.u32 %v2282, 16
      %v2352 = vrot.slane %v2350, 1
      %v2353 = vsel %vm1364, %v2348, %v2352
      %v2355 = vshrl.u32 %v2219, 16
      %v2357 = vshll.u32 %v2219, 16
      %v2359 = vrot.slane %v2357, 1
      %v2360 = vor.u32 %v2355, %v2359
      %v2362 = vshll.u32 %v2283, 16
      %v2364 = vrot.slane %v2362, 1
      %v2365 = vsel %vm1364, %v2360, %v2364
      %v2367 = vshrl.u32 %v2220, 16
      %v2369 = vshll.u32 %v2220, 16
      %v2371 = vrot.slane %v2369, 1
      %v2372 = vor.u32 %v2367, %v2371
      %v2374 = vshll.u32 %v2284, 16
      %v2376 = vrot.slane %v2374, 1
      %v2377 = vsel %vm1364, %v2372, %v2376
      %v2379 = vshrl.u32 %v2221, 16
      %v2381 = vshll.u32 %v2221, 16
      %v2383 = vrot.slane %v2381, 1
      %v2384 = vor.u32 %v2379, %v2383
      %v2386 = vshll.u32 %v2285, 16
      %v2388 = vrot.slane %v2386, 1
      %v2389 = vsel %vm1364, %v2384, %v2388
      %v2391 = vshrl.u32 %v2222, 16
      %v2393 = vshll.u32 %v2222, 16
      %v2395 = vrot.slane %v2393, 1
      %v2396 = vor.u32 %v2391, %v2395
      %v2398 = vshll.u32 %v2286, 16
      %v2400 = vrot.slane %v2398, 1
      %v2401 = vsel %vm1364, %v2396, %v2400
      %v2403 = vshrl.u32 %v2223, 16
      %v2405 = vshll.u32 %v2223, 16
      %v2407 = vrot.slane %v2405, 1
      %v2408 = vor.u32 %v2403, %v2407
      %v2410 = vshll.u32 %v2287, 16
      %v2412 = vrot.slane %v2410, 1
      %v2413 = vsel %vm1364, %v2408, %v2412
      %v2415 = vshrl.u32 %v2224, 16
      %v2417 = vshll.u32 %v2224, 16
      %v2419 = vrot.slane %v2417, 1
      %v2420 = vor.u32 %v2415, %v2419
      %v2422 = vshll.u32 %v2288, 16
      %v2424 = vrot.slane %v2422, 1
      %v2425 = vsel %vm1364, %v2420, %v2424
      %v2427 = vshrl.u32 %v2225, 16
      %v2429 = vshll.u32 %v2225, 16
      %v2431 = vrot.slane %v2429, 1
      %v2432 = vor.u32 %v2427, %v2431
      %v2434 = vshll.u32 %v2289, 16
      %v2436 = vrot.slane %v2434, 1
      %v2437 = vsel %vm1364, %v2432, %v2436
      %v2439 = vshrl.u32 %v2226, 16
      %v2441 = vshll.u32 %v2226, 16
      %v2443 = vrot.slane %v2441, 1
      %v2444 = vor.u32 %v2439, %v2443
      %v2446 = vshll.u32 %v2290, 16
      %v2448 = vrot.slane %v2446, 1
      %v2449 = vsel %vm1364, %v2444, %v2448
      %v2451 = vshrl.u32 %v2227, 16
      %v2453 = vshll.u32 %v2227, 16
      %v2455 = vrot.slane %v2453, 1
      %v2456 = vor.u32 %v2451, %v2455
      %v2458 = vshll.u32 %v2291, 16
      %v2460 = vrot.slane %v2458, 1
      %v2461 = vsel %vm1364, %v2456, %v2460
      %v2463 = vshrl.u32 %v2228, 16
      %v2465 = vshll.u32 %v2228, 16
      %v2467 = vrot.slane %v2465, 1
      %v2468 = vor.u32 %v2463, %v2467
      %v2470 = vshll.u32 %v2292, 16
      %v2472 = vrot.slane %v2470, 1
      %v2473 = vsel %vm1364, %v2468, %v2472
      %v2475 = vshrl.u32 %v2229, 16
      %v2477 = vshll.u32 %v2229, 16
      %v2479 = vrot.slane %v2477, 1
      %v2480 = vor.u32 %v2475, %v2479
      %v2482 = vshll.u32 %v2293, 16
      %v2484 = vrot.slane %v2482, 1
      %v2485 = vsel %vm1364, %v2480, %v2484
      %v2518 = vunpack.c.l.b16 %v1204
      %v2519 = vunpack.c.l.b16 %v1205
      %v2520 = vunpack.c.l.b16 %v1206
      %v2521 = vunpack.c.l.b16 %v1207
      %v2522 = vunpack.c.l.b16 %v1208
      %v2523 = vunpack.c.l.b16 %v1209
      %v2524 = vunpack.c.l.b16 %v1210
      %v2525 = vunpack.c.l.b16 %v1211
      %v2526 = vunpack.c.l.b16 %v1212
      %v2527 = vunpack.c.l.b16 %v1213
      %v2528 = vunpack.c.l.b16 %v1214
      %v2529 = vunpack.c.l.b16 %v1215
      %v2530 = vunpack.c.l.b16 %v1216
      %v2531 = vunpack.c.l.b16 %v1217
      %v2532 = vunpack.c.l.b16 %v1218
      %v2533 = vunpack.c.l.b16 %v1219
      %v2534 = vpack.c.b16 %v2183, %v2518
      %v2535 = vpack.c.b16 %v2185, %v2519
      %v2536 = vpack.c.b16 %v2187, %v2520
      %v2537 = vpack.c.b16 %v2189, %v2521
      %v2538 = vpack.c.b16 %v2191, %v2522
      %v2539 = vpack.c.b16 %v2193, %v2523
      %v2540 = vpack.c.b16 %v2195, %v2524
      %v2541 = vpack.c.b16 %v2197, %v2525
      %v2542 = vpack.c.b16 %v2199, %v2526
      %v2543 = vpack.c.b16 %v2201, %v2527
      %v2544 = vpack.c.b16 %v2203, %v2528
      %v2545 = vpack.c.b16 %v2205, %v2529
      %v2546 = vpack.c.b16 %v2207, %v2530
      %v2547 = vpack.c.b16 %v2209, %v2531
      %v2548 = vpack.c.b16 %v2211, %v2532
      %v2549 = vpack.c.b16 %v2213, %v2533
      %v2550 = vrot.slane %v2534, 1
      %v2551 = vrot.slane %v2278, 1
      %v2552 = vsel %vm1621, %v2550, %v2551
      %v2553 = vrot.slane %v2535, 1
      %v2554 = vrot.slane %v2279, 1
      %v2555 = vsel %vm1621, %v2553, %v2554
      %v2556 = vrot.slane %v2536, 1
      %v2557 = vrot.slane %v2280, 1
      %v2558 = vsel %vm1621, %v2556, %v2557
      %v2559 = vrot.slane %v2537, 1
      %v2560 = vrot.slane %v2281, 1
      %v2561 = vsel %vm1621, %v2559, %v2560
      %v2562 = vrot.slane %v2538, 1
      %v2563 = vrot.slane %v2282, 1
      %v2564 = vsel %vm1621, %v2562, %v2563
      %v2565 = vrot.slane %v2539, 1
      %v2566 = vrot.slane %v2283, 1
      %v2567 = vsel %vm1621, %v2565, %v2566
      %v2568 = vrot.slane %v2540, 1
      %v2569 = vrot.slane %v2284, 1
      %v2570 = vsel %vm1621, %v2568, %v2569
      %v2571 = vrot.slane %v2541, 1
      %v2572 = vrot.slane %v2285, 1
      %v2573 = vsel %vm1621, %v2571, %v2572
      %v2574 = vrot.slane %v2542, 1
      %v2575 = vrot.slane %v2286, 1
      %v2576 = vsel %vm1621, %v2574, %v2575
      %v2577 = vrot.slane %v2543, 1
      %v2578 = vrot.slane %v2287, 1
      %v2579 = vsel %vm1621, %v2577, %v2578
      %v2580 = vrot.slane %v2544, 1
      %v2581 = vrot.slane %v2288, 1
      %v2582 = vsel %vm1621, %v2580, %v2581
      %v2583 = vrot.slane %v2545, 1
      %v2584 = vrot.slane %v2289, 1
      %v2585 = vsel %vm1621, %v2583, %v2584
      %v2586 = vrot.slane %v2546, 1
      %v2587 = vrot.slane %v2290, 1
      %v2588 = vsel %vm1621, %v2586, %v2587
      %v2589 = vrot.slane %v2547, 1
      %v2590 = vrot.slane %v2291, 1
      %v2591 = vsel %vm1621, %v2589, %v2590
      %v2592 = vrot.slane %v2548, 1
      %v2593 = vrot.slane %v2292, 1
      %v2594 = vsel %vm1621, %v2592, %v2593
      %v2595 = vrot.slane %v2549, 1
      %v2596 = vrot.slane %v2293, 1
      %v2597 = vsel %vm1621, %v2595, %v2596
      %v2614 = vld [vmem:[%s3] sm:$0xf]
      %v2615 = vld [vmem:[%s3 + $0x4] sm:$0xf]
      %v2616 = vld [vmem:[%s3 + $0x8] sm:$0xf]
      %v2617 = vld [vmem:[%s3 + $0xc] sm:$0xf]
      %v2618 = vld [vmem:[%s3 + $0x10] sm:$0xf]
      %v2619 = vld [vmem:[%s3 + $0x14] sm:$0xf]
      %v2620 = vld [vmem:[%s3 + $0x18] sm:$0xf]
      %v2621 = vld [vmem:[%s3 + $0x1c] sm:$0xf]
      %v2622 = vld [vmem:[%s3 + $0x20] sm:$0xf]
      %v2623 = vld [vmem:[%s3 + $0x24] sm:$0xf]
      %v2624 = vld [vmem:[%s3 + $0x28] sm:$0xf]
      %v2625 = vld [vmem:[%s3 + $0x2c] sm:$0xf]
      %v2626 = vld [vmem:[%s3 + $0x30] sm:$0xf]
      %v2627 = vld [vmem:[%s3 + $0x34] sm:$0xf]
      %v2628 = vld [vmem:[%s3 + $0x38] sm:$0xf]
      %v2629 = vld [vmem:[%s3 + $0x3c] sm:$0xf]
      %v2630 = vld [vmem:[%s3 + $0x40] sm:$0xf]
      %v2631 = vld [vmem:[%s3 + $0x44] sm:$0xf]
      %v2632 = vld [vmem:[%s3 + $0x48] sm:$0xf]
      %v2633 = vld [vmem:[%s3 + $0x4c] sm:$0xf]
      %v2634 = vld [vmem:[%s3 + $0x50] sm:$0xf]
      %v2635 = vld [vmem:[%s3 + $0x54] sm:$0xf]
      %v2636 = vld [vmem:[%s3 + $0x58] sm:$0xf]
      %v2637 = vld [vmem:[%s3 + $0x5c] sm:$0xf]
      %v2638 = vld [vmem:[%s3 + $0x60] sm:$0xf]
      %v2639 = vld [vmem:[%s3 + $0x64] sm:$0xf]
      %v2640 = vld [vmem:[%s3 + $0x68] sm:$0xf]
      %v2641 = vld [vmem:[%s3 + $0x6c] sm:$0xf]
      %v2642 = vld [vmem:[%s3 + $0x70] sm:$0xf]
      %v2643 = vld [vmem:[%s3 + $0x74] sm:$0xf]
      %v2644 = vld [vmem:[%s3 + $0x78] sm:$0xf]
      %v2645 = vld [vmem:[%s3 + $0x7c] sm:$0xf]
      %v2646 = vld [vmem:[%s3 + $0x80] sm:$0xf]
      %v2647 = vld [vmem:[%s3 + $0x84] sm:$0xf]
      %v2648 = vld [vmem:[%s3 + $0x88] sm:$0xf]
      %v2649 = vld [vmem:[%s3 + $0x8c] sm:$0xf]
      %v2650 = vld [vmem:[%s3 + $0x90] sm:$0xf]
      %v2651 = vld [vmem:[%s3 + $0x94] sm:$0xf]
      %v2652 = vld [vmem:[%s3 + $0x98] sm:$0xf]
      %v2653 = vld [vmem:[%s3 + $0x9c] sm:$0xf]
      %v2654 = vld [vmem:[%s3 + $0xa0] sm:$0xf]
      %v2655 = vld [vmem:[%s3 + $0xa4] sm:$0xf]
      %v2656 = vld [vmem:[%s3 + $0xa8] sm:$0xf]
      %v2657 = vld [vmem:[%s3 + $0xac] sm:$0xf]
      %v2658 = vld [vmem:[%s3 + $0xb0] sm:$0xf]
      %v2659 = vld [vmem:[%s3 + $0xb4] sm:$0xf]
      %v2660 = vld [vmem:[%s3 + $0xb8] sm:$0xf]
      %v2661 = vld [vmem:[%s3 + $0xbc] sm:$0xf]
      %v2662 = vld [vmem:[%s3 + $0xc0] sm:$0xf]
      %v2663 = vld [vmem:[%s3 + $0xc4] sm:$0xf]
      %v2664 = vld [vmem:[%s3 + $0xc8] sm:$0xf]
      %v2665 = vld [vmem:[%s3 + $0xcc] sm:$0xf]
      %v2666 = vld [vmem:[%s3 + $0xd0] sm:$0xf]
      %v2667 = vld [vmem:[%s3 + $0xd4] sm:$0xf]
      %v2668 = vld [vmem:[%s3 + $0xd8] sm:$0xf]
      %v2669 = vld [vmem:[%s3 + $0xdc] sm:$0xf]
      %v2670 = vld [vmem:[%s3 + $0xe0] sm:$0xf]
      %v2671 = vld [vmem:[%s3 + $0xe4] sm:$0xf]
      %v2672 = vld [vmem:[%s3 + $0xe8] sm:$0xf]
      %v2673 = vld [vmem:[%s3 + $0xec] sm:$0xf]
      %v2674 = vld [vmem:[%s3 + $0xf0] sm:$0xf]
      %v2675 = vld [vmem:[%s3 + $0xf4] sm:$0xf]
      %v2676 = vld [vmem:[%s3 + $0xf8] sm:$0xf]
      %v2677 = vld [vmem:[%s3 + $0xfc] sm:$0xf]
      %v2678 = vld [vmem:[%s3 + $0x100] sm:$0xf]
      %v2679 = vld [vmem:[%s3 + $0x104] sm:$0xf]
      %v2680 = vld [vmem:[%s3 + $0x108] sm:$0xf]
      %v2681 = vld [vmem:[%s3 + $0x10c] sm:$0xf]
      %v2682 = vld [vmem:[%s3 + $0x110] sm:$0xf]
      %v2683 = vld [vmem:[%s3 + $0x114] sm:$0xf]
      %v2684 = vld [vmem:[%s3 + $0x118] sm:$0xf]
      %v2685 = vld [vmem:[%s3 + $0x11c] sm:$0xf]
      %v2686 = vld [vmem:[%s3 + $0x120] sm:$0xf]
      %v2687 = vld [vmem:[%s3 + $0x124] sm:$0xf]
      %v2688 = vld [vmem:[%s3 + $0x128] sm:$0xf]
      %v2689 = vld [vmem:[%s3 + $0x12c] sm:$0xf]
      %v2690 = vld [vmem:[%s3 + $0x130] sm:$0xf]
      %v2691 = vld [vmem:[%s3 + $0x134] sm:$0xf]
      %v2692 = vld [vmem:[%s3 + $0x138] sm:$0xf]
      %v2693 = vld [vmem:[%s3 + $0x13c] sm:$0xf]
      %v2694 = vld [vmem:[%s3 + $0x140] sm:$0xf]
      %v2695 = vld [vmem:[%s3 + $0x144] sm:$0xf]
      %v2696 = vld [vmem:[%s3 + $0x148] sm:$0xf]
      %v2697 = vld [vmem:[%s3 + $0x14c] sm:$0xf]
      %v2698 = vld [vmem:[%s3 + $0x150] sm:$0xf]
      %v2699 = vld [vmem:[%s3 + $0x154] sm:$0xf]
      %v2700 = vld [vmem:[%s3 + $0x158] sm:$0xf]
      %v2701 = vld [vmem:[%s3 + $0x15c] sm:$0xf]
      %v2702 = vld [vmem:[%s3 + $0x160] sm:$0xf]
      %v2703 = vld [vmem:[%s3 + $0x164] sm:$0xf]
      %v2704 = vld [vmem:[%s3 + $0x168] sm:$0xf]
      %v2705 = vld [vmem:[%s3 + $0x16c] sm:$0xf]
      %v2706 = vld [vmem:[%s3 + $0x170] sm:$0xf]
      %v2707 = vld [vmem:[%s3 + $0x174] sm:$0xf]
      %v2708 = vld [vmem:[%s3 + $0x178] sm:$0xf]
      %v2709 = vld [vmem:[%s3 + $0x17c] sm:$0xf]
      %v2710 = vld [vmem:[%s3 + $0x180] sm:$0xf]
      %v2711 = vld [vmem:[%s3 + $0x184] sm:$0xf]
      %v2712 = vld [vmem:[%s3 + $0x188] sm:$0xf]
      %v2713 = vld [vmem:[%s3 + $0x18c] sm:$0xf]
      %v2714 = vld [vmem:[%s3 + $0x190] sm:$0xf]
      %v2715 = vld [vmem:[%s3 + $0x194] sm:$0xf]
      %v2716 = vld [vmem:[%s3 + $0x198] sm:$0xf]
      %v2717 = vld [vmem:[%s3 + $0x19c] sm:$0xf]
      %v2718 = vld [vmem:[%s3 + $0x1a0] sm:$0xf]
      %v2719 = vld [vmem:[%s3 + $0x1a4] sm:$0xf]
      %v2720 = vld [vmem:[%s3 + $0x1a8] sm:$0xf]
      %v2721 = vld [vmem:[%s3 + $0x1ac] sm:$0xf]
      %v2722 = vld [vmem:[%s3 + $0x1b0] sm:$0xf]
      %v2723 = vld [vmem:[%s3 + $0x1b4] sm:$0xf]
      %v2724 = vld [vmem:[%s3 + $0x1b8] sm:$0xf]
      %v2725 = vld [vmem:[%s3 + $0x1bc] sm:$0xf]
      %v2726 = vld [vmem:[%s3 + $0x1c0] sm:$0xf]
      %v2727 = vld [vmem:[%s3 + $0x1c4] sm:$0xf]
      %v2728 = vld [vmem:[%s3 + $0x1c8] sm:$0xf]
      %v2729 = vld [vmem:[%s3 + $0x1cc] sm:$0xf]
      %v2730 = vld [vmem:[%s3 + $0x1d0] sm:$0xf]
      %v2731 = vld [vmem:[%s3 + $0x1d4] sm:$0xf]
      %v2732 = vld [vmem:[%s3 + $0x1d8] sm:$0xf]
      %v2733 = vld [vmem:[%s3 + $0x1dc] sm:$0xf]
      %v2734 = vld [vmem:[%s3 + $0x1e0] sm:$0xf]
      %v2735 = vld [vmem:[%s3 + $0x1e4] sm:$0xf]
      %v2736 = vld [vmem:[%s3 + $0x1e8] sm:$0xf]
      %v2737 = vld [vmem:[%s3 + $0x1ec] sm:$0xf]
      %v2738 = vld [vmem:[%s3 + $0x1f0] sm:$0xf]
      %v2739 = vld [vmem:[%s3 + $0x1f4] sm:$0xf]
      %v2740 = vld [vmem:[%s3 + $0x1f8] sm:$0xf]
      %v2741 = vld [vmem:[%s3 + $0x1fc] sm:$0xf]
      %v2742 = vld [vmem:[%s3 + $0x200] sm:$0xf]
      %v2743 = vld [vmem:[%s3 + $0x204] sm:$0xf]
      %v2744 = vld [vmem:[%s3 + $0x208] sm:$0xf]
      %v2745 = vld [vmem:[%s3 + $0x20c] sm:$0xf]
      %v2746 = vld [vmem:[%s3 + $0x210] sm:$0xf]
      %v2747 = vld [vmem:[%s3 + $0x214] sm:$0xf]
      %v2748 = vld [vmem:[%s3 + $0x218] sm:$0xf]
      %v2749 = vld [vmem:[%s3 + $0x21c] sm:$0xf]
      %v2750 = vld [vmem:[%s3 + $0x220] sm:$0xf]
      %v2751 = vld [vmem:[%s3 + $0x224] sm:$0xf]
      %v2752 = vld [vmem:[%s3 + $0x228] sm:$0xf]
      %v2753 = vld [vmem:[%s3 + $0x22c] sm:$0xf]
      %v2754 = vld [vmem:[%s3 + $0x230] sm:$0xf]
      %v2755 = vld [vmem:[%s3 + $0x234] sm:$0xf]
      %v2756 = vld [vmem:[%s3 + $0x238] sm:$0xf]
      %v2757 = vld [vmem:[%s3 + $0x23c] sm:$0xf]
      %v2902 = vunpack.c.l.b16 %v2614
      %v2903 = vunpack.c.l.b16 %v2615
      %v2904 = vunpack.c.l.b16 %v2616
      %v2905 = vunpack.c.l.b16 %v2617
      %v2906 = vunpack.c.l.b16 %v2618
      %v2907 = vunpack.c.l.b16 %v2619
      %v2908 = vunpack.c.l.b16 %v2620
      %v2909 = vunpack.c.l.b16 %v2621
      %v2910 = vunpack.c.l.b16 %v2622
      %v2911 = vunpack.c.l.b16 %v2623
      %v2912 = vunpack.c.l.b16 %v2624
      %v2913 = vunpack.c.l.b16 %v2625
      %v2914 = vunpack.c.l.b16 %v2626
      %v2915 = vunpack.c.l.b16 %v2627
      %v2916 = vunpack.c.l.b16 %v2628
      %v2917 = vunpack.c.l.b16 %v2629
      %v2918 = vunpack.c.l.b16 %v2630
      %v2919 = vunpack.c.l.b16 %v2631
      %v2920 = vunpack.c.l.b16 %v2632
      %v2921 = vunpack.c.l.b16 %v2633
      %v2922 = vunpack.c.l.b16 %v2634
      %v2923 = vunpack.c.l.b16 %v2635
      %v2924 = vunpack.c.l.b16 %v2636
      %v2925 = vunpack.c.l.b16 %v2637
      %v2926 = vunpack.c.l.b16 %v2638
      %v2927 = vunpack.c.l.b16 %v2639
      %v2928 = vunpack.c.l.b16 %v2640
      %v2929 = vunpack.c.l.b16 %v2641
      %v2930 = vunpack.c.l.b16 %v2642
      %v2931 = vunpack.c.l.b16 %v2643
      %v2932 = vunpack.c.l.b16 %v2644
      %v2933 = vunpack.c.l.b16 %v2645
      %v2934 = vunpack.c.l.b16 %v2646
      %v2935 = vunpack.c.l.b16 %v2647
      %v2936 = vunpack.c.l.b16 %v2648
      %v2937 = vunpack.c.l.b16 %v2649
      %v2938 = vunpack.c.l.b16 %v2650
      %v2939 = vunpack.c.l.b16 %v2651
      %v2940 = vunpack.c.l.b16 %v2652
      %v2941 = vunpack.c.l.b16 %v2653
      %v2942 = vunpack.c.l.b16 %v2654
      %v2943 = vunpack.c.l.b16 %v2655
      %v2944 = vunpack.c.l.b16 %v2656
      %v2945 = vunpack.c.l.b16 %v2657
      %v2946 = vunpack.c.l.b16 %v2658
      %v2947 = vunpack.c.l.b16 %v2659
      %v2948 = vunpack.c.l.b16 %v2660
      %v2949 = vunpack.c.l.b16 %v2661
      %v2950 = vunpack.c.l.b16 %v2662
      %v2951 = vunpack.c.l.b16 %v2663
      %v2952 = vunpack.c.l.b16 %v2664
      %v2953 = vunpack.c.l.b16 %v2665
      %v2954 = vunpack.c.l.b16 %v2666
      %v2955 = vunpack.c.l.b16 %v2667
      %v2956 = vunpack.c.l.b16 %v2668
      %v2957 = vunpack.c.l.b16 %v2669
      %v2958 = vunpack.c.l.b16 %v2670
      %v2959 = vunpack.c.l.b16 %v2671
      %v2960 = vunpack.c.l.b16 %v2672
      %v2961 = vunpack.c.l.b16 %v2673
      %v2962 = vunpack.c.l.b16 %v2674
      %v2963 = vunpack.c.l.b16 %v2675
      %v2964 = vunpack.c.l.b16 %v2676
      %v2965 = vunpack.c.l.b16 %v2677
      %v2966 = vunpack.c.l.b16 %v2678
      %v2967 = vunpack.c.l.b16 %v2679
      %v2968 = vunpack.c.l.b16 %v2680
      %v2969 = vunpack.c.l.b16 %v2681
      %v2970 = vunpack.c.l.b16 %v2682
      %v2971 = vunpack.c.l.b16 %v2683
      %v2972 = vunpack.c.l.b16 %v2684
      %v2973 = vunpack.c.l.b16 %v2685
      %v2974 = vunpack.c.l.b16 %v2686
      %v2975 = vunpack.c.l.b16 %v2687
      %v2976 = vunpack.c.l.b16 %v2688
      %v2977 = vunpack.c.l.b16 %v2689
      %v2978 = vunpack.c.l.b16 %v2690
      %v2979 = vunpack.c.l.b16 %v2691
      %v2980 = vunpack.c.l.b16 %v2692
      %v2981 = vunpack.c.l.b16 %v2693
      %v2982 = vunpack.c.l.b16 %v2694
      %v2983 = vunpack.c.l.b16 %v2695
      %v2984 = vunpack.c.l.b16 %v2696
      %v2985 = vunpack.c.l.b16 %v2697
      %v2986 = vunpack.c.l.b16 %v2698
      %v2987 = vunpack.c.l.b16 %v2699
      %v2988 = vunpack.c.l.b16 %v2700
      %v2989 = vunpack.c.l.b16 %v2701
      %v2990 = vunpack.c.l.b16 %v2702
      %v2991 = vunpack.c.l.b16 %v2703
      %v2992 = vunpack.c.l.b16 %v2704
      %v2993 = vunpack.c.l.b16 %v2705
      %v2994 = vunpack.c.l.b16 %v2706
      %v2995 = vunpack.c.l.b16 %v2707
      %v2996 = vunpack.c.l.b16 %v2708
      %v2997 = vunpack.c.l.b16 %v2709
      %v2998 = vunpack.c.l.b16 %v2710
      %v2999 = vunpack.c.l.b16 %v2711
      %v3000 = vunpack.c.l.b16 %v2712
      %v3001 = vunpack.c.l.b16 %v2713
      %v3002 = vunpack.c.l.b16 %v2714
      %v3003 = vunpack.c.l.b16 %v2715
      %v3004 = vunpack.c.l.b16 %v2716
      %v3005 = vunpack.c.l.b16 %v2717
      %v3006 = vunpack.c.l.b16 %v2718
      %v3007 = vunpack.c.l.b16 %v2719
      %v3008 = vunpack.c.l.b16 %v2720
      %v3009 = vunpack.c.l.b16 %v2721
      %v3010 = vunpack.c.l.b16 %v2722
      %v3011 = vunpack.c.l.b16 %v2723
      %v3012 = vunpack.c.l.b16 %v2724
      %v3013 = vunpack.c.l.b16 %v2725
      %v3014 = vunpack.c.l.b16 %v2726
      %v3015 = vunpack.c.l.b16 %v2727
      %v3016 = vunpack.c.l.b16 %v2728
      %v3017 = vunpack.c.l.b16 %v2729
      %v3018 = vunpack.c.l.b16 %v2730
      %v3019 = vunpack.c.l.b16 %v2731
      %v3020 = vunpack.c.l.b16 %v2732
      %v3021 = vunpack.c.l.b16 %v2733
      %v3022 = vunpack.c.l.b16 %v2734
      %v3023 = vunpack.c.l.b16 %v2735
      %v3024 = vunpack.c.l.b16 %v2736
      %v3025 = vunpack.c.l.b16 %v2737
      %v3026 = vunpack.c.l.b16 %v2738
      %v3027 = vunpack.c.l.b16 %v2739
      %v3028 = vunpack.c.l.b16 %v2740
      %v3029 = vunpack.c.l.b16 %v2741
      %v3030 = vunpack.c.l.b16 %v2742
      %v3031 = vunpack.c.l.b16 %v2743
      %v3032 = vunpack.c.l.b16 %v2744
      %v3033 = vunpack.c.l.b16 %v2745
      %v3034 = vunpack.c.l.b16 %v2746
      %v3035 = vunpack.c.l.b16 %v2747
      %v3036 = vunpack.c.l.b16 %v2748
      %v3037 = vunpack.c.l.b16 %v2749
      %v3038 = vunpack.c.l.b16 %v2750
      %v3039 = vunpack.c.l.b16 %v2751
      %v3040 = vunpack.c.l.b16 %v2752
      %v3041 = vunpack.c.l.b16 %v2753
      %v3042 = vunpack.c.l.b16 %v2754
      %v3043 = vunpack.c.l.b16 %v2755
      %v3044 = vunpack.c.l.b16 %v2756
      %v3045 = vunpack.c.l.b16 %v2757
      %v3046 = vpack.c.b16 %v2903, %v2902
      %v3047 = vpack.c.b16 %v2905, %v2904
      %v3048 = vpack.c.b16 %v2907, %v2906
      %v3049 = vpack.c.b16 %v2909, %v2908
      %v3050 = vpack.c.b16 %v2911, %v2910
      %v3051 = vpack.c.b16 %v2913, %v2912
      %v3052 = vpack.c.b16 %v2915, %v2914
      %v3053 = vpack.c.b16 %v2917, %v2916
      %v3054 = vpack.c.b16 %v2919, %v2918
      %v3055 = vpack.c.b16 %v2921, %v2920
      %v3056 = vpack.c.b16 %v2923, %v2922
      %v3057 = vpack.c.b16 %v2925, %v2924
      %v3058 = vpack.c.b16 %v2927, %v2926
      %v3059 = vpack.c.b16 %v2929, %v2928
      %v3060 = vpack.c.b16 %v2931, %v2930
      %v3061 = vpack.c.b16 %v2933, %v2932
      %v3062 = vpack.c.b16 %v2935, %v2934
      %v3063 = vpack.c.b16 %v2937, %v2936
      %v3064 = vpack.c.b16 %v2939, %v2938
      %v3065 = vpack.c.b16 %v2941, %v2940
      %v3066 = vpack.c.b16 %v2943, %v2942
      %v3067 = vpack.c.b16 %v2945, %v2944
      %v3068 = vpack.c.b16 %v2947, %v2946
      %v3069 = vpack.c.b16 %v2949, %v2948
      %v3070 = vpack.c.b16 %v2951, %v2950
      %v3071 = vpack.c.b16 %v2953, %v2952
      %v3072 = vpack.c.b16 %v2955, %v2954
      %v3073 = vpack.c.b16 %v2957, %v2956
      %v3074 = vpack.c.b16 %v2959, %v2958
      %v3075 = vpack.c.b16 %v2961, %v2960
      %v3076 = vpack.c.b16 %v2963, %v2962
      %v3077 = vpack.c.b16 %v2965, %v2964
      %v3078 = vpack.c.b16 %v2967, %v2966
      %v3079 = vpack.c.b16 %v2969, %v2968
      %v3080 = vpack.c.b16 %v2971, %v2970
      %v3081 = vpack.c.b16 %v2973, %v2972
      %v3082 = vpack.c.b16 %v2975, %v2974
      %v3083 = vpack.c.b16 %v2977, %v2976
      %v3084 = vpack.c.b16 %v2979, %v2978
      %v3085 = vpack.c.b16 %v2981, %v2980
      %v3086 = vpack.c.b16 %v2983, %v2982
      %v3087 = vpack.c.b16 %v2985, %v2984
      %v3088 = vpack.c.b16 %v2987, %v2986
      %v3089 = vpack.c.b16 %v2989, %v2988
      %v3090 = vpack.c.b16 %v2991, %v2990
      %v3091 = vpack.c.b16 %v2993, %v2992
      %v3092 = vpack.c.b16 %v2995, %v2994
      %v3093 = vpack.c.b16 %v2997, %v2996
      %v3094 = vpack.c.b16 %v2999, %v2998
      %v3095 = vpack.c.b16 %v3001, %v3000
      %v3096 = vpack.c.b16 %v3003, %v3002
      %v3097 = vpack.c.b16 %v3005, %v3004
      %v3098 = vpack.c.b16 %v3007, %v3006
      %v3099 = vpack.c.b16 %v3009, %v3008
      %v3100 = vpack.c.b16 %v3011, %v3010
      %v3101 = vpack.c.b16 %v3013, %v3012
      %v3102 = vpack.c.b16 %v3015, %v3014
      %v3103 = vpack.c.b16 %v3017, %v3016
      %v3104 = vpack.c.b16 %v3019, %v3018
      %v3105 = vpack.c.b16 %v3021, %v3020
      %v3106 = vpack.c.b16 %v3023, %v3022
      %v3107 = vpack.c.b16 %v3025, %v3024
      %v3108 = vpack.c.b16 %v3027, %v3026
      %v3109 = vpack.c.b16 %v3029, %v3028
      %v3110 = vpack.c.b16 %v3031, %v3030
      %v3111 = vpack.c.b16 %v3033, %v3032
      %v3112 = vpack.c.b16 %v3035, %v3034
      %v3113 = vpack.c.b16 %v3037, %v3036
      %v3114 = vpack.c.b16 %v3039, %v3038
      %v3115 = vpack.c.b16 %v3041, %v3040
      %v3116 = vpack.c.b16 %v3043, %v3042
      %v3117 = vpack.c.b16 %v3045, %v3044
      %3190 = vmatpush.bf16.msra.mxu0 %v3053
      %3191 = vmatpush.bf16.msra.mxu0 %v3052
      %3192 = vmatpush.bf16.msra.mxu0 %v3051
      %3193 = vmatpush.bf16.msra.mxu0 %v3050
      %3194 = vmatpush.bf16.msra.mxu0 %v3049
      %3195 = vmatpush.bf16.msra.mxu0 %v3048
      %3196 = vmatpush.bf16.msra.mxu0 %v3047
      %3197 = vmatpush.bf16.msra.mxu0 %v3046
      %3198 = vmatmul.bf16.gmra.mxu0 %v1284
      %v3199 = vpop.f32.mrf.mxu0
      %v3200 = vadd.f32 0.0, %v3199
      %v3201 = vpop.f32.mrf.mxu0
      %v3202 = vadd.f32 0.0, %v3201
      %3203 = vmatmul.bf16.gmra.mxu0 %v1285
      %v3204 = vpop.f32.mrf.mxu0
      %v3205 = vadd.f32 0.0, %v3204
      %v3206 = vpop.f32.mrf.mxu0
      %v3207 = vadd.f32 0.0, %v3206
      %3208 = vmatmul.bf16.gmra.mxu0 %v1286
      %v3209 = vpop.f32.mrf.mxu0
      %v3210 = vadd.f32 0.0, %v3209
      %v3211 = vpop.f32.mrf.mxu0
      %v3212 = vadd.f32 0.0, %v3211
      %3213 = vmatmul.bf16.gmra.mxu0 %v1287
      %v3214 = vpop.f32.mrf.mxu0
      %v3215 = vadd.f32 0.0, %v3214
      %v3216 = vpop.f32.mrf.mxu0
      %v3217 = vadd.f32 0.0, %v3216
      %3218 = vmatmul.bf16.gmra.mxu0 %v1288
      %v3219 = vpop.f32.mrf.mxu0
      %v3220 = vadd.f32 0.0, %v3219
      %v3221 = vpop.f32.mrf.mxu0
      %v3222 = vadd.f32 0.0, %v3221
      %3223 = vmatmul.bf16.gmra.mxu0 %v1289
      %v3224 = vpop.f32.mrf.mxu0
      %v3225 = vadd.f32 0.0, %v3224
      %v3226 = vpop.f32.mrf.mxu0
      %v3227 = vadd.f32 0.0, %v3226
      %3228 = vmatmul.bf16.gmra.mxu0 %v1290
      %v3229 = vpop.f32.mrf.mxu0
      %v3230 = vadd.f32 0.0, %v3229
      %v3231 = vpop.f32.mrf.mxu0
      %v3232 = vadd.f32 0.0, %v3231
      %3233 = vmatmul.bf16.gmra.mxu0 %v1291
      %v3234 = vpop.f32.mrf.mxu0
      %v3235 = vadd.f32 0.0, %v3234
      %v3236 = vpop.f32.mrf.mxu0
      %v3237 = vadd.f32 0.0, %v3236
      %3238 = vmatmul.bf16.gmra.mxu0 %v1292
      %v3239 = vpop.f32.mrf.mxu0
      %v3240 = vadd.f32 0.0, %v3239
      %v3241 = vpop.f32.mrf.mxu0
      %v3242 = vadd.f32 0.0, %v3241
      %3243 = vmatmul.bf16.gmra.mxu0 %v1293
      %v3244 = vpop.f32.mrf.mxu0
      %v3245 = vadd.f32 0.0, %v3244
      %v3246 = vpop.f32.mrf.mxu0
      %v3247 = vadd.f32 0.0, %v3246
      %3248 = vmatmul.bf16.gmra.mxu0 %v1294
      %v3249 = vpop.f32.mrf.mxu0
      %v3250 = vadd.f32 0.0, %v3249
      %v3251 = vpop.f32.mrf.mxu0
      %v3252 = vadd.f32 0.0, %v3251
      %3253 = vmatmul.bf16.gmra.mxu0 %v1295
      %v3254 = vpop.f32.mrf.mxu0
      %v3255 = vadd.f32 0.0, %v3254
      %v3256 = vpop.f32.mrf.mxu0
      %v3257 = vadd.f32 0.0, %v3256
      %3258 = vmatmul.bf16.gmra.mxu0 %v1296
      %v3259 = vpop.f32.mrf.mxu0
      %v3260 = vadd.f32 0.0, %v3259
      %v3261 = vpop.f32.mrf.mxu0
      %v3262 = vadd.f32 0.0, %v3261
      %3263 = vmatmul.bf16.gmra.mxu0 %v1297
      %v3264 = vpop.f32.mrf.mxu0
      %v3265 = vadd.f32 0.0, %v3264
      %v3266 = vpop.f32.mrf.mxu0
      %v3267 = vadd.f32 0.0, %v3266
      %3268 = vmatmul.bf16.gmra.mxu0 %v1298
      %v3269 = vpop.f32.mrf.mxu0
      %v3270 = vadd.f32 0.0, %v3269
      %v3271 = vpop.f32.mrf.mxu0
      %v3272 = vadd.f32 0.0, %v3271
      %3273 = vmatmul.bf16.gmra.mxu0 %v1299
      %v3274 = vpop.f32.mrf.mxu0
      %v3275 = vadd.f32 0.0, %v3274
      %v3276 = vpop.f32.mrf.mxu0
      %v3277 = vadd.f32 0.0, %v3276
      %3278 = vdwg.mxu0
      %3279 = vmatpush.bf16.msra.mxu0 %v3061
      %3280 = vmatpush.bf16.msra.mxu0 %v3060
      %3281 = vmatpush.bf16.msra.mxu0 %v3059
      %3282 = vmatpush.bf16.msra.mxu0 %v3058
      %3283 = vmatpush.bf16.msra.mxu0 %v3057
      %3284 = vmatpush.bf16.msra.mxu0 %v3056
      %3285 = vmatpush.bf16.msra.mxu0 %v3055
      %3286 = vmatpush.bf16.msra.mxu0 %v3054
      %3287 = vmatmul.bf16.gmra.mxu0 %v1376
      %v3288 = vpop.f32.mrf.mxu0
      %v3289 = vadd.f32 %v3200, %v3288
      %v3290 = vpop.f32.mrf.mxu0
      %v3291 = vadd.f32 %v3202, %v3290
      %3292 = vmatmul.bf16.gmra.mxu0 %v1388
      %v3293 = vpop.f32.mrf.mxu0
      %v3294 = vadd.f32 %v3205, %v3293
      %v3295 = vpop.f32.mrf.mxu0
      %v3296 = vadd.f32 %v3207, %v3295
      %3297 = vmatmul.bf16.gmra.mxu0 %v1400
      %v3298 = vpop.f32.mrf.mxu0
      %v3299 = vadd.f32 %v3210, %v3298
      %v3300 = vpop.f32.mrf.mxu0
      %v3301 = vadd.f32 %v3212, %v3300
      %3302 = vmatmul.bf16.gmra.mxu0 %v1412
      %v3303 = vpop.f32.mrf.mxu0
      %v3304 = vadd.f32 %v3215, %v3303
      %v3305 = vpop.f32.mrf.mxu0
      %v3306 = vadd.f32 %v3217, %v3305
      %3307 = vmatmul.bf16.gmra.mxu0 %v1424
      %v3308 = vpop.f32.mrf.mxu0
      %v3309 = vadd.f32 %v3220, %v3308
      %v3310 = vpop.f32.mrf.mxu0
      %v3311 = vadd.f32 %v3222, %v3310
      %3312 = vmatmul.bf16.gmra.mxu0 %v1436
      %v3313 = vpop.f32.mrf.mxu0
      %v3314 = vadd.f32 %v3225, %v3313
      %v3315 = vpop.f32.mrf.mxu0
      %v3316 = vadd.f32 %v3227, %v3315
      %3317 = vmatmul.bf16.gmra.mxu0 %v1448
      %v3318 = vpop.f32.mrf.mxu0
      %v3319 = vadd.f32 %v3230, %v3318
      %v3320 = vpop.f32.mrf.mxu0
      %v3321 = vadd.f32 %v3232, %v3320
      %3322 = vmatmul.bf16.gmra.mxu0 %v1460
      %v3323 = vpop.f32.mrf.mxu0
      %v3324 = vadd.f32 %v3235, %v3323
      %v3325 = vpop.f32.mrf.mxu0
      %v3326 = vadd.f32 %v3237, %v3325
      %3327 = vmatmul.bf16.gmra.mxu0 %v1472
      %v3328 = vpop.f32.mrf.mxu0
      %v3329 = vadd.f32 %v3240, %v3328
      %v3330 = vpop.f32.mrf.mxu0
      %v3331 = vadd.f32 %v3242, %v3330
      %3332 = vmatmul.bf16.gmra.mxu0 %v1484
      %v3333 = vpop.f32.mrf.mxu0
      %v3334 = vadd.f32 %v3245, %v3333
      %v3335 = vpop.f32.mrf.mxu0
      %v3336 = vadd.f32 %v3247, %v3335
      %3337 = vmatmul.bf16.gmra.mxu0 %v1496
      %v3338 = vpop.f32.mrf.mxu0
      %v3339 = vadd.f32 %v3250, %v3338
      %v3340 = vpop.f32.mrf.mxu0
      %v3341 = vadd.f32 %v3252, %v3340
      %3342 = vmatmul.bf16.gmra.mxu0 %v1508
      %v3343 = vpop.f32.mrf.mxu0
      %v3344 = vadd.f32 %v3255, %v3343
      %v3345 = vpop.f32.mrf.mxu0
      %v3346 = vadd.f32 %v3257, %v3345
      %3347 = vmatmul.bf16.gmra.mxu0 %v1520
      %v3348 = vpop.f32.mrf.mxu0
      %v3349 = vadd.f32 %v3260, %v3348
      %v3350 = vpop.f32.mrf.mxu0
      %v3351 = vadd.f32 %v3262, %v3350
      %3352 = vmatmul.bf16.gmra.mxu0 %v1532
      %v3353 = vpop.f32.mrf.mxu0
      %v3354 = vadd.f32 %v3265, %v3353
      %v3355 = vpop.f32.mrf.mxu0
      %v3356 = vadd.f32 %v3267, %v3355
      %3357 = vmatmul.bf16.gmra.mxu0 %v1544
      %v3358 = vpop.f32.mrf.mxu0
      %v3359 = vadd.f32 %v3270, %v3358
      %v3360 = vpop.f32.mrf.mxu0
      %v3361 = vadd.f32 %v3272, %v3360
      %3362 = vmatmul.bf16.gmra.mxu0 %v1556
      %v3363 = vpop.f32.mrf.mxu0
      %v3364 = vadd.f32 %v3275, %v3363
      %v3365 = vpop.f32.mrf.mxu0
      %v3366 = vadd.f32 %v3277, %v3365
      %3367 = vdwg.mxu0
      %3368 = vmatpush.bf16.msra.mxu0 %v3069
      %3369 = vmatpush.bf16.msra.mxu0 %v3068
      %3370 = vmatpush.bf16.msra.mxu0 %v3067
      %3371 = vmatpush.bf16.msra.mxu0 %v3066
      %3372 = vmatpush.bf16.msra.mxu0 %v3065
      %3373 = vmatpush.bf16.msra.mxu0 %v3064
      %3374 = vmatpush.bf16.msra.mxu0 %v3063
      %3375 = vmatpush.bf16.msra.mxu0 %v3062
      %3376 = vmatmul.bf16.gmra.mxu0 %v1624
      %v3377 = vpop.f32.mrf.mxu0
      %v3378 = vadd.f32 %v3289, %v3377
      %v3379 = vpop.f32.mrf.mxu0
      %v3380 = vadd.f32 %v3291, %v3379
      %3381 = vmatmul.bf16.gmra.mxu0 %v1627
      %v3382 = vpop.f32.mrf.mxu0
      %v3383 = vadd.f32 %v3294, %v3382
      %v3384 = vpop.f32.mrf.mxu0
      %v3385 = vadd.f32 %v3296, %v3384
      %3386 = vmatmul.bf16.gmra.mxu0 %v1630
      %v3387 = vpop.f32.mrf.mxu0
      %v3388 = vadd.f32 %v3299, %v3387
      %v3389 = vpop.f32.mrf.mxu0
      %v3390 = vadd.f32 %v3301, %v3389
      %3391 = vmatmul.bf16.gmra.mxu0 %v1633
      %v3392 = vpop.f32.mrf.mxu0
      %v3393 = vadd.f32 %v3304, %v3392
      %v3394 = vpop.f32.mrf.mxu0
      %v3395 = vadd.f32 %v3306, %v3394
      %3396 = vmatmul.bf16.gmra.mxu0 %v1636
      %v3397 = vpop.f32.mrf.mxu0
      %v3398 = vadd.f32 %v3309, %v3397
      %v3399 = vpop.f32.mrf.mxu0
      %v3400 = vadd.f32 %v3311, %v3399
      %3401 = vmatmul.bf16.gmra.mxu0 %v1639
      %v3402 = vpop.f32.mrf.mxu0
      %v3403 = vadd.f32 %v3314, %v3402
      %v3404 = vpop.f32.mrf.mxu0
      %v3405 = vadd.f32 %v3316, %v3404
      %3406 = vmatmul.bf16.gmra.mxu0 %v1642
      %v3407 = vpop.f32.mrf.mxu0
      %v3408 = vadd.f32 %v3319, %v3407
      %v3409 = vpop.f32.mrf.mxu0
      %v3410 = vadd.f32 %v3321, %v3409
      %3411 = vmatmul.bf16.gmra.mxu0 %v1645
      %v3412 = vpop.f32.mrf.mxu0
      %v3413 = vadd.f32 %v3324, %v3412
      %v3414 = vpop.f32.mrf.mxu0
      %v3415 = vadd.f32 %v3326, %v3414
      %3416 = vmatmul.bf16.gmra.mxu0 %v1648
      %v3417 = vpop.f32.mrf.mxu0
      %v3418 = vadd.f32 %v3329, %v3417
      %v3419 = vpop.f32.mrf.mxu0
      %v3420 = vadd.f32 %v3331, %v3419
      %3421 = vmatmul.bf16.gmra.mxu0 %v1651
      %v3422 = vpop.f32.mrf.mxu0
      %v3423 = vadd.f32 %v3334, %v3422
      %v3424 = vpop.f32.mrf.mxu0
      %v3425 = vadd.f32 %v3336, %v3424
      %3426 = vmatmul.bf16.gmra.mxu0 %v1654
      %v3427 = vpop.f32.mrf.mxu0
      %v3428 = vadd.f32 %v3339, %v3427
      %v3429 = vpop.f32.mrf.mxu0
      %v3430 = vadd.f32 %v3341, %v3429
      %3431 = vmatmul.bf16.gmra.mxu0 %v1657
      %v3432 = vpop.f32.mrf.mxu0
      %v3433 = vadd.f32 %v3344, %v3432
      %v3434 = vpop.f32.mrf.mxu0
      %v3435 = vadd.f32 %v3346, %v3434
      %3436 = vmatmul.bf16.gmra.mxu0 %v1660
      %v3437 = vpop.f32.mrf.mxu0
      %v3438 = vadd.f32 %v3349, %v3437
      %v3439 = vpop.f32.mrf.mxu0
      %v3440 = vadd.f32 %v3351, %v3439
      %3441 = vmatmul.bf16.gmra.mxu0 %v1663
      %v3442 = vpop.f32.mrf.mxu0
      %v3443 = vadd.f32 %v3354, %v3442
      %v3444 = vpop.f32.mrf.mxu0
      %v3445 = vadd.f32 %v3356, %v3444
      %3446 = vmatmul.bf16.gmra.mxu0 %v1666
      %v3447 = vpop.f32.mrf.mxu0
      %v3448 = vadd.f32 %v3359, %v3447
      %v3449 = vpop.f32.mrf.mxu0
      %v3450 = vadd.f32 %v3361, %v3449
      %3451 = vmatmul.bf16.gmra.mxu0 %v1669
      %v3452 = vpop.f32.mrf.mxu0
      %v3453 = vadd.f32 %v3364, %v3452
      %v3454 = vpop.f32.mrf.mxu0
      %v3455 = vadd.f32 %v3366, %v3454
      %3456 = vdwg.mxu0
      %3457 = vmatpush.bf16.msra.mxu0 %v3077
      %3458 = vmatpush.bf16.msra.mxu0 %v3076
      %3459 = vmatpush.bf16.msra.mxu0 %v3075
      %3460 = vmatpush.bf16.msra.mxu0 %v3074
      %3461 = vmatpush.bf16.msra.mxu0 %v3073
      %3462 = vmatpush.bf16.msra.mxu0 %v3072
      %3463 = vmatpush.bf16.msra.mxu0 %v3071
      %3464 = vmatpush.bf16.msra.mxu0 %v3070
      %3465 = vmatmul.bf16.gmra.mxu0 %v1750
      %v3466 = vpop.f32.mrf.mxu0
      %v3467 = vadd.f32 %v3378, %v3466
      %v3468 = vpop.f32.mrf.mxu0
      %v3469 = vadd.f32 %v3380, %v3468
      %3470 = vmatmul.bf16.gmra.mxu0 %v1751
      %v3471 = vpop.f32.mrf.mxu0
      %v3472 = vadd.f32 %v3383, %v3471
      %v3473 = vpop.f32.mrf.mxu0
      %v3474 = vadd.f32 %v3385, %v3473
      %3475 = vmatmul.bf16.gmra.mxu0 %v1752
      %v3476 = vpop.f32.mrf.mxu0
      %v3477 = vadd.f32 %v3388, %v3476
      %v3478 = vpop.f32.mrf.mxu0
      %v3479 = vadd.f32 %v3390, %v3478
      %3480 = vmatmul.bf16.gmra.mxu0 %v1753
      %v3481 = vpop.f32.mrf.mxu0
      %v3482 = vadd.f32 %v3393, %v3481
      %v3483 = vpop.f32.mrf.mxu0
      %v3484 = vadd.f32 %v3395, %v3483
      %3485 = vmatmul.bf16.gmra.mxu0 %v1754
      %v3486 = vpop.f32.mrf.mxu0
      %v3487 = vadd.f32 %v3398, %v3486
      %v3488 = vpop.f32.mrf.mxu0
      %v3489 = vadd.f32 %v3400, %v3488
      %3490 = vmatmul.bf16.gmra.mxu0 %v1755
      %v3491 = vpop.f32.mrf.mxu0
      %v3492 = vadd.f32 %v3403, %v3491
      %v3493 = vpop.f32.mrf.mxu0
      %v3494 = vadd.f32 %v3405, %v3493
      %3495 = vmatmul.bf16.gmra.mxu0 %v1756
      %v3496 = vpop.f32.mrf.mxu0
      %v3497 = vadd.f32 %v3408, %v3496
      %v3498 = vpop.f32.mrf.mxu0
      %v3499 = vadd.f32 %v3410, %v3498
      %3500 = vmatmul.bf16.gmra.mxu0 %v1757
      %v3501 = vpop.f32.mrf.mxu0
      %v3502 = vadd.f32 %v3413, %v3501
      %v3503 = vpop.f32.mrf.mxu0
      %v3504 = vadd.f32 %v3415, %v3503
      %3505 = vmatmul.bf16.gmra.mxu0 %v1758
      %v3506 = vpop.f32.mrf.mxu0
      %v3507 = vadd.f32 %v3418, %v3506
      %v3508 = vpop.f32.mrf.mxu0
      %v3509 = vadd.f32 %v3420, %v3508
      %3510 = vmatmul.bf16.gmra.mxu0 %v1759
      %v3511 = vpop.f32.mrf.mxu0
      %v3512 = vadd.f32 %v3423, %v3511
      %v3513 = vpop.f32.mrf.mxu0
      %v3514 = vadd.f32 %v3425, %v3513
      %3515 = vmatmul.bf16.gmra.mxu0 %v1760
      %v3516 = vpop.f32.mrf.mxu0
      %v3517 = vadd.f32 %v3428, %v3516
      %v3518 = vpop.f32.mrf.mxu0
      %v3519 = vadd.f32 %v3430, %v3518
      %3520 = vmatmul.bf16.gmra.mxu0 %v1761
      %v3521 = vpop.f32.mrf.mxu0
      %v3522 = vadd.f32 %v3433, %v3521
      %v3523 = vpop.f32.mrf.mxu0
      %v3524 = vadd.f32 %v3435, %v3523
      %3525 = vmatmul.bf16.gmra.mxu0 %v1762
      %v3526 = vpop.f32.mrf.mxu0
      %v3527 = vadd.f32 %v3438, %v3526
      %v3528 = vpop.f32.mrf.mxu0
      %v3529 = vadd.f32 %v3440, %v3528
      %3530 = vmatmul.bf16.gmra.mxu0 %v1763
      %v3531 = vpop.f32.mrf.mxu0
      %v3532 = vadd.f32 %v3443, %v3531
      %v3533 = vpop.f32.mrf.mxu0
      %v3534 = vadd.f32 %v3445, %v3533
      %3535 = vmatmul.bf16.gmra.mxu0 %v1764
      %v3536 = vpop.f32.mrf.mxu0
      %v3537 = vadd.f32 %v3448, %v3536
      %v3538 = vpop.f32.mrf.mxu0
      %v3539 = vadd.f32 %v3450, %v3538
      %3540 = vmatmul.bf16.gmra.mxu0 %v1765
      %v3541 = vpop.f32.mrf.mxu0
      %v3542 = vadd.f32 %v3453, %v3541
      %v3543 = vpop.f32.mrf.mxu0
      %v3544 = vadd.f32 %v3455, %v3543
      %3545 = vdwg.mxu0
      %3546 = vmatpush.bf16.msra.mxu0 %v3085
      %3547 = vmatpush.bf16.msra.mxu0 %v3084
      %3548 = vmatpush.bf16.msra.mxu0 %v3083
      %3549 = vmatpush.bf16.msra.mxu0 %v3082
      %3550 = vmatpush.bf16.msra.mxu0 %v3081
      %3551 = vmatpush.bf16.msra.mxu0 %v3080
      %3552 = vmatpush.bf16.msra.mxu0 %v3079
      %3553 = vmatpush.bf16.msra.mxu0 %v3078
      %3554 = vmatmul.bf16.gmra.mxu0 %v1841
      %v3555 = vpop.f32.mrf.mxu0
      %v3556 = vadd.f32 %v3467, %v3555
      %v3557 = vpop.f32.mrf.mxu0
      %v3558 = vadd.f32 %v3469, %v3557
      %3559 = vmatmul.bf16.gmra.mxu0 %v1853
      %v3560 = vpop.f32.mrf.mxu0
      %v3561 = vadd.f32 %v3472, %v3560
      %v3562 = vpop.f32.mrf.mxu0
      %v3563 = vadd.f32 %v3474, %v3562
      %3564 = vmatmul.bf16.gmra.mxu0 %v1865
      %v3565 = vpop.f32.mrf.mxu0
      %v3566 = vadd.f32 %v3477, %v3565
      %v3567 = vpop.f32.mrf.mxu0
      %v3568 = vadd.f32 %v3479, %v3567
      %3569 = vmatmul.bf16.gmra.mxu0 %v1877
      %v3570 = vpop.f32.mrf.mxu0
      %v3571 = vadd.f32 %v3482, %v3570
      %v3572 = vpop.f32.mrf.mxu0
      %v3573 = vadd.f32 %v3484, %v3572
      %3574 = vmatmul.bf16.gmra.mxu0 %v1889
      %v3575 = vpop.f32.mrf.mxu0
      %v3576 = vadd.f32 %v3487, %v3575
      %v3577 = vpop.f32.mrf.mxu0
      %v3578 = vadd.f32 %v3489, %v3577
      %3579 = vmatmul.bf16.gmra.mxu0 %v1901
      %v3580 = vpop.f32.mrf.mxu0
      %v3581 = vadd.f32 %v3492, %v3580
      %v3582 = vpop.f32.mrf.mxu0
      %v3583 = vadd.f32 %v3494, %v3582
      %3584 = vmatmul.bf16.gmra.mxu0 %v1913
      %v3585 = vpop.f32.mrf.mxu0
      %v3586 = vadd.f32 %v3497, %v3585
      %v3587 = vpop.f32.mrf.mxu0
      %v3588 = vadd.f32 %v3499, %v3587
      %3589 = vmatmul.bf16.gmra.mxu0 %v1925
      %v3590 = vpop.f32.mrf.mxu0
      %v3591 = vadd.f32 %v3502, %v3590
      %v3592 = vpop.f32.mrf.mxu0
      %v3593 = vadd.f32 %v3504, %v3592
      %3594 = vmatmul.bf16.gmra.mxu0 %v1937
      %v3595 = vpop.f32.mrf.mxu0
      %v3596 = vadd.f32 %v3507, %v3595
      %v3597 = vpop.f32.mrf.mxu0
      %v3598 = vadd.f32 %v3509, %v3597
      %3599 = vmatmul.bf16.gmra.mxu0 %v1949
      %v3600 = vpop.f32.mrf.mxu0
      %v3601 = vadd.f32 %v3512, %v3600
      %v3602 = vpop.f32.mrf.mxu0
      %v3603 = vadd.f32 %v3514, %v3602
      %3604 = vmatmul.bf16.gmra.mxu0 %v1961
      %v3605 = vpop.f32.mrf.mxu0
      %v3606 = vadd.f32 %v3517, %v3605
      %v3607 = vpop.f32.mrf.mxu0
      %v3608 = vadd.f32 %v3519, %v3607
      %3609 = vmatmul.bf16.gmra.mxu0 %v1973
      %v3610 = vpop.f32.mrf.mxu0
      %v3611 = vadd.f32 %v3522, %v3610
      %v3612 = vpop.f32.mrf.mxu0
      %v3613 = vadd.f32 %v3524, %v3612
      %3614 = vmatmul.bf16.gmra.mxu0 %v1985
      %v3615 = vpop.f32.mrf.mxu0
      %v3616 = vadd.f32 %v3527, %v3615
      %v3617 = vpop.f32.mrf.mxu0
      %v3618 = vadd.f32 %v3529, %v3617
      %3619 = vmatmul.bf16.gmra.mxu0 %v1997
      %v3620 = vpop.f32.mrf.mxu0
      %v3621 = vadd.f32 %v3532, %v3620
      %v3622 = vpop.f32.mrf.mxu0
      %v3623 = vadd.f32 %v3534, %v3622
      %3624 = vmatmul.bf16.gmra.mxu0 %v2009
      %v3625 = vpop.f32.mrf.mxu0
      %v3626 = vadd.f32 %v3537, %v3625
      %v3627 = vpop.f32.mrf.mxu0
      %v3628 = vadd.f32 %v3539, %v3627
      %3629 = vmatmul.bf16.gmra.mxu0 %v2021
      %v3630 = vpop.f32.mrf.mxu0
      %v3631 = vadd.f32 %v3542, %v3630
      %v3632 = vpop.f32.mrf.mxu0
      %v3633 = vadd.f32 %v3544, %v3632
      %3634 = vdwg.mxu0
      %3635 = vmatpush.bf16.msra.mxu0 %v3093
      %3636 = vmatpush.bf16.msra.mxu0 %v3092
      %3637 = vmatpush.bf16.msra.mxu0 %v3091
      %3638 = vmatpush.bf16.msra.mxu0 %v3090
      %3639 = vmatpush.bf16.msra.mxu0 %v3089
      %3640 = vmatpush.bf16.msra.mxu0 %v3088
      %3641 = vmatpush.bf16.msra.mxu0 %v3087
      %3642 = vmatpush.bf16.msra.mxu0 %v3086
      %3643 = vmatmul.bf16.gmra.mxu0 %v2088
      %v3644 = vpop.f32.mrf.mxu0
      %v3645 = vadd.f32 %v3556, %v3644
      %v3646 = vpop.f32.mrf.mxu0
      %v3647 = vadd.f32 %v3558, %v3646
      %3648 = vmatmul.bf16.gmra.mxu0 %v2091
      %v3649 = vpop.f32.mrf.mxu0
      %v3650 = vadd.f32 %v3561, %v3649
      %v3651 = vpop.f32.mrf.mxu0
      %v3652 = vadd.f32 %v3563, %v3651
      %3653 = vmatmul.bf16.gmra.mxu0 %v2094
      %v3654 = vpop.f32.mrf.mxu0
      %v3655 = vadd.f32 %v3566, %v3654
      %v3656 = vpop.f32.mrf.mxu0
      %v3657 = vadd.f32 %v3568, %v3656
      %3658 = vmatmul.bf16.gmra.mxu0 %v2097
      %v3659 = vpop.f32.mrf.mxu0
      %v3660 = vadd.f32 %v3571, %v3659
      %v3661 = vpop.f32.mrf.mxu0
      %v3662 = vadd.f32 %v3573, %v3661
      %3663 = vmatmul.bf16.gmra.mxu0 %v2100
      %v3664 = vpop.f32.mrf.mxu0
      %v3665 = vadd.f32 %v3576, %v3664
      %v3666 = vpop.f32.mrf.mxu0
      %v3667 = vadd.f32 %v3578, %v3666
      %3668 = vmatmul.bf16.gmra.mxu0 %v2103
      %v3669 = vpop.f32.mrf.mxu0
      %v3670 = vadd.f32 %v3581, %v3669
      %v3671 = vpop.f32.mrf.mxu0
      %v3672 = vadd.f32 %v3583, %v3671
      %3673 = vmatmul.bf16.gmra.mxu0 %v2106
      %v3674 = vpop.f32.mrf.mxu0
      %v3675 = vadd.f32 %v3586, %v3674
      %v3676 = vpop.f32.mrf.mxu0
      %v3677 = vadd.f32 %v3588, %v3676
      %3678 = vmatmul.bf16.gmra.mxu0 %v2109
      %v3679 = vpop.f32.mrf.mxu0
      %v3680 = vadd.f32 %v3591, %v3679
      %v3681 = vpop.f32.mrf.mxu0
      %v3682 = vadd.f32 %v3593, %v3681
      %3683 = vmatmul.bf16.gmra.mxu0 %v2112
      %v3684 = vpop.f32.mrf.mxu0
      %v3685 = vadd.f32 %v3596, %v3684
      %v3686 = vpop.f32.mrf.mxu0
      %v3687 = vadd.f32 %v3598, %v3686
      %3688 = vmatmul.bf16.gmra.mxu0 %v2115
      %v3689 = vpop.f32.mrf.mxu0
      %v3690 = vadd.f32 %v3601, %v3689
      %v3691 = vpop.f32.mrf.mxu0
      %v3692 = vadd.f32 %v3603, %v3691
      %3693 = vmatmul.bf16.gmra.mxu0 %v2118
      %v3694 = vpop.f32.mrf.mxu0
      %v3695 = vadd.f32 %v3606, %v3694
      %v3696 = vpop.f32.mrf.mxu0
      %v3697 = vadd.f32 %v3608, %v3696
      %3698 = vmatmul.bf16.gmra.mxu0 %v2121
      %v3699 = vpop.f32.mrf.mxu0
      %v3700 = vadd.f32 %v3611, %v3699
      %v3701 = vpop.f32.mrf.mxu0
      %v3702 = vadd.f32 %v3613, %v3701
      %3703 = vmatmul.bf16.gmra.mxu0 %v2124
      %v3704 = vpop.f32.mrf.mxu0
      %v3705 = vadd.f32 %v3616, %v3704
      %v3706 = vpop.f32.mrf.mxu0
      %v3707 = vadd.f32 %v3618, %v3706
      %3708 = vmatmul.bf16.gmra.mxu0 %v2127
      %v3709 = vpop.f32.mrf.mxu0
      %v3710 = vadd.f32 %v3621, %v3709
      %v3711 = vpop.f32.mrf.mxu0
      %v3712 = vadd.f32 %v3623, %v3711
      %3713 = vmatmul.bf16.gmra.mxu0 %v2130
      %v3714 = vpop.f32.mrf.mxu0
      %v3715 = vadd.f32 %v3626, %v3714
      %v3716 = vpop.f32.mrf.mxu0
      %v3717 = vadd.f32 %v3628, %v3716
      %3718 = vmatmul.bf16.gmra.mxu0 %v2133
      %v3719 = vpop.f32.mrf.mxu0
      %v3720 = vadd.f32 %v3631, %v3719
      %v3721 = vpop.f32.mrf.mxu0
      %v3722 = vadd.f32 %v3633, %v3721
      %3723 = vdwg.mxu0
      %3724 = vmatpush.bf16.msra.mxu0 %v3101
      %3725 = vmatpush.bf16.msra.mxu0 %v3100
      %3726 = vmatpush.bf16.msra.mxu0 %v3099
      %3727 = vmatpush.bf16.msra.mxu0 %v3098
      %3728 = vmatpush.bf16.msra.mxu0 %v3097
      %3729 = vmatpush.bf16.msra.mxu0 %v3096
      %3730 = vmatpush.bf16.msra.mxu0 %v3095
      %3731 = vmatpush.bf16.msra.mxu0 %v3094
      %3732 = vmatmul.bf16.gmra.mxu0 %v2214
      %v3733 = vpop.f32.mrf.mxu0
      %v3734 = vadd.f32 %v3645, %v3733
      %v3735 = vpop.f32.mrf.mxu0
      %v3736 = vadd.f32 %v3647, %v3735
      %3737 = vmatmul.bf16.gmra.mxu0 %v2215
      %v3738 = vpop.f32.mrf.mxu0
      %v3739 = vadd.f32 %v3650, %v3738
      %v3740 = vpop.f32.mrf.mxu0
      %v3741 = vadd.f32 %v3652, %v3740
      %3742 = vmatmul.bf16.gmra.mxu0 %v2216
      %v3743 = vpop.f32.mrf.mxu0
      %v3744 = vadd.f32 %v3655, %v3743
      %v3745 = vpop.f32.mrf.mxu0
      %v3746 = vadd.f32 %v3657, %v3745
      %3747 = vmatmul.bf16.gmra.mxu0 %v2217
      %v3748 = vpop.f32.mrf.mxu0
      %v3749 = vadd.f32 %v3660, %v3748
      %v3750 = vpop.f32.mrf.mxu0
      %v3751 = vadd.f32 %v3662, %v3750
      %3752 = vmatmul.bf16.gmra.mxu0 %v2218
      %v3753 = vpop.f32.mrf.mxu0
      %v3754 = vadd.f32 %v3665, %v3753
      %v3755 = vpop.f32.mrf.mxu0
      %v3756 = vadd.f32 %v3667, %v3755
      %3757 = vmatmul.bf16.gmra.mxu0 %v2219
      %v3758 = vpop.f32.mrf.mxu0
      %v3759 = vadd.f32 %v3670, %v3758
      %v3760 = vpop.f32.mrf.mxu0
      %v3761 = vadd.f32 %v3672, %v3760
      %3762 = vmatmul.bf16.gmra.mxu0 %v2220
      %v3763 = vpop.f32.mrf.mxu0
      %v3764 = vadd.f32 %v3675, %v3763
      %v3765 = vpop.f32.mrf.mxu0
      %v3766 = vadd.f32 %v3677, %v3765
      %3767 = vmatmul.bf16.gmra.mxu0 %v2221
      %v3768 = vpop.f32.mrf.mxu0
      %v3769 = vadd.f32 %v3680, %v3768
      %v3770 = vpop.f32.mrf.mxu0
      %v3771 = vadd.f32 %v3682, %v3770
      %3772 = vmatmul.bf16.gmra.mxu0 %v2222
      %v3773 = vpop.f32.mrf.mxu0
      %v3774 = vadd.f32 %v3685, %v3773
      %v3775 = vpop.f32.mrf.mxu0
      %v3776 = vadd.f32 %v3687, %v3775
      %3777 = vmatmul.bf16.gmra.mxu0 %v2223
      %v3778 = vpop.f32.mrf.mxu0
      %v3779 = vadd.f32 %v3690, %v3778
      %v3780 = vpop.f32.mrf.mxu0
      %v3781 = vadd.f32 %v3692, %v3780
      %3782 = vmatmul.bf16.gmra.mxu0 %v2224
      %v3783 = vpop.f32.mrf.mxu0
      %v3784 = vadd.f32 %v3695, %v3783
      %v3785 = vpop.f32.mrf.mxu0
      %v3786 = vadd.f32 %v3697, %v3785
      %3787 = vmatmul.bf16.gmra.mxu0 %v2225
      %v3788 = vpop.f32.mrf.mxu0
      %v3789 = vadd.f32 %v3700, %v3788
      %v3790 = vpop.f32.mrf.mxu0
      %v3791 = vadd.f32 %v3702, %v3790
      %3792 = vmatmul.bf16.gmra.mxu0 %v2226
      %v3793 = vpop.f32.mrf.mxu0
      %v3794 = vadd.f32 %v3705, %v3793
      %v3795 = vpop.f32.mrf.mxu0
      %v3796 = vadd.f32 %v3707, %v3795
      %3797 = vmatmul.bf16.gmra.mxu0 %v2227
      %v3798 = vpop.f32.mrf.mxu0
      %v3799 = vadd.f32 %v3710, %v3798
      %v3800 = vpop.f32.mrf.mxu0
      %v3801 = vadd.f32 %v3712, %v3800
      %3802 = vmatmul.bf16.gmra.mxu0 %v2228
      %v3803 = vpop.f32.mrf.mxu0
      %v3804 = vadd.f32 %v3715, %v3803
      %v3805 = vpop.f32.mrf.mxu0
      %v3806 = vadd.f32 %v3717, %v3805
      %3807 = vmatmul.bf16.gmra.mxu0 %v2229
      %v3808 = vpop.f32.mrf.mxu0
      %v3809 = vadd.f32 %v3720, %v3808
      %v3810 = vpop.f32.mrf.mxu0
      %v3811 = vadd.f32 %v3722, %v3810
      %3812 = vdwg.mxu0
      %3813 = vmatpush.bf16.msra.mxu0 %v3109
      %3814 = vmatpush.bf16.msra.mxu0 %v3108
      %3815 = vmatpush.bf16.msra.mxu0 %v3107
      %3816 = vmatpush.bf16.msra.mxu0 %v3106
      %3817 = vmatpush.bf16.msra.mxu0 %v3105
      %3818 = vmatpush.bf16.msra.mxu0 %v3104
      %3819 = vmatpush.bf16.msra.mxu0 %v3103
      %3820 = vmatpush.bf16.msra.mxu0 %v3102
      %3821 = vmatmul.bf16.gmra.mxu0 %v2305
      %v3822 = vpop.f32.mrf.mxu0
      %v3823 = vadd.f32 %v3734, %v3822
      %v3824 = vpop.f32.mrf.mxu0
      %v3825 = vadd.f32 %v3736, %v3824
      %3826 = vmatmul.bf16.gmra.mxu0 %v2317
      %v3827 = vpop.f32.mrf.mxu0
      %v3828 = vadd.f32 %v3739, %v3827
      %v3829 = vpop.f32.mrf.mxu0
      %v3830 = vadd.f32 %v3741, %v3829
      %3831 = vmatmul.bf16.gmra.mxu0 %v2329
      %v3832 = vpop.f32.mrf.mxu0
      %v3833 = vadd.f32 %v3744, %v3832
      %v3834 = vpop.f32.mrf.mxu0
      %v3835 = vadd.f32 %v3746, %v3834
      %3836 = vmatmul.bf16.gmra.mxu0 %v2341
      %v3837 = vpop.f32.mrf.mxu0
      %v3838 = vadd.f32 %v3749, %v3837
      %v3839 = vpop.f32.mrf.mxu0
      %v3840 = vadd.f32 %v3751, %v3839
      %3841 = vmatmul.bf16.gmra.mxu0 %v2353
      %v3842 = vpop.f32.mrf.mxu0
      %v3843 = vadd.f32 %v3754, %v3842
      %v3844 = vpop.f32.mrf.mxu0
      %v3845 = vadd.f32 %v3756, %v3844
      %3846 = vmatmul.bf16.gmra.mxu0 %v2365
      %v3847 = vpop.f32.mrf.mxu0
      %v3848 = vadd.f32 %v3759, %v3847
      %v3849 = vpop.f32.mrf.mxu0
      %v3850 = vadd.f32 %v3761, %v3849
      %3851 = vmatmul.bf16.gmra.mxu0 %v2377
      %v3852 = vpop.f32.mrf.mxu0
      %v3853 = vadd.f32 %v3764, %v3852
      %v3854 = vpop.f32.mrf.mxu0
      %v3855 = vadd.f32 %v3766, %v3854
      %3856 = vmatmul.bf16.gmra.mxu0 %v2389
      %v3857 = vpop.f32.mrf.mxu0
      %v3858 = vadd.f32 %v3769, %v3857
      %v3859 = vpop.f32.mrf.mxu0
      %v3860 = vadd.f32 %v3771, %v3859
      %3861 = vmatmul.bf16.gmra.mxu0 %v2401
      %v3862 = vpop.f32.mrf.mxu0
      %v3863 = vadd.f32 %v3774, %v3862
      %v3864 = vpop.f32.mrf.mxu0
      %v3865 = vadd.f32 %v3776, %v3864
      %3866 = vmatmul.bf16.gmra.mxu0 %v2413
      %v3867 = vpop.f32.mrf.mxu0
      %v3868 = vadd.f32 %v3779, %v3867
      %v3869 = vpop.f32.mrf.mxu0
      %v3870 = vadd.f32 %v3781, %v3869
      %3871 = vmatmul.bf16.gmra.mxu0 %v2425
      %v3872 = vpop.f32.mrf.mxu0
      %v3873 = vadd.f32 %v3784, %v3872
      %v3874 = vpop.f32.mrf.mxu0
      %v3875 = vadd.f32 %v3786, %v3874
      %3876 = vmatmul.bf16.gmra.mxu0 %v2437
      %v3877 = vpop.f32.mrf.mxu0
      %v3878 = vadd.f32 %v3789, %v3877
      %v3879 = vpop.f32.mrf.mxu0
      %v3880 = vadd.f32 %v3791, %v3879
      %3881 = vmatmul.bf16.gmra.mxu0 %v2449
      %v3882 = vpop.f32.mrf.mxu0
      %v3883 = vadd.f32 %v3794, %v3882
      %v3884 = vpop.f32.mrf.mxu0
      %v3885 = vadd.f32 %v3796, %v3884
      %3886 = vmatmul.bf16.gmra.mxu0 %v2461
      %v3887 = vpop.f32.mrf.mxu0
      %v3888 = vadd.f32 %v3799, %v3887
      %v3889 = vpop.f32.mrf.mxu0
      %v3890 = vadd.f32 %v3801, %v3889
      %3891 = vmatmul.bf16.gmra.mxu0 %v2473
      %v3892 = vpop.f32.mrf.mxu0
      %v3893 = vadd.f32 %v3804, %v3892
      %v3894 = vpop.f32.mrf.mxu0
      %v3895 = vadd.f32 %v3806, %v3894
      %3896 = vmatmul.bf16.gmra.mxu0 %v2485
      %v3897 = vpop.f32.mrf.mxu0
      %v3898 = vadd.f32 %v3809, %v3897
      %v3899 = vpop.f32.mrf.mxu0
      %v3900 = vadd.f32 %v3811, %v3899
      %3901 = vdwg.mxu0
      %3902 = vmatpush.bf16.msra.mxu0 %v3117
      %3903 = vmatpush.bf16.msra.mxu0 %v3116
      %3904 = vmatpush.bf16.msra.mxu0 %v3115
      %3905 = vmatpush.bf16.msra.mxu0 %v3114
      %3906 = vmatpush.bf16.msra.mxu0 %v3113
      %3907 = vmatpush.bf16.msra.mxu0 %v3112
      %3908 = vmatpush.bf16.msra.mxu0 %v3111
      %3909 = vmatpush.bf16.msra.mxu0 %v3110
      %3910 = vmatmul.bf16.gmra.mxu0 %v2552
      %v3911 = vpop.f32.mrf.mxu0
      %v3912 = vadd.f32 %v3823, %v3911
      %v3913 = vpop.f32.mrf.mxu0
      %v3914 = vadd.f32 %v3825, %v3913
      %3915 = vmatmul.bf16.gmra.mxu0 %v2555
      %v3916 = vpop.f32.mrf.mxu0
      %v3917 = vadd.f32 %v3828, %v3916
      %v3918 = vpop.f32.mrf.mxu0
      %v3919 = vadd.f32 %v3830, %v3918
      %3920 = vmatmul.bf16.gmra.mxu0 %v2558
      %v3921 = vpop.f32.mrf.mxu0
      %v3922 = vadd.f32 %v3833, %v3921
      %v3923 = vpop.f32.mrf.mxu0
      %v3924 = vadd.f32 %v3835, %v3923
      %3925 = vmatmul.bf16.gmra.mxu0 %v2561
      %v3926 = vpop.f32.mrf.mxu0
      %v3927 = vadd.f32 %v3838, %v3926
      %v3928 = vpop.f32.mrf.mxu0
      %v3929 = vadd.f32 %v3840, %v3928
      %3930 = vmatmul.bf16.gmra.mxu0 %v2564
      %v3931 = vpop.f32.mrf.mxu0
      %v3932 = vadd.f32 %v3843, %v3931
      %v3933 = vpop.f32.mrf.mxu0
      %v3934 = vadd.f32 %v3845, %v3933
      %3935 = vmatmul.bf16.gmra.mxu0 %v2567
      %v3936 = vpop.f32.mrf.mxu0
      %v3937 = vadd.f32 %v3848, %v3936
      %v3938 = vpop.f32.mrf.mxu0
      %v3939 = vadd.f32 %v3850, %v3938
      %3940 = vmatmul.bf16.gmra.mxu0 %v2570
      %v3941 = vpop.f32.mrf.mxu0
      %v3942 = vadd.f32 %v3853, %v3941
      %v3943 = vpop.f32.mrf.mxu0
      %v3944 = vadd.f32 %v3855, %v3943
      %3945 = vmatmul.bf16.gmra.mxu0 %v2573
      %v3946 = vpop.f32.mrf.mxu0
      %v3947 = vadd.f32 %v3858, %v3946
      %v3948 = vpop.f32.mrf.mxu0
      %v3949 = vadd.f32 %v3860, %v3948
      %3950 = vmatmul.bf16.gmra.mxu0 %v2576
      %v3951 = vpop.f32.mrf.mxu0
      %v3952 = vadd.f32 %v3863, %v3951
      %v3953 = vpop.f32.mrf.mxu0
      %v3954 = vadd.f32 %v3865, %v3953
      %3955 = vmatmul.bf16.gmra.mxu0 %v2579
      %v3956 = vpop.f32.mrf.mxu0
      %v3957 = vadd.f32 %v3868, %v3956
      %v3958 = vpop.f32.mrf.mxu0
      %v3959 = vadd.f32 %v3870, %v3958
      %3960 = vmatmul.bf16.gmra.mxu0 %v2582
      %v3961 = vpop.f32.mrf.mxu0
      %v3962 = vadd.f32 %v3873, %v3961
      %v3963 = vpop.f32.mrf.mxu0
      %v3964 = vadd.f32 %v3875, %v3963
      %3965 = vmatmul.bf16.gmra.mxu0 %v2585
      %v3966 = vpop.f32.mrf.mxu0
      %v3967 = vadd.f32 %v3878, %v3966
      %v3968 = vpop.f32.mrf.mxu0
      %v3969 = vadd.f32 %v3880, %v3968
      %3970 = vmatmul.bf16.gmra.mxu0 %v2588
      %v3971 = vpop.f32.mrf.mxu0
      %v3972 = vadd.f32 %v3883, %v3971
      %v3973 = vpop.f32.mrf.mxu0
      %v3974 = vadd.f32 %v3885, %v3973
      %3975 = vmatmul.bf16.gmra.mxu0 %v2591
      %v3976 = vpop.f32.mrf.mxu0
      %v3977 = vadd.f32 %v3888, %v3976
      %v3978 = vpop.f32.mrf.mxu0
      %v3979 = vadd.f32 %v3890, %v3978
      %3980 = vmatmul.bf16.gmra.mxu0 %v2594
      %v3981 = vpop.f32.mrf.mxu0
      %v3982 = vadd.f32 %v3893, %v3981
      %v3983 = vpop.f32.mrf.mxu0
      %v3984 = vadd.f32 %v3895, %v3983
      %3985 = vmatmul.bf16.gmra.mxu0 %v2597
      %v3986 = vpop.f32.mrf.mxu0
      %v3987 = vadd.f32 %v3898, %v3986
      %v3988 = vpop.f32.mrf.mxu0
      %v3989 = vadd.f32 %v3900, %v3988
      %3990 = vdwg.mxu0
      %v3991 = vpack.c.bf16 %v3912, %v3912
      %v3992 = vpack.c.bf16 %v3914, %v3914
      %v3993 = vpack.c.bf16 %v3917, %v3917
      %v3994 = vpack.c.bf16 %v3919, %v3919
      %v3995 = vpack.c.bf16 %v3922, %v3922
      %v3996 = vpack.c.bf16 %v3924, %v3924
      %v3997 = vpack.c.bf16 %v3927, %v3927
      %v3998 = vpack.c.bf16 %v3929, %v3929
      %v3999 = vpack.c.bf16 %v3932, %v3932
      %v4000 = vpack.c.bf16 %v3934, %v3934
      %v4001 = vpack.c.bf16 %v3937, %v3937
      %v4002 = vpack.c.bf16 %v3939, %v3939
      %v4003 = vpack.c.bf16 %v3942, %v3942
      %v4004 = vpack.c.bf16 %v3944, %v3944
      %v4005 = vpack.c.bf16 %v3947, %v3947
      %v4006 = vpack.c.bf16 %v3949, %v3949
      %v4007 = vpack.c.bf16 %v3952, %v3952
      %v4008 = vpack.c.bf16 %v3954, %v3954
      %v4009 = vpack.c.bf16 %v3957, %v3957
      %v4010 = vpack.c.bf16 %v3959, %v3959
      %v4011 = vpack.c.bf16 %v3962, %v3962
      %v4012 = vpack.c.bf16 %v3964, %v3964
      %v4013 = vpack.c.bf16 %v3967, %v3967
      %v4014 = vpack.c.bf16 %v3969, %v3969
      %v4015 = vpack.c.bf16 %v3972, %v3972
      %v4016 = vpack.c.bf16 %v3974, %v3974
      %v4017 = vpack.c.bf16 %v3977, %v3977
      %v4018 = vpack.c.bf16 %v3979, %v3979
      %v4019 = vpack.c.bf16 %v3982, %v3982
      %v4020 = vpack.c.bf16 %v3984, %v3984
      %v4021 = vpack.c.bf16 %v3987, %v3987
      %v4022 = vpack.c.bf16 %v3989, %v3989
      %4023 = vst [vmem:[%s262] sm:$0xf] %v3991
      %4024 = vst [vmem:[%s262 + $0x4] sm:$0xf] %v3992
      %4025 = vst [vmem:[%s262 + $0x8] sm:$0xf] %v3993
      %4026 = vst [vmem:[%s262 + $0xc] sm:$0xf] %v3994
      %4027 = vst [vmem:[%s262 + $0x10] sm:$0xf] %v3995
      %4028 = vst [vmem:[%s262 + $0x14] sm:$0xf] %v3996
      %4029 = vst [vmem:[%s262 + $0x18] sm:$0xf] %v3997
      %4030 = vst [vmem:[%s262 + $0x1c] sm:$0xf] %v3998
      %4031 = vst [vmem:[%s262 + $0x20] sm:$0xf] %v3999
      %4032 = vst [vmem:[%s262 + $0x24] sm:$0xf] %v4000
      %4033 = vst [vmem:[%s262 + $0x28] sm:$0xf] %v4001
      %4034 = vst [vmem:[%s262 + $0x2c] sm:$0xf] %v4002
      %4035 = vst [vmem:[%s262 + $0x30] sm:$0xf] %v4003
      %4036 = vst [vmem:[%s262 + $0x34] sm:$0xf] %v4004
      %4037 = vst [vmem:[%s262 + $0x38] sm:$0xf] %v4005
      %4038 = vst [vmem:[%s262 + $0x3c] sm:$0xf] %v4006
      %4039 = vst [vmem:[%s262 + $0x40] sm:$0xf] %v4007
      %4040 = vst [vmem:[%s262 + $0x44] sm:$0xf] %v4008
      %4041 = vst [vmem:[%s262 + $0x48] sm:$0xf] %v4009
      %4042 = vst [vmem:[%s262 + $0x4c] sm:$0xf] %v4010
      %4043 = vst [vmem:[%s262 + $0x50] sm:$0xf] %v4011
      %4044 = vst [vmem:[%s262 + $0x54] sm:$0xf] %v4012
      %4045 = vst [vmem:[%s262 + $0x58] sm:$0xf] %v4013
      %4046 = vst [vmem:[%s262 + $0x5c] sm:$0xf] %v4014
      %4047 = vst [vmem:[%s262 + $0x60] sm:$0xf] %v4015
      %4048 = vst [vmem:[%s262 + $0x64] sm:$0xf] %v4016
      %4049 = vst [vmem:[%s262 + $0x68] sm:$0xf] %v4017
      %4050 = vst [vmem:[%s262 + $0x6c] sm:$0xf] %v4018
      %4051 = vst [vmem:[%s262 + $0x70] sm:$0xf] %v4019
      %4052 = vst [vmem:[%s262 + $0x74] sm:$0xf] %v4020
      %4053 = vst [vmem:[%s262 + $0x78] sm:$0xf] %v4021
      %4054 = vst [vmem:[%s262 + $0x7c] sm:$0xf] %v4022
      %v4055 = vadd.f32 %v3912, %v3914
      %v4056 = vadd.f32 %v4055, %v3917
      %v4057 = vadd.f32 %v4056, %v3919
      %v4058 = vadd.f32 %v4057, %v3922
      %v4059 = vadd.f32 %v4058, %v3924
      %v4060 = vadd.f32 %v4059, %v3927
      %v4061 = vadd.f32 %v4060, %v3929
      %v4062 = vadd.f32 %v4061, %v3932
      %v4063 = vadd.f32 %v4062, %v3934
      %v4064 = vadd.f32 %v4063, %v3937
      %v4065 = vadd.f32 %v4064, %v3939
      %v4066 = vadd.f32 %v4065, %v3942
      %v4067 = vadd.f32 %v4066, %v3944
      %v4068 = vadd.f32 %v4067, %v3947
      %v4069 = vadd.f32 %v4068, %v3949
      %v4070 = vadd.f32 %v4069, %v3952
      %v4071 = vadd.f32 %v4070, %v3954
      %v4072 = vadd.f32 %v4071, %v3957
      %v4073 = vadd.f32 %v4072, %v3959
      %v4074 = vadd.f32 %v4073, %v3962
      %v4075 = vadd.f32 %v4074, %v3964
      %v4076 = vadd.f32 %v4075, %v3967
      %v4077 = vadd.f32 %v4076, %v3969
      %v4078 = vadd.f32 %v4077, %v3972
      %v4079 = vadd.f32 %v4078, %v3974
      %v4080 = vadd.f32 %v4079, %v3977
      %v4081 = vadd.f32 %v4080, %v3979
      %v4082 = vadd.f32 %v4081, %v3982
      %v4083 = vadd.f32 %v4082, %v3984
      %v4084 = vadd.f32 %v4083, %v3987
      %v4085 = vadd.f32 %v4084, %v3989
      %v4086 = vrot.slane %v4085, 4
      %v4087 = vadd.f32 %v4085, %v4086
      %v4088 = vrot.slane %v4087, 2
      %v4089 = vadd.f32 %v4087, %v4088
      %v4090 = vrot.slane %v4089, 1
      %v4091 = vadd.f32 %v4089, %v4090
      %4092 = vst [vmem:[%s265] sm:$0x1] %v4091
      %v4093 = vmul.f32 %v3912, %v3912
      %v4094 = vmul.f32 %v3914, %v3914
      %v4095 = vmul.f32 %v3917, %v3917
      %v4096 = vmul.f32 %v3919, %v3919
      %v4097 = vmul.f32 %v3922, %v3922
      %v4098 = vmul.f32 %v3924, %v3924
      %v4099 = vmul.f32 %v3927, %v3927
      %v4100 = vmul.f32 %v3929, %v3929
      %v4101 = vmul.f32 %v3932, %v3932
      %v4102 = vmul.f32 %v3934, %v3934
      %v4103 = vmul.f32 %v3937, %v3937
      %v4104 = vmul.f32 %v3939, %v3939
      %v4105 = vmul.f32 %v3942, %v3942
      %v4106 = vmul.f32 %v3944, %v3944
      %v4107 = vmul.f32 %v3947, %v3947
      %v4108 = vmul.f32 %v3949, %v3949
      %v4109 = vmul.f32 %v3952, %v3952
      %v4110 = vmul.f32 %v3954, %v3954
      %v4111 = vmul.f32 %v3957, %v3957
      %v4112 = vmul.f32 %v3959, %v3959
      %v4113 = vmul.f32 %v3962, %v3962
      %v4114 = vmul.f32 %v3964, %v3964
      %v4115 = vmul.f32 %v3967, %v3967
      %v4116 = vmul.f32 %v3969, %v3969
      %v4117 = vmul.f32 %v3972, %v3972
      %v4118 = vmul.f32 %v3974, %v3974
      %v4119 = vmul.f32 %v3977, %v3977
      %v4120 = vmul.f32 %v3979, %v3979
      %v4121 = vmul.f32 %v3982, %v3982
      %v4122 = vmul.f32 %v3984, %v3984
      %v4123 = vmul.f32 %v3987, %v3987
      %v4124 = vmul.f32 %v3989, %v3989
      %v4125 = vadd.f32 %v4093, %v4094
      %v4126 = vadd.f32 %v4125, %v4095
      %v4127 = vadd.f32 %v4126, %v4096
      %v4128 = vadd.f32 %v4127, %v4097
      %v4129 = vadd.f32 %v4128, %v4098
      %v4130 = vadd.f32 %v4129, %v4099
      %v4131 = vadd.f32 %v4130, %v4100
      %v4132 = vadd.f32 %v4131, %v4101
      %v4133 = vadd.f32 %v4132, %v4102
      %v4134 = vadd.f32 %v4133, %v4103
      %v4135 = vadd.f32 %v4134, %v4104
      %v4136 = vadd.f32 %v4135, %v4105
      %v4137 = vadd.f32 %v4136, %v4106
      %v4138 = vadd.f32 %v4137, %v4107
      %v4139 = vadd.f32 %v4138, %v4108
      %v4140 = vadd.f32 %v4139, %v4109
      %v4141 = vadd.f32 %v4140, %v4110
      %v4142 = vadd.f32 %v4141, %v4111
      %v4143 = vadd.f32 %v4142, %v4112
      %v4144 = vadd.f32 %v4143, %v4113
      %v4145 = vadd.f32 %v4144, %v4114
      %v4146 = vadd.f32 %v4145, %v4115
      %v4147 = vadd.f32 %v4146, %v4116
      %v4148 = vadd.f32 %v4147, %v4117
      %v4149 = vadd.f32 %v4148, %v4118
      %v4150 = vadd.f32 %v4149, %v4119
      %v4151 = vadd.f32 %v4150, %v4120
      %v4152 = vadd.f32 %v4151, %v4121
      %v4153 = vadd.f32 %v4152, %v4122
      %v4154 = vadd.f32 %v4153, %v4123
      %v4155 = vadd.f32 %v4154, %v4124
      %v4156 = vrot.slane %v4155, 4
      %v4157 = vadd.f32 %v4155, %v4156
      %v4158 = vrot.slane %v4157, 2
      %v4159 = vadd.f32 %v4157, %v4158
      %v4160 = vrot.slane %v4159, 1
      %v4161 = vadd.f32 %v4159, %v4160
      %4162 = vst [vmem:[%s268] sm:$0x1] %v4161
      %p4163 = scmp.lt.s32.totalorder %s18, 1
      %s4164 = scalar_select %p4163, %s18, 1
      %s4165 = smul.addr %s4164, 32
      %s4166 = smul.addr %s4165, 4
      %s4167 = scalar_lea.vmem %s4, %s4166
      %p4168 = scmp.lt.s32.totalorder %s18, 1
      %s4169 = scalar_select %p4168, %s18, 1
      %s4170 = scalar_lea.vmem %s5, %s4169
      %p4171 = scmp.lt.s32.totalorder %s18, 1
      %s4172 = scalar_select %p4171, %s18, 1
      %s4173 = scalar_lea.vmem %s6, %s4172
      // Predicated region
      $region37: #{basic_block_forward.4} parent=35 // pred_check
        %p4174 = pneg %p125
      $region38: #{basic_block_forward.4} parent=35 // pred_check_branch
        %4176 = sbr.rel (%p4174) target = $region40
      $region39: #{basic_block_forward.4} parent=35 // pred_region
        _
      $region40: #{basic_block_forward.4} parent=35 // pred_fallthru
        _
      // Predicated region
      $region41: #{basic_block_forward.4} parent=35 // pred_check
        %p4177 = pneg %p151
      $region42: #{basic_block_forward.4} parent=35 // pred_check_branch
        %4179 = sbr.rel (%p4177) target = $region44
      $region43: #{basic_block_forward.4} parent=35 // pred_region
        _
      $region44: #{basic_block_forward.4} parent=35 // pred_fallthru
        _
      // Predicated region
      $region45: #{basic_block_forward.4} parent=35 // pred_check
        %p4180 = pneg %p177
      $region46: #{basic_block_forward.4} parent=35 // pred_check_branch
        %4182 = sbr.rel (%p4180) target = $region48
      $region47: #{basic_block_forward.4} parent=35 // pred_region
        _
      $region48: #{basic_block_forward.4} parent=35 // pred_fallthru
        _
    $region36: #{basic_block_forward.4} parent=5 // pred_fallthru
      _
    %p4183 = scmp.le.s32.totalorder 2, %s13
    // Predicated region
    $region49: #{basic_block_forward.4} parent=5 // pred_check
      %p4184 = pneg %p4183
    $region50: #{basic_block_forward.4} parent=5 // pred_check_branch
      %4186 = sbr.rel (%p4184) target = $region52
    $region51: #{basic_block_forward.4} parent=5 // pred_region
      %s4187 = ssub.s32 %s13, 2
      // Predicated region
      $region53: #{basic_block_forward.4} parent=51 // pred_check
        %p4188 = pneg %p131
      $region54: #{basic_block_forward.4} parent=51 // pred_check_branch
        %4190 = sbr.rel (%p4188) target = $region56
      $region55: #{basic_block_forward.4} parent=51 // pred_region
        %p4191 = scmp.lt.s32.totalorder %s19, 1
        %s4192 = scalar_select %p4191, %s19, 1
        %s4193 = smul.addr %s4192, 32
        %s4194 = smul.addr %s4193, 4
        %s4195 = scalar_lea.vmem %s4, %s4194
      $region56: #{basic_block_forward.4} parent=51 // pred_fallthru
        _
      // Predicated region
      $region57: #{basic_block_forward.4} parent=51 // pred_check
        %p4196 = pneg %p157
      $region58: #{basic_block_forward.4} parent=51 // pred_check_branch
        %4198 = sbr.rel (%p4196) target = $region60
      $region59: #{basic_block_forward.4} parent=51 // pred_region
        %p4199 = scmp.lt.s32.totalorder %s19, 1
        %s4200 = scalar_select %p4199, %s19, 1
        %s4201 = scalar_lea.vmem %s5, %s4200
      $region60: #{basic_block_forward.4} parent=51 // pred_fallthru
        _
      // Predicated region
      $region61: #{basic_block_forward.4} parent=51 // pred_check
        %p4202 = pneg %p183
      $region62: #{basic_block_forward.4} parent=51 // pred_check_branch
        %4204 = sbr.rel (%p4202) target = $region64
      $region63: #{basic_block_forward.4} parent=51 // pred_region
        %p4205 = scmp.lt.s32.totalorder %s19, 1
        %s4206 = scalar_select %p4205, %s19, 1
        %s4207 = scalar_lea.vmem %s6, %s4206
      $region64: #{basic_block_forward.4} parent=51 // pred_fallthru
        _
    $region52: #{basic_block_forward.4} parent=5 // pred_fallthru
      _
  $region6: #{basic_block_forward.4} parent=0 // loop_footer
    %s17 = sadd.s32 1, %s13
  $region7: #{basic_block_forward.4} parent=0 // loop_footer_branch
    %12 = sbr.rel target = $region3
  $region8: #{basic_block_forward.4} parent=0 // loop_exit
    _

</llo_original>
